<compile_context>
chip_gen: v7x
topology: tpu7x:2x2x1
jax: 0.10.0
libtpu: 0.0.40
codegen_flags: <defaults>
</compile_context>

<pallas_src>
import functools
import numpy as np
import jax
import jax.numpy as jnp
from jax.experimental import pallas as pl
from jax.experimental.pallas import tpu as pltpu

LN_EPS = 1e-5
LANE = 128                        # lane width; hidden must be a multiple
ENC_IN_ALIGN = 16                 # encoder-input column pad (bf16 sublane pack)
MXU_DTYPE = jnp.bfloat16          # matmul input dtype (f32 accumulation)
ACT_DTYPE = jnp.bfloat16          # carried activation dtype (ef / nf)


# ----------------------------------------------------------------------------
# generation-aware tiling / VMEM limits
# ----------------------------------------------------------------------------
def _vmem_capacity_bytes():
    try:
        info = pltpu.get_tpu_info()
        for attr in ("vmem_capacity_bytes", "vmem_bytes", "vmem_capacity"):
            v = getattr(info, attr, None)
            if isinstance(v, (int, np.integer)) and int(v) > 0:
                return int(v)
    except Exception:
        pass
    return 64 * 1024 * 1024       # conservative: v7x per-TensorCore VMEM


_VMEM_CAP = _vmem_capacity_bytes()
if _VMEM_CAP >= 128 * 1024 * 1024:          # v5e / v6e (128 MiB VMEM)
    MAX_TILE_ROWS = 2048
    VMEM_LIMIT_BYTES = 100 * 1024 * 1024
else:                                        # v7x (64 MiB per TC) or unknown
    MAX_TILE_ROWS = 1024
    VMEM_LIMIT_BYTES = 48 * 1024 * 1024


def _round_up(x, m):
    return ((x + m - 1) // m) * m


def _pick_tile(rows):
    if rows < 256:
        return rows                # single full-dim block (always legal)
    # at least 2 tiles (both v7x TCs busy), capped by generation-aware max
    return min(MAX_TILE_ROWS, _round_up(pl.cdiv(rows, 2), 128))


def _pad_cols(x, width):
    c = x.shape[1]
    return x if c == width else jnp.pad(x, ((0, 0), (0, width - c)))


def _enc_in_width(d):
    return _round_up(max(d, 1), ENC_IN_ALIGN)


# ----------------------------------------------------------------------------
# in-kernel math helpers (f32 everywhere except MXU inputs)
# ----------------------------------------------------------------------------
def _layernorm(h, gamma, beta):
    mean = jnp.mean(h, axis=-1, keepdims=True)
    var = jnp.mean(jnp.square(h - mean), axis=-1, keepdims=True)
    return (h - mean) * jax.lax.rsqrt(var + LN_EPS) * gamma + beta


def _dot(a, w):
    # bf16 MXU inputs, f32 accumulation.
    return jnp.dot(a.astype(MXU_DTYPE), w, preferred_element_type=jnp.float32)


# ----------------------------------------------------------------------------
# Kernel 1: 3-layer MLP (Linear+ReLU, Linear+ReLU, Linear, [LayerNorm])
# Used for node/edge encoders (LN, bf16 out) and node decoder (no LN, f32 out).
# ----------------------------------------------------------------------------
def _mlp3_kernel(use_ln, x_ref, w1_ref, b1_ref, w2_ref, b2_ref, w3_ref, b3_ref,
                 *rest):
    if use_ln:
        g_ref, bt_ref, o_ref = rest
    else:
        (o_ref,) = rest
    h = jnp.maximum(_dot(x_ref[...], w1_ref[...]) + b1_ref[...], 0.0)
    h = jnp.maximum(_dot(h, w2_ref[...]) + b2_ref[...], 0.0)
    h = _dot(h, w3_ref[...]) + b3_ref[...]
    if use_ln:
        h = _layernorm(h, g_ref[...], bt_ref[...])
    o_ref[...] = h.astype(o_ref.dtype)


# ----------------------------------------------------------------------------
# Kernel 2: Edge block
#   (nf[src], nf[dst], ef) -> W1_src + W1_dst + W1_e partial matmuls -> ReLU
#   -> Linear+ReLU -> Linear -> LN -> + ef
# ----------------------------------------------------------------------------
def _edge_block_kernel(src_ref, dst_ref, ef_ref,
                       w1s_ref, w1d_ref, w1e_ref, b1_ref,
                       w2_ref, b2_ref, w3_ref, b3_ref,
                       g_ref, bt_ref, o_ref):
    ef = ef_ref[...]
    h = (_dot(src_ref[...], w1s_ref[...])
         + _dot(dst_ref[...], w1d_ref[...])
         + _dot(ef, w1e_ref[...]) + b1_ref[...])
    h = jnp.maximum(h, 0.0)
    h = jnp.maximum(_dot(h, w2_ref[...]) + b2_ref[...], 0.0)
    h = _dot(h, w3_ref[...]) + b3_ref[...]
    h = _layernorm(h, g_ref[...], bt_ref[...]) + ef.astype(jnp.float32)
    o_ref[...] = h.astype(o_ref.dtype)


# ----------------------------------------------------------------------------
# Kernel 3: Node block
#   (agg, nf) -> W1_agg + W1_nf partial matmuls -> ReLU -> Linear+ReLU
#   -> Linear -> LN -> + nf          (agg = sorted segment-sum of ef @ dst)
# ----------------------------------------------------------------------------
def _node_block_kernel(agg_ref, nf_ref,
                       w1a_ref, w1n_ref, b1_ref,
                       w2_ref, b2_ref, w3_ref, b3_ref,
                       g_ref, bt_ref, o_ref):
    nf = nf_ref[...]
    h = _dot(agg_ref[...], w1a_ref[...]) + _dot(nf, w1n_ref[...]) + b1_ref[...]
    h = jnp.maximum(h, 0.0)
    h = jnp.maximum(_dot(h, w2_ref[...]) + b2_ref[...], 0.0)
    h = _dot(h, w3_ref[...]) + b3_ref[...]
    h = _layernorm(h, g_ref[...], bt_ref[...]) + nf.astype(jnp.float32)
    o_ref[...] = h.astype(o_ref.dtype)


# ----------------------------------------------------------------------------
# Row-tiled pallas_call driver: tiles the row axis, keeps params VMEM-resident.
# No wrapper-side padding: ragged last tiles use Pallas boundary masking.
# ----------------------------------------------------------------------------
def _row_tiled_call(kernel, row_inputs, resident_params, out_width, out_dtype,
                    flops_per_row=0):
    rows = row_inputs[0].shape[0]
    tile = _pick_tile(rows)
    grid = (pl.cdiv(rows, tile),)

    row_specs = [pl.BlockSpec((tile, x.shape[1]), lambda i: (i, 0))
                 for x in row_inputs]
    # weights / biases / LN params: same block every grid step -> resident
    par_specs = [pl.BlockSpec(p.shape, lambda i: (0, 0))
                 for p in resident_params]

    bytes_accessed = (sum(int(x.size) * x.dtype.itemsize for x in row_inputs)
                      + sum(int(p.size) * p.dtype.itemsize
                            for p in resident_params)
                      + rows * out_width * jnp.dtype(out_dtype).itemsize)
    cost = pl.CostEstimate(flops=int(flops_per_row) * int(rows),
                           transcendentals=int(rows),
                           bytes_accessed=int(bytes_accessed))

    return pl.pallas_call(
        kernel,
        out_shape=jax.ShapeDtypeStruct((rows, out_width), out_dtype),
        grid=grid,
        in_specs=row_specs + par_specs,
        out_specs=pl.BlockSpec((tile, out_width), lambda i: (i, 0)),
        compiler_params=pltpu.CompilerParams(
            dimension_semantics=("parallel",),
            vmem_limit_bytes=VMEM_LIMIT_BYTES),
        cost_estimate=cost,
    )(*row_inputs, *resident_params)


def mlp3(x, p, use_ln, out_dtype):
    params = [p["w1"], p["b1"], p["w2"], p["b2"], p["w3"], p["b3"]]
    if use_ln:
        params += [p["g"], p["bt"]]
    in_d, hid = p["w1"].shape
    out_d = p["w3"].shape[1]
    flops = 2 * (in_d * hid + hid * hid + hid * out_d)
    return _row_tiled_call(functools.partial(_mlp3_kernel, use_ln),
                           [x], params, out_d, out_dtype, flops_per_row=flops)


def edge_block(nf_src, nf_dst, ef, p):
    params = [p["w1s"], p["w1d"], p["w1e"], p["b1"],
              p["w2"], p["b2"], p["w3"], p["b3"], p["g"], p["bt"]]
    h = ef.shape[1]
    flops = 2 * 5 * h * h
    return _row_tiled_call(_edge_block_kernel, [nf_src, nf_dst, ef],
                           params, h, ACT_DTYPE, flops_per_row=flops)


def node_block(agg, nf, p):
    params = [p["w1a"], p["w1n"], p["b1"],
              p["w2"], p["b2"], p["w3"], p["b3"], p["g"], p["bt"]]
    h = nf.shape[1]
    flops = 2 * 4 * h * h
    return _row_tiled_call(_node_block_kernel, [agg, nf],
                           params, h, ACT_DTYPE, flops_per_row=flops)


# ----------------------------------------------------------------------------
# Parameter init (mirrors torch.nn.Linear / LayerNorm defaults).
# Weights stored bf16; biases / LN params f32.
# ----------------------------------------------------------------------------
def _linear(key, fan_in, fan_out, pad_in=None, pad_out=None):
    kw, kb = jax.random.split(key)
    bound = 1.0 / np.sqrt(fan_in)
    w = jax.random.uniform(kw, (fan_in, fan_out), jnp.float32, -bound, bound)
    b = jax.random.uniform(kb, (1, fan_out), jnp.float32, -bound, bound)
    if pad_in is not None and pad_in > fan_in:
        w = jnp.pad(w, ((0, pad_in - fan_in), (0, 0)))
    if pad_out is not None and pad_out > fan_out:
        w = jnp.pad(w, ((0, 0), (0, pad_out - fan_out)))
        b = jnp.pad(b, ((0, 0), (0, pad_out - fan_out)))
    return w.astype(MXU_DTYPE), b


def _ln_params(dim):
    return jnp.ones((1, dim), jnp.float32), jnp.zeros((1, dim), jnp.float32)


def init_encoder(key, in_dim, hidden):
    assert hidden % LANE == 0, "hidden must be lane-aligned (LayerNorm width)"
    k1, k2, k3 = jax.random.split(key, 3)
    w1, b1 = _linear(k1, in_dim, hidden, pad_in=_enc_in_width(in_dim))
    w2, b2 = _linear(k2, hidden, hidden)
    w3, b3 = _linear(k3, hidden, hidden)
    g, bt = _ln_params(hidden)
    return dict(w1=w1, b1=b1, w2=w2, b2=b2, w3=w3, b3=b3, g=g, bt=bt)


def init_decoder(key, hidden, out_dim):
    assert hidden % LANE == 0
    k1, k2, k3 = jax.random.split(key, 3)
    w1, b1 = _linear(k1, hidden, hidden)
    w2, b2 = _linear(k2, hidden, hidden)
    w3, b3 = _linear(k3, hidden, out_dim, pad_out=_round_up(out_dim, LANE))
    return dict(w1=w1, b1=b1, w2=w2, b2=b2, w3=w3, b3=b3)


def init_edge_block(key, hidden):
    assert hidden % LANE == 0
    k1, k2, k3 = jax.random.split(key, 3)
    w1, b1 = _linear(k1, 3 * hidden, hidden)    # fan_in = 3H (torch semantics)
    w2, b2 = _linear(k2, hidden, hidden)
    w3, b3 = _linear(k3, hidden, hidden)
    g, bt = _ln_params(hidden)
    return dict(w1s=w1[:hidden], w1d=w1[hidden:2 * hidden], w1e=w1[2 * hidden:],
                b1=b1, w2=w2, b2=b2, w3=w3, b3=b3, g=g, bt=bt)


def init_node_block(key, hidden):
    assert hidden % LANE == 0
    k1, k2, k3 = jax.random.split(key, 3)
    w1, b1 = _linear(k1, 2 * hidden, hidden)    # fan_in = 2H
    w2, b2 = _linear(k2, hidden, hidden)
    w3, b3 = _linear(k3, hidden, hidden)
    g, bt = _ln_params(hidden)
    return dict(w1a=w1[:hidden], w1n=w1[hidden:],
                b1=b1, w2=w2, b2=b2, w3=w3, b3=b3, g=g, bt=bt)


# ----------------------------------------------------------------------------
# Graph prep: pre-sort edges by destination once (static graph) so the
# aggregation in the processor loop is a fast *sorted* segment-sum.
# Edge permutation does not change node-level outputs.
# ----------------------------------------------------------------------------
def prepare_graph(src, dst, edge_feat):
    order = jnp.argsort(dst)
    return src[order], dst[order], edge_feat[order]


# ----------------------------------------------------------------------------
# Full MeshGraphNet forward (Pallas) and mirrored pure-JAX reference
# ----------------------------------------------------------------------------
@functools.partial(jax.jit, static_argnames=("num_nodes", "out_dim"))
def meshgraphnet_forward(params, node_feat, edge_feat, src, dst, *,
                         num_nodes, out_dim):
    # NOTE: edges must be pre-sorted by dst (see prepare_graph).
    ef = mlp3(_pad_cols(edge_feat, _enc_in_width(edge_feat.shape[1])),
              params["edge_enc"], use_ln=True, out_dtype=ACT_DTYPE)
    nf = mlp3(_pad_cols(node_feat, _enc_in_width(node_feat.shape[1])),
              params["node_enc"], use_ln=True, out_dtype=ACT_DTYPE)
    for eb_p, nb_p in zip(params["edge_blocks"], params["node_blocks"]):
        # gather src/dst node rows (XLA dynamic gather on bf16 activations)
        ef = edge_block(nf[src], nf[dst], ef, eb_p)
        # sorted segment-sum of updated edge features onto destination nodes
        agg = jax.ops.segment_sum(ef.astype(jnp.float32), dst,
                                  num_segments=num_nodes,
                                  indices_are_sorted=True)
        nf = node_block(agg, nf, nb_p)
    out = mlp3(nf, params["decoder"], use_ln=False, out_dtype=jnp.float32)
    return out[:, :out_dim]


def _ref_mlp3(x, p, use_ln, out_dtype):
    h = jnp.maximum(_dot(x, p["w1"]) + p["b1"], 0.0)
    h = jnp.maximum(_dot(h, p["w2"]) + p["b2"], 0.0)
    h = _dot(h, p["w3"]) + p["b3"]
    if use_ln:
        h = _layernorm(h, p["g"], p["bt"])
    return h.astype(out_dtype)


def meshgraphnet_reference(params, node_feat, edge_feat, src, dst,
                           num_nodes, out_dim):
    ef = _ref_mlp3(_pad_cols(edge_feat, _enc_in_width(edge_feat.shape[1])),
                   params["edge_enc"], True, ACT_DTYPE)
    nf = _ref_mlp3(_pad_cols(node_feat, _enc_in_width(node_feat.shape[1])),
                   params["node_enc"], True, ACT_DTYPE)
    for eb, nb in zip(params["edge_blocks"], params["node_blocks"]):
        h = (_dot(nf[src], eb["w1s"]) + _dot(nf[dst], eb["w1d"])
             + _dot(ef, eb["w1e"]) + eb["b1"])
        h = jnp.maximum(h, 0.0)
        h = jnp.maximum(_dot(h, eb["w2"]) + eb["b2"], 0.0)
        h = _dot(h, eb["w3"]) + eb["b3"]
        ef = (_layernorm(h, eb["g"], eb["bt"])
              + ef.astype(jnp.float32)).astype(ACT_DTYPE)

        agg = jax.ops.segment_sum(ef.astype(jnp.float32), dst,
                                  num_segments=num_nodes,
                                  indices_are_sorted=True)
        h = _dot(agg, nb["w1a"]) + _dot(nf, nb["w1n"]) + nb["b1"]
        h = jnp.maximum(h, 0.0)
        h = jnp.maximum(_dot(h, nb["w2"]) + nb["b2"], 0.0)
        h = _dot(h, nb["w3"]) + nb["b3"]
        nf = (_layernorm(h, nb["g"], nb["bt"])
              + nf.astype(jnp.float32)).astype(ACT_DTYPE)
    out = _ref_mlp3(nf, params["decoder"], False, jnp.float32)
    return out[:, :out_dim]


if __name__ == "__main__":
    # Small config consistent with the module (hidden=128 is the module default)
    INPUT_DIM_NODES = 4
    INPUT_DIM_EDGES = 3
    OUTPUT_DIM = 2
    HIDDEN = 128
    PROCESSOR_SIZE = 2
    N_NODES = 256
    N_EDGES = 1024

    root = jax.random.PRNGKey(0)
    keys = jax.random.split(root, 8 + 2 * PROCESSOR_SIZE)

    node_feat = jax.random.normal(keys[0], (N_NODES, INPUT_DIM_NODES), jnp.float32)
    edge_feat = jax.random.normal(keys[1], (N_EDGES, INPUT_DIM_EDGES), jnp.float32)
    src = jax.random.randint(keys[2], (N_EDGES,), 0, N_NODES)
    dst = jax.random.randint(keys[3], (N_EDGES,), 0, N_NODES)

    # static graph: sort edges by destination once (node outputs are invariant
    # to edge order), enabling the sorted segment-sum in the processor loop.
    src, dst, edge_feat = prepare_graph(src, dst, edge_feat)
    src, dst, edge_feat = jax.block_until_ready((src, dst, edge_feat))

    params = {
        "edge_enc": init_encoder(keys[4], INPUT_DIM_EDGES, HIDDEN),
        "node_enc": init_encoder(keys[5], INPUT_DIM_NODES, HIDDEN),
        "decoder": init_decoder(keys[6], HIDDEN, OUTPUT_DIM),
        "edge_blocks": [init_edge_block(keys[8 + i], HIDDEN)
                        for i in range(PROCESSOR_SIZE)],
        "node_blocks": [init_node_block(keys[8 + PROCESSOR_SIZE + i], HIDDEN)
                        for i in range(PROCESSOR_SIZE)],
    }

    out = meshgraphnet_forward(params, node_feat, edge_feat, src, dst,
                               num_nodes=N_NODES, out_dim=OUTPUT_DIM)
    out = jax.block_until_ready(out)

    ref = meshgraphnet_reference(params, node_feat, edge_feat, src, dst,
                                 N_NODES, OUTPUT_DIM)
    ref = jax.block_until_ready(ref)

    assert out.shape == (N_NODES, OUTPUT_DIM)
    np.testing.assert_allclose(np.asarray(out), np.asarray(ref),
                               rtol=1e-2, atol=1e-2)
    print("KERNEL_OK")
</pallas_src>

<mosaic_0001>
module attributes {stable_mosaic.version = 11 : i64} {
  func.func @_mlp3_kernel(%arg0: i32, %arg1: memref<128x16xf32, #tpu.memory_space<vmem>>, %arg2: memref<16x128xbf16, #tpu.memory_space<vmem>>, %arg3: memref<1x128xf32, #tpu.memory_space<vmem>>, %arg4: memref<128x128xbf16, #tpu.memory_space<vmem>>, %arg5: memref<1x128xf32, #tpu.memory_space<vmem>>, %arg6: memref<128x128xbf16, #tpu.memory_space<vmem>>, %arg7: memref<1x128xf32, #tpu.memory_space<vmem>>, %arg8: memref<1x128xf32, #tpu.memory_space<vmem>>, %arg9: memref<1x128xf32, #tpu.memory_space<vmem>>, %arg10: memref<128x128xbf16, #tpu.memory_space<vmem>>) attributes {dimension_semantics = [#tpu.dimension_semantics<parallel>], iteration_bounds = array<i64: 2>, scalar_prefetch = 0 : i64, scratch_operands = 0 : i64, tpu.core_type = #tpu.core_type<tc>, window_params = [{transform_indices = @transform_0, window_bounds = array<i64: 128, 16>}, {pipeline_mode = #tpu.pipeline_mode<synchronous>, transform_indices = @transform_1, window_bounds = array<i64: 16, 128>}, {pipeline_mode = #tpu.pipeline_mode<synchronous>, transform_indices = @transform_2, window_bounds = array<i64: 1, 128>}, {pipeline_mode = #tpu.pipeline_mode<synchronous>, transform_indices = @transform_3, window_bounds = array<i64: 128, 128>}, {pipeline_mode = #tpu.pipeline_mode<synchronous>, transform_indices = @transform_4, window_bounds = array<i64: 1, 128>}, {pipeline_mode = #tpu.pipeline_mode<synchronous>, transform_indices = @transform_5, window_bounds = array<i64: 128, 128>}, {pipeline_mode = #tpu.pipeline_mode<synchronous>, transform_indices = @transform_6, window_bounds = array<i64: 1, 128>}, {pipeline_mode = #tpu.pipeline_mode<synchronous>, transform_indices = @transform_7, window_bounds = array<i64: 1, 128>}, {pipeline_mode = #tpu.pipeline_mode<synchronous>, transform_indices = @transform_8, window_bounds = array<i64: 1, 128>}, {transform_indices = @transform_9, window_bounds = array<i64: 128, 128>}]} {
    %c0 = arith.constant 0 : index
    %c0_0 = arith.constant 0 : index
    %0 = vector.load %arg1[%c0, %c0_0] : memref<128x16xf32, #tpu.memory_space<vmem>>, vector<128x16xf32>
    %c0_1 = arith.constant 0 : index
    %c0_2 = arith.constant 0 : index
    %1 = vector.load %arg2[%c0_1, %c0_2] : memref<16x128xbf16, #tpu.memory_space<vmem>>, vector<16x128xbf16>
    %2 = arith.truncf %0 : vector<128x16xf32> to vector<128x16xbf16>
    %cst = arith.constant dense<0.000000e+00> : vector<128x128xf32>
    %3 = tpu.matmul %2, %1, %cst {dimension_numbers = #tpu.dot_dimension_numbers<[1], [0], [0], [1], [0, 0, 1, 1], [], []>} : vector<128x16xbf16>, vector<16x128xbf16>, vector<128x128xf32> -> vector<128x128xf32>
    %c0_3 = arith.constant 0 : index
    %c0_4 = arith.constant 0 : index
    %4 = vector.load %arg3[%c0_3, %c0_4] : memref<1x128xf32, #tpu.memory_space<vmem>>, vector<1x128xf32>
    %5 = vector.broadcast %4 : vector<1x128xf32> to vector<128x128xf32>
    %6 = arith.addf %3, %5 : vector<128x128xf32>
    %cst_5 = arith.constant 0.000000e+00 : f32
    %7 = vector.broadcast %cst_5 : f32 to vector<128x128xf32>
    %8 = arith.maximumf %6, %7 : vector<128x128xf32>
    %c0_6 = arith.constant 0 : index
    %c0_7 = arith.constant 0 : index
    %9 = vector.load %arg4[%c0_6, %c0_7] : memref<128x128xbf16, #tpu.memory_space<vmem>>, vector<128x128xbf16>
    %10 = arith.truncf %8 : vector<128x128xf32> to vector<128x128xbf16>
    %cst_8 = arith.constant dense<0.000000e+00> : vector<128x128xf32>
    %11 = tpu.matmul %10, %9, %cst_8 {dimension_numbers = #tpu.dot_dimension_numbers<[1], [0], [0], [1], [0, 0, 1, 1], [], []>} : vector<128x128xbf16>, vector<128x128xbf16>, vector<128x128xf32> -> vector<128x128xf32>
    %c0_9 = arith.constant 0 : index
    %c0_10 = arith.constant 0 : index
    %12 = vector.load %arg5[%c0_9, %c0_10] : memref<1x128xf32, #tpu.memory_space<vmem>>, vector<1x128xf32>
    %13 = vector.broadcast %12 : vector<1x128xf32> to vector<128x128xf32>
    %14 = arith.addf %11, %13 : vector<128x128xf32>
    %cst_11 = arith.constant 0.000000e+00 : f32
    %15 = vector.broadcast %cst_11 : f32 to vector<128x128xf32>
    %16 = arith.maximumf %14, %15 : vector<128x128xf32>
    %c0_12 = arith.constant 0 : index
    %c0_13 = arith.constant 0 : index
    %17 = vector.load %arg6[%c0_12, %c0_13] : memref<128x128xbf16, #tpu.memory_space<vmem>>, vector<128x128xbf16>
    %18 = arith.truncf %16 : vector<128x128xf32> to vector<128x128xbf16>
    %cst_14 = arith.constant dense<0.000000e+00> : vector<128x128xf32>
    %19 = tpu.matmul %18, %17, %cst_14 {dimension_numbers = #tpu.dot_dimension_numbers<[1], [0], [0], [1], [0, 0, 1, 1], [], []>} : vector<128x128xbf16>, vector<128x128xbf16>, vector<128x128xf32> -> vector<128x128xf32>
    %c0_15 = arith.constant 0 : index
    %c0_16 = arith.constant 0 : index
    %20 = vector.load %arg7[%c0_15, %c0_16] : memref<1x128xf32, #tpu.memory_space<vmem>>, vector<1x128xf32>
    %21 = vector.broadcast %20 : vector<1x128xf32> to vector<128x128xf32>
    %22 = arith.addf %19, %21 : vector<128x128xf32>
    %c0_17 = arith.constant 0 : index
    %c0_18 = arith.constant 0 : index
    %23 = vector.load %arg8[%c0_17, %c0_18] : memref<1x128xf32, #tpu.memory_space<vmem>>, vector<1x128xf32>
    %c0_19 = arith.constant 0 : index
    %c0_20 = arith.constant 0 : index
    %24 = vector.load %arg9[%c0_19, %c0_20] : memref<1x128xf32, #tpu.memory_space<vmem>>, vector<1x128xf32>
    %cst_21 = arith.constant dense<0.000000e+00> : vector<128xf32>
    %25 = vector.multi_reduction <add>, %22, %cst_21 [1] : vector<128x128xf32> to vector<128xf32>
    %26 = vector.shape_cast %25 : vector<128xf32> to vector<128x1xf32>
    %cst_22 = arith.constant 1.280000e+02 : f32
    %27 = vector.broadcast %cst_22 : f32 to vector<128x1xf32>
    %28 = arith.divf %26, %27 : vector<128x1xf32>
    %29 = vector.broadcast %28 : vector<128x1xf32> to vector<128x128xf32>
    %30 = arith.subf %22, %29 : vector<128x128xf32>
    %31 = arith.mulf %30, %30 : vector<128x128xf32>
    %cst_23 = arith.constant dense<0.000000e+00> : vector<128xf32>
    %32 = vector.multi_reduction <add>, %31, %cst_23 [1] : vector<128x128xf32> to vector<128xf32>
    %33 = vector.shape_cast %32 : vector<128xf32> to vector<128x1xf32>
    %cst_24 = arith.constant 1.280000e+02 : f32
    %34 = vector.broadcast %cst_24 : f32 to vector<128x1xf32>
    %35 = arith.divf %33, %34 : vector<128x1xf32>
    %36 = vector.broadcast %28 : vector<128x1xf32> to vector<128x128xf32>
    %37 = arith.subf %22, %36 : vector<128x128xf32>
    %cst_25 = arith.constant 9.99999974E-6 : f32
    %38 = vector.broadcast %cst_25 : f32 to vector<128x1xf32>
    %39 = arith.addf %35, %38 : vector<128x1xf32>
    %40 = math.rsqrt %39 : vector<128x1xf32>
    %41 = vector.broadcast %40 : vector<128x1xf32> to vector<128x128xf32>
    %42 = arith.mulf %37, %41 : vector<128x128xf32>
    %43 = vector.broadcast %23 : vector<1x128xf32> to vector<128x128xf32>
    %44 = arith.mulf %42, %43 : vector<128x128xf32>
    %45 = vector.broadcast %24 : vector<1x128xf32> to vector<128x128xf32>
    %46 = arith.addf %44, %45 : vector<128x128xf32>
    %47 = arith.truncf %46 : vector<128x128xf32> to vector<128x128xbf16>
    %c0_26 = arith.constant 0 : index
    %c0_27 = arith.constant 0 : index
    %48 = vector.load %arg10[%c0_26, %c0_27] : memref<128x128xbf16, #tpu.memory_space<vmem>>, vector<128x128xbf16>
    tpu.vector_store %arg10[%c0_26, %c0_27], %47 {strides = array<i32>} : memref<128x128xbf16, #tpu.memory_space<vmem>>, vector<128x128xbf16>,
    return
  }
  func.func @transform_0(%arg0: i32) -> (i32, i32) {
    %c0_i32 = arith.constant 0 : i32
    %c0_i32_0 = arith.constant 0 : i32
    return %arg0, %c0_i32 : i32, i32
  }
  func.func @transform_1(%arg0: i32) -> (i32, i32) {
    %c0_i32 = arith.constant 0 : i32
    %c0_i32_0 = arith.constant 0 : i32
    %c0_i32_1 = arith.constant 0 : i32
    return %c0_i32, %c0_i32_0 : i32, i32
  }
  func.func @transform_2(%arg0: i32) -> (i32, i32) {
    %c0_i32 = arith.constant 0 : i32
    %c0_i32_0 = arith.constant 0 : i32
    %c0_i32_1 = arith.constant 0 : i32
    return %c0_i32, %c0_i32_0 : i32, i32
  }
  func.func @transform_3(%arg0: i32) -> (i32, i32) {
    %c0_i32 = arith.constant 0 : i32
    %c0_i32_0 = arith.constant 0 : i32
    %c0_i32_1 = arith.constant 0 : i32
    return %c0_i32, %c0_i32_0 : i32, i32
  }
  func.func @transform_4(%arg0: i32) -> (i32, i32) {
    %c0_i32 = arith.constant 0 : i32
    %c0_i32_0 = arith.constant 0 : i32
    %c0_i32_1 = arith.constant 0 : i32
    return %c0_i32, %c0_i32_0 : i32, i32
  }
  func.func @transform_5(%arg0: i32) -> (i32, i32) {
    %c0_i32 = arith.constant 0 : i32
    %c0_i32_0 = arith.constant 0 : i32
    %c0_i32_1 = arith.constant 0 : i32
    return %c0_i32, %c0_i32_0 : i32, i32
  }
  func.func @transform_6(%arg0: i32) -> (i32, i32) {
    %c0_i32 = arith.constant 0 : i32
    %c0_i32_0 = arith.constant 0 : i32
    %c0_i32_1 = arith.constant 0 : i32
    return %c0_i32, %c0_i32_0 : i32, i32
  }
  func.func @transform_7(%arg0: i32) -> (i32, i32) {
    %c0_i32 = arith.constant 0 : i32
    %c0_i32_0 = arith.constant 0 : i32
    %c0_i32_1 = arith.constant 0 : i32
    return %c0_i32, %c0_i32_0 : i32, i32
  }
  func.func @transform_8(%arg0: i32) -> (i32, i32) {
    %c0_i32 = arith.constant 0 : i32
    %c0_i32_0 = arith.constant 0 : i32
    %c0_i32_1 = arith.constant 0 : i32
    return %c0_i32, %c0_i32_0 : i32, i32
  }
  func.func @transform_9(%arg0: i32) -> (i32, i32) {
    %c0_i32 = arith.constant 0 : i32
    %c0_i32_0 = arith.constant 0 : i32
    return %arg0, %c0_i32 : i32, i32
  }
}

module attributes {stable_mosaic.version = 11 : i64} {
  func.func @_mlp3_kernel(%arg0: i32, %arg1: memref<512x16xf32, #tpu.memory_space<vmem>>, %arg2: memref<16x128xbf16, #tpu.memory_space<vmem>>, %arg3: memref<1x128xf32, #tpu.memory_space<vmem>>, %arg4: memref<128x128xbf16, #tpu.memory_space<vmem>>, %arg5: memref<1x128xf32, #tpu.memory_space<vmem>>, %arg6: memref<128x128xbf16, #tpu.memory_space<vmem>>, %arg7: memref<1x128xf32, #tpu.memory_space<vmem>>, %arg8: memref<1x128xf32, #tpu.memory_space<vmem>>, %arg9: memref<1x128xf32, #tpu.memory_space<vmem>>, %arg10: memref<512x128xbf16, #tpu.memory_space<vmem>>) attributes {dimension_semantics = [#tpu.dimension_semantics<parallel>], iteration_bounds = array<i64: 2>, scalar_prefetch = 0 : i64, scratch_operands = 0 : i64, tpu.core_type = #tpu.core_type<tc>, window_params = [{transform_indices = @transform_0, window_bounds = array<i64: 512, 16>}, {pipeline_mode = #tpu.pipeline_mode<synchronous>, transform_indices = @transform_1, window_bounds = array<i64: 16, 128>}, {pipeline_mode = #tpu.pipeline_mode<synchronous>, transform_indices = @transform_2, window_bounds = array<i64: 1, 128>}, {pipeline_mode = #tpu.pipeline_mode<synchronous>, transform_indices = @transform_3, window_bounds = array<i64: 128, 128>}, {pipeline_mode = #tpu.pipeline_mode<synchronous>, transform_indices = @transform_4, window_bounds = array<i64: 1, 128>}, {pipeline_mode = #tpu.pipeline_mode<synchronous>, transform_indices = @transform_5, window_bounds = array<i64: 128, 128>}, {pipeline_mode = #tpu.pipeline_mode<synchronous>, transform_indices = @transform_6, window_bounds = array<i64: 1, 128>}, {pipeline_mode = #tpu.pipeline_mode<synchronous>, transform_indices = @transform_7, window_bounds = array<i64: 1, 128>}, {pipeline_mode = #tpu.pipeline_mode<synchronous>, transform_indices = @transform_8, window_bounds = array<i64: 1, 128>}, {transform_indices = @transform_9, window_bounds = array<i64: 512, 128>}]} {
    %c0 = arith.constant 0 : index
    %c0_0 = arith.constant 0 : index
    %0 = vector.load %arg1[%c0, %c0_0] : memref<512x16xf32, #tpu.memory_space<vmem>>, vector<512x16xf32>
    %c0_1 = arith.constant 0 : index
    %c0_2 = arith.constant 0 : index
    %1 = vector.load %arg2[%c0_1, %c0_2] : memref<16x128xbf16, #tpu.memory_space<vmem>>, vector<16x128xbf16>
    %2 = arith.truncf %0 : vector<512x16xf32> to vector<512x16xbf16>
    %cst = arith.constant dense<0.000000e+00> : vector<512x128xf32>
    %3 = tpu.matmul %2, %1, %cst {dimension_numbers = #tpu.dot_dimension_numbers<[1], [0], [0], [1], [0, 0, 1, 1], [], []>} : vector<512x16xbf16>, vector<16x128xbf16>, vector<512x128xf32> -> vector<512x128xf32>
    %c0_3 = arith.constant 0 : index
    %c0_4 = arith.constant 0 : index
    %4 = vector.load %arg3[%c0_3, %c0_4] : memref<1x128xf32, #tpu.memory_space<vmem>>, vector<1x128xf32>
    %5 = vector.broadcast %4 : vector<1x128xf32> to vector<512x128xf32>
    %6 = arith.addf %3, %5 : vector<512x128xf32>
    %cst_5 = arith.constant 0.000000e+00 : f32
    %7 = vector.broadcast %cst_5 : f32 to vector<512x128xf32>
    %8 = arith.maximumf %6, %7 : vector<512x128xf32>
    %c0_6 = arith.constant 0 : index
    %c0_7 = arith.constant 0 : index
    %9 = vector.load %arg4[%c0_6, %c0_7] : memref<128x128xbf16, #tpu.memory_space<vmem>>, vector<128x128xbf16>
    %10 = arith.truncf %8 : vector<512x128xf32> to vector<512x128xbf16>
    %cst_8 = arith.constant dense<0.000000e+00> : vector<512x128xf32>
    %11 = tpu.matmul %10, %9, %cst_8 {dimension_numbers = #tpu.dot_dimension_numbers<[1], [0], [0], [1], [0, 0, 1, 1], [], []>} : vector<512x128xbf16>, vector<128x128xbf16>, vector<512x128xf32> -> vector<512x128xf32>
    %c0_9 = arith.constant 0 : index
    %c0_10 = arith.constant 0 : index
    %12 = vector.load %arg5[%c0_9, %c0_10] : memref<1x128xf32, #tpu.memory_space<vmem>>, vector<1x128xf32>
    %13 = vector.broadcast %12 : vector<1x128xf32> to vector<512x128xf32>
    %14 = arith.addf %11, %13 : vector<512x128xf32>
    %cst_11 = arith.constant 0.000000e+00 : f32
    %15 = vector.broadcast %cst_11 : f32 to vector<512x128xf32>
    %16 = arith.maximumf %14, %15 : vector<512x128xf32>
    %c0_12 = arith.constant 0 : index
    %c0_13 = arith.constant 0 : index
    %17 = vector.load %arg6[%c0_12, %c0_13] : memref<128x128xbf16, #tpu.memory_space<vmem>>, vector<128x128xbf16>
    %18 = arith.truncf %16 : vector<512x128xf32> to vector<512x128xbf16>
    %cst_14 = arith.constant dense<0.000000e+00> : vector<512x128xf32>
    %19 = tpu.matmul %18, %17, %cst_14 {dimension_numbers = #tpu.dot_dimension_numbers<[1], [0], [0], [1], [0, 0, 1, 1], [], []>} : vector<512x128xbf16>, vector<128x128xbf16>, vector<512x128xf32> -> vector<512x128xf32>
    %c0_15 = arith.constant 0 : index
    %c0_16 = arith.constant 0 : index
    %20 = vector.load %arg7[%c0_15, %c0_16] : memref<1x128xf32, #tpu.memory_space<vmem>>, vector<1x128xf32>
    %21 = vector.broadcast %20 : vector<1x128xf32> to vector<512x128xf32>
    %22 = arith.addf %19, %21 : vector<512x128xf32>
    %c0_17 = arith.constant 0 : index
    %c0_18 = arith.constant 0 : index
    %23 = vector.load %arg8[%c0_17, %c0_18] : memref<1x128xf32, #tpu.memory_space<vmem>>, vector<1x128xf32>
    %c0_19 = arith.constant 0 : index
    %c0_20 = arith.constant 0 : index
    %24 = vector.load %arg9[%c0_19, %c0_20] : memref<1x128xf32, #tpu.memory_space<vmem>>, vector<1x128xf32>
    %cst_21 = arith.constant dense<0.000000e+00> : vector<512xf32>
    %25 = vector.multi_reduction <add>, %22, %cst_21 [1] : vector<512x128xf32> to vector<512xf32>
    %26 = vector.shape_cast %25 : vector<512xf32> to vector<512x1xf32>
    %cst_22 = arith.constant 1.280000e+02 : f32
    %27 = vector.broadcast %cst_22 : f32 to vector<512x1xf32>
    %28 = arith.divf %26, %27 : vector<512x1xf32>
    %29 = vector.broadcast %28 : vector<512x1xf32> to vector<512x128xf32>
    %30 = arith.subf %22, %29 : vector<512x128xf32>
    %31 = arith.mulf %30, %30 : vector<512x128xf32>
    %cst_23 = arith.constant dense<0.000000e+00> : vector<512xf32>
    %32 = vector.multi_reduction <add>, %31, %cst_23 [1] : vector<512x128xf32> to vector<512xf32>
    %33 = vector.shape_cast %32 : vector<512xf32> to vector<512x1xf32>
    %cst_24 = arith.constant 1.280000e+02 : f32
    %34 = vector.broadcast %cst_24 : f32 to vector<512x1xf32>
    %35 = arith.divf %33, %34 : vector<512x1xf32>
    %36 = vector.broadcast %28 : vector<512x1xf32> to vector<512x128xf32>
    %37 = arith.subf %22, %36 : vector<512x128xf32>
    %cst_25 = arith.constant 9.99999974E-6 : f32
    %38 = vector.broadcast %cst_25 : f32 to vector<512x1xf32>
    %39 = arith.addf %35, %38 : vector<512x1xf32>
    %40 = math.rsqrt %39 : vector<512x1xf32>
    %41 = vector.broadcast %40 : vector<512x1xf32> to vector<512x128xf32>
    %42 = arith.mulf %37, %41 : vector<512x128xf32>
    %43 = vector.broadcast %23 : vector<1x128xf32> to vector<512x128xf32>
    %44 = arith.mulf %42, %43 : vector<512x128xf32>
    %45 = vector.broadcast %24 : vector<1x128xf32> to vector<512x128xf32>
    %46 = arith.addf %44, %45 : vector<512x128xf32>
    %47 = arith.truncf %46 : vector<512x128xf32> to vector<512x128xbf16>
    %c0_26 = arith.constant 0 : index
    %c0_27 = arith.constant 0 : index
    %48 = vector.load %arg10[%c0_26, %c0_27] : memref<512x128xbf16, #tpu.memory_space<vmem>>, vector<512x128xbf16>
    tpu.vector_store %arg10[%c0_26, %c0_27], %47 {strides = array<i32>} : memref<512x128xbf16, #tpu.memory_space<vmem>>, vector<512x128xbf16>,
    return
  }
  func.func @transform_0(%arg0: i32) -> (i32, i32) {
    %c0_i32 = arith.constant 0 : i32
    %c0_i32_0 = arith.constant 0 : i32
    return %arg0, %c0_i32 : i32, i32
  }
  func.func @transform_1(%arg0: i32) -> (i32, i32) {
    %c0_i32 = arith.constant 0 : i32
    %c0_i32_0 = arith.constant 0 : i32
    %c0_i32_1 = arith.constant 0 : i32
    return %c0_i32, %c0_i32_0 : i32, i32
  }
  func.func @transform_2(%arg0: i32) -> (i32, i32) {
    %c0_i32 = arith.constant 0 : i32
    %c0_i32_0 = arith.constant 0 : i32
    %c0_i32_1 = arith.constant 0 : i32
    return %c0_i32, %c0_i32_0 : i32, i32
  }
  func.func @transform_3(%arg0: i32) -> (i32, i32) {
    %c0_i32 = arith.constant 0 : i32
    %c0_i32_0 = arith.constant 0 : i32
    %c0_i32_1 = arith.constant 0 : i32
    return %c0_i32, %c0_i32_0 : i32, i32
  }
  func.func @transform_4(%arg0: i32) -> (i32, i32) {
    %c0_i32 = arith.constant 0 : i32
    %c0_i32_0 = arith.constant 0 : i32
    %c0_i32_1 = arith.constant 0 : i32
    return %c0_i32, %c0_i32_0 : i32, i32
  }
  func.func @transform_5(%arg0: i32) -> (i32, i32) {
    %c0_i32 = arith.constant 0 : i32
    %c0_i32_0 = arith.constant 0 : i32
    %c0_i32_1 = arith.constant 0 : i32
    return %c0_i32, %c0_i32_0 : i32, i32
  }
  func.func @transform_6(%arg0: i32) -> (i32, i32) {
    %c0_i32 = arith.constant 0 : i32
    %c0_i32_0 = arith.constant 0 : i32
    %c0_i32_1 = arith.constant 0 : i32
    return %c0_i32, %c0_i32_0 : i32, i32
  }
  func.func @transform_7(%arg0: i32) -> (i32, i32) {
    %c0_i32 = arith.constant 0 : i32
    %c0_i32_0 = arith.constant 0 : i32
    %c0_i32_1 = arith.constant 0 : i32
    return %c0_i32, %c0_i32_0 : i32, i32
  }
  func.func @transform_8(%arg0: i32) -> (i32, i32) {
    %c0_i32 = arith.constant 0 : i32
    %c0_i32_0 = arith.constant 0 : i32
    %c0_i32_1 = arith.constant 0 : i32
    return %c0_i32, %c0_i32_0 : i32, i32
  }
  func.func @transform_9(%arg0: i32) -> (i32, i32) {
    %c0_i32 = arith.constant 0 : i32
    %c0_i32_0 = arith.constant 0 : i32
    return %arg0, %c0_i32 : i32, i32
  }
}

module attributes {stable_mosaic.version = 11 : i64} {
  func.func @_edge_block_kernel(%arg0: i32, %arg1: memref<512x128xbf16, #tpu.memory_space<vmem>>, %arg2: memref<512x128xbf16, #tpu.memory_space<vmem>>, %arg3: memref<512x128xbf16, #tpu.memory_space<vmem>>, %arg4: memref<128x128xbf16, #tpu.memory_space<vmem>>, %arg5: memref<128x128xbf16, #tpu.memory_space<vmem>>, %arg6: memref<128x128xbf16, #tpu.memory_space<vmem>>, %arg7: memref<1x128xf32, #tpu.memory_space<vmem>>, %arg8: memref<128x128xbf16, #tpu.memory_space<vmem>>, %arg9: memref<1x128xf32, #tpu.memory_space<vmem>>, %arg10: memref<128x128xbf16, #tpu.memory_space<vmem>>, %arg11: memref<1x128xf32, #tpu.memory_space<vmem>>, %arg12: memref<1x128xf32, #tpu.memory_space<vmem>>, %arg13: memref<1x128xf32, #tpu.memory_space<vmem>>, %arg14: memref<512x128xbf16, #tpu.memory_space<vmem>>) attributes {dimension_semantics = [#tpu.dimension_semantics<parallel>], iteration_bounds = array<i64: 2>, scalar_prefetch = 0 : i64, scratch_operands = 0 : i64, tpu.core_type = #tpu.core_type<tc>, window_params = [{transform_indices = @transform_0, window_bounds = array<i64: 512, 128>}, {transform_indices = @transform_1, window_bounds = array<i64: 512, 128>}, {transform_indices = @transform_2, window_bounds = array<i64: 512, 128>}, {pipeline_mode = #tpu.pipeline_mode<synchronous>, transform_indices = @transform_3, window_bounds = array<i64: 128, 128>}, {pipeline_mode = #tpu.pipeline_mode<synchronous>, transform_indices = @transform_4, window_bounds = array<i64: 128, 128>}, {pipeline_mode = #tpu.pipeline_mode<synchronous>, transform_indices = @transform_5, window_bounds = array<i64: 128, 128>}, {pipeline_mode = #tpu.pipeline_mode<synchronous>, transform_indices = @transform_6, window_bounds = array<i64: 1, 128>}, {pipeline_mode = #tpu.pipeline_mode<synchronous>, transform_indices = @transform_7, window_bounds = array<i64: 128, 128>}, {pipeline_mode = #tpu.pipeline_mode<synchronous>, transform_indices = @transform_8, window_bounds = array<i64: 1, 128>}, {pipeline_mode = #tpu.pipeline_mode<synchronous>, transform_indices = @transform_9, window_bounds = array<i64: 128, 128>}, {pipeline_mode = #tpu.pipeline_mode<synchronous>, transform_indices = @transform_10, window_bounds = array<i64: 1, 128>}, {pipeline_mode = #tpu.pipeline_mode<synchronous>, transform_indices = @transform_11, window_bounds = array<i64: 1, 128>}, {pipeline_mode = #tpu.pipeline_mode<synchronous>, transform_indices = @transform_12, window_bounds = array<i64: 1, 128>}, {transform_indices = @transform_13, window_bounds = array<i64: 512, 128>}]} {
    %c0 = arith.constant 0 : index
    %c0_0 = arith.constant 0 : index
    %0 = vector.load %arg3[%c0, %c0_0] : memref<512x128xbf16, #tpu.memory_space<vmem>>, vector<512x128xbf16>
    %c0_1 = arith.constant 0 : index
    %c0_2 = arith.constant 0 : index
    %1 = vector.load %arg1[%c0_1, %c0_2] : memref<512x128xbf16, #tpu.memory_space<vmem>>, vector<512x128xbf16>
    %c0_3 = arith.constant 0 : index
    %c0_4 = arith.constant 0 : index
    %2 = vector.load %arg4[%c0_3, %c0_4] : memref<128x128xbf16, #tpu.memory_space<vmem>>, vector<128x128xbf16>
    %cst = arith.constant dense<0.000000e+00> : vector<512x128xf32>
    %3 = tpu.matmul %1, %2, %cst {dimension_numbers = #tpu.dot_dimension_numbers<[1], [0], [0], [1], [0, 0, 1, 1], [], []>} : vector<512x128xbf16>, vector<128x128xbf16>, vector<512x128xf32> -> vector<512x128xf32>
    %c0_5 = arith.constant 0 : index
    %c0_6 = arith.constant 0 : index
    %4 = vector.load %arg2[%c0_5, %c0_6] : memref<512x128xbf16, #tpu.memory_space<vmem>>, vector<512x128xbf16>
    %c0_7 = arith.constant 0 : index
    %c0_8 = arith.constant 0 : index
    %5 = vector.load %arg5[%c0_7, %c0_8] : memref<128x128xbf16, #tpu.memory_space<vmem>>, vector<128x128xbf16>
    %cst_9 = arith.constant dense<0.000000e+00> : vector<512x128xf32>
    %6 = tpu.matmul %4, %5, %cst_9 {dimension_numbers = #tpu.dot_dimension_numbers<[1], [0], [0], [1], [0, 0, 1, 1], [], []>} : vector<512x128xbf16>, vector<128x128xbf16>, vector<512x128xf32> -> vector<512x128xf32>
    %7 = arith.addf %3, %6 : vector<512x128xf32>
    %c0_10 = arith.constant 0 : index
    %c0_11 = arith.constant 0 : index
    %8 = vector.load %arg6[%c0_10, %c0_11] : memref<128x128xbf16, #tpu.memory_space<vmem>>, vector<128x128xbf16>
    %cst_12 = arith.constant dense<0.000000e+00> : vector<512x128xf32>
    %9 = tpu.matmul %0, %8, %cst_12 {dimension_numbers = #tpu.dot_dimension_numbers<[1], [0], [0], [1], [0, 0, 1, 1], [], []>} : vector<512x128xbf16>, vector<128x128xbf16>, vector<512x128xf32> -> vector<512x128xf32>
    %10 = arith.addf %7, %9 : vector<512x128xf32>
    %c0_13 = arith.constant 0 : index
    %c0_14 = arith.constant 0 : index
    %11 = vector.load %arg7[%c0_13, %c0_14] : memref<1x128xf32, #tpu.memory_space<vmem>>, vector<1x128xf32>
    %12 = vector.broadcast %11 : vector<1x128xf32> to vector<512x128xf32>
    %13 = arith.addf %10, %12 : vector<512x128xf32>
    %cst_15 = arith.constant 0.000000e+00 : f32
    %14 = vector.broadcast %cst_15 : f32 to vector<512x128xf32>
    %15 = arith.maximumf %13, %14 : vector<512x128xf32>
    %c0_16 = arith.constant 0 : index
    %c0_17 = arith.constant 0 : index
    %16 = vector.load %arg8[%c0_16, %c0_17] : memref<128x128xbf16, #tpu.memory_space<vmem>>, vector<128x128xbf16>
    %17 = arith.truncf %15 : vector<512x128xf32> to vector<512x128xbf16>
    %cst_18 = arith.constant dense<0.000000e+00> : vector<512x128xf32>
    %18 = tpu.matmul %17, %16, %cst_18 {dimension_numbers = #tpu.dot_dimension_numbers<[1], [0], [0], [1], [0, 0, 1, 1], [], []>} : vector<512x128xbf16>, vector<128x128xbf16>, vector<512x128xf32> -> vector<512x128xf32>
    %c0_19 = arith.constant 0 : index
    %c0_20 = arith.constant 0 : index
    %19 = vector.load %arg9[%c0_19, %c0_20] : memref<1x128xf32, #tpu.memory_space<vmem>>, vector<1x128xf32>
    %20 = vector.broadcast %19 : vector<1x128xf32> to vector<512x128xf32>
    %21 = arith.addf %18, %20 : vector<512x128xf32>
    %cst_21 = arith.constant 0.000000e+00 : f32
    %22 = vector.broadcast %cst_21 : f32 to vector<512x128xf32>
    %23 = arith.maximumf %21, %22 : vector<512x128xf32>
    %c0_22 = arith.constant 0 : index
    %c0_23 = arith.constant 0 : index
    %24 = vector.load %arg10[%c0_22, %c0_23] : memref<128x128xbf16, #tpu.memory_space<vmem>>, vector<128x128xbf16>
    %25 = arith.truncf %23 : vector<512x128xf32> to vector<512x128xbf16>
    %cst_24 = arith.constant dense<0.000000e+00> : vector<512x128xf32>
    %26 = tpu.matmul %25, %24, %cst_24 {dimension_numbers = #tpu.dot_dimension_numbers<[1], [0], [0], [1], [0, 0, 1, 1], [], []>} : vector<512x128xbf16>, vector<128x128xbf16>, vector<512x128xf32> -> vector<512x128xf32>
    %c0_25 = arith.constant 0 : index
    %c0_26 = arith.constant 0 : index
    %27 = vector.load %arg11[%c0_25, %c0_26] : memref<1x128xf32, #tpu.memory_space<vmem>>, vector<1x128xf32>
    %28 = vector.broadcast %27 : vector<1x128xf32> to vector<512x128xf32>
    %29 = arith.addf %26, %28 : vector<512x128xf32>
    %c0_27 = arith.constant 0 : index
    %c0_28 = arith.constant 0 : index
    %30 = vector.load %arg12[%c0_27, %c0_28] : memref<1x128xf32, #tpu.memory_space<vmem>>, vector<1x128xf32>
    %c0_29 = arith.constant 0 : index
    %c0_30 = arith.constant 0 : index
    %31 = vector.load %arg13[%c0_29, %c0_30] : memref<1x128xf32, #tpu.memory_space<vmem>>, vector<1x128xf32>
    %cst_31 = arith.constant dense<0.000000e+00> : vector<512xf32>
    %32 = vector.multi_reduction <add>, %29, %cst_31 [1] : vector<512x128xf32> to vector<512xf32>
    %33 = vector.shape_cast %32 : vector<512xf32> to vector<512x1xf32>
    %cst_32 = arith.constant 1.280000e+02 : f32
    %34 = vector.broadcast %cst_32 : f32 to vector<512x1xf32>
    %35 = arith.divf %33, %34 : vector<512x1xf32>
    %36 = vector.broadcast %35 : vector<512x1xf32> to vector<512x128xf32>
    %37 = arith.subf %29, %36 : vector<512x128xf32>
    %38 = arith.mulf %37, %37 : vector<512x128xf32>
    %cst_33 = arith.constant dense<0.000000e+00> : vector<512xf32>
    %39 = vector.multi_reduction <add>, %38, %cst_33 [1] : vector<512x128xf32> to vector<512xf32>
    %40 = vector.shape_cast %39 : vector<512xf32> to vector<512x1xf32>
    %cst_34 = arith.constant 1.280000e+02 : f32
    %41 = vector.broadcast %cst_34 : f32 to vector<512x1xf32>
    %42 = arith.divf %40, %41 : vector<512x1xf32>
    %43 = vector.broadcast %35 : vector<512x1xf32> to vector<512x128xf32>
    %44 = arith.subf %29, %43 : vector<512x128xf32>
    %cst_35 = arith.constant 9.99999974E-6 : f32
    %45 = vector.broadcast %cst_35 : f32 to vector<512x1xf32>
    %46 = arith.addf %42, %45 : vector<512x1xf32>
    %47 = math.rsqrt %46 : vector<512x1xf32>
    %48 = vector.broadcast %47 : vector<512x1xf32> to vector<512x128xf32>
    %49 = arith.mulf %44, %48 : vector<512x128xf32>
    %50 = vector.broadcast %30 : vector<1x128xf32> to vector<512x128xf32>
    %51 = arith.mulf %49, %50 : vector<512x128xf32>
    %52 = vector.broadcast %31 : vector<1x128xf32> to vector<512x128xf32>
    %53 = arith.addf %51, %52 : vector<512x128xf32>
    %54 = arith.extf %0 : vector<512x128xbf16> to vector<512x128xf32>
    %55 = arith.addf %53, %54 : vector<512x128xf32>
    %56 = arith.truncf %55 : vector<512x128xf32> to vector<512x128xbf16>
    %c0_36 = arith.constant 0 : index
    %c0_37 = arith.constant 0 : index
    %57 = vector.load %arg14[%c0_36, %c0_37] : memref<512x128xbf16, #tpu.memory_space<vmem>>, vector<512x128xbf16>
    tpu.vector_store %arg14[%c0_36, %c0_37], %56 {strides = array<i32>} : memref<512x128xbf16, #tpu.memory_space<vmem>>, vector<512x128xbf16>,
    return
  }
  func.func @transform_0(%arg0: i32) -> (i32, i32) {
    %c0_i32 = arith.constant 0 : i32
    %c0_i32_0 = arith.constant 0 : i32
    return %arg0, %c0_i32 : i32, i32
  }
  func.func @transform_1(%arg0: i32) -> (i32, i32) {
    %c0_i32 = arith.constant 0 : i32
    %c0_i32_0 = arith.constant 0 : i32
    return %arg0, %c0_i32 : i32, i32
  }
  func.func @transform_2(%arg0: i32) -> (i32, i32) {
    %c0_i32 = arith.constant 0 : i32
    %c0_i32_0 = arith.constant 0 : i32
    return %arg0, %c0_i32 : i32, i32
  }
  func.func @transform_3(%arg0: i32) -> (i32, i32) {
    %c0_i32 = arith.constant 0 : i32
    %c0_i32_0 = arith.constant 0 : i32
    %c0_i32_1 = arith.constant 0 : i32
    return %c0_i32, %c0_i32_0 : i32, i32
  }
  func.func @transform_4(%arg0: i32) -> (i32, i32) {
    %c0_i32 = arith.constant 0 : i32
    %c0_i32_0 = arith.constant 0 : i32
    %c0_i32_1 = arith.constant 0 : i32
    return %c0_i32, %c0_i32_0 : i32, i32
  }
  func.func @transform_5(%arg0: i32) -> (i32, i32) {
    %c0_i32 = arith.constant 0 : i32
    %c0_i32_0 = arith.constant 0 : i32
    %c0_i32_1 = arith.constant 0 : i32
    return %c0_i32, %c0_i32_0 : i32, i32
  }
  func.func @transform_6(%arg0: i32) -> (i32, i32) {
    %c0_i32 = arith.constant 0 : i32
    %c0_i32_0 = arith.constant 0 : i32
    %c0_i32_1 = arith.constant 0 : i32
    return %c0_i32, %c0_i32_0 : i32, i32
  }
  func.func @transform_7(%arg0: i32) -> (i32, i32) {
    %c0_i32 = arith.constant 0 : i32
    %c0_i32_0 = arith.constant 0 : i32
    %c0_i32_1 = arith.constant 0 : i32
    return %c0_i32, %c0_i32_0 : i32, i32
  }
  func.func @transform_8(%arg0: i32) -> (i32, i32) {
    %c0_i32 = arith.constant 0 : i32
    %c0_i32_0 = arith.constant 0 : i32
    %c0_i32_1 = arith.constant 0 : i32
    return %c0_i32, %c0_i32_0 : i32, i32
  }
  func.func @transform_9(%arg0: i32) -> (i32, i32) {
    %c0_i32 = arith.constant 0 : i32
    %c0_i32_0 = arith.constant 0 : i32
    %c0_i32_1 = arith.constant 0 : i32
    return %c0_i32, %c0_i32_0 : i32, i32
  }
  func.func @transform_10(%arg0: i32) -> (i32, i32) {
    %c0_i32 = arith.constant 0 : i32
    %c0_i32_0 = arith.constant 0 : i32
    %c0_i32_1 = arith.constant 0 : i32
    return %c0_i32, %c0_i32_0 : i32, i32
  }
  func.func @transform_11(%arg0: i32) -> (i32, i32) {
    %c0_i32 = arith.constant 0 : i32
    %c0_i32_0 = arith.constant 0 : i32
    %c0_i32_1 = arith.constant 0 : i32
    return %c0_i32, %c0_i32_0 : i32, i32
  }
  func.func @transform_12(%arg0: i32) -> (i32, i32) {
    %c0_i32 = arith.constant 0 : i32
    %c0_i32_0 = arith.constant 0 : i32
    %c0_i32_1 = arith.constant 0 : i32
    return %c0_i32, %c0_i32_0 : i32, i32
  }
  func.func @transform_13(%arg0: i32) -> (i32, i32) {
    %c0_i32 = arith.constant 0 : i32
    %c0_i32_0 = arith.constant 0 : i32
    return %arg0, %c0_i32 : i32, i32
  }
}

module attributes {stable_mosaic.version = 11 : i64} {
  func.func @_node_block_kernel(%arg0: i32, %arg1: memref<128x128xf32, #tpu.memory_space<vmem>>, %arg2: memref<128x128xbf16, #tpu.memory_space<vmem>>, %arg3: memref<128x128xbf16, #tpu.memory_space<vmem>>, %arg4: memref<128x128xbf16, #tpu.memory_space<vmem>>, %arg5: memref<1x128xf32, #tpu.memory_space<vmem>>, %arg6: memref<128x128xbf16, #tpu.memory_space<vmem>>, %arg7: memref<1x128xf32, #tpu.memory_space<vmem>>, %arg8: memref<128x128xbf16, #tpu.memory_space<vmem>>, %arg9: memref<1x128xf32, #tpu.memory_space<vmem>>, %arg10: memref<1x128xf32, #tpu.memory_space<vmem>>, %arg11: memref<1x128xf32, #tpu.memory_space<vmem>>, %arg12: memref<128x128xbf16, #tpu.memory_space<vmem>>) attributes {dimension_semantics = [#tpu.dimension_semantics<parallel>], iteration_bounds = array<i64: 2>, scalar_prefetch = 0 : i64, scratch_operands = 0 : i64, tpu.core_type = #tpu.core_type<tc>, window_params = [{transform_indices = @transform_0, window_bounds = array<i64: 128, 128>}, {transform_indices = @transform_1, window_bounds = array<i64: 128, 128>}, {pipeline_mode = #tpu.pipeline_mode<synchronous>, transform_indices = @transform_2, window_bounds = array<i64: 128, 128>}, {pipeline_mode = #tpu.pipeline_mode<synchronous>, transform_indices = @transform_3, window_bounds = array<i64: 128, 128>}, {pipeline_mode = #tpu.pipeline_mode<synchronous>, transform_indices = @transform_4, window_bounds = array<i64: 1, 128>}, {pipeline_mode = #tpu.pipeline_mode<synchronous>, transform_indices = @transform_5, window_bounds = array<i64: 128, 128>}, {pipeline_mode = #tpu.pipeline_mode<synchronous>, transform_indices = @transform_6, window_bounds = array<i64: 1, 128>}, {pipeline_mode = #tpu.pipeline_mode<synchronous>, transform_indices = @transform_7, window_bounds = array<i64: 128, 128>}, {pipeline_mode = #tpu.pipeline_mode<synchronous>, transform_indices = @transform_8, window_bounds = array<i64: 1, 128>}, {pipeline_mode = #tpu.pipeline_mode<synchronous>, transform_indices = @transform_9, window_bounds = array<i64: 1, 128>}, {pipeline_mode = #tpu.pipeline_mode<synchronous>, transform_indices = @transform_10, window_bounds = array<i64: 1, 128>}, {transform_indices = @transform_11, window_bounds = array<i64: 128, 128>}]} {
    %c0 = arith.constant 0 : index
    %c0_0 = arith.constant 0 : index
    %0 = vector.load %arg2[%c0, %c0_0] : memref<128x128xbf16, #tpu.memory_space<vmem>>, vector<128x128xbf16>
    %c0_1 = arith.constant 0 : index
    %c0_2 = arith.constant 0 : index
    %1 = vector.load %arg1[%c0_1, %c0_2] : memref<128x128xf32, #tpu.memory_space<vmem>>, vector<128x128xf32>
    %c0_3 = arith.constant 0 : index
    %c0_4 = arith.constant 0 : index
    %2 = vector.load %arg3[%c0_3, %c0_4] : memref<128x128xbf16, #tpu.memory_space<vmem>>, vector<128x128xbf16>
    %3 = arith.truncf %1 : vector<128x128xf32> to vector<128x128xbf16>
    %cst = arith.constant dense<0.000000e+00> : vector<128x128xf32>
    %4 = tpu.matmul %3, %2, %cst {dimension_numbers = #tpu.dot_dimension_numbers<[1], [0], [0], [1], [0, 0, 1, 1], [], []>} : vector<128x128xbf16>, vector<128x128xbf16>, vector<128x128xf32> -> vector<128x128xf32>
    %c0_5 = arith.constant 0 : index
    %c0_6 = arith.constant 0 : index
    %5 = vector.load %arg4[%c0_5, %c0_6] : memref<128x128xbf16, #tpu.memory_space<vmem>>, vector<128x128xbf16>
    %cst_7 = arith.constant dense<0.000000e+00> : vector<128x128xf32>
    %6 = tpu.matmul %0, %5, %cst_7 {dimension_numbers = #tpu.dot_dimension_numbers<[1], [0], [0], [1], [0, 0, 1, 1], [], []>} : vector<128x128xbf16>, vector<128x128xbf16>, vector<128x128xf32> -> vector<128x128xf32>
    %7 = arith.addf %4, %6 : vector<128x128xf32>
    %c0_8 = arith.constant 0 : index
    %c0_9 = arith.constant 0 : index
    %8 = vector.load %arg5[%c0_8, %c0_9] : memref<1x128xf32, #tpu.memory_space<vmem>>, vector<1x128xf32>
    %9 = vector.broadcast %8 : vector<1x128xf32> to vector<128x128xf32>
    %10 = arith.addf %7, %9 : vector<128x128xf32>
    %cst_10 = arith.constant 0.000000e+00 : f32
    %11 = vector.broadcast %cst_10 : f32 to vector<128x128xf32>
    %12 = arith.maximumf %10, %11 : vector<128x128xf32>
    %c0_11 = arith.constant 0 : index
    %c0_12 = arith.constant 0 : index
    %13 = vector.load %arg6[%c0_11, %c0_12] : memref<128x128xbf16, #tpu.memory_space<vmem>>, vector<128x128xbf16>
    %14 = arith.truncf %12 : vector<128x128xf32> to vector<128x128xbf16>
    %cst_13 = arith.constant dense<0.000000e+00> : vector<128x128xf32>
    %15 = tpu.matmul %14, %13, %cst_13 {dimension_numbers = #tpu.dot_dimension_numbers<[1], [0], [0], [1], [0, 0, 1, 1], [], []>} : vector<128x128xbf16>, vector<128x128xbf16>, vector<128x128xf32> -> vector<128x128xf32>
    %c0_14 = arith.constant 0 : index
    %c0_15 = arith.constant 0 : index
    %16 = vector.load %arg7[%c0_14, %c0_15] : memref<1x128xf32, #tpu.memory_space<vmem>>, vector<1x128xf32>
    %17 = vector.broadcast %16 : vector<1x128xf32> to vector<128x128xf32>
    %18 = arith.addf %15, %17 : vector<128x128xf32>
    %cst_16 = arith.constant 0.000000e+00 : f32
    %19 = vector.broadcast %cst_16 : f32 to vector<128x128xf32>
    %20 = arith.maximumf %18, %19 : vector<128x128xf32>
    %c0_17 = arith.constant 0 : index
    %c0_18 = arith.constant 0 : index
    %21 = vector.load %arg8[%c0_17, %c0_18] : memref<128x128xbf16, #tpu.memory_space<vmem>>, vector<128x128xbf16>
    %22 = arith.truncf %20 : vector<128x128xf32> to vector<128x128xbf16>
    %cst_19 = arith.constant dense<0.000000e+00> : vector<128x128xf32>
    %23 = tpu.matmul %22, %21, %cst_19 {dimension_numbers = #tpu.dot_dimension_numbers<[1], [0], [0], [1], [0, 0, 1, 1], [], []>} : vector<128x128xbf16>, vector<128x128xbf16>, vector<128x128xf32> -> vector<128x128xf32>
    %c0_20 = arith.constant 0 : index
    %c0_21 = arith.constant 0 : index
    %24 = vector.load %arg9[%c0_20, %c0_21] : memref<1x128xf32, #tpu.memory_space<vmem>>, vector<1x128xf32>
    %25 = vector.broadcast %24 : vector<1x128xf32> to vector<128x128xf32>
    %26 = arith.addf %23, %25 : vector<128x128xf32>
    %c0_22 = arith.constant 0 : index
    %c0_23 = arith.constant 0 : index
    %27 = vector.load %arg10[%c0_22, %c0_23] : memref<1x128xf32, #tpu.memory_space<vmem>>, vector<1x128xf32>
    %c0_24 = arith.constant 0 : index
    %c0_25 = arith.constant 0 : index
    %28 = vector.load %arg11[%c0_24, %c0_25] : memref<1x128xf32, #tpu.memory_space<vmem>>, vector<1x128xf32>
    %cst_26 = arith.constant dense<0.000000e+00> : vector<128xf32>
    %29 = vector.multi_reduction <add>, %26, %cst_26 [1] : vector<128x128xf32> to vector<128xf32>
    %30 = vector.shape_cast %29 : vector<128xf32> to vector<128x1xf32>
    %cst_27 = arith.constant 1.280000e+02 : f32
    %31 = vector.broadcast %cst_27 : f32 to vector<128x1xf32>
    %32 = arith.divf %30, %31 : vector<128x1xf32>
    %33 = vector.broadcast %32 : vector<128x1xf32> to vector<128x128xf32>
    %34 = arith.subf %26, %33 : vector<128x128xf32>
    %35 = arith.mulf %34, %34 : vector<128x128xf32>
    %cst_28 = arith.constant dense<0.000000e+00> : vector<128xf32>
    %36 = vector.multi_reduction <add>, %35, %cst_28 [1] : vector<128x128xf32> to vector<128xf32>
    %37 = vector.shape_cast %36 : vector<128xf32> to vector<128x1xf32>
    %cst_29 = arith.constant 1.280000e+02 : f32
    %38 = vector.broadcast %cst_29 : f32 to vector<128x1xf32>
    %39 = arith.divf %37, %38 : vector<128x1xf32>
    %40 = vector.broadcast %32 : vector<128x1xf32> to vector<128x128xf32>
    %41 = arith.subf %26, %40 : vector<128x128xf32>
    %cst_30 = arith.constant 9.99999974E-6 : f32
    %42 = vector.broadcast %cst_30 : f32 to vector<128x1xf32>
    %43 = arith.addf %39, %42 : vector<128x1xf32>
    %44 = math.rsqrt %43 : vector<128x1xf32>
    %45 = vector.broadcast %44 : vector<128x1xf32> to vector<128x128xf32>
    %46 = arith.mulf %41, %45 : vector<128x128xf32>
    %47 = vector.broadcast %27 : vector<1x128xf32> to vector<128x128xf32>
    %48 = arith.mulf %46, %47 : vector<128x128xf32>
    %49 = vector.broadcast %28 : vector<1x128xf32> to vector<128x128xf32>
    %50 = arith.addf %48, %49 : vector<128x128xf32>
    %51 = arith.extf %0 : vector<128x128xbf16> to vector<128x128xf32>
    %52 = arith.addf %50, %51 : vector<128x128xf32>
    %53 = arith.truncf %52 : vector<128x128xf32> to vector<128x128xbf16>
    %c0_31 = arith.constant 0 : index
    %c0_32 = arith.constant 0 : index
    %54 = vector.load %arg12[%c0_31, %c0_32] : memref<128x128xbf16, #tpu.memory_space<vmem>>, vector<128x128xbf16>
    tpu.vector_store %arg12[%c0_31, %c0_32], %53 {strides = array<i32>} : memref<128x128xbf16, #tpu.memory_space<vmem>>, vector<128x128xbf16>,
    return
  }
  func.func @transform_0(%arg0: i32) -> (i32, i32) {
    %c0_i32 = arith.constant 0 : i32
    %c0_i32_0 = arith.constant 0 : i32
    return %arg0, %c0_i32 : i32, i32
  }
  func.func @transform_1(%arg0: i32) -> (i32, i32) {
    %c0_i32 = arith.constant 0 : i32
    %c0_i32_0 = arith.constant 0 : i32
    return %arg0, %c0_i32 : i32, i32
  }
  func.func @transform_2(%arg0: i32) -> (i32, i32) {
    %c0_i32 = arith.constant 0 : i32
    %c0_i32_0 = arith.constant 0 : i32
    %c0_i32_1 = arith.constant 0 : i32
    return %c0_i32, %c0_i32_0 : i32, i32
  }
  func.func @transform_3(%arg0: i32) -> (i32, i32) {
    %c0_i32 = arith.constant 0 : i32
    %c0_i32_0 = arith.constant 0 : i32
    %c0_i32_1 = arith.constant 0 : i32
    return %c0_i32, %c0_i32_0 : i32, i32
  }
  func.func @transform_4(%arg0: i32) -> (i32, i32) {
    %c0_i32 = arith.constant 0 : i32
    %c0_i32_0 = arith.constant 0 : i32
    %c0_i32_1 = arith.constant 0 : i32
    return %c0_i32, %c0_i32_0 : i32, i32
  }
  func.func @transform_5(%arg0: i32) -> (i32, i32) {
    %c0_i32 = arith.constant 0 : i32
    %c0_i32_0 = arith.constant 0 : i32
    %c0_i32_1 = arith.constant 0 : i32
    return %c0_i32, %c0_i32_0 : i32, i32
  }
  func.func @transform_6(%arg0: i32) -> (i32, i32) {
    %c0_i32 = arith.constant 0 : i32
    %c0_i32_0 = arith.constant 0 : i32
    %c0_i32_1 = arith.constant 0 : i32
    return %c0_i32, %c0_i32_0 : i32, i32
  }
  func.func @transform_7(%arg0: i32) -> (i32, i32) {
    %c0_i32 = arith.constant 0 : i32
    %c0_i32_0 = arith.constant 0 : i32
    %c0_i32_1 = arith.constant 0 : i32
    return %c0_i32, %c0_i32_0 : i32, i32
  }
  func.func @transform_8(%arg0: i32) -> (i32, i32) {
    %c0_i32 = arith.constant 0 : i32
    %c0_i32_0 = arith.constant 0 : i32
    %c0_i32_1 = arith.constant 0 : i32
    return %c0_i32, %c0_i32_0 : i32, i32
  }
  func.func @transform_9(%arg0: i32) -> (i32, i32) {
    %c0_i32 = arith.constant 0 : i32
    %c0_i32_0 = arith.constant 0 : i32
    %c0_i32_1 = arith.constant 0 : i32
    return %c0_i32, %c0_i32_0 : i32, i32
  }
  func.func @transform_10(%arg0: i32) -> (i32, i32) {
    %c0_i32 = arith.constant 0 : i32
    %c0_i32_0 = arith.constant 0 : i32
    %c0_i32_1 = arith.constant 0 : i32
    return %c0_i32, %c0_i32_0 : i32, i32
  }
  func.func @transform_11(%arg0: i32) -> (i32, i32) {
    %c0_i32 = arith.constant 0 : i32
    %c0_i32_0 = arith.constant 0 : i32
    return %arg0, %c0_i32 : i32, i32
  }
}

module attributes {stable_mosaic.version = 11 : i64} {
  func.func @_mlp3_kernel(%arg0: i32, %arg1: memref<128x128xbf16, #tpu.memory_space<vmem>>, %arg2: memref<128x128xbf16, #tpu.memory_space<vmem>>, %arg3: memref<1x128xf32, #tpu.memory_space<vmem>>, %arg4: memref<128x128xbf16, #tpu.memory_space<vmem>>, %arg5: memref<1x128xf32, #tpu.memory_space<vmem>>, %arg6: memref<128x128xbf16, #tpu.memory_space<vmem>>, %arg7: memref<1x128xf32, #tpu.memory_space<vmem>>, %arg8: memref<128x128xf32, #tpu.memory_space<vmem>>) attributes {dimension_semantics = [#tpu.dimension_semantics<parallel>], iteration_bounds = array<i64: 2>, scalar_prefetch = 0 : i64, scratch_operands = 0 : i64, tpu.core_type = #tpu.core_type<tc>, window_params = [{transform_indices = @transform_0, window_bounds = array<i64: 128, 128>}, {pipeline_mode = #tpu.pipeline_mode<synchronous>, transform_indices = @transform_1, window_bounds = array<i64: 128, 128>}, {pipeline_mode = #tpu.pipeline_mode<synchronous>, transform_indices = @transform_2, window_bounds = array<i64: 1, 128>}, {pipeline_mode = #tpu.pipeline_mode<synchronous>, transform_indices = @transform_3, window_bounds = array<i64: 128, 128>}, {pipeline_mode = #tpu.pipeline_mode<synchronous>, transform_indices = @transform_4, window_bounds = array<i64: 1, 128>}, {pipeline_mode = #tpu.pipeline_mode<synchronous>, transform_indices = @transform_5, window_bounds = array<i64: 128, 128>}, {pipeline_mode = #tpu.pipeline_mode<synchronous>, transform_indices = @transform_6, window_bounds = array<i64: 1, 128>}, {transform_indices = @transform_7, window_bounds = array<i64: 128, 128>}]} {
    %c0 = arith.constant 0 : index
    %c0_0 = arith.constant 0 : index
    %0 = vector.load %arg1[%c0, %c0_0] : memref<128x128xbf16, #tpu.memory_space<vmem>>, vector<128x128xbf16>
    %c0_1 = arith.constant 0 : index
    %c0_2 = arith.constant 0 : index
    %1 = vector.load %arg2[%c0_1, %c0_2] : memref<128x128xbf16, #tpu.memory_space<vmem>>, vector<128x128xbf16>
    %cst = arith.constant dense<0.000000e+00> : vector<128x128xf32>
    %2 = tpu.matmul %0, %1, %cst {dimension_numbers = #tpu.dot_dimension_numbers<[1], [0], [0], [1], [0, 0, 1, 1], [], []>} : vector<128x128xbf16>, vector<128x128xbf16>, vector<128x128xf32> -> vector<128x128xf32>
    %c0_3 = arith.constant 0 : index
    %c0_4 = arith.constant 0 : index
    %3 = vector.load %arg3[%c0_3, %c0_4] : memref<1x128xf32, #tpu.memory_space<vmem>>, vector<1x128xf32>
    %4 = vector.broadcast %3 : vector<1x128xf32> to vector<128x128xf32>
    %5 = arith.addf %2, %4 : vector<128x128xf32>
    %cst_5 = arith.constant 0.000000e+00 : f32
    %6 = vector.broadcast %cst_5 : f32 to vector<128x128xf32>
    %7 = arith.maximumf %5, %6 : vector<128x128xf32>
    %c0_6 = arith.constant 0 : index
    %c0_7 = arith.constant 0 : index
    %8 = vector.load %arg4[%c0_6, %c0_7] : memref<128x128xbf16, #tpu.memory_space<vmem>>, vector<128x128xbf16>
    %9 = arith.truncf %7 : vector<128x128xf32> to vector<128x128xbf16>
    %cst_8 = arith.constant dense<0.000000e+00> : vector<128x128xf32>
    %10 = tpu.matmul %9, %8, %cst_8 {dimension_numbers = #tpu.dot_dimension_numbers<[1], [0], [0], [1], [0, 0, 1, 1], [], []>} : vector<128x128xbf16>, vector<128x128xbf16>, vector<128x128xf32> -> vector<128x128xf32>
    %c0_9 = arith.constant 0 : index
    %c0_10 = arith.constant 0 : index
    %11 = vector.load %arg5[%c0_9, %c0_10] : memref<1x128xf32, #tpu.memory_space<vmem>>, vector<1x128xf32>
    %12 = vector.broadcast %11 : vector<1x128xf32> to vector<128x128xf32>
    %13 = arith.addf %10, %12 : vector<128x128xf32>
    %cst_11 = arith.constant 0.000000e+00 : f32
    %14 = vector.broadcast %cst_11 : f32 to vector<128x128xf32>
    %15 = arith.maximumf %13, %14 : vector<128x128xf32>
    %c0_12 = arith.constant 0 : index
    %c0_13 = arith.constant 0 : index
    %16 = vector.load %arg6[%c0_12, %c0_13] : memref<128x128xbf16, #tpu.memory_space<vmem>>, vector<128x128xbf16>
    %17 = arith.truncf %15 : vector<128x128xf32> to vector<128x128xbf16>
    %cst_14 = arith.constant dense<0.000000e+00> : vector<128x128xf32>
    %18 = tpu.matmul %17, %16, %cst_14 {dimension_numbers = #tpu.dot_dimension_numbers<[1], [0], [0], [1], [0, 0, 1, 1], [], []>} : vector<128x128xbf16>, vector<128x128xbf16>, vector<128x128xf32> -> vector<128x128xf32>
    %c0_15 = arith.constant 0 : index
    %c0_16 = arith.constant 0 : index
    %19 = vector.load %arg7[%c0_15, %c0_16] : memref<1x128xf32, #tpu.memory_space<vmem>>, vector<1x128xf32>
    %20 = vector.broadcast %19 : vector<1x128xf32> to vector<128x128xf32>
    %21 = arith.addf %18, %20 : vector<128x128xf32>
    %c0_17 = arith.constant 0 : index
    %c0_18 = arith.constant 0 : index
    %22 = vector.load %arg8[%c0_17, %c0_18] : memref<128x128xf32, #tpu.memory_space<vmem>>, vector<128x128xf32>
    tpu.vector_store %arg8[%c0_17, %c0_18], %21 {strides = array<i32>} : memref<128x128xf32, #tpu.memory_space<vmem>>, vector<128x128xf32>,
    return
  }
  func.func @transform_0(%arg0: i32) -> (i32, i32) {
    %c0_i32 = arith.constant 0 : i32
    %c0_i32_0 = arith.constant 0 : i32
    return %arg0, %c0_i32 : i32, i32
  }
  func.func @transform_1(%arg0: i32) -> (i32, i32) {
    %c0_i32 = arith.constant 0 : i32
    %c0_i32_0 = arith.constant 0 : i32
    %c0_i32_1 = arith.constant 0 : i32
    return %c0_i32, %c0_i32_0 : i32, i32
  }
  func.func @transform_2(%arg0: i32) -> (i32, i32) {
    %c0_i32 = arith.constant 0 : i32
    %c0_i32_0 = arith.constant 0 : i32
    %c0_i32_1 = arith.constant 0 : i32
    return %c0_i32, %c0_i32_0 : i32, i32
  }
  func.func @transform_3(%arg0: i32) -> (i32, i32) {
    %c0_i32 = arith.constant 0 : i32
    %c0_i32_0 = arith.constant 0 : i32
    %c0_i32_1 = arith.constant 0 : i32
    return %c0_i32, %c0_i32_0 : i32, i32
  }
  func.func @transform_4(%arg0: i32) -> (i32, i32) {
    %c0_i32 = arith.constant 0 : i32
    %c0_i32_0 = arith.constant 0 : i32
    %c0_i32_1 = arith.constant 0 : i32
    return %c0_i32, %c0_i32_0 : i32, i32
  }
  func.func @transform_5(%arg0: i32) -> (i32, i32) {
    %c0_i32 = arith.constant 0 : i32
    %c0_i32_0 = arith.constant 0 : i32
    %c0_i32_1 = arith.constant 0 : i32
    return %c0_i32, %c0_i32_0 : i32, i32
  }
  func.func @transform_6(%arg0: i32) -> (i32, i32) {
    %c0_i32 = arith.constant 0 : i32
    %c0_i32_0 = arith.constant 0 : i32
    %c0_i32_1 = arith.constant 0 : i32
    return %c0_i32, %c0_i32_0 : i32, i32
  }
  func.func @transform_7(%arg0: i32) -> (i32, i32) {
    %c0_i32 = arith.constant 0 : i32
    %c0_i32_0 = arith.constant 0 : i32
    return %arg0, %c0_i32 : i32, i32
  }
}

</mosaic_0001>

<llo_original>
// kernel: meshgraphnet_forward.8
$region0: #{meshgraphnet_forward.8}
  #allocation0 [shape = 'u32[]', space=smem, size = 0x4, offset = 0x4, fixed_abs, tag = 'smem constant byte address 0x4 - core index']
  #allocation1 [shape = 'u32[144,128]{1,0:T(1,128)}', space=vmem, size = 0x12000, scoped, tag = 'internal scratch']
  %s0 = inlined_call_operand.vmem [shape: f32[256,16], index: 0, kind: input, shape index: {}]
  %s1 = inlined_call_operand.vmem [shape: bf16[16,128], index: 1, kind: input, shape index: {}]
  %s2 = inlined_call_operand.vmem [shape: f32[1,128], index: 2, kind: input, shape index: {}]
  %s3 = inlined_call_operand.vmem [shape: bf16[128,128], index: 3, kind: input, shape index: {}]
  %s4 = inlined_call_operand.vmem [shape: f32[1,128], index: 4, kind: input, shape index: {}]
  %s5 = inlined_call_operand.vmem [shape: bf16[128,128], index: 5, kind: input, shape index: {}]
  %s6 = inlined_call_operand.vmem [shape: f32[1,128], index: 6, kind: input, shape index: {}]
  %s7 = inlined_call_operand.vmem [shape: f32[1,128], index: 7, kind: input, shape index: {}]
  %s8 = inlined_call_operand.vmem [shape: f32[1,128], index: 8, kind: input, shape index: {}]
  %s9 = inlined_call_operand.vmem [shape: bf16[256,128], index: 9, kind: output, shape index: {}]
  %s10 = sld [smem:[#allocation0]]
  $region69: #{meshgraphnet_forward.8} parent=0
    _
  %s12 = ssub.s32 1, %s10
  %s13 = scalar_select 0, %s12, %s10
  loop: start=0, step=1, limit=4
  $region2: #{meshgraphnet_forward.8} parent=0 // loop_pre_header
    _
  $region3: #{meshgraphnet_forward.8} parent=0 // loop_header
    %s15 = sphi 0, %s19
    %p16 = scmp.ge.s32.totalorder %s15, 4
    %s25 = sphi 0, %s27
    %s28 = sphi 0, %s25
    %s29 = sphi 0, %s28
    %s45 = sphi 0, %s29
    %s49 = sphi 0, %s49
    %s51 = sphi 0, %s49
    %s52 = sphi 0, %s51
    %s66 = sphi 0, %s52
    %s70 = sphi 0, %s70
    %s72 = sphi 0, %s70
    %s73 = sphi 0, %s72
    %s87 = sphi 0, %s73
    %s91 = sphi 0, %s91
    %s93 = sphi 0, %s91
    %s94 = sphi 0, %s93
    %s108 = sphi 0, %s94
    %s112 = sphi 0, %s112
    %s114 = sphi 0, %s112
    %s115 = sphi 0, %s114
    %s129 = sphi 0, %s115
    %s133 = sphi 0, %s133
    %s135 = sphi 0, %s133
    %s136 = sphi 0, %s135
    %s150 = sphi 0, %s136
    %s154 = sphi 0, %s154
    %s156 = sphi 0, %s154
    %s157 = sphi 0, %s156
    %s171 = sphi 0, %s157
    %s175 = sphi 0, %s175
    %s177 = sphi 0, %s175
    %s178 = sphi 0, %s177
    %s192 = sphi 0, %s178
    %s196 = sphi 0, %s196
    %s198 = sphi 0, %s196
    %s199 = sphi 0, %s198
    %s213 = sphi 0, %s199
    %s219 = sphi 0, %s221
    %s222 = sphi 0, %s219
    %s223 = sphi 0, %s222
    %s239 = sphi 0, %s223
  $region4: #{meshgraphnet_forward.8} parent=0 // loop_header_branch
    %18 = sbr.rel (%p16) target = $region8
  $region5: #{meshgraphnet_forward.8} parent=0 // loop_body
    %s20 = ssub.s32 %s15, 1
    %s21 = ssub.s32 %s15, 2
    %s22 = sadd.s32 %s15, 1
    %s23 = ssub.s32 %s15, %s22
    %p24 = scmp.eq.s32.totalorder %s23, 0
    %s26 = sadd.s32 %s25, 1
    %s27 = scalar_select %p24, %s25, %s26
    %p30 = pneg %p24
    %p31 = scmp.eq.s32.totalorder %s15, 1
    %p32 = por %p30, %p31
    %p33 = scmp.ne.s32.totalorder %s25, %s28
    %p34 = scmp.eq.s32.totalorder %s15, 0
    %p35 = por %p33, %p34
    %p36 = scmp.ne.s32.totalorder %s25, %s28
    %p37 = scmp.eq.s32.totalorder %s20, 1
    %p38 = por %p36, %p37
    %p39 = scmp.ne.s32.totalorder %s28, %s29
    %p40 = scmp.eq.s32.totalorder %s20, 0
    %p41 = por %p39, %p40
    %p42 = scmp.ne.s32.totalorder %s28, %s29
    %p43 = scmp.eq.s32.totalorder %s21, 1
    %p44 = por %p42, %p43
    %p46 = scmp.ne.s32.totalorder %s29, %s45
    %p47 = scmp.eq.s32.totalorder %s21, 0
    %p48 = por %p46, %p47
    %s50 = sadd.s32 %s49, 1
    %p53 = scmp.eq.s32.totalorder %s15, 1
    %p54 = scmp.ne.s32.totalorder %s49, %s51
    %p55 = scmp.eq.s32.totalorder %s15, 0
    %p56 = por %p54, %p55
    %p57 = scmp.ne.s32.totalorder %s49, %s51
    %p58 = scmp.eq.s32.totalorder %s20, 1
    %p59 = por %p57, %p58
    %p60 = scmp.ne.s32.totalorder %s51, %s52
    %p61 = scmp.eq.s32.totalorder %s20, 0
    %p62 = por %p60, %p61
    %p63 = scmp.ne.s32.totalorder %s51, %s52
    %p64 = scmp.eq.s32.totalorder %s21, 1
    %p65 = por %p63, %p64
    %p67 = scmp.ne.s32.totalorder %s52, %s66
    %p68 = scmp.eq.s32.totalorder %s21, 0
    %p69 = por %p67, %p68
    %s71 = sadd.s32 %s70, 1
    %p74 = scmp.eq.s32.totalorder %s15, 1
    %p75 = scmp.ne.s32.totalorder %s70, %s72
    %p76 = scmp.eq.s32.totalorder %s15, 0
    %p77 = por %p75, %p76
    %p78 = scmp.ne.s32.totalorder %s70, %s72
    %p79 = scmp.eq.s32.totalorder %s20, 1
    %p80 = por %p78, %p79
    %p81 = scmp.ne.s32.totalorder %s72, %s73
    %p82 = scmp.eq.s32.totalorder %s20, 0
    %p83 = por %p81, %p82
    %p84 = scmp.ne.s32.totalorder %s72, %s73
    %p85 = scmp.eq.s32.totalorder %s21, 1
    %p86 = por %p84, %p85
    %p88 = scmp.ne.s32.totalorder %s73, %s87
    %p89 = scmp.eq.s32.totalorder %s21, 0
    %p90 = por %p88, %p89
    %s92 = sadd.s32 %s91, 1
    %p95 = scmp.eq.s32.totalorder %s15, 1
    %p96 = scmp.ne.s32.totalorder %s91, %s93
    %p97 = scmp.eq.s32.totalorder %s15, 0
    %p98 = por %p96, %p97
    %p99 = scmp.ne.s32.totalorder %s91, %s93
    %p100 = scmp.eq.s32.totalorder %s20, 1
    %p101 = por %p99, %p100
    %p102 = scmp.ne.s32.totalorder %s93, %s94
    %p103 = scmp.eq.s32.totalorder %s20, 0
    %p104 = por %p102, %p103
    %p105 = scmp.ne.s32.totalorder %s93, %s94
    %p106 = scmp.eq.s32.totalorder %s21, 1
    %p107 = por %p105, %p106
    %p109 = scmp.ne.s32.totalorder %s94, %s108
    %p110 = scmp.eq.s32.totalorder %s21, 0
    %p111 = por %p109, %p110
    %s113 = sadd.s32 %s112, 1
    %p116 = scmp.eq.s32.totalorder %s15, 1
    %p117 = scmp.ne.s32.totalorder %s112, %s114
    %p118 = scmp.eq.s32.totalorder %s15, 0
    %p119 = por %p117, %p118
    %p120 = scmp.ne.s32.totalorder %s112, %s114
    %p121 = scmp.eq.s32.totalorder %s20, 1
    %p122 = por %p120, %p121
    %p123 = scmp.ne.s32.totalorder %s114, %s115
    %p124 = scmp.eq.s32.totalorder %s20, 0
    %p125 = por %p123, %p124
    %p126 = scmp.ne.s32.totalorder %s114, %s115
    %p127 = scmp.eq.s32.totalorder %s21, 1
    %p128 = por %p126, %p127
    %p130 = scmp.ne.s32.totalorder %s115, %s129
    %p131 = scmp.eq.s32.totalorder %s21, 0
    %p132 = por %p130, %p131
    %s134 = sadd.s32 %s133, 1
    %p137 = scmp.eq.s32.totalorder %s15, 1
    %p138 = scmp.ne.s32.totalorder %s133, %s135
    %p139 = scmp.eq.s32.totalorder %s15, 0
    %p140 = por %p138, %p139
    %p141 = scmp.ne.s32.totalorder %s133, %s135
    %p142 = scmp.eq.s32.totalorder %s20, 1
    %p143 = por %p141, %p142
    %p144 = scmp.ne.s32.totalorder %s135, %s136
    %p145 = scmp.eq.s32.totalorder %s20, 0
    %p146 = por %p144, %p145
    %p147 = scmp.ne.s32.totalorder %s135, %s136
    %p148 = scmp.eq.s32.totalorder %s21, 1
    %p149 = por %p147, %p148
    %p151 = scmp.ne.s32.totalorder %s136, %s150
    %p152 = scmp.eq.s32.totalorder %s21, 0
    %p153 = por %p151, %p152
    %s155 = sadd.s32 %s154, 1
    %p158 = scmp.eq.s32.totalorder %s15, 1
    %p159 = scmp.ne.s32.totalorder %s154, %s156
    %p160 = scmp.eq.s32.totalorder %s15, 0
    %p161 = por %p159, %p160
    %p162 = scmp.ne.s32.totalorder %s154, %s156
    %p163 = scmp.eq.s32.totalorder %s20, 1
    %p164 = por %p162, %p163
    %p165 = scmp.ne.s32.totalorder %s156, %s157
    %p166 = scmp.eq.s32.totalorder %s20, 0
    %p167 = por %p165, %p166
    %p168 = scmp.ne.s32.totalorder %s156, %s157
    %p169 = scmp.eq.s32.totalorder %s21, 1
    %p170 = por %p168, %p169
    %p172 = scmp.ne.s32.totalorder %s157, %s171
    %p173 = scmp.eq.s32.totalorder %s21, 0
    %p174 = por %p172, %p173
    %s176 = sadd.s32 %s175, 1
    %p179 = scmp.eq.s32.totalorder %s15, 1
    %p180 = scmp.ne.s32.totalorder %s175, %s177
    %p181 = scmp.eq.s32.totalorder %s15, 0
    %p182 = por %p180, %p181
    %p183 = scmp.ne.s32.totalorder %s175, %s177
    %p184 = scmp.eq.s32.totalorder %s20, 1
    %p185 = por %p183, %p184
    %p186 = scmp.ne.s32.totalorder %s177, %s178
    %p187 = scmp.eq.s32.totalorder %s20, 0
    %p188 = por %p186, %p187
    %p189 = scmp.ne.s32.totalorder %s177, %s178
    %p190 = scmp.eq.s32.totalorder %s21, 1
    %p191 = por %p189, %p190
    %p193 = scmp.ne.s32.totalorder %s178, %s192
    %p194 = scmp.eq.s32.totalorder %s21, 0
    %p195 = por %p193, %p194
    %s197 = sadd.s32 %s196, 1
    %p200 = scmp.eq.s32.totalorder %s15, 1
    %p201 = scmp.ne.s32.totalorder %s196, %s198
    %p202 = scmp.eq.s32.totalorder %s15, 0
    %p203 = por %p201, %p202
    %p204 = scmp.ne.s32.totalorder %s196, %s198
    %p205 = scmp.eq.s32.totalorder %s20, 1
    %p206 = por %p204, %p205
    %p207 = scmp.ne.s32.totalorder %s198, %s199
    %p208 = scmp.eq.s32.totalorder %s20, 0
    %p209 = por %p207, %p208
    %p210 = scmp.ne.s32.totalorder %s198, %s199
    %p211 = scmp.eq.s32.totalorder %s21, 1
    %p212 = por %p210, %p211
    %p214 = scmp.ne.s32.totalorder %s199, %s213
    %p215 = scmp.eq.s32.totalorder %s21, 0
    %p216 = por %p214, %p215
    %s217 = ssub.s32 %s15, %s22
    %p218 = scmp.eq.s32.totalorder %s217, 0
    %s220 = sadd.s32 %s219, 1
    %s221 = scalar_select %p218, %s219, %s220
    %p224 = pneg %p218
    %p225 = scmp.eq.s32.totalorder %s15, 1
    %p226 = por %p224, %p225
    %p227 = scmp.ne.s32.totalorder %s219, %s222
    %p228 = scmp.eq.s32.totalorder %s15, 0
    %p229 = por %p227, %p228
    %p230 = scmp.ne.s32.totalorder %s219, %s222
    %p231 = scmp.eq.s32.totalorder %s20, 1
    %p232 = por %p230, %p231
    %p233 = scmp.ne.s32.totalorder %s222, %s223
    %p234 = scmp.eq.s32.totalorder %s20, 0
    %p235 = por %p233, %p234
    %p236 = scmp.ne.s32.totalorder %s222, %s223
    %p237 = scmp.eq.s32.totalorder %s21, 1
    %p238 = por %p236, %p237
    %p240 = scmp.ne.s32.totalorder %s223, %s239
    %p241 = scmp.eq.s32.totalorder %s21, 0
    %p242 = por %p240, %p241
    %p243 = scmp.le.s32.totalorder 1, %s15
    %p244 = scmp.lt.s32.totalorder %s15, 3
    %p245 = pnand %p243, %p244
    %p246 = pneg %p245
    // Predicated region
    $region9: #{meshgraphnet_forward.8} parent=5 // pred_check
      _
    $region10: #{meshgraphnet_forward.8} parent=5 // pred_check_branch
      %248 = sbr.rel (%p245) target = $region12
    $region11: #{meshgraphnet_forward.8} parent=5 // pred_region
      %s249 = ssub.s32 %s15, 1
      // Predicated region
      $region13: #{meshgraphnet_forward.8} parent=11 // pred_check
        %p250 = pneg %p62
      $region14: #{meshgraphnet_forward.8} parent=11 // pred_check_branch
        %252 = sbr.rel (%p250) target = $region16
      $region15: #{meshgraphnet_forward.8} parent=11 // pred_region
        _
      $region16: #{meshgraphnet_forward.8} parent=11 // pred_fallthru
        _
      // Predicated region
      $region17: #{meshgraphnet_forward.8} parent=11 // pred_check
        %p253 = pneg %p83
      $region18: #{meshgraphnet_forward.8} parent=11 // pred_check_branch
        %255 = sbr.rel (%p253) target = $region20
      $region19: #{meshgraphnet_forward.8} parent=11 // pred_region
        _
      $region20: #{meshgraphnet_forward.8} parent=11 // pred_fallthru
        _
      // Predicated region
      $region21: #{meshgraphnet_forward.8} parent=11 // pred_check
        %p256 = pneg %p104
      $region22: #{meshgraphnet_forward.8} parent=11 // pred_check_branch
        %258 = sbr.rel (%p256) target = $region24
      $region23: #{meshgraphnet_forward.8} parent=11 // pred_region
        _
      $region24: #{meshgraphnet_forward.8} parent=11 // pred_fallthru
        _
      // Predicated region
      $region25: #{meshgraphnet_forward.8} parent=11 // pred_check
        %p259 = pneg %p125
      $region26: #{meshgraphnet_forward.8} parent=11 // pred_check_branch
        %261 = sbr.rel (%p259) target = $region28
      $region27: #{meshgraphnet_forward.8} parent=11 // pred_region
        _
      $region28: #{meshgraphnet_forward.8} parent=11 // pred_fallthru
        _
      // Predicated region
      $region29: #{meshgraphnet_forward.8} parent=11 // pred_check
        %p262 = pneg %p146
      $region30: #{meshgraphnet_forward.8} parent=11 // pred_check_branch
        %264 = sbr.rel (%p262) target = $region32
      $region31: #{meshgraphnet_forward.8} parent=11 // pred_region
        _
      $region32: #{meshgraphnet_forward.8} parent=11 // pred_fallthru
        _
      // Predicated region
      $region33: #{meshgraphnet_forward.8} parent=11 // pred_check
        %p265 = pneg %p167
      $region34: #{meshgraphnet_forward.8} parent=11 // pred_check_branch
        %267 = sbr.rel (%p265) target = $region36
      $region35: #{meshgraphnet_forward.8} parent=11 // pred_region
        _
      $region36: #{meshgraphnet_forward.8} parent=11 // pred_fallthru
        _
      // Predicated region
      $region37: #{meshgraphnet_forward.8} parent=11 // pred_check
        %p268 = pneg %p188
      $region38: #{meshgraphnet_forward.8} parent=11 // pred_check_branch
        %270 = sbr.rel (%p268) target = $region40
      $region39: #{meshgraphnet_forward.8} parent=11 // pred_region
        _
      $region40: #{meshgraphnet_forward.8} parent=11 // pred_fallthru
        _
      // Predicated region
      $region41: #{meshgraphnet_forward.8} parent=11 // pred_check
        %p271 = pneg %p209
      $region42: #{meshgraphnet_forward.8} parent=11 // pred_check_branch
        %273 = sbr.rel (%p271) target = $region44
      $region43: #{meshgraphnet_forward.8} parent=11 // pred_region
        _
      $region44: #{meshgraphnet_forward.8} parent=11 // pred_fallthru
        _
    $region12: #{meshgraphnet_forward.8} parent=5 // pred_fallthru
      _
    %p274 = scmp.lt.s32.totalorder %s15, 2
    // Predicated region
    $region45: #{meshgraphnet_forward.8} parent=5 // pred_check
      %p275 = pneg %p274
    $region46: #{meshgraphnet_forward.8} parent=5 // pred_check_branch
      %277 = sbr.rel (%p275) target = $region48
    $region47: #{meshgraphnet_forward.8} parent=5 // pred_region
      // Predicated region
      $region49: #{meshgraphnet_forward.8} parent=47 // pred_check
        %p278 = pneg %p35
      $region50: #{meshgraphnet_forward.8} parent=47 // pred_check_branch
        %280 = sbr.rel (%p278) target = $region52
      $region51: #{meshgraphnet_forward.8} parent=47 // pred_region
        %s281 = smul.u32 16, %s15
        %p282 = scmp.lt.s32.totalorder %s281, 31
        %s283 = scalar_select %p282, %s281, 31
        %s284 = smul.addr %s283, 8
        %s285 = scalar_lea.vmem %s0, %s284
        %s286 = smul.u32 16, %s15
      $region52: #{meshgraphnet_forward.8} parent=47 // pred_fallthru
        _
    $region48: #{meshgraphnet_forward.8} parent=5 // pred_fallthru
      _
    %p287 = scmp.le.s32.totalorder 1, %s15
    %p288 = scmp.lt.s32.totalorder %s15, 3
    %p289 = pnand %p287, %p288
    %p290 = pneg %p289
    // Predicated region
    $region53: #{meshgraphnet_forward.8} parent=5 // pred_check
      _
    $region54: #{meshgraphnet_forward.8} parent=5 // pred_check_branch
      %292 = sbr.rel (%p289) target = $region56
    $region55: #{meshgraphnet_forward.8} parent=5 // pred_region
      %s293 = ssub.s32 %s15, 1
      %s294 = smul.u32 16, %s20
      %p295 = scmp.lt.s32.totalorder %s294, 31
      %s296 = scalar_select %p295, %s294, 31
      %s297 = smul.addr %s296, 8
      %s298 = scalar_lea.vmem %s0, %s297
      %p299 = pneg %p41
      %p300 = pneg %p38
      %p301 = pneg %p62
      %p302 = pneg %p59
      %p303 = pneg %p83
      %p304 = pneg %p80
      %p305 = pneg %p104
      %p306 = pneg %p101
      %p307 = pneg %p125
      %p308 = pneg %p122
      %p309 = pneg %p146
      %p310 = pneg %p143
      %p311 = pneg %p167
      %p312 = pneg %p164
      %p313 = pneg %p188
      %p314 = pneg %p185
      %p315 = pneg %p209
      %p316 = pneg %p206
      %p317 = pneg %p235
      %p318 = pneg %p232
      %s319 = smul.u32 16, %s20
      %p320 = scmp.lt.s32.totalorder %s319, 31
      %s321 = scalar_select %p320, %s319, 31
      %s322 = smul.addr %s321, 4
      %s323 = scalar_lea.vmem %s9, %s322
      %s324 = smul.u32 16, %s20
      %p325 = scmp.lt.s32.totalorder %s324, 31
      %s326 = scalar_select %p325, %s324, 31
      %s327 = smul.addr %s326, 8
      %s328 = scalar_lea.vmem %s0, %s327
      %s329 = smul.u32 16, %s20
      %s330 = smul.u32 16, %s20
      %p331 = scmp.lt.s32.totalorder %s330, 31
      %s332 = scalar_select %p331, %s330, 31
      %s333 = smul.addr %s332, 4
      %s334 = scalar_lea.vmem %s9, %s333
      %s335 = smul.u32 16, %s20
      %v337 = vld [vmem:[%s328] sm:$0xff]
      %v338 = vld [vmem:[%s328 + $0x8] sm:$0xff]
      %v339 = vld [vmem:[%s328 + $0x10] sm:$0xff]
      %v340 = vld [vmem:[%s328 + $0x18] sm:$0xff]
      %v341 = vld [vmem:[%s328 + $0x20] sm:$0xff]
      %v342 = vld [vmem:[%s328 + $0x28] sm:$0xff]
      %v343 = vld [vmem:[%s328 + $0x30] sm:$0xff]
      %v344 = vld [vmem:[%s328 + $0x38] sm:$0xff]
      %v345 = vld [vmem:[%s328 + $0x40] sm:$0xff]
      %v346 = vld [vmem:[%s328 + $0x48] sm:$0xff]
      %v347 = vld [vmem:[%s328 + $0x50] sm:$0xff]
      %v348 = vld [vmem:[%s328 + $0x58] sm:$0xff]
      %v349 = vld [vmem:[%s328 + $0x60] sm:$0xff]
      %v350 = vld [vmem:[%s328 + $0x68] sm:$0xff]
      %v351 = vld [vmem:[%s328 + $0x70] sm:$0xff]
      %v352 = vld [vmem:[%s328 + $0x78] sm:$0xff]
      %v353 = vld [vmem:[%s1] sm:$0xf]
      %v354 = vld [vmem:[%s1 + $0x4] sm:$0xf]
      %v355 = vpack.c.bf16 %v338, %v337
      %v356 = vpack.c.bf16 %v340, %v339
      %v357 = vpack.c.bf16 %v342, %v341
      %v358 = vpack.c.bf16 %v344, %v343
      %v359 = vpack.c.bf16 %v346, %v345
      %v360 = vpack.c.bf16 %v348, %v347
      %v361 = vpack.c.bf16 %v350, %v349
      %v362 = vpack.c.bf16 %v352, %v351
      %v363 = vld [vmem:[%s2] sm:$0x1]
      %v365 = vlaneseq
      %v366 = vshrl.u32 %v365, 7
      %v367 = vsub.s32 0, %v366
      %v368 = vrot.slane %v363, %v367
      %v372 = vunpack.c.l.b16 %v353
      %v373 = vunpack.c.l.b16 %v354
      %v374 = vpack.c.b16 %v373, %v372
      %vm376 = vcmask 130048
      %v378 = vsel %vm376, %v355, 0
      %v381 = vsel %vm376, %v356, 0
      %v384 = vsel %vm376, %v357, 0
      %v387 = vsel %vm376, %v358, 0
      %v390 = vsel %vm376, %v359, 0
      %v393 = vsel %vm376, %v360, 0
      %v396 = vsel %vm376, %v361, 0
      %v399 = vsel %vm376, %v362, 0
      %401 = vmatprep.subr.bf16.mxu0 0
      %402 = vmatpush1.bf16.msra.mxu0 %v374
      %403 = vmatprep.subr.bf16.mxu0 0
      %404 = vmatpush1.bf16.msra.mxu0 0
      %405 = vmatprep.subr.bf16.mxu0 0
      %406 = vmatpush1.bf16.msra.mxu0 0
      %407 = vmatprep.subr.bf16.mxu0 0
      %408 = vmatpush1.bf16.msra.mxu0 0
      %409 = vmatprep.subr.bf16.mxu0 0
      %410 = vmatpush1.bf16.msra.mxu0 0
      %411 = vmatprep.subr.bf16.mxu0 0
      %412 = vmatpush1.bf16.msra.mxu0 0
      %413 = vmatprep.subr.bf16.mxu0 0
      %414 = vmatpush1.bf16.msra.mxu0 0
      %415 = vmatprep.subr.bf16.mxu0 0
      %416 = vmatpush1.bf16.msra.mxu0 0
      %417 = vmatprep.subr.bf16.mxu0 0
      %418 = vmatpush1.bf16.msra.mxu0 0
      %419 = vmatprep.subr.bf16.mxu0 0
      %420 = vmatpush1.bf16.msra.mxu0 0
      %421 = vmatprep.subr.bf16.mxu0 0
      %422 = vmatpush1.bf16.msra.mxu0 0
      %423 = vmatprep.subr.bf16.mxu0 0
      %424 = vmatpush1.bf16.msra.mxu0 0
      %425 = vmatprep.subr.bf16.mxu0 0
      %426 = vmatpush1.bf16.msra.mxu0 0
      %427 = vmatprep.subr.bf16.mxu0 0
      %428 = vmatpush1.bf16.msra.mxu0 0
      %429 = vmatprep.subr.bf16.mxu0 0
      %430 = vmatpush1.bf16.msra.mxu0 0
      %431 = vmatprep.subr.bf16.mxu0 0
      %432 = vmatpush1.bf16.msra.mxu0 0
      %433 = vmatprep.mubr.bf16.mxu0 0
      %434 = vmatmul.mubr.bf16.gmra.mrb[0].mxu0 %v378
      %v435 = vpop.f32.mrb[0].mxu0
      %v436 = vadd.f32 %v368, %v435
      %v437 = vpop.f32.mrb[0].mxu0
      %v438 = vpop.f32.mrb[0].mxu0
      %v439 = vadd.f32 %v368, %v438
      %v440 = vpop.f32.mrb[0].mxu0
      %441 = vmatprep.mubr.bf16.mxu0 0
      %442 = vmatmul.mubr.bf16.gmra.mrb[0].mxu0 %v381
      %v443 = vpop.f32.mrb[0].mxu0
      %v444 = vadd.f32 %v368, %v443
      %v445 = vpop.f32.mrb[0].mxu0
      %v446 = vpop.f32.mrb[0].mxu0
      %v447 = vadd.f32 %v368, %v446
      %v448 = vpop.f32.mrb[0].mxu0
      %449 = vmatprep.mubr.bf16.mxu0 0
      %450 = vmatmul.mubr.bf16.gmra.mrb[0].mxu0 %v384
      %v451 = vpop.f32.mrb[0].mxu0
      %v452 = vadd.f32 %v368, %v451
      %v453 = vpop.f32.mrb[0].mxu0
      %v454 = vpop.f32.mrb[0].mxu0
      %v455 = vadd.f32 %v368, %v454
      %v456 = vpop.f32.mrb[0].mxu0
      %457 = vmatprep.mubr.bf16.mxu0 0
      %458 = vmatmul.mubr.bf16.gmra.mrb[0].mxu0 %v387
      %v459 = vpop.f32.mrb[0].mxu0
      %v460 = vadd.f32 %v368, %v459
      %v461 = vpop.f32.mrb[0].mxu0
      %v462 = vpop.f32.mrb[0].mxu0
      %v463 = vadd.f32 %v368, %v462
      %v464 = vpop.f32.mrb[0].mxu0
      %465 = vmatprep.mubr.bf16.mxu0 0
      %466 = vmatmul.mubr.bf16.gmra.mrb[0].mxu0 %v390
      %v467 = vpop.f32.mrb[0].mxu0
      %v468 = vadd.f32 %v368, %v467
      %v469 = vpop.f32.mrb[0].mxu0
      %v470 = vpop.f32.mrb[0].mxu0
      %v471 = vadd.f32 %v368, %v470
      %v472 = vpop.f32.mrb[0].mxu0
      %473 = vmatprep.mubr.bf16.mxu0 0
      %474 = vmatmul.mubr.bf16.gmra.mrb[0].mxu0 %v393
      %v475 = vpop.f32.mrb[0].mxu0
      %v476 = vadd.f32 %v368, %v475
      %v477 = vpop.f32.mrb[0].mxu0
      %v478 = vpop.f32.mrb[0].mxu0
      %v479 = vadd.f32 %v368, %v478
      %v480 = vpop.f32.mrb[0].mxu0
      %481 = vmatprep.mubr.bf16.mxu0 0
      %482 = vmatmul.mubr.bf16.gmra.mrb[0].mxu0 %v396
      %v483 = vpop.f32.mrb[0].mxu0
      %v484 = vadd.f32 %v368, %v483
      %v485 = vpop.f32.mrb[0].mxu0
      %v486 = vpop.f32.mrb[0].mxu0
      %v487 = vadd.f32 %v368, %v486
      %v488 = vpop.f32.mrb[0].mxu0
      %489 = vmatprep.mubr.bf16.mxu0 0
      %490 = vmatmul.mubr.bf16.gmra.mrb[0].mxu0 %v399
      %v491 = vpop.f32.mrb[0].mxu0
      %v492 = vadd.f32 %v368, %v491
      %v493 = vpop.f32.mrb[0].mxu0
      %v494 = vpop.f32.mrb[0].mxu0
      %v495 = vadd.f32 %v368, %v494
      %v496 = vpop.f32.mrb[0].mxu0
      %497 = vdwg.mxu0
      %v498 = vmax.f32 %v436, 0.0
      %v499 = vmax.f32 %v439, 0.0
      %v500 = vmax.f32 %v444, 0.0
      %v501 = vmax.f32 %v447, 0.0
      %v502 = vmax.f32 %v452, 0.0
      %v503 = vmax.f32 %v455, 0.0
      %v504 = vmax.f32 %v460, 0.0
      %v505 = vmax.f32 %v463, 0.0
      %v506 = vmax.f32 %v468, 0.0
      %v507 = vmax.f32 %v471, 0.0
      %v508 = vmax.f32 %v476, 0.0
      %v509 = vmax.f32 %v479, 0.0
      %v510 = vmax.f32 %v484, 0.0
      %v511 = vmax.f32 %v487, 0.0
      %v512 = vmax.f32 %v492, 0.0
      %v513 = vmax.f32 %v495, 0.0
      %v514 = vld [vmem:[%s3] sm:$0xf]
      %v515 = vld [vmem:[%s3 + $0x4] sm:$0xf]
      %v516 = vld [vmem:[%s3 + $0x8] sm:$0xf]
      %v517 = vld [vmem:[%s3 + $0xc] sm:$0xf]
      %v518 = vld [vmem:[%s3 + $0x10] sm:$0xf]
      %v519 = vld [vmem:[%s3 + $0x14] sm:$0xf]
      %v520 = vld [vmem:[%s3 + $0x18] sm:$0xf]
      %v521 = vld [vmem:[%s3 + $0x1c] sm:$0xf]
      %v522 = vld [vmem:[%s3 + $0x20] sm:$0xf]
      %v523 = vld [vmem:[%s3 + $0x24] sm:$0xf]
      %v524 = vld [vmem:[%s3 + $0x28] sm:$0xf]
      %v525 = vld [vmem:[%s3 + $0x2c] sm:$0xf]
      %v526 = vld [vmem:[%s3 + $0x30] sm:$0xf]
      %v527 = vld [vmem:[%s3 + $0x34] sm:$0xf]
      %v528 = vld [vmem:[%s3 + $0x38] sm:$0xf]
      %v529 = vld [vmem:[%s3 + $0x3c] sm:$0xf]
      %v530 = vpack.c.bf16 %v499, %v498
      %v531 = vpack.c.bf16 %v501, %v500
      %v532 = vpack.c.bf16 %v503, %v502
      %v533 = vpack.c.bf16 %v505, %v504
      %v534 = vpack.c.bf16 %v507, %v506
      %v535 = vpack.c.bf16 %v509, %v508
      %v536 = vpack.c.bf16 %v511, %v510
      %v537 = vpack.c.bf16 %v513, %v512
      %v538 = vld [vmem:[%s4] sm:$0x1]
      %v540 = vlaneseq
      %v541 = vshrl.u32 %v540, 7
      %v542 = vsub.s32 0, %v541
      %v543 = vrot.slane %v538, %v542
      %v561 = vunpack.c.l.b16 %v514
      %v562 = vunpack.c.l.b16 %v515
      %v563 = vunpack.c.l.b16 %v516
      %v564 = vunpack.c.l.b16 %v517
      %v565 = vunpack.c.l.b16 %v518
      %v566 = vunpack.c.l.b16 %v519
      %v567 = vunpack.c.l.b16 %v520
      %v568 = vunpack.c.l.b16 %v521
      %v569 = vunpack.c.l.b16 %v522
      %v570 = vunpack.c.l.b16 %v523
      %v571 = vunpack.c.l.b16 %v524
      %v572 = vunpack.c.l.b16 %v525
      %v573 = vunpack.c.l.b16 %v526
      %v574 = vunpack.c.l.b16 %v527
      %v575 = vunpack.c.l.b16 %v528
      %v576 = vunpack.c.l.b16 %v529
      %v577 = vpack.c.b16 %v562, %v561
      %v578 = vpack.c.b16 %v564, %v563
      %v579 = vpack.c.b16 %v566, %v565
      %v580 = vpack.c.b16 %v568, %v567
      %v581 = vpack.c.b16 %v570, %v569
      %v582 = vpack.c.b16 %v572, %v571
      %v583 = vpack.c.b16 %v574, %v573
      %v584 = vpack.c.b16 %v576, %v575
      %593 = vmatprep.subr.bf16.mxu0 0
      %594 = vmatpush1.bf16.msra.mxu0 %v577
      %595 = vmatprep.subr.bf16.mxu0 0
      %596 = vmatpush1.bf16.msra.mxu0 %v578
      %597 = vmatprep.subr.bf16.mxu0 0
      %598 = vmatpush1.bf16.msra.mxu0 %v579
      %599 = vmatprep.subr.bf16.mxu0 0
      %600 = vmatpush1.bf16.msra.mxu0 %v580
      %601 = vmatprep.subr.bf16.mxu0 0
      %602 = vmatpush1.bf16.msra.mxu0 %v581
      %603 = vmatprep.subr.bf16.mxu0 0
      %604 = vmatpush1.bf16.msra.mxu0 %v582
      %605 = vmatprep.subr.bf16.mxu0 0
      %606 = vmatpush1.bf16.msra.mxu0 %v583
      %607 = vmatprep.subr.bf16.mxu0 0
      %608 = vmatpush1.bf16.msra.mxu0 %v584
      %609 = vmatprep.subr.bf16.mxu0 0
      %610 = vmatpush1.bf16.msra.mxu0 0
      %611 = vmatprep.subr.bf16.mxu0 0
      %612 = vmatpush1.bf16.msra.mxu0 0
      %613 = vmatprep.subr.bf16.mxu0 0
      %614 = vmatpush1.bf16.msra.mxu0 0
      %615 = vmatprep.subr.bf16.mxu0 0
      %616 = vmatpush1.bf16.msra.mxu0 0
      %617 = vmatprep.subr.bf16.mxu0 0
      %618 = vmatpush1.bf16.msra.mxu0 0
      %619 = vmatprep.subr.bf16.mxu0 0
      %620 = vmatpush1.bf16.msra.mxu0 0
      %621 = vmatprep.subr.bf16.mxu0 0
      %622 = vmatpush1.bf16.msra.mxu0 0
      %623 = vmatprep.subr.bf16.mxu0 0
      %624 = vmatpush1.bf16.msra.mxu0 0
      %625 = vmatprep.mubr.bf16.mxu0 0
      %626 = vmatmul.mubr.bf16.gmra.mrb[0].mxu0 %v530
      %v627 = vpop.f32.mrb[0].mxu0
      %v628 = vadd.f32 %v543, %v627
      %v629 = vpop.f32.mrb[0].mxu0
      %v630 = vpop.f32.mrb[0].mxu0
      %v631 = vadd.f32 %v543, %v630
      %v632 = vpop.f32.mrb[0].mxu0
      %633 = vmatprep.mubr.bf16.mxu0 0
      %634 = vmatmul.mubr.bf16.gmra.mrb[0].mxu0 %v531
      %v635 = vpop.f32.mrb[0].mxu0
      %v636 = vadd.f32 %v543, %v635
      %v637 = vpop.f32.mrb[0].mxu0
      %v638 = vpop.f32.mrb[0].mxu0
      %v639 = vadd.f32 %v543, %v638
      %v640 = vpop.f32.mrb[0].mxu0
      %641 = vmatprep.mubr.bf16.mxu0 0
      %642 = vmatmul.mubr.bf16.gmra.mrb[0].mxu0 %v532
      %v643 = vpop.f32.mrb[0].mxu0
      %v644 = vadd.f32 %v543, %v643
      %v645 = vpop.f32.mrb[0].mxu0
      %v646 = vpop.f32.mrb[0].mxu0
      %v647 = vadd.f32 %v543, %v646
      %v648 = vpop.f32.mrb[0].mxu0
      %649 = vmatprep.mubr.bf16.mxu0 0
      %650 = vmatmul.mubr.bf16.gmra.mrb[0].mxu0 %v533
      %v651 = vpop.f32.mrb[0].mxu0
      %v652 = vadd.f32 %v543, %v651
      %v653 = vpop.f32.mrb[0].mxu0
      %v654 = vpop.f32.mrb[0].mxu0
      %v655 = vadd.f32 %v543, %v654
      %v656 = vpop.f32.mrb[0].mxu0
      %657 = vmatprep.mubr.bf16.mxu0 0
      %658 = vmatmul.mubr.bf16.gmra.mrb[0].mxu0 %v534
      %v659 = vpop.f32.mrb[0].mxu0
      %v660 = vadd.f32 %v543, %v659
      %v661 = vpop.f32.mrb[0].mxu0
      %v662 = vpop.f32.mrb[0].mxu0
      %v663 = vadd.f32 %v543, %v662
      %v664 = vpop.f32.mrb[0].mxu0
      %665 = vmatprep.mubr.bf16.mxu0 0
      %666 = vmatmul.mubr.bf16.gmra.mrb[0].mxu0 %v535
      %v667 = vpop.f32.mrb[0].mxu0
      %v668 = vadd.f32 %v543, %v667
      %v669 = vpop.f32.mrb[0].mxu0
      %v670 = vpop.f32.mrb[0].mxu0
      %v671 = vadd.f32 %v543, %v670
      %v672 = vpop.f32.mrb[0].mxu0
      %673 = vmatprep.mubr.bf16.mxu0 0
      %674 = vmatmul.mubr.bf16.gmra.mrb[0].mxu0 %v536
      %v675 = vpop.f32.mrb[0].mxu0
      %v676 = vadd.f32 %v543, %v675
      %v677 = vpop.f32.mrb[0].mxu0
      %v678 = vpop.f32.mrb[0].mxu0
      %v679 = vadd.f32 %v543, %v678
      %v680 = vpop.f32.mrb[0].mxu0
      %681 = vmatprep.mubr.bf16.mxu0 0
      %682 = vmatmul.mubr.bf16.gmra.mrb[0].mxu0 %v537
      %v683 = vpop.f32.mrb[0].mxu0
      %v684 = vadd.f32 %v543, %v683
      %v685 = vpop.f32.mrb[0].mxu0
      %v686 = vpop.f32.mrb[0].mxu0
      %v687 = vadd.f32 %v543, %v686
      %v688 = vpop.f32.mrb[0].mxu0
      %689 = vdwg.mxu0
      %v690 = vmax.f32 %v628, 0.0
      %v691 = vmax.f32 %v631, 0.0
      %v692 = vmax.f32 %v636, 0.0
      %v693 = vmax.f32 %v639, 0.0
      %v694 = vmax.f32 %v644, 0.0
      %v695 = vmax.f32 %v647, 0.0
      %v696 = vmax.f32 %v652, 0.0
      %v697 = vmax.f32 %v655, 0.0
      %v698 = vmax.f32 %v660, 0.0
      %v699 = vmax.f32 %v663, 0.0
      %v700 = vmax.f32 %v668, 0.0
      %v701 = vmax.f32 %v671, 0.0
      %v702 = vmax.f32 %v676, 0.0
      %v703 = vmax.f32 %v679, 0.0
      %v704 = vmax.f32 %v684, 0.0
      %v705 = vmax.f32 %v687, 0.0
      %v706 = vld [vmem:[%s5] sm:$0xf]
      %v707 = vld [vmem:[%s5 + $0x4] sm:$0xf]
      %v708 = vld [vmem:[%s5 + $0x8] sm:$0xf]
      %v709 = vld [vmem:[%s5 + $0xc] sm:$0xf]
      %v710 = vld [vmem:[%s5 + $0x10] sm:$0xf]
      %v711 = vld [vmem:[%s5 + $0x14] sm:$0xf]
      %v712 = vld [vmem:[%s5 + $0x18] sm:$0xf]
      %v713 = vld [vmem:[%s5 + $0x1c] sm:$0xf]
      %v714 = vld [vmem:[%s5 + $0x20] sm:$0xf]
      %v715 = vld [vmem:[%s5 + $0x24] sm:$0xf]
      %v716 = vld [vmem:[%s5 + $0x28] sm:$0xf]
      %v717 = vld [vmem:[%s5 + $0x2c] sm:$0xf]
      %v718 = vld [vmem:[%s5 + $0x30] sm:$0xf]
      %v719 = vld [vmem:[%s5 + $0x34] sm:$0xf]
      %v720 = vld [vmem:[%s5 + $0x38] sm:$0xf]
      %v721 = vld [vmem:[%s5 + $0x3c] sm:$0xf]
      %v722 = vpack.c.bf16 %v691, %v690
      %v723 = vpack.c.bf16 %v693, %v692
      %v724 = vpack.c.bf16 %v695, %v694
      %v725 = vpack.c.bf16 %v697, %v696
      %v726 = vpack.c.bf16 %v699, %v698
      %v727 = vpack.c.bf16 %v701, %v700
      %v728 = vpack.c.bf16 %v703, %v702
      %v729 = vpack.c.bf16 %v705, %v704
      %v730 = vld [vmem:[%s6] sm:$0x1]
      %v732 = vlaneseq
      %v733 = vshrl.u32 %v732, 7
      %v734 = vsub.s32 0, %v733
      %v735 = vrot.slane %v730, %v734
      %v753 = vunpack.c.l.b16 %v706
      %v754 = vunpack.c.l.b16 %v707
      %v755 = vunpack.c.l.b16 %v708
      %v756 = vunpack.c.l.b16 %v709
      %v757 = vunpack.c.l.b16 %v710
      %v758 = vunpack.c.l.b16 %v711
      %v759 = vunpack.c.l.b16 %v712
      %v760 = vunpack.c.l.b16 %v713
      %v761 = vunpack.c.l.b16 %v714
      %v762 = vunpack.c.l.b16 %v715
      %v763 = vunpack.c.l.b16 %v716
      %v764 = vunpack.c.l.b16 %v717
      %v765 = vunpack.c.l.b16 %v718
      %v766 = vunpack.c.l.b16 %v719
      %v767 = vunpack.c.l.b16 %v720
      %v768 = vunpack.c.l.b16 %v721
      %v769 = vpack.c.b16 %v754, %v753
      %v770 = vpack.c.b16 %v756, %v755
      %v771 = vpack.c.b16 %v758, %v757
      %v772 = vpack.c.b16 %v760, %v759
      %v773 = vpack.c.b16 %v762, %v761
      %v774 = vpack.c.b16 %v764, %v763
      %v775 = vpack.c.b16 %v766, %v765
      %v776 = vpack.c.b16 %v768, %v767
      %785 = vmatprep.subr.bf16.mxu0 0
      %786 = vmatpush1.bf16.msra.mxu0 %v769
      %787 = vmatprep.subr.bf16.mxu0 0
      %788 = vmatpush1.bf16.msra.mxu0 %v770
      %789 = vmatprep.subr.bf16.mxu0 0
      %790 = vmatpush1.bf16.msra.mxu0 %v771
      %791 = vmatprep.subr.bf16.mxu0 0
      %792 = vmatpush1.bf16.msra.mxu0 %v772
      %793 = vmatprep.subr.bf16.mxu0 0
      %794 = vmatpush1.bf16.msra.mxu0 %v773
      %795 = vmatprep.subr.bf16.mxu0 0
      %796 = vmatpush1.bf16.msra.mxu0 %v774
      %797 = vmatprep.subr.bf16.mxu0 0
      %798 = vmatpush1.bf16.msra.mxu0 %v775
      %799 = vmatprep.subr.bf16.mxu0 0
      %800 = vmatpush1.bf16.msra.mxu0 %v776
      %801 = vmatprep.subr.bf16.mxu0 0
      %802 = vmatpush1.bf16.msra.mxu0 0
      %803 = vmatprep.subr.bf16.mxu0 0
      %804 = vmatpush1.bf16.msra.mxu0 0
      %805 = vmatprep.subr.bf16.mxu0 0
      %806 = vmatpush1.bf16.msra.mxu0 0
      %807 = vmatprep.subr.bf16.mxu0 0
      %808 = vmatpush1.bf16.msra.mxu0 0
      %809 = vmatprep.subr.bf16.mxu0 0
      %810 = vmatpush1.bf16.msra.mxu0 0
      %811 = vmatprep.subr.bf16.mxu0 0
      %812 = vmatpush1.bf16.msra.mxu0 0
      %813 = vmatprep.subr.bf16.mxu0 0
      %814 = vmatpush1.bf16.msra.mxu0 0
      %815 = vmatprep.subr.bf16.mxu0 0
      %816 = vmatpush1.bf16.msra.mxu0 0
      %817 = vmatprep.mubr.bf16.mxu0 0
      %818 = vmatmul.mubr.bf16.gmra.mrb[0].mxu0 %v722
      %v819 = vpop.f32.mrb[0].mxu0
      %v820 = vadd.f32 %v735, %v819
      %v821 = vpop.f32.mrb[0].mxu0
      %v822 = vpop.f32.mrb[0].mxu0
      %v823 = vadd.f32 %v735, %v822
      %v824 = vpop.f32.mrb[0].mxu0
      %825 = vmatprep.mubr.bf16.mxu0 0
      %826 = vmatmul.mubr.bf16.gmra.mrb[0].mxu0 %v723
      %v827 = vpop.f32.mrb[0].mxu0
      %v828 = vadd.f32 %v735, %v827
      %v829 = vpop.f32.mrb[0].mxu0
      %v830 = vpop.f32.mrb[0].mxu0
      %v831 = vadd.f32 %v735, %v830
      %v832 = vpop.f32.mrb[0].mxu0
      %833 = vmatprep.mubr.bf16.mxu0 0
      %834 = vmatmul.mubr.bf16.gmra.mrb[0].mxu0 %v724
      %v835 = vpop.f32.mrb[0].mxu0
      %v836 = vadd.f32 %v735, %v835
      %v837 = vpop.f32.mrb[0].mxu0
      %v838 = vpop.f32.mrb[0].mxu0
      %v839 = vadd.f32 %v735, %v838
      %v840 = vpop.f32.mrb[0].mxu0
      %841 = vmatprep.mubr.bf16.mxu0 0
      %842 = vmatmul.mubr.bf16.gmra.mrb[0].mxu0 %v725
      %v843 = vpop.f32.mrb[0].mxu0
      %v844 = vadd.f32 %v735, %v843
      %v845 = vpop.f32.mrb[0].mxu0
      %v846 = vpop.f32.mrb[0].mxu0
      %v847 = vadd.f32 %v735, %v846
      %v848 = vpop.f32.mrb[0].mxu0
      %849 = vmatprep.mubr.bf16.mxu0 0
      %850 = vmatmul.mubr.bf16.gmra.mrb[0].mxu0 %v726
      %v851 = vpop.f32.mrb[0].mxu0
      %v852 = vadd.f32 %v735, %v851
      %v853 = vpop.f32.mrb[0].mxu0
      %v854 = vpop.f32.mrb[0].mxu0
      %v855 = vadd.f32 %v735, %v854
      %v856 = vpop.f32.mrb[0].mxu0
      %857 = vmatprep.mubr.bf16.mxu0 0
      %858 = vmatmul.mubr.bf16.gmra.mrb[0].mxu0 %v727
      %v859 = vpop.f32.mrb[0].mxu0
      %v860 = vadd.f32 %v735, %v859
      %v861 = vpop.f32.mrb[0].mxu0
      %v862 = vpop.f32.mrb[0].mxu0
      %v863 = vadd.f32 %v735, %v862
      %v864 = vpop.f32.mrb[0].mxu0
      %865 = vmatprep.mubr.bf16.mxu0 0
      %866 = vmatmul.mubr.bf16.gmra.mrb[0].mxu0 %v728
      %v867 = vpop.f32.mrb[0].mxu0
      %v868 = vadd.f32 %v735, %v867
      %v869 = vpop.f32.mrb[0].mxu0
      %v870 = vpop.f32.mrb[0].mxu0
      %v871 = vadd.f32 %v735, %v870
      %v872 = vpop.f32.mrb[0].mxu0
      %873 = vmatprep.mubr.bf16.mxu0 0
      %874 = vmatmul.mubr.bf16.gmra.mrb[0].mxu0 %v729
      %v875 = vpop.f32.mrb[0].mxu0
      %v876 = vadd.f32 %v735, %v875
      %v877 = vpop.f32.mrb[0].mxu0
      %v878 = vpop.f32.mrb[0].mxu0
      %v879 = vadd.f32 %v735, %v878
      %v880 = vpop.f32.mrb[0].mxu0
      %881 = vdwg.mxu0
      %v882 = vld [vmem:[%s7] sm:$0x1]
      %v883 = vld [vmem:[%s8] sm:$0x1]
      %884 = vadd.xlane.f32.xlu0 %v820
      %v885 = vpop.xlane.xlu0 %884
      %886 = vadd.xlane.f32.xlu0 %v823
      %v887 = vpop.xlane.xlu0 %886
      %888 = vadd.xlane.f32.xlu0 %v828
      %v889 = vpop.xlane.xlu0 %888
      %890 = vadd.xlane.f32.xlu0 %v831
      %v891 = vpop.xlane.xlu0 %890
      %892 = vadd.xlane.f32.xlu0 %v836
      %v893 = vpop.xlane.xlu0 %892
      %894 = vadd.xlane.f32.xlu0 %v839
      %v895 = vpop.xlane.xlu0 %894
      %896 = vadd.xlane.f32.xlu0 %v844
      %v897 = vpop.xlane.xlu0 %896
      %898 = vadd.xlane.f32.xlu0 %v847
      %v899 = vpop.xlane.xlu0 %898
      %900 = vadd.xlane.f32.xlu0 %v852
      %v901 = vpop.xlane.xlu0 %900
      %902 = vadd.xlane.f32.xlu0 %v855
      %v903 = vpop.xlane.xlu0 %902
      %904 = vadd.xlane.f32.xlu0 %v860
      %v905 = vpop.xlane.xlu0 %904
      %906 = vadd.xlane.f32.xlu0 %v863
      %v907 = vpop.xlane.xlu0 %906
      %908 = vadd.xlane.f32.xlu0 %v868
      %v909 = vpop.xlane.xlu0 %908
      %910 = vadd.xlane.f32.xlu0 %v871
      %v911 = vpop.xlane.xlu0 %910
      %912 = vadd.xlane.f32.xlu0 %v876
      %v913 = vpop.xlane.xlu0 %912
      %914 = vadd.xlane.f32.xlu0 %v879
      %v915 = vpop.xlane.xlu0 %914
      %v916 = vrcp.pop 128.0
      %v917 = vmul.f32 %v885, %v916
      %v918 = vmul.f32 %v887, %v916
      %v919 = vmul.f32 %v889, %v916
      %v920 = vmul.f32 %v891, %v916
      %v921 = vmul.f32 %v893, %v916
      %v922 = vmul.f32 %v895, %v916
      %v923 = vmul.f32 %v897, %v916
      %v924 = vmul.f32 %v899, %v916
      %v925 = vmul.f32 %v901, %v916
      %v926 = vmul.f32 %v903, %v916
      %v927 = vmul.f32 %v905, %v916
      %v928 = vmul.f32 %v907, %v916
      %v929 = vmul.f32 %v909, %v916
      %v930 = vmul.f32 %v911, %v916
      %v931 = vmul.f32 %v913, %v916
      %v932 = vmul.f32 %v915, %v916
      %v933 = vsub.f32 %v820, %v917
      %v934 = vsub.f32 %v823, %v918
      %v935 = vsub.f32 %v828, %v919
      %v936 = vsub.f32 %v831, %v920
      %v937 = vsub.f32 %v836, %v921
      %v938 = vsub.f32 %v839, %v922
      %v939 = vsub.f32 %v844, %v923
      %v940 = vsub.f32 %v847, %v924
      %v941 = vsub.f32 %v852, %v925
      %v942 = vsub.f32 %v855, %v926
      %v943 = vsub.f32 %v860, %v927
      %v944 = vsub.f32 %v863, %v928
      %v945 = vsub.f32 %v868, %v929
      %v946 = vsub.f32 %v871, %v930
      %v947 = vsub.f32 %v876, %v931
      %v948 = vsub.f32 %v879, %v932
      %v949 = vmul.f32 %v933, %v933
      %v950 = vmul.f32 %v934, %v934
      %v951 = vmul.f32 %v935, %v935
      %v952 = vmul.f32 %v936, %v936
      %v953 = vmul.f32 %v937, %v937
      %v954 = vmul.f32 %v938, %v938
      %v955 = vmul.f32 %v939, %v939
      %v956 = vmul.f32 %v940, %v940
      %v957 = vmul.f32 %v941, %v941
      %v958 = vmul.f32 %v942, %v942
      %v959 = vmul.f32 %v943, %v943
      %v960 = vmul.f32 %v944, %v944
      %v961 = vmul.f32 %v945, %v945
      %v962 = vmul.f32 %v946, %v946
      %v963 = vmul.f32 %v947, %v947
      %v964 = vmul.f32 %v948, %v948
      %965 = vadd.xlane.f32.xlu0 %v949
      %v966 = vpop.xlane.xlu0 %965
      %967 = vadd.xlane.f32.xlu0 %v950
      %v968 = vpop.xlane.xlu0 %967
      %969 = vadd.xlane.f32.xlu0 %v951
      %v970 = vpop.xlane.xlu0 %969
      %971 = vadd.xlane.f32.xlu0 %v952
      %v972 = vpop.xlane.xlu0 %971
      %973 = vadd.xlane.f32.xlu0 %v953
      %v974 = vpop.xlane.xlu0 %973
      %975 = vadd.xlane.f32.xlu0 %v954
      %v976 = vpop.xlane.xlu0 %975
      %977 = vadd.xlane.f32.xlu0 %v955
      %v978 = vpop.xlane.xlu0 %977
      %979 = vadd.xlane.f32.xlu0 %v956
      %v980 = vpop.xlane.xlu0 %979
      %981 = vadd.xlane.f32.xlu0 %v957
      %v982 = vpop.xlane.xlu0 %981
      %983 = vadd.xlane.f32.xlu0 %v958
      %v984 = vpop.xlane.xlu0 %983
      %985 = vadd.xlane.f32.xlu0 %v959
      %v986 = vpop.xlane.xlu0 %985
      %987 = vadd.xlane.f32.xlu0 %v960
      %v988 = vpop.xlane.xlu0 %987
      %989 = vadd.xlane.f32.xlu0 %v961
      %v990 = vpop.xlane.xlu0 %989
      %991 = vadd.xlane.f32.xlu0 %v962
      %v992 = vpop.xlane.xlu0 %991
      %993 = vadd.xlane.f32.xlu0 %v963
      %v994 = vpop.xlane.xlu0 %993
      %995 = vadd.xlane.f32.xlu0 %v964
      %v996 = vpop.xlane.xlu0 %995
      %v997 = vmul.f32 %v966, %v916
      %v998 = vmul.f32 %v968, %v916
      %v999 = vmul.f32 %v970, %v916
      %v1000 = vmul.f32 %v972, %v916
      %v1001 = vmul.f32 %v974, %v916
      %v1002 = vmul.f32 %v976, %v916
      %v1003 = vmul.f32 %v978, %v916
      %v1004 = vmul.f32 %v980, %v916
      %v1005 = vmul.f32 %v982, %v916
      %v1006 = vmul.f32 %v984, %v916
      %v1007 = vmul.f32 %v986, %v916
      %v1008 = vmul.f32 %v988, %v916
      %v1009 = vmul.f32 %v990, %v916
      %v1010 = vmul.f32 %v992, %v916
      %v1011 = vmul.f32 %v994, %v916
      %v1012 = vmul.f32 %v996, %v916
      %v1013 = vadd.f32 %v997, 1e-05
      %v1014 = vadd.f32 %v998, 1e-05
      %v1015 = vadd.f32 %v999, 1e-05
      %v1016 = vadd.f32 %v1000, 1e-05
      %v1017 = vadd.f32 %v1001, 1e-05
      %v1018 = vadd.f32 %v1002, 1e-05
      %v1019 = vadd.f32 %v1003, 1e-05
      %v1020 = vadd.f32 %v1004, 1e-05
      %v1021 = vadd.f32 %v1005, 1e-05
      %v1022 = vadd.f32 %v1006, 1e-05
      %v1023 = vadd.f32 %v1007, 1e-05
      %v1024 = vadd.f32 %v1008, 1e-05
      %v1025 = vadd.f32 %v1009, 1e-05
      %v1026 = vadd.f32 %v1010, 1e-05
      %v1027 = vadd.f32 %v1011, 1e-05
      %v1028 = vadd.f32 %v1012, 1e-05
      %v1029 = vrsqrt.pop %v1013
      %v1030 = vrsqrt.pop %v1014
      %v1031 = vrsqrt.pop %v1015
      %v1032 = vrsqrt.pop %v1016
      %v1033 = vrsqrt.pop %v1017
      %v1034 = vrsqrt.pop %v1018
      %v1035 = vrsqrt.pop %v1019
      %v1036 = vrsqrt.pop %v1020
      %v1037 = vrsqrt.pop %v1021
      %v1038 = vrsqrt.pop %v1022
      %v1039 = vrsqrt.pop %v1023
      %v1040 = vrsqrt.pop %v1024
      %v1041 = vrsqrt.pop %v1025
      %v1042 = vrsqrt.pop %v1026
      %v1043 = vrsqrt.pop %v1027
      %v1044 = vrsqrt.pop %v1028
      %v1045 = vmul.f32 %v933, %v1029
      %v1046 = vmul.f32 %v934, %v1030
      %v1047 = vmul.f32 %v935, %v1031
      %v1048 = vmul.f32 %v936, %v1032
      %v1049 = vmul.f32 %v937, %v1033
      %v1050 = vmul.f32 %v938, %v1034
      %v1051 = vmul.f32 %v939, %v1035
      %v1052 = vmul.f32 %v940, %v1036
      %v1053 = vmul.f32 %v941, %v1037
      %v1054 = vmul.f32 %v942, %v1038
      %v1055 = vmul.f32 %v943, %v1039
      %v1056 = vmul.f32 %v944, %v1040
      %v1057 = vmul.f32 %v945, %v1041
      %v1058 = vmul.f32 %v946, %v1042
      %v1059 = vmul.f32 %v947, %v1043
      %v1060 = vmul.f32 %v948, %v1044
      %v1062 = vlaneseq
      %v1063 = vshrl.u32 %v1062, 7
      %v1064 = vsub.s32 0, %v1063
      %v1065 = vrot.slane %v882, %v1064
      %v1067 = vmul.f32 %v1045, %v1065
      %v1068 = vmul.f32 %v1046, %v1065
      %v1069 = vmul.f32 %v1047, %v1065
      %v1070 = vmul.f32 %v1048, %v1065
      %v1071 = vmul.f32 %v1049, %v1065
      %v1072 = vmul.f32 %v1050, %v1065
      %v1073 = vmul.f32 %v1051, %v1065
      %v1074 = vmul.f32 %v1052, %v1065
      %v1075 = vmul.f32 %v1053, %v1065
      %v1076 = vmul.f32 %v1054, %v1065
      %v1077 = vmul.f32 %v1055, %v1065
      %v1078 = vmul.f32 %v1056, %v1065
      %v1079 = vmul.f32 %v1057, %v1065
      %v1080 = vmul.f32 %v1058, %v1065
      %v1081 = vmul.f32 %v1059, %v1065
      %v1082 = vmul.f32 %v1060, %v1065
      %v1084 = vlaneseq
      %v1085 = vshrl.u32 %v1084, 7
      %v1086 = vsub.s32 0, %v1085
      %v1087 = vrot.slane %v883, %v1086
      %v1089 = vadd.f32 %v1067, %v1087
      %v1090 = vadd.f32 %v1068, %v1087
      %v1091 = vadd.f32 %v1069, %v1087
      %v1092 = vadd.f32 %v1070, %v1087
      %v1093 = vadd.f32 %v1071, %v1087
      %v1094 = vadd.f32 %v1072, %v1087
      %v1095 = vadd.f32 %v1073, %v1087
      %v1096 = vadd.f32 %v1074, %v1087
      %v1097 = vadd.f32 %v1075, %v1087
      %v1098 = vadd.f32 %v1076, %v1087
      %v1099 = vadd.f32 %v1077, %v1087
      %v1100 = vadd.f32 %v1078, %v1087
      %v1101 = vadd.f32 %v1079, %v1087
      %v1102 = vadd.f32 %v1080, %v1087
      %v1103 = vadd.f32 %v1081, %v1087
      %v1104 = vadd.f32 %v1082, %v1087
      %v1105 = vpack.c.bf16 %v1090, %v1089
      %v1106 = vpack.c.bf16 %v1092, %v1091
      %v1107 = vpack.c.bf16 %v1094, %v1093
      %v1108 = vpack.c.bf16 %v1096, %v1095
      %v1109 = vpack.c.bf16 %v1098, %v1097
      %v1110 = vpack.c.bf16 %v1100, %v1099
      %v1111 = vpack.c.bf16 %v1102, %v1101
      %v1112 = vpack.c.bf16 %v1104, %v1103
      %v1121 = vunpack.c.l.b16 %v1105
      %v1122 = vunpack.c.h.b16 %v1105
      %v1123 = vunpack.c.l.b16 %v1106
      %v1124 = vunpack.c.h.b16 %v1106
      %v1125 = vunpack.c.l.b16 %v1107
      %v1126 = vunpack.c.h.b16 %v1107
      %v1127 = vunpack.c.l.b16 %v1108
      %v1128 = vunpack.c.h.b16 %v1108
      %v1129 = vunpack.c.l.b16 %v1109
      %v1130 = vunpack.c.h.b16 %v1109
      %v1131 = vunpack.c.l.b16 %v1110
      %v1132 = vunpack.c.h.b16 %v1110
      %v1133 = vunpack.c.l.b16 %v1111
      %v1134 = vunpack.c.h.b16 %v1111
      %v1135 = vunpack.c.l.b16 %v1112
      %v1136 = vunpack.c.h.b16 %v1112
      %v1137 = vpack.c.b16 %v1121, %v1121
      %v1138 = vpack.c.b16 %v1122, %v1122
      %v1139 = vpack.c.b16 %v1123, %v1123
      %v1140 = vpack.c.b16 %v1124, %v1124
      %v1141 = vpack.c.b16 %v1125, %v1125
      %v1142 = vpack.c.b16 %v1126, %v1126
      %v1143 = vpack.c.b16 %v1127, %v1127
      %v1144 = vpack.c.b16 %v1128, %v1128
      %v1145 = vpack.c.b16 %v1129, %v1129
      %v1146 = vpack.c.b16 %v1130, %v1130
      %v1147 = vpack.c.b16 %v1131, %v1131
      %v1148 = vpack.c.b16 %v1132, %v1132
      %v1149 = vpack.c.b16 %v1133, %v1133
      %v1150 = vpack.c.b16 %v1134, %v1134
      %v1151 = vpack.c.b16 %v1135, %v1135
      %v1152 = vpack.c.b16 %v1136, %v1136
      %1169 = vst [vmem:[%s334] sm:$0xf] %v1137
      %1170 = vst [vmem:[%s334 + $0x4] sm:$0xf] %v1138
      %1171 = vst [vmem:[%s334 + $0x8] sm:$0xf] %v1139
      %1172 = vst [vmem:[%s334 + $0xc] sm:$0xf] %v1140
      %1173 = vst [vmem:[%s334 + $0x10] sm:$0xf] %v1141
      %1174 = vst [vmem:[%s334 + $0x14] sm:$0xf] %v1142
      %1175 = vst [vmem:[%s334 + $0x18] sm:$0xf] %v1143
      %1176 = vst [vmem:[%s334 + $0x1c] sm:$0xf] %v1144
      %1177 = vst [vmem:[%s334 + $0x20] sm:$0xf] %v1145
      %1178 = vst [vmem:[%s334 + $0x24] sm:$0xf] %v1146
      %1179 = vst [vmem:[%s334 + $0x28] sm:$0xf] %v1147
      %1180 = vst [vmem:[%s334 + $0x2c] sm:$0xf] %v1148
      %1181 = vst [vmem:[%s334 + $0x30] sm:$0xf] %v1149
      %1182 = vst [vmem:[%s334 + $0x34] sm:$0xf] %v1150
      %1183 = vst [vmem:[%s334 + $0x38] sm:$0xf] %v1151
      %1184 = vst [vmem:[%s334 + $0x3c] sm:$0xf] %v1152
      %s1185 = smul.u32 16, %s20
      %p1186 = scmp.lt.s32.totalorder %s1185, 31
      %s1187 = scalar_select %p1186, %s1185, 31
      %s1188 = smul.addr %s1187, 4
      %s1189 = scalar_lea.vmem %s9, %s1188
      // Predicated region
      $region57: #{meshgraphnet_forward.8} parent=55 // pred_check
        %p1190 = pneg %p232
      $region58: #{meshgraphnet_forward.8} parent=55 // pred_check_branch
        %1192 = sbr.rel (%p1190) target = $region60
      $region59: #{meshgraphnet_forward.8} parent=55 // pred_region
        %s1193 = smul.u32 16, %s20
      $region60: #{meshgraphnet_forward.8} parent=55 // pred_fallthru
        _
    $region56: #{meshgraphnet_forward.8} parent=5 // pred_fallthru
      _
    %p1194 = scmp.le.s32.totalorder 2, %s15
    // Predicated region
    $region61: #{meshgraphnet_forward.8} parent=5 // pred_check
      %p1195 = pneg %p1194
    $region62: #{meshgraphnet_forward.8} parent=5 // pred_check_branch
      %1197 = sbr.rel (%p1195) target = $region64
    $region63: #{meshgraphnet_forward.8} parent=5 // pred_region
      %s1198 = ssub.s32 %s15, 2
      // Predicated region
      $region65: #{meshgraphnet_forward.8} parent=63 // pred_check
        %p1199 = pneg %p238
      $region66: #{meshgraphnet_forward.8} parent=63 // pred_check_branch
        %1201 = sbr.rel (%p1199) target = $region68
      $region67: #{meshgraphnet_forward.8} parent=63 // pred_region
        %s1202 = smul.u32 16, %s21
        %p1203 = scmp.lt.s32.totalorder %s1202, 31
        %s1204 = scalar_select %p1203, %s1202, 31
        %s1205 = smul.addr %s1204, 4
        %s1206 = scalar_lea.vmem %s9, %s1205
      $region68: #{meshgraphnet_forward.8} parent=63 // pred_fallthru
        _
    $region64: #{meshgraphnet_forward.8} parent=5 // pred_fallthru
      _
  $region6: #{meshgraphnet_forward.8} parent=0 // loop_footer
    %s19 = sadd.s32 1, %s15
  $region7: #{meshgraphnet_forward.8} parent=0 // loop_footer_branch
    %14 = sbr.rel target = $region3
  $region8: #{meshgraphnet_forward.8} parent=0 // loop_exit
    _

// kernel: meshgraphnet_forward.7
$region0: #{meshgraphnet_forward.7}
  #allocation0 [shape = 'u32[]', space=smem, size = 0x4, offset = 0x4, fixed_abs, tag = 'smem constant byte address 0x4 - core index']
  #allocation1 [shape = 'u32[144,128]{1,0:T(1,128)}', space=vmem, size = 0x12000, scoped, tag = 'internal scratch']
  %s0 = inlined_call_operand.vmem [shape: f32[1024,16], index: 0, kind: input, shape index: {}]
  %s1 = inlined_call_operand.vmem [shape: bf16[16,128], index: 1, kind: input, shape index: {}]
  %s2 = inlined_call_operand.vmem [shape: f32[1,128], index: 2, kind: input, shape index: {}]
  %s3 = inlined_call_operand.vmem [shape: bf16[128,128], index: 3, kind: input, shape index: {}]
  %s4 = inlined_call_operand.vmem [shape: f32[1,128], index: 4, kind: input, shape index: {}]
  %s5 = inlined_call_operand.vmem [shape: bf16[128,128], index: 5, kind: input, shape index: {}]
  %s6 = inlined_call_operand.vmem [shape: f32[1,128], index: 6, kind: input, shape index: {}]
  %s7 = inlined_call_operand.vmem [shape: f32[1,128], index: 7, kind: input, shape index: {}]
  %s8 = inlined_call_operand.vmem [shape: f32[1,128], index: 8, kind: input, shape index: {}]
  %s9 = inlined_call_operand.vmem [shape: bf16[1024,128], index: 9, kind: output, shape index: {}]
  %s10 = sld [smem:[#allocation0]]
  $region69: #{meshgraphnet_forward.7} parent=0
    _
  %s12 = ssub.s32 1, %s10
  %s13 = scalar_select 0, %s12, %s10
  loop: start=0, step=1, limit=4
  $region2: #{meshgraphnet_forward.7} parent=0 // loop_pre_header
    _
  $region3: #{meshgraphnet_forward.7} parent=0 // loop_header
    %s15 = sphi 0, %s19
    %p16 = scmp.ge.s32.totalorder %s15, 4
    %s25 = sphi 0, %s27
    %s28 = sphi 0, %s25
    %s29 = sphi 0, %s28
    %s45 = sphi 0, %s29
    %s49 = sphi 0, %s49
    %s51 = sphi 0, %s49
    %s52 = sphi 0, %s51
    %s66 = sphi 0, %s52
    %s70 = sphi 0, %s70
    %s72 = sphi 0, %s70
    %s73 = sphi 0, %s72
    %s87 = sphi 0, %s73
    %s91 = sphi 0, %s91
    %s93 = sphi 0, %s91
    %s94 = sphi 0, %s93
    %s108 = sphi 0, %s94
    %s112 = sphi 0, %s112
    %s114 = sphi 0, %s112
    %s115 = sphi 0, %s114
    %s129 = sphi 0, %s115
    %s133 = sphi 0, %s133
    %s135 = sphi 0, %s133
    %s136 = sphi 0, %s135
    %s150 = sphi 0, %s136
    %s154 = sphi 0, %s154
    %s156 = sphi 0, %s154
    %s157 = sphi 0, %s156
    %s171 = sphi 0, %s157
    %s175 = sphi 0, %s175
    %s177 = sphi 0, %s175
    %s178 = sphi 0, %s177
    %s192 = sphi 0, %s178
    %s196 = sphi 0, %s196
    %s198 = sphi 0, %s196
    %s199 = sphi 0, %s198
    %s213 = sphi 0, %s199
    %s219 = sphi 0, %s221
    %s222 = sphi 0, %s219
    %s223 = sphi 0, %s222
    %s239 = sphi 0, %s223
  $region4: #{meshgraphnet_forward.7} parent=0 // loop_header_branch
    %18 = sbr.rel (%p16) target = $region8
  $region5: #{meshgraphnet_forward.7} parent=0 // loop_body
    %s20 = ssub.s32 %s15, 1
    %s21 = ssub.s32 %s15, 2
    %s22 = sadd.s32 %s15, 1
    %s23 = ssub.s32 %s15, %s22
    %p24 = scmp.eq.s32.totalorder %s23, 0
    %s26 = sadd.s32 %s25, 1
    %s27 = scalar_select %p24, %s25, %s26
    %p30 = pneg %p24
    %p31 = scmp.eq.s32.totalorder %s15, 1
    %p32 = por %p30, %p31
    %p33 = scmp.ne.s32.totalorder %s25, %s28
    %p34 = scmp.eq.s32.totalorder %s15, 0
    %p35 = por %p33, %p34
    %p36 = scmp.ne.s32.totalorder %s25, %s28
    %p37 = scmp.eq.s32.totalorder %s20, 1
    %p38 = por %p36, %p37
    %p39 = scmp.ne.s32.totalorder %s28, %s29
    %p40 = scmp.eq.s32.totalorder %s20, 0
    %p41 = por %p39, %p40
    %p42 = scmp.ne.s32.totalorder %s28, %s29
    %p43 = scmp.eq.s32.totalorder %s21, 1
    %p44 = por %p42, %p43
    %p46 = scmp.ne.s32.totalorder %s29, %s45
    %p47 = scmp.eq.s32.totalorder %s21, 0
    %p48 = por %p46, %p47
    %s50 = sadd.s32 %s49, 1
    %p53 = scmp.eq.s32.totalorder %s15, 1
    %p54 = scmp.ne.s32.totalorder %s49, %s51
    %p55 = scmp.eq.s32.totalorder %s15, 0
    %p56 = por %p54, %p55
    %p57 = scmp.ne.s32.totalorder %s49, %s51
    %p58 = scmp.eq.s32.totalorder %s20, 1
    %p59 = por %p57, %p58
    %p60 = scmp.ne.s32.totalorder %s51, %s52
    %p61 = scmp.eq.s32.totalorder %s20, 0
    %p62 = por %p60, %p61
    %p63 = scmp.ne.s32.totalorder %s51, %s52
    %p64 = scmp.eq.s32.totalorder %s21, 1
    %p65 = por %p63, %p64
    %p67 = scmp.ne.s32.totalorder %s52, %s66
    %p68 = scmp.eq.s32.totalorder %s21, 0
    %p69 = por %p67, %p68
    %s71 = sadd.s32 %s70, 1
    %p74 = scmp.eq.s32.totalorder %s15, 1
    %p75 = scmp.ne.s32.totalorder %s70, %s72
    %p76 = scmp.eq.s32.totalorder %s15, 0
    %p77 = por %p75, %p76
    %p78 = scmp.ne.s32.totalorder %s70, %s72
    %p79 = scmp.eq.s32.totalorder %s20, 1
    %p80 = por %p78, %p79
    %p81 = scmp.ne.s32.totalorder %s72, %s73
    %p82 = scmp.eq.s32.totalorder %s20, 0
    %p83 = por %p81, %p82
    %p84 = scmp.ne.s32.totalorder %s72, %s73
    %p85 = scmp.eq.s32.totalorder %s21, 1
    %p86 = por %p84, %p85
    %p88 = scmp.ne.s32.totalorder %s73, %s87
    %p89 = scmp.eq.s32.totalorder %s21, 0
    %p90 = por %p88, %p89
    %s92 = sadd.s32 %s91, 1
    %p95 = scmp.eq.s32.totalorder %s15, 1
    %p96 = scmp.ne.s32.totalorder %s91, %s93
    %p97 = scmp.eq.s32.totalorder %s15, 0
    %p98 = por %p96, %p97
    %p99 = scmp.ne.s32.totalorder %s91, %s93
    %p100 = scmp.eq.s32.totalorder %s20, 1
    %p101 = por %p99, %p100
    %p102 = scmp.ne.s32.totalorder %s93, %s94
    %p103 = scmp.eq.s32.totalorder %s20, 0
    %p104 = por %p102, %p103
    %p105 = scmp.ne.s32.totalorder %s93, %s94
    %p106 = scmp.eq.s32.totalorder %s21, 1
    %p107 = por %p105, %p106
    %p109 = scmp.ne.s32.totalorder %s94, %s108
    %p110 = scmp.eq.s32.totalorder %s21, 0
    %p111 = por %p109, %p110
    %s113 = sadd.s32 %s112, 1
    %p116 = scmp.eq.s32.totalorder %s15, 1
    %p117 = scmp.ne.s32.totalorder %s112, %s114
    %p118 = scmp.eq.s32.totalorder %s15, 0
    %p119 = por %p117, %p118
    %p120 = scmp.ne.s32.totalorder %s112, %s114
    %p121 = scmp.eq.s32.totalorder %s20, 1
    %p122 = por %p120, %p121
    %p123 = scmp.ne.s32.totalorder %s114, %s115
    %p124 = scmp.eq.s32.totalorder %s20, 0
    %p125 = por %p123, %p124
    %p126 = scmp.ne.s32.totalorder %s114, %s115
    %p127 = scmp.eq.s32.totalorder %s21, 1
    %p128 = por %p126, %p127
    %p130 = scmp.ne.s32.totalorder %s115, %s129
    %p131 = scmp.eq.s32.totalorder %s21, 0
    %p132 = por %p130, %p131
    %s134 = sadd.s32 %s133, 1
    %p137 = scmp.eq.s32.totalorder %s15, 1
    %p138 = scmp.ne.s32.totalorder %s133, %s135
    %p139 = scmp.eq.s32.totalorder %s15, 0
    %p140 = por %p138, %p139
    %p141 = scmp.ne.s32.totalorder %s133, %s135
    %p142 = scmp.eq.s32.totalorder %s20, 1
    %p143 = por %p141, %p142
    %p144 = scmp.ne.s32.totalorder %s135, %s136
    %p145 = scmp.eq.s32.totalorder %s20, 0
    %p146 = por %p144, %p145
    %p147 = scmp.ne.s32.totalorder %s135, %s136
    %p148 = scmp.eq.s32.totalorder %s21, 1
    %p149 = por %p147, %p148
    %p151 = scmp.ne.s32.totalorder %s136, %s150
    %p152 = scmp.eq.s32.totalorder %s21, 0
    %p153 = por %p151, %p152
    %s155 = sadd.s32 %s154, 1
    %p158 = scmp.eq.s32.totalorder %s15, 1
    %p159 = scmp.ne.s32.totalorder %s154, %s156
    %p160 = scmp.eq.s32.totalorder %s15, 0
    %p161 = por %p159, %p160
    %p162 = scmp.ne.s32.totalorder %s154, %s156
    %p163 = scmp.eq.s32.totalorder %s20, 1
    %p164 = por %p162, %p163
    %p165 = scmp.ne.s32.totalorder %s156, %s157
    %p166 = scmp.eq.s32.totalorder %s20, 0
    %p167 = por %p165, %p166
    %p168 = scmp.ne.s32.totalorder %s156, %s157
    %p169 = scmp.eq.s32.totalorder %s21, 1
    %p170 = por %p168, %p169
    %p172 = scmp.ne.s32.totalorder %s157, %s171
    %p173 = scmp.eq.s32.totalorder %s21, 0
    %p174 = por %p172, %p173
    %s176 = sadd.s32 %s175, 1
    %p179 = scmp.eq.s32.totalorder %s15, 1
    %p180 = scmp.ne.s32.totalorder %s175, %s177
    %p181 = scmp.eq.s32.totalorder %s15, 0
    %p182 = por %p180, %p181
    %p183 = scmp.ne.s32.totalorder %s175, %s177
    %p184 = scmp.eq.s32.totalorder %s20, 1
    %p185 = por %p183, %p184
    %p186 = scmp.ne.s32.totalorder %s177, %s178
    %p187 = scmp.eq.s32.totalorder %s20, 0
    %p188 = por %p186, %p187
    %p189 = scmp.ne.s32.totalorder %s177, %s178
    %p190 = scmp.eq.s32.totalorder %s21, 1
    %p191 = por %p189, %p190
    %p193 = scmp.ne.s32.totalorder %s178, %s192
    %p194 = scmp.eq.s32.totalorder %s21, 0
    %p195 = por %p193, %p194
    %s197 = sadd.s32 %s196, 1
    %p200 = scmp.eq.s32.totalorder %s15, 1
    %p201 = scmp.ne.s32.totalorder %s196, %s198
    %p202 = scmp.eq.s32.totalorder %s15, 0
    %p203 = por %p201, %p202
    %p204 = scmp.ne.s32.totalorder %s196, %s198
    %p205 = scmp.eq.s32.totalorder %s20, 1
    %p206 = por %p204, %p205
    %p207 = scmp.ne.s32.totalorder %s198, %s199
    %p208 = scmp.eq.s32.totalorder %s20, 0
    %p209 = por %p207, %p208
    %p210 = scmp.ne.s32.totalorder %s198, %s199
    %p211 = scmp.eq.s32.totalorder %s21, 1
    %p212 = por %p210, %p211
    %p214 = scmp.ne.s32.totalorder %s199, %s213
    %p215 = scmp.eq.s32.totalorder %s21, 0
    %p216 = por %p214, %p215
    %s217 = ssub.s32 %s15, %s22
    %p218 = scmp.eq.s32.totalorder %s217, 0
    %s220 = sadd.s32 %s219, 1
    %s221 = scalar_select %p218, %s219, %s220
    %p224 = pneg %p218
    %p225 = scmp.eq.s32.totalorder %s15, 1
    %p226 = por %p224, %p225
    %p227 = scmp.ne.s32.totalorder %s219, %s222
    %p228 = scmp.eq.s32.totalorder %s15, 0
    %p229 = por %p227, %p228
    %p230 = scmp.ne.s32.totalorder %s219, %s222
    %p231 = scmp.eq.s32.totalorder %s20, 1
    %p232 = por %p230, %p231
    %p233 = scmp.ne.s32.totalorder %s222, %s223
    %p234 = scmp.eq.s32.totalorder %s20, 0
    %p235 = por %p233, %p234
    %p236 = scmp.ne.s32.totalorder %s222, %s223
    %p237 = scmp.eq.s32.totalorder %s21, 1
    %p238 = por %p236, %p237
    %p240 = scmp.ne.s32.totalorder %s223, %s239
    %p241 = scmp.eq.s32.totalorder %s21, 0
    %p242 = por %p240, %p241
    %p243 = scmp.le.s32.totalorder 1, %s15
    %p244 = scmp.lt.s32.totalorder %s15, 3
    %p245 = pnand %p243, %p244
    %p246 = pneg %p245
    // Predicated region
    $region9: #{meshgraphnet_forward.7} parent=5 // pred_check
      _
    $region10: #{meshgraphnet_forward.7} parent=5 // pred_check_branch
      %248 = sbr.rel (%p245) target = $region12
    $region11: #{meshgraphnet_forward.7} parent=5 // pred_region
      %s249 = ssub.s32 %s15, 1
      // Predicated region
      $region13: #{meshgraphnet_forward.7} parent=11 // pred_check
        %p250 = pneg %p62
      $region14: #{meshgraphnet_forward.7} parent=11 // pred_check_branch
        %252 = sbr.rel (%p250) target = $region16
      $region15: #{meshgraphnet_forward.7} parent=11 // pred_region
        _
      $region16: #{meshgraphnet_forward.7} parent=11 // pred_fallthru
        _
      // Predicated region
      $region17: #{meshgraphnet_forward.7} parent=11 // pred_check
        %p253 = pneg %p83
      $region18: #{meshgraphnet_forward.7} parent=11 // pred_check_branch
        %255 = sbr.rel (%p253) target = $region20
      $region19: #{meshgraphnet_forward.7} parent=11 // pred_region
        _
      $region20: #{meshgraphnet_forward.7} parent=11 // pred_fallthru
        _
      // Predicated region
      $region21: #{meshgraphnet_forward.7} parent=11 // pred_check
        %p256 = pneg %p104
      $region22: #{meshgraphnet_forward.7} parent=11 // pred_check_branch
        %258 = sbr.rel (%p256) target = $region24
      $region23: #{meshgraphnet_forward.7} parent=11 // pred_region
        _
      $region24: #{meshgraphnet_forward.7} parent=11 // pred_fallthru
        _
      // Predicated region
      $region25: #{meshgraphnet_forward.7} parent=11 // pred_check
        %p259 = pneg %p125
      $region26: #{meshgraphnet_forward.7} parent=11 // pred_check_branch
        %261 = sbr.rel (%p259) target = $region28
      $region27: #{meshgraphnet_forward.7} parent=11 // pred_region
        _
      $region28: #{meshgraphnet_forward.7} parent=11 // pred_fallthru
        _
      // Predicated region
      $region29: #{meshgraphnet_forward.7} parent=11 // pred_check
        %p262 = pneg %p146
      $region30: #{meshgraphnet_forward.7} parent=11 // pred_check_branch
        %264 = sbr.rel (%p262) target = $region32
      $region31: #{meshgraphnet_forward.7} parent=11 // pred_region
        _
      $region32: #{meshgraphnet_forward.7} parent=11 // pred_fallthru
        _
      // Predicated region
      $region33: #{meshgraphnet_forward.7} parent=11 // pred_check
        %p265 = pneg %p167
      $region34: #{meshgraphnet_forward.7} parent=11 // pred_check_branch
        %267 = sbr.rel (%p265) target = $region36
      $region35: #{meshgraphnet_forward.7} parent=11 // pred_region
        _
      $region36: #{meshgraphnet_forward.7} parent=11 // pred_fallthru
        _
      // Predicated region
      $region37: #{meshgraphnet_forward.7} parent=11 // pred_check
        %p268 = pneg %p188
      $region38: #{meshgraphnet_forward.7} parent=11 // pred_check_branch
        %270 = sbr.rel (%p268) target = $region40
      $region39: #{meshgraphnet_forward.7} parent=11 // pred_region
        _
      $region40: #{meshgraphnet_forward.7} parent=11 // pred_fallthru
        _
      // Predicated region
      $region41: #{meshgraphnet_forward.7} parent=11 // pred_check
        %p271 = pneg %p209
      $region42: #{meshgraphnet_forward.7} parent=11 // pred_check_branch
        %273 = sbr.rel (%p271) target = $region44
      $region43: #{meshgraphnet_forward.7} parent=11 // pred_region
        _
      $region44: #{meshgraphnet_forward.7} parent=11 // pred_fallthru
        _
    $region12: #{meshgraphnet_forward.7} parent=5 // pred_fallthru
      _
    %p274 = scmp.lt.s32.totalorder %s15, 2
    // Predicated region
    $region45: #{meshgraphnet_forward.7} parent=5 // pred_check
      %p275 = pneg %p274
    $region46: #{meshgraphnet_forward.7} parent=5 // pred_check_branch
      %277 = sbr.rel (%p275) target = $region48
    $region47: #{meshgraphnet_forward.7} parent=5 // pred_region
      // Predicated region
      $region49: #{meshgraphnet_forward.7} parent=47 // pred_check
        %p278 = pneg %p35
      $region50: #{meshgraphnet_forward.7} parent=47 // pred_check_branch
        %280 = sbr.rel (%p278) target = $region52
      $region51: #{meshgraphnet_forward.7} parent=47 // pred_region
        %s281 = smul.u32 64, %s15
        %p282 = scmp.lt.s32.totalorder %s281, 127
        %s283 = scalar_select %p282, %s281, 127
        %s284 = smul.addr %s283, 8
        %s285 = scalar_lea.vmem %s0, %s284
        %s286 = smul.u32 64, %s15
      $region52: #{meshgraphnet_forward.7} parent=47 // pred_fallthru
        _
    $region48: #{meshgraphnet_forward.7} parent=5 // pred_fallthru
      _
    %p287 = scmp.le.s32.totalorder 1, %s15
    %p288 = scmp.lt.s32.totalorder %s15, 3
    %p289 = pnand %p287, %p288
    %p290 = pneg %p289
    // Predicated region
    $region53: #{meshgraphnet_forward.7} parent=5 // pred_check
      _
    $region54: #{meshgraphnet_forward.7} parent=5 // pred_check_branch
      %292 = sbr.rel (%p289) target = $region56
    $region55: #{meshgraphnet_forward.7} parent=5 // pred_region
      %s293 = ssub.s32 %s15, 1
      %s294 = smul.u32 64, %s20
      %p295 = scmp.lt.s32.totalorder %s294, 127
      %s296 = scalar_select %p295, %s294, 127
      %s297 = smul.addr %s296, 8
      %s298 = scalar_lea.vmem %s0, %s297
      %p299 = pneg %p41
      %p300 = pneg %p38
      %p301 = pneg %p62
      %p302 = pneg %p59
      %p303 = pneg %p83
      %p304 = pneg %p80
      %p305 = pneg %p104
      %p306 = pneg %p101
      %p307 = pneg %p125
      %p308 = pneg %p122
      %p309 = pneg %p146
      %p310 = pneg %p143
      %p311 = pneg %p167
      %p312 = pneg %p164
      %p313 = pneg %p188
      %p314 = pneg %p185
      %p315 = pneg %p209
      %p316 = pneg %p206
      %p317 = pneg %p235
      %p318 = pneg %p232
      %s319 = smul.u32 64, %s20
      %p320 = scmp.lt.s32.totalorder %s319, 127
      %s321 = scalar_select %p320, %s319, 127
      %s322 = smul.addr %s321, 4
      %s323 = scalar_lea.vmem %s9, %s322
      %s324 = smul.u32 64, %s20
      %p325 = scmp.lt.s32.totalorder %s324, 127
      %s326 = scalar_select %p325, %s324, 127
      %s327 = smul.addr %s326, 8
      %s328 = scalar_lea.vmem %s0, %s327
      %s329 = smul.u32 64, %s20
      %s330 = smul.u32 64, %s20
      %p331 = scmp.lt.s32.totalorder %s330, 127
      %s332 = scalar_select %p331, %s330, 127
      %s333 = smul.addr %s332, 4
      %s334 = scalar_lea.vmem %s9, %s333
      %s335 = smul.u32 64, %s20
      %v337 = vld [vmem:[%s328] sm:$0xff]
      %v338 = vld [vmem:[%s328 + $0x8] sm:$0xff]
      %v339 = vld [vmem:[%s328 + $0x10] sm:$0xff]
      %v340 = vld [vmem:[%s328 + $0x18] sm:$0xff]
      %v341 = vld [vmem:[%s328 + $0x20] sm:$0xff]
      %v342 = vld [vmem:[%s328 + $0x28] sm:$0xff]
      %v343 = vld [vmem:[%s328 + $0x30] sm:$0xff]
      %v344 = vld [vmem:[%s328 + $0x38] sm:$0xff]
      %v345 = vld [vmem:[%s328 + $0x40] sm:$0xff]
      %v346 = vld [vmem:[%s328 + $0x48] sm:$0xff]
      %v347 = vld [vmem:[%s328 + $0x50] sm:$0xff]
      %v348 = vld [vmem:[%s328 + $0x58] sm:$0xff]
      %v349 = vld [vmem:[%s328 + $0x60] sm:$0xff]
      %v350 = vld [vmem:[%s328 + $0x68] sm:$0xff]
      %v351 = vld [vmem:[%s328 + $0x70] sm:$0xff]
      %v352 = vld [vmem:[%s328 + $0x78] sm:$0xff]
      %v353 = vld [vmem:[%s328 + $0x80] sm:$0xff]
      %v354 = vld [vmem:[%s328 + $0x88] sm:$0xff]
      %v355 = vld [vmem:[%s328 + $0x90] sm:$0xff]
      %v356 = vld [vmem:[%s328 + $0x98] sm:$0xff]
      %v357 = vld [vmem:[%s328 + $0xa0] sm:$0xff]
      %v358 = vld [vmem:[%s328 + $0xa8] sm:$0xff]
      %v359 = vld [vmem:[%s328 + $0xb0] sm:$0xff]
      %v360 = vld [vmem:[%s328 + $0xb8] sm:$0xff]
      %v361 = vld [vmem:[%s328 + $0xc0] sm:$0xff]
      %v362 = vld [vmem:[%s328 + $0xc8] sm:$0xff]
      %v363 = vld [vmem:[%s328 + $0xd0] sm:$0xff]
      %v364 = vld [vmem:[%s328 + $0xd8] sm:$0xff]
      %v365 = vld [vmem:[%s328 + $0xe0] sm:$0xff]
      %v366 = vld [vmem:[%s328 + $0xe8] sm:$0xff]
      %v367 = vld [vmem:[%s328 + $0xf0] sm:$0xff]
      %v368 = vld [vmem:[%s328 + $0xf8] sm:$0xff]
      %v369 = vld [vmem:[%s328 + $0x100] sm:$0xff]
      %v370 = vld [vmem:[%s328 + $0x108] sm:$0xff]
      %v371 = vld [vmem:[%s328 + $0x110] sm:$0xff]
      %v372 = vld [vmem:[%s328 + $0x118] sm:$0xff]
      %v373 = vld [vmem:[%s328 + $0x120] sm:$0xff]
      %v374 = vld [vmem:[%s328 + $0x128] sm:$0xff]
      %v375 = vld [vmem:[%s328 + $0x130] sm:$0xff]
      %v376 = vld [vmem:[%s328 + $0x138] sm:$0xff]
      %v377 = vld [vmem:[%s328 + $0x140] sm:$0xff]
      %v378 = vld [vmem:[%s328 + $0x148] sm:$0xff]
      %v379 = vld [vmem:[%s328 + $0x150] sm:$0xff]
      %v380 = vld [vmem:[%s328 + $0x158] sm:$0xff]
      %v381 = vld [vmem:[%s328 + $0x160] sm:$0xff]
      %v382 = vld [vmem:[%s328 + $0x168] sm:$0xff]
      %v383 = vld [vmem:[%s328 + $0x170] sm:$0xff]
      %v384 = vld [vmem:[%s328 + $0x178] sm:$0xff]
      %v385 = vld [vmem:[%s328 + $0x180] sm:$0xff]
      %v386 = vld [vmem:[%s328 + $0x188] sm:$0xff]
      %v387 = vld [vmem:[%s328 + $0x190] sm:$0xff]
      %v388 = vld [vmem:[%s328 + $0x198] sm:$0xff]
      %v389 = vld [vmem:[%s328 + $0x1a0] sm:$0xff]
      %v390 = vld [vmem:[%s328 + $0x1a8] sm:$0xff]
      %v391 = vld [vmem:[%s328 + $0x1b0] sm:$0xff]
      %v392 = vld [vmem:[%s328 + $0x1b8] sm:$0xff]
      %v393 = vld [vmem:[%s328 + $0x1c0] sm:$0xff]
      %v394 = vld [vmem:[%s328 + $0x1c8] sm:$0xff]
      %v395 = vld [vmem:[%s328 + $0x1d0] sm:$0xff]
      %v396 = vld [vmem:[%s328 + $0x1d8] sm:$0xff]
      %v397 = vld [vmem:[%s328 + $0x1e0] sm:$0xff]
      %v398 = vld [vmem:[%s328 + $0x1e8] sm:$0xff]
      %v399 = vld [vmem:[%s328 + $0x1f0] sm:$0xff]
      %v400 = vld [vmem:[%s328 + $0x1f8] sm:$0xff]
      %v401 = vld [vmem:[%s1] sm:$0xf]
      %v402 = vld [vmem:[%s1 + $0x4] sm:$0xf]
      %v403 = vpack.c.bf16 %v338, %v337
      %v404 = vpack.c.bf16 %v340, %v339
      %v405 = vpack.c.bf16 %v342, %v341
      %v406 = vpack.c.bf16 %v344, %v343
      %v407 = vpack.c.bf16 %v346, %v345
      %v408 = vpack.c.bf16 %v348, %v347
      %v409 = vpack.c.bf16 %v350, %v349
      %v410 = vpack.c.bf16 %v352, %v351
      %v411 = vpack.c.bf16 %v354, %v353
      %v412 = vpack.c.bf16 %v356, %v355
      %v413 = vpack.c.bf16 %v358, %v357
      %v414 = vpack.c.bf16 %v360, %v359
      %v415 = vpack.c.bf16 %v362, %v361
      %v416 = vpack.c.bf16 %v364, %v363
      %v417 = vpack.c.bf16 %v366, %v365
      %v418 = vpack.c.bf16 %v368, %v367
      %v419 = vpack.c.bf16 %v370, %v369
      %v420 = vpack.c.bf16 %v372, %v371
      %v421 = vpack.c.bf16 %v374, %v373
      %v422 = vpack.c.bf16 %v376, %v375
      %v423 = vpack.c.bf16 %v378, %v377
      %v424 = vpack.c.bf16 %v380, %v379
      %v425 = vpack.c.bf16 %v382, %v381
      %v426 = vpack.c.bf16 %v384, %v383
      %v427 = vpack.c.bf16 %v386, %v385
      %v428 = vpack.c.bf16 %v388, %v387
      %v429 = vpack.c.bf16 %v390, %v389
      %v430 = vpack.c.bf16 %v392, %v391
      %v431 = vpack.c.bf16 %v394, %v393
      %v432 = vpack.c.bf16 %v396, %v395
      %v433 = vpack.c.bf16 %v398, %v397
      %v434 = vpack.c.bf16 %v400, %v399
      %v435 = vld [vmem:[%s2] sm:$0x1]
      %v437 = vlaneseq
      %v438 = vshrl.u32 %v437, 7
      %v439 = vsub.s32 0, %v438
      %v440 = vrot.slane %v435, %v439
      %v444 = vunpack.c.l.b16 %v401
      %v445 = vunpack.c.l.b16 %v402
      %v446 = vpack.c.b16 %v445, %v444
      %vm448 = vcmask 130048
      %v450 = vsel %vm448, %v403, 0
      %v453 = vsel %vm448, %v404, 0
      %v456 = vsel %vm448, %v405, 0
      %v459 = vsel %vm448, %v406, 0
      %v462 = vsel %vm448, %v407, 0
      %v465 = vsel %vm448, %v408, 0
      %v468 = vsel %vm448, %v409, 0
      %v471 = vsel %vm448, %v410, 0
      %v474 = vsel %vm448, %v411, 0
      %v477 = vsel %vm448, %v412, 0
      %v480 = vsel %vm448, %v413, 0
      %v483 = vsel %vm448, %v414, 0
      %v486 = vsel %vm448, %v415, 0
      %v489 = vsel %vm448, %v416, 0
      %v492 = vsel %vm448, %v417, 0
      %v495 = vsel %vm448, %v418, 0
      %v498 = vsel %vm448, %v419, 0
      %v501 = vsel %vm448, %v420, 0
      %v504 = vsel %vm448, %v421, 0
      %v507 = vsel %vm448, %v422, 0
      %v510 = vsel %vm448, %v423, 0
      %v513 = vsel %vm448, %v424, 0
      %v516 = vsel %vm448, %v425, 0
      %v519 = vsel %vm448, %v426, 0
      %v522 = vsel %vm448, %v427, 0
      %v525 = vsel %vm448, %v428, 0
      %v528 = vsel %vm448, %v429, 0
      %v531 = vsel %vm448, %v430, 0
      %v534 = vsel %vm448, %v431, 0
      %v537 = vsel %vm448, %v432, 0
      %v540 = vsel %vm448, %v433, 0
      %v543 = vsel %vm448, %v434, 0
      %545 = vmatprep.subr.bf16.mxu0 0
      %546 = vmatpush1.bf16.msra.mxu0 %v446
      %547 = vmatprep.subr.bf16.mxu0 0
      %548 = vmatpush1.bf16.msra.mxu0 0
      %549 = vmatprep.subr.bf16.mxu0 0
      %550 = vmatpush1.bf16.msra.mxu0 0
      %551 = vmatprep.subr.bf16.mxu0 0
      %552 = vmatpush1.bf16.msra.mxu0 0
      %553 = vmatprep.subr.bf16.mxu0 0
      %554 = vmatpush1.bf16.msra.mxu0 0
      %555 = vmatprep.subr.bf16.mxu0 0
      %556 = vmatpush1.bf16.msra.mxu0 0
      %557 = vmatprep.subr.bf16.mxu0 0
      %558 = vmatpush1.bf16.msra.mxu0 0
      %559 = vmatprep.subr.bf16.mxu0 0
      %560 = vmatpush1.bf16.msra.mxu0 0
      %561 = vmatprep.subr.bf16.mxu0 0
      %562 = vmatpush1.bf16.msra.mxu0 0
      %563 = vmatprep.subr.bf16.mxu0 0
      %564 = vmatpush1.bf16.msra.mxu0 0
      %565 = vmatprep.subr.bf16.mxu0 0
      %566 = vmatpush1.bf16.msra.mxu0 0
      %567 = vmatprep.subr.bf16.mxu0 0
      %568 = vmatpush1.bf16.msra.mxu0 0
      %569 = vmatprep.subr.bf16.mxu0 0
      %570 = vmatpush1.bf16.msra.mxu0 0
      %571 = vmatprep.subr.bf16.mxu0 0
      %572 = vmatpush1.bf16.msra.mxu0 0
      %573 = vmatprep.subr.bf16.mxu0 0
      %574 = vmatpush1.bf16.msra.mxu0 0
      %575 = vmatprep.subr.bf16.mxu0 0
      %576 = vmatpush1.bf16.msra.mxu0 0
      %577 = vmatprep.mubr.bf16.mxu0 0
      %578 = vmatmul.mubr.bf16.gmra.mrb[0].mxu0 %v450
      %v579 = vpop.f32.mrb[0].mxu0
      %v580 = vadd.f32 %v440, %v579
      %v581 = vpop.f32.mrb[0].mxu0
      %v582 = vpop.f32.mrb[0].mxu0
      %v583 = vadd.f32 %v440, %v582
      %v584 = vpop.f32.mrb[0].mxu0
      %585 = vmatprep.mubr.bf16.mxu0 0
      %586 = vmatmul.mubr.bf16.gmra.mrb[0].mxu0 %v453
      %v587 = vpop.f32.mrb[0].mxu0
      %v588 = vadd.f32 %v440, %v587
      %v589 = vpop.f32.mrb[0].mxu0
      %v590 = vpop.f32.mrb[0].mxu0
      %v591 = vadd.f32 %v440, %v590
      %v592 = vpop.f32.mrb[0].mxu0
      %593 = vmatprep.mubr.bf16.mxu0 0
      %594 = vmatmul.mubr.bf16.gmra.mrb[0].mxu0 %v456
      %v595 = vpop.f32.mrb[0].mxu0
      %v596 = vadd.f32 %v440, %v595
      %v597 = vpop.f32.mrb[0].mxu0
      %v598 = vpop.f32.mrb[0].mxu0
      %v599 = vadd.f32 %v440, %v598
      %v600 = vpop.f32.mrb[0].mxu0
      %601 = vmatprep.mubr.bf16.mxu0 0
      %602 = vmatmul.mubr.bf16.gmra.mrb[0].mxu0 %v459
      %v603 = vpop.f32.mrb[0].mxu0
      %v604 = vadd.f32 %v440, %v603
      %v605 = vpop.f32.mrb[0].mxu0
      %v606 = vpop.f32.mrb[0].mxu0
      %v607 = vadd.f32 %v440, %v606
      %v608 = vpop.f32.mrb[0].mxu0
      %609 = vmatprep.mubr.bf16.mxu0 0
      %610 = vmatmul.mubr.bf16.gmra.mrb[0].mxu0 %v462
      %v611 = vpop.f32.mrb[0].mxu0
      %v612 = vadd.f32 %v440, %v611
      %v613 = vpop.f32.mrb[0].mxu0
      %v614 = vpop.f32.mrb[0].mxu0
      %v615 = vadd.f32 %v440, %v614
      %v616 = vpop.f32.mrb[0].mxu0
      %617 = vmatprep.mubr.bf16.mxu0 0
      %618 = vmatmul.mubr.bf16.gmra.mrb[0].mxu0 %v465
      %v619 = vpop.f32.mrb[0].mxu0
      %v620 = vadd.f32 %v440, %v619
      %v621 = vpop.f32.mrb[0].mxu0
      %v622 = vpop.f32.mrb[0].mxu0
      %v623 = vadd.f32 %v440, %v622
      %v624 = vpop.f32.mrb[0].mxu0
      %625 = vmatprep.mubr.bf16.mxu0 0
      %626 = vmatmul.mubr.bf16.gmra.mrb[0].mxu0 %v468
      %v627 = vpop.f32.mrb[0].mxu0
      %v628 = vadd.f32 %v440, %v627
      %v629 = vpop.f32.mrb[0].mxu0
      %v630 = vpop.f32.mrb[0].mxu0
      %v631 = vadd.f32 %v440, %v630
      %v632 = vpop.f32.mrb[0].mxu0
      %633 = vmatprep.mubr.bf16.mxu0 0
      %634 = vmatmul.mubr.bf16.gmra.mrb[0].mxu0 %v471
      %v635 = vpop.f32.mrb[0].mxu0
      %v636 = vadd.f32 %v440, %v635
      %v637 = vpop.f32.mrb[0].mxu0
      %v638 = vpop.f32.mrb[0].mxu0
      %v639 = vadd.f32 %v440, %v638
      %v640 = vpop.f32.mrb[0].mxu0
      %641 = vmatprep.mubr.bf16.mxu0 0
      %642 = vmatmul.mubr.bf16.gmra.mrb[0].mxu0 %v474
      %v643 = vpop.f32.mrb[0].mxu0
      %v644 = vadd.f32 %v440, %v643
      %v645 = vpop.f32.mrb[0].mxu0
      %v646 = vpop.f32.mrb[0].mxu0
      %v647 = vadd.f32 %v440, %v646
      %v648 = vpop.f32.mrb[0].mxu0
      %649 = vmatprep.mubr.bf16.mxu0 0
      %650 = vmatmul.mubr.bf16.gmra.mrb[0].mxu0 %v477
      %v651 = vpop.f32.mrb[0].mxu0
      %v652 = vadd.f32 %v440, %v651
      %v653 = vpop.f32.mrb[0].mxu0
      %v654 = vpop.f32.mrb[0].mxu0
      %v655 = vadd.f32 %v440, %v654
      %v656 = vpop.f32.mrb[0].mxu0
      %657 = vmatprep.mubr.bf16.mxu0 0
      %658 = vmatmul.mubr.bf16.gmra.mrb[0].mxu0 %v480
      %v659 = vpop.f32.mrb[0].mxu0
      %v660 = vadd.f32 %v440, %v659
      %v661 = vpop.f32.mrb[0].mxu0
      %v662 = vpop.f32.mrb[0].mxu0
      %v663 = vadd.f32 %v440, %v662
      %v664 = vpop.f32.mrb[0].mxu0
      %665 = vmatprep.mubr.bf16.mxu0 0
      %666 = vmatmul.mubr.bf16.gmra.mrb[0].mxu0 %v483
      %v667 = vpop.f32.mrb[0].mxu0
      %v668 = vadd.f32 %v440, %v667
      %v669 = vpop.f32.mrb[0].mxu0
      %v670 = vpop.f32.mrb[0].mxu0
      %v671 = vadd.f32 %v440, %v670
      %v672 = vpop.f32.mrb[0].mxu0
      %673 = vmatprep.mubr.bf16.mxu0 0
      %674 = vmatmul.mubr.bf16.gmra.mrb[0].mxu0 %v486
      %v675 = vpop.f32.mrb[0].mxu0
      %v676 = vadd.f32 %v440, %v675
      %v677 = vpop.f32.mrb[0].mxu0
      %v678 = vpop.f32.mrb[0].mxu0
      %v679 = vadd.f32 %v440, %v678
      %v680 = vpop.f32.mrb[0].mxu0
      %681 = vmatprep.mubr.bf16.mxu0 0
      %682 = vmatmul.mubr.bf16.gmra.mrb[0].mxu0 %v489
      %v683 = vpop.f32.mrb[0].mxu0
      %v684 = vadd.f32 %v440, %v683
      %v685 = vpop.f32.mrb[0].mxu0
      %v686 = vpop.f32.mrb[0].mxu0
      %v687 = vadd.f32 %v440, %v686
      %v688 = vpop.f32.mrb[0].mxu0
      %689 = vmatprep.mubr.bf16.mxu0 0
      %690 = vmatmul.mubr.bf16.gmra.mrb[0].mxu0 %v492
      %v691 = vpop.f32.mrb[0].mxu0
      %v692 = vadd.f32 %v440, %v691
      %v693 = vpop.f32.mrb[0].mxu0
      %v694 = vpop.f32.mrb[0].mxu0
      %v695 = vadd.f32 %v440, %v694
      %v696 = vpop.f32.mrb[0].mxu0
      %697 = vmatprep.mubr.bf16.mxu0 0
      %698 = vmatmul.mubr.bf16.gmra.mrb[0].mxu0 %v495
      %v699 = vpop.f32.mrb[0].mxu0
      %v700 = vadd.f32 %v440, %v699
      %v701 = vpop.f32.mrb[0].mxu0
      %v702 = vpop.f32.mrb[0].mxu0
      %v703 = vadd.f32 %v440, %v702
      %v704 = vpop.f32.mrb[0].mxu0
      %705 = vmatprep.mubr.bf16.mxu0 0
      %706 = vmatmul.mubr.bf16.gmra.mrb[0].mxu0 %v498
      %v707 = vpop.f32.mrb[0].mxu0
      %v708 = vadd.f32 %v440, %v707
      %v709 = vpop.f32.mrb[0].mxu0
      %v710 = vpop.f32.mrb[0].mxu0
      %v711 = vadd.f32 %v440, %v710
      %v712 = vpop.f32.mrb[0].mxu0
      %713 = vmatprep.mubr.bf16.mxu0 0
      %714 = vmatmul.mubr.bf16.gmra.mrb[0].mxu0 %v501
      %v715 = vpop.f32.mrb[0].mxu0
      %v716 = vadd.f32 %v440, %v715
      %v717 = vpop.f32.mrb[0].mxu0
      %v718 = vpop.f32.mrb[0].mxu0
      %v719 = vadd.f32 %v440, %v718
      %v720 = vpop.f32.mrb[0].mxu0
      %721 = vmatprep.mubr.bf16.mxu0 0
      %722 = vmatmul.mubr.bf16.gmra.mrb[0].mxu0 %v504
      %v723 = vpop.f32.mrb[0].mxu0
      %v724 = vadd.f32 %v440, %v723
      %v725 = vpop.f32.mrb[0].mxu0
      %v726 = vpop.f32.mrb[0].mxu0
      %v727 = vadd.f32 %v440, %v726
      %v728 = vpop.f32.mrb[0].mxu0
      %729 = vmatprep.mubr.bf16.mxu0 0
      %730 = vmatmul.mubr.bf16.gmra.mrb[0].mxu0 %v507
      %v731 = vpop.f32.mrb[0].mxu0
      %v732 = vadd.f32 %v440, %v731
      %v733 = vpop.f32.mrb[0].mxu0
      %v734 = vpop.f32.mrb[0].mxu0
      %v735 = vadd.f32 %v440, %v734
      %v736 = vpop.f32.mrb[0].mxu0
      %737 = vmatprep.mubr.bf16.mxu0 0
      %738 = vmatmul.mubr.bf16.gmra.mrb[0].mxu0 %v510
      %v739 = vpop.f32.mrb[0].mxu0
      %v740 = vadd.f32 %v440, %v739
      %v741 = vpop.f32.mrb[0].mxu0
      %v742 = vpop.f32.mrb[0].mxu0
      %v743 = vadd.f32 %v440, %v742
      %v744 = vpop.f32.mrb[0].mxu0
      %745 = vmatprep.mubr.bf16.mxu0 0
      %746 = vmatmul.mubr.bf16.gmra.mrb[0].mxu0 %v513
      %v747 = vpop.f32.mrb[0].mxu0
      %v748 = vadd.f32 %v440, %v747
      %v749 = vpop.f32.mrb[0].mxu0
      %v750 = vpop.f32.mrb[0].mxu0
      %v751 = vadd.f32 %v440, %v750
      %v752 = vpop.f32.mrb[0].mxu0
      %753 = vmatprep.mubr.bf16.mxu0 0
      %754 = vmatmul.mubr.bf16.gmra.mrb[0].mxu0 %v516
      %v755 = vpop.f32.mrb[0].mxu0
      %v756 = vadd.f32 %v440, %v755
      %v757 = vpop.f32.mrb[0].mxu0
      %v758 = vpop.f32.mrb[0].mxu0
      %v759 = vadd.f32 %v440, %v758
      %v760 = vpop.f32.mrb[0].mxu0
      %761 = vmatprep.mubr.bf16.mxu0 0
      %762 = vmatmul.mubr.bf16.gmra.mrb[0].mxu0 %v519
      %v763 = vpop.f32.mrb[0].mxu0
      %v764 = vadd.f32 %v440, %v763
      %v765 = vpop.f32.mrb[0].mxu0
      %v766 = vpop.f32.mrb[0].mxu0
      %v767 = vadd.f32 %v440, %v766
      %v768 = vpop.f32.mrb[0].mxu0
      %769 = vmatprep.mubr.bf16.mxu0 0
      %770 = vmatmul.mubr.bf16.gmra.mrb[0].mxu0 %v522
      %v771 = vpop.f32.mrb[0].mxu0
      %v772 = vadd.f32 %v440, %v771
      %v773 = vpop.f32.mrb[0].mxu0
      %v774 = vpop.f32.mrb[0].mxu0
      %v775 = vadd.f32 %v440, %v774
      %v776 = vpop.f32.mrb[0].mxu0
      %777 = vmatprep.mubr.bf16.mxu0 0
      %778 = vmatmul.mubr.bf16.gmra.mrb[0].mxu0 %v525
      %v779 = vpop.f32.mrb[0].mxu0
      %v780 = vadd.f32 %v440, %v779
      %v781 = vpop.f32.mrb[0].mxu0
      %v782 = vpop.f32.mrb[0].mxu0
      %v783 = vadd.f32 %v440, %v782
      %v784 = vpop.f32.mrb[0].mxu0
      %785 = vmatprep.mubr.bf16.mxu0 0
      %786 = vmatmul.mubr.bf16.gmra.mrb[0].mxu0 %v528
      %v787 = vpop.f32.mrb[0].mxu0
      %v788 = vadd.f32 %v440, %v787
      %v789 = vpop.f32.mrb[0].mxu0
      %v790 = vpop.f32.mrb[0].mxu0
      %v791 = vadd.f32 %v440, %v790
      %v792 = vpop.f32.mrb[0].mxu0
      %793 = vmatprep.mubr.bf16.mxu0 0
      %794 = vmatmul.mubr.bf16.gmra.mrb[0].mxu0 %v531
      %v795 = vpop.f32.mrb[0].mxu0
      %v796 = vadd.f32 %v440, %v795
      %v797 = vpop.f32.mrb[0].mxu0
      %v798 = vpop.f32.mrb[0].mxu0
      %v799 = vadd.f32 %v440, %v798
      %v800 = vpop.f32.mrb[0].mxu0
      %801 = vmatprep.mubr.bf16.mxu0 0
      %802 = vmatmul.mubr.bf16.gmra.mrb[0].mxu0 %v534
      %v803 = vpop.f32.mrb[0].mxu0
      %v804 = vadd.f32 %v440, %v803
      %v805 = vpop.f32.mrb[0].mxu0
      %v806 = vpop.f32.mrb[0].mxu0
      %v807 = vadd.f32 %v440, %v806
      %v808 = vpop.f32.mrb[0].mxu0
      %809 = vmatprep.mubr.bf16.mxu0 0
      %810 = vmatmul.mubr.bf16.gmra.mrb[0].mxu0 %v537
      %v811 = vpop.f32.mrb[0].mxu0
      %v812 = vadd.f32 %v440, %v811
      %v813 = vpop.f32.mrb[0].mxu0
      %v814 = vpop.f32.mrb[0].mxu0
      %v815 = vadd.f32 %v440, %v814
      %v816 = vpop.f32.mrb[0].mxu0
      %817 = vmatprep.mubr.bf16.mxu0 0
      %818 = vmatmul.mubr.bf16.gmra.mrb[0].mxu0 %v540
      %v819 = vpop.f32.mrb[0].mxu0
      %v820 = vadd.f32 %v440, %v819
      %v821 = vpop.f32.mrb[0].mxu0
      %v822 = vpop.f32.mrb[0].mxu0
      %v823 = vadd.f32 %v440, %v822
      %v824 = vpop.f32.mrb[0].mxu0
      %825 = vmatprep.mubr.bf16.mxu0 0
      %826 = vmatmul.mubr.bf16.gmra.mrb[0].mxu0 %v543
      %v827 = vpop.f32.mrb[0].mxu0
      %v828 = vadd.f32 %v440, %v827
      %v829 = vpop.f32.mrb[0].mxu0
      %v830 = vpop.f32.mrb[0].mxu0
      %v831 = vadd.f32 %v440, %v830
      %v832 = vpop.f32.mrb[0].mxu0
      %833 = vdwg.mxu0
      %v834 = vmax.f32 %v580, 0.0
      %v835 = vmax.f32 %v583, 0.0
      %v836 = vmax.f32 %v588, 0.0
      %v837 = vmax.f32 %v591, 0.0
      %v838 = vmax.f32 %v596, 0.0
      %v839 = vmax.f32 %v599, 0.0
      %v840 = vmax.f32 %v604, 0.0
      %v841 = vmax.f32 %v607, 0.0
      %v842 = vmax.f32 %v612, 0.0
      %v843 = vmax.f32 %v615, 0.0
      %v844 = vmax.f32 %v620, 0.0
      %v845 = vmax.f32 %v623, 0.0
      %v846 = vmax.f32 %v628, 0.0
      %v847 = vmax.f32 %v631, 0.0
      %v848 = vmax.f32 %v636, 0.0
      %v849 = vmax.f32 %v639, 0.0
      %v850 = vmax.f32 %v644, 0.0
      %v851 = vmax.f32 %v647, 0.0
      %v852 = vmax.f32 %v652, 0.0
      %v853 = vmax.f32 %v655, 0.0
      %v854 = vmax.f32 %v660, 0.0
      %v855 = vmax.f32 %v663, 0.0
      %v856 = vmax.f32 %v668, 0.0
      %v857 = vmax.f32 %v671, 0.0
      %v858 = vmax.f32 %v676, 0.0
      %v859 = vmax.f32 %v679, 0.0
      %v860 = vmax.f32 %v684, 0.0
      %v861 = vmax.f32 %v687, 0.0
      %v862 = vmax.f32 %v692, 0.0
      %v863 = vmax.f32 %v695, 0.0
      %v864 = vmax.f32 %v700, 0.0
      %v865 = vmax.f32 %v703, 0.0
      %v866 = vmax.f32 %v708, 0.0
      %v867 = vmax.f32 %v711, 0.0
      %v868 = vmax.f32 %v716, 0.0
      %v869 = vmax.f32 %v719, 0.0
      %v870 = vmax.f32 %v724, 0.0
      %v871 = vmax.f32 %v727, 0.0
      %v872 = vmax.f32 %v732, 0.0
      %v873 = vmax.f32 %v735, 0.0
      %v874 = vmax.f32 %v740, 0.0
      %v875 = vmax.f32 %v743, 0.0
      %v876 = vmax.f32 %v748, 0.0
      %v877 = vmax.f32 %v751, 0.0
      %v878 = vmax.f32 %v756, 0.0
      %v879 = vmax.f32 %v759, 0.0
      %v880 = vmax.f32 %v764, 0.0
      %v881 = vmax.f32 %v767, 0.0
      %v882 = vmax.f32 %v772, 0.0
      %v883 = vmax.f32 %v775, 0.0
      %v884 = vmax.f32 %v780, 0.0
      %v885 = vmax.f32 %v783, 0.0
      %v886 = vmax.f32 %v788, 0.0
      %v887 = vmax.f32 %v791, 0.0
      %v888 = vmax.f32 %v796, 0.0
      %v889 = vmax.f32 %v799, 0.0
      %v890 = vmax.f32 %v804, 0.0
      %v891 = vmax.f32 %v807, 0.0
      %v892 = vmax.f32 %v812, 0.0
      %v893 = vmax.f32 %v815, 0.0
      %v894 = vmax.f32 %v820, 0.0
      %v895 = vmax.f32 %v823, 0.0
      %v896 = vmax.f32 %v828, 0.0
      %v897 = vmax.f32 %v831, 0.0
      %v898 = vld [vmem:[%s3] sm:$0xf]
      %v899 = vld [vmem:[%s3 + $0x4] sm:$0xf]
      %v900 = vld [vmem:[%s3 + $0x8] sm:$0xf]
      %v901 = vld [vmem:[%s3 + $0xc] sm:$0xf]
      %v902 = vld [vmem:[%s3 + $0x10] sm:$0xf]
      %v903 = vld [vmem:[%s3 + $0x14] sm:$0xf]
      %v904 = vld [vmem:[%s3 + $0x18] sm:$0xf]
      %v905 = vld [vmem:[%s3 + $0x1c] sm:$0xf]
      %v906 = vld [vmem:[%s3 + $0x20] sm:$0xf]
      %v907 = vld [vmem:[%s3 + $0x24] sm:$0xf]
      %v908 = vld [vmem:[%s3 + $0x28] sm:$0xf]
      %v909 = vld [vmem:[%s3 + $0x2c] sm:$0xf]
      %v910 = vld [vmem:[%s3 + $0x30] sm:$0xf]
      %v911 = vld [vmem:[%s3 + $0x34] sm:$0xf]
      %v912 = vld [vmem:[%s3 + $0x38] sm:$0xf]
      %v913 = vld [vmem:[%s3 + $0x3c] sm:$0xf]
      %v914 = vpack.c.bf16 %v835, %v834
      %v915 = vpack.c.bf16 %v837, %v836
      %v916 = vpack.c.bf16 %v839, %v838
      %v917 = vpack.c.bf16 %v841, %v840
      %v918 = vpack.c.bf16 %v843, %v842
      %v919 = vpack.c.bf16 %v845, %v844
      %v920 = vpack.c.bf16 %v847, %v846
      %v921 = vpack.c.bf16 %v849, %v848
      %v922 = vpack.c.bf16 %v851, %v850
      %v923 = vpack.c.bf16 %v853, %v852
      %v924 = vpack.c.bf16 %v855, %v854
      %v925 = vpack.c.bf16 %v857, %v856
      %v926 = vpack.c.bf16 %v859, %v858
      %v927 = vpack.c.bf16 %v861, %v860
      %v928 = vpack.c.bf16 %v863, %v862
      %v929 = vpack.c.bf16 %v865, %v864
      %v930 = vpack.c.bf16 %v867, %v866
      %v931 = vpack.c.bf16 %v869, %v868
      %v932 = vpack.c.bf16 %v871, %v870
      %v933 = vpack.c.bf16 %v873, %v872
      %v934 = vpack.c.bf16 %v875, %v874
      %v935 = vpack.c.bf16 %v877, %v876
      %v936 = vpack.c.bf16 %v879, %v878
      %v937 = vpack.c.bf16 %v881, %v880
      %v938 = vpack.c.bf16 %v883, %v882
      %v939 = vpack.c.bf16 %v885, %v884
      %v940 = vpack.c.bf16 %v887, %v886
      %v941 = vpack.c.bf16 %v889, %v888
      %v942 = vpack.c.bf16 %v891, %v890
      %v943 = vpack.c.bf16 %v893, %v892
      %v944 = vpack.c.bf16 %v895, %v894
      %v945 = vpack.c.bf16 %v897, %v896
      %v946 = vld [vmem:[%s4] sm:$0x1]
      %v948 = vlaneseq
      %v949 = vshrl.u32 %v948, 7
      %v950 = vsub.s32 0, %v949
      %v951 = vrot.slane %v946, %v950
      %v969 = vunpack.c.l.b16 %v898
      %v970 = vunpack.c.l.b16 %v899
      %v971 = vunpack.c.l.b16 %v900
      %v972 = vunpack.c.l.b16 %v901
      %v973 = vunpack.c.l.b16 %v902
      %v974 = vunpack.c.l.b16 %v903
      %v975 = vunpack.c.l.b16 %v904
      %v976 = vunpack.c.l.b16 %v905
      %v977 = vunpack.c.l.b16 %v906
      %v978 = vunpack.c.l.b16 %v907
      %v979 = vunpack.c.l.b16 %v908
      %v980 = vunpack.c.l.b16 %v909
      %v981 = vunpack.c.l.b16 %v910
      %v982 = vunpack.c.l.b16 %v911
      %v983 = vunpack.c.l.b16 %v912
      %v984 = vunpack.c.l.b16 %v913
      %v985 = vpack.c.b16 %v970, %v969
      %v986 = vpack.c.b16 %v972, %v971
      %v987 = vpack.c.b16 %v974, %v973
      %v988 = vpack.c.b16 %v976, %v975
      %v989 = vpack.c.b16 %v978, %v977
      %v990 = vpack.c.b16 %v980, %v979
      %v991 = vpack.c.b16 %v982, %v981
      %v992 = vpack.c.b16 %v984, %v983
      %1001 = vmatprep.subr.bf16.mxu0 0
      %1002 = vmatpush1.bf16.msra.mxu0 %v985
      %1003 = vmatprep.subr.bf16.mxu0 0
      %1004 = vmatpush1.bf16.msra.mxu0 %v986
      %1005 = vmatprep.subr.bf16.mxu0 0
      %1006 = vmatpush1.bf16.msra.mxu0 %v987
      %1007 = vmatprep.subr.bf16.mxu0 0
      %1008 = vmatpush1.bf16.msra.mxu0 %v988
      %1009 = vmatprep.subr.bf16.mxu0 0
      %1010 = vmatpush1.bf16.msra.mxu0 %v989
      %1011 = vmatprep.subr.bf16.mxu0 0
      %1012 = vmatpush1.bf16.msra.mxu0 %v990
      %1013 = vmatprep.subr.bf16.mxu0 0
      %1014 = vmatpush1.bf16.msra.mxu0 %v991
      %1015 = vmatprep.subr.bf16.mxu0 0
      %1016 = vmatpush1.bf16.msra.mxu0 %v992
      %1017 = vmatprep.subr.bf16.mxu0 0
      %1018 = vmatpush1.bf16.msra.mxu0 0
      %1019 = vmatprep.subr.bf16.mxu0 0
      %1020 = vmatpush1.bf16.msra.mxu0 0
      %1021 = vmatprep.subr.bf16.mxu0 0
      %1022 = vmatpush1.bf16.msra.mxu0 0
      %1023 = vmatprep.subr.bf16.mxu0 0
      %1024 = vmatpush1.bf16.msra.mxu0 0
      %1025 = vmatprep.subr.bf16.mxu0 0
      %1026 = vmatpush1.bf16.msra.mxu0 0
      %1027 = vmatprep.subr.bf16.mxu0 0
      %1028 = vmatpush1.bf16.msra.mxu0 0
      %1029 = vmatprep.subr.bf16.mxu0 0
      %1030 = vmatpush1.bf16.msra.mxu0 0
      %1031 = vmatprep.subr.bf16.mxu0 0
      %1032 = vmatpush1.bf16.msra.mxu0 0
      %1033 = vmatprep.mubr.bf16.mxu0 0
      %1034 = vmatmul.mubr.bf16.gmra.mrb[0].mxu0 %v914
      %v1035 = vpop.f32.mrb[0].mxu0
      %v1036 = vadd.f32 %v951, %v1035
      %v1037 = vpop.f32.mrb[0].mxu0
      %v1038 = vpop.f32.mrb[0].mxu0
      %v1039 = vadd.f32 %v951, %v1038
      %v1040 = vpop.f32.mrb[0].mxu0
      %1041 = vmatprep.mubr.bf16.mxu0 0
      %1042 = vmatmul.mubr.bf16.gmra.mrb[0].mxu0 %v915
      %v1043 = vpop.f32.mrb[0].mxu0
      %v1044 = vadd.f32 %v951, %v1043
      %v1045 = vpop.f32.mrb[0].mxu0
      %v1046 = vpop.f32.mrb[0].mxu0
      %v1047 = vadd.f32 %v951, %v1046
      %v1048 = vpop.f32.mrb[0].mxu0
      %1049 = vmatprep.mubr.bf16.mxu0 0
      %1050 = vmatmul.mubr.bf16.gmra.mrb[0].mxu0 %v916
      %v1051 = vpop.f32.mrb[0].mxu0
      %v1052 = vadd.f32 %v951, %v1051
      %v1053 = vpop.f32.mrb[0].mxu0
      %v1054 = vpop.f32.mrb[0].mxu0
      %v1055 = vadd.f32 %v951, %v1054
      %v1056 = vpop.f32.mrb[0].mxu0
      %1057 = vmatprep.mubr.bf16.mxu0 0
      %1058 = vmatmul.mubr.bf16.gmra.mrb[0].mxu0 %v917
      %v1059 = vpop.f32.mrb[0].mxu0
      %v1060 = vadd.f32 %v951, %v1059
      %v1061 = vpop.f32.mrb[0].mxu0
      %v1062 = vpop.f32.mrb[0].mxu0
      %v1063 = vadd.f32 %v951, %v1062
      %v1064 = vpop.f32.mrb[0].mxu0
      %1065 = vmatprep.mubr.bf16.mxu0 0
      %1066 = vmatmul.mubr.bf16.gmra.mrb[0].mxu0 %v918
      %v1067 = vpop.f32.mrb[0].mxu0
      %v1068 = vadd.f32 %v951, %v1067
      %v1069 = vpop.f32.mrb[0].mxu0
      %v1070 = vpop.f32.mrb[0].mxu0
      %v1071 = vadd.f32 %v951, %v1070
      %v1072 = vpop.f32.mrb[0].mxu0
      %1073 = vmatprep.mubr.bf16.mxu0 0
      %1074 = vmatmul.mubr.bf16.gmra.mrb[0].mxu0 %v919
      %v1075 = vpop.f32.mrb[0].mxu0
      %v1076 = vadd.f32 %v951, %v1075
      %v1077 = vpop.f32.mrb[0].mxu0
      %v1078 = vpop.f32.mrb[0].mxu0
      %v1079 = vadd.f32 %v951, %v1078
      %v1080 = vpop.f32.mrb[0].mxu0
      %1081 = vmatprep.mubr.bf16.mxu0 0
      %1082 = vmatmul.mubr.bf16.gmra.mrb[0].mxu0 %v920
      %v1083 = vpop.f32.mrb[0].mxu0
      %v1084 = vadd.f32 %v951, %v1083
      %v1085 = vpop.f32.mrb[0].mxu0
      %v1086 = vpop.f32.mrb[0].mxu0
      %v1087 = vadd.f32 %v951, %v1086
      %v1088 = vpop.f32.mrb[0].mxu0
      %1089 = vmatprep.mubr.bf16.mxu0 0
      %1090 = vmatmul.mubr.bf16.gmra.mrb[0].mxu0 %v921
      %v1091 = vpop.f32.mrb[0].mxu0
      %v1092 = vadd.f32 %v951, %v1091
      %v1093 = vpop.f32.mrb[0].mxu0
      %v1094 = vpop.f32.mrb[0].mxu0
      %v1095 = vadd.f32 %v951, %v1094
      %v1096 = vpop.f32.mrb[0].mxu0
      %1097 = vmatprep.mubr.bf16.mxu0 0
      %1098 = vmatmul.mubr.bf16.gmra.mrb[0].mxu0 %v922
      %v1099 = vpop.f32.mrb[0].mxu0
      %v1100 = vadd.f32 %v951, %v1099
      %v1101 = vpop.f32.mrb[0].mxu0
      %v1102 = vpop.f32.mrb[0].mxu0
      %v1103 = vadd.f32 %v951, %v1102
      %v1104 = vpop.f32.mrb[0].mxu0
      %1105 = vmatprep.mubr.bf16.mxu0 0
      %1106 = vmatmul.mubr.bf16.gmra.mrb[0].mxu0 %v923
      %v1107 = vpop.f32.mrb[0].mxu0
      %v1108 = vadd.f32 %v951, %v1107
      %v1109 = vpop.f32.mrb[0].mxu0
      %v1110 = vpop.f32.mrb[0].mxu0
      %v1111 = vadd.f32 %v951, %v1110
      %v1112 = vpop.f32.mrb[0].mxu0
      %1113 = vmatprep.mubr.bf16.mxu0 0
      %1114 = vmatmul.mubr.bf16.gmra.mrb[0].mxu0 %v924
      %v1115 = vpop.f32.mrb[0].mxu0
      %v1116 = vadd.f32 %v951, %v1115
      %v1117 = vpop.f32.mrb[0].mxu0
      %v1118 = vpop.f32.mrb[0].mxu0
      %v1119 = vadd.f32 %v951, %v1118
      %v1120 = vpop.f32.mrb[0].mxu0
      %1121 = vmatprep.mubr.bf16.mxu0 0
      %1122 = vmatmul.mubr.bf16.gmra.mrb[0].mxu0 %v925
      %v1123 = vpop.f32.mrb[0].mxu0
      %v1124 = vadd.f32 %v951, %v1123
      %v1125 = vpop.f32.mrb[0].mxu0
      %v1126 = vpop.f32.mrb[0].mxu0
      %v1127 = vadd.f32 %v951, %v1126
      %v1128 = vpop.f32.mrb[0].mxu0
      %1129 = vmatprep.mubr.bf16.mxu0 0
      %1130 = vmatmul.mubr.bf16.gmra.mrb[0].mxu0 %v926
      %v1131 = vpop.f32.mrb[0].mxu0
      %v1132 = vadd.f32 %v951, %v1131
      %v1133 = vpop.f32.mrb[0].mxu0
      %v1134 = vpop.f32.mrb[0].mxu0
      %v1135 = vadd.f32 %v951, %v1134
      %v1136 = vpop.f32.mrb[0].mxu0
      %1137 = vmatprep.mubr.bf16.mxu0 0
      %1138 = vmatmul.mubr.bf16.gmra.mrb[0].mxu0 %v927
      %v1139 = vpop.f32.mrb[0].mxu0
      %v1140 = vadd.f32 %v951, %v1139
      %v1141 = vpop.f32.mrb[0].mxu0
      %v1142 = vpop.f32.mrb[0].mxu0
      %v1143 = vadd.f32 %v951, %v1142
      %v1144 = vpop.f32.mrb[0].mxu0
      %1145 = vmatprep.mubr.bf16.mxu0 0
      %1146 = vmatmul.mubr.bf16.gmra.mrb[0].mxu0 %v928
      %v1147 = vpop.f32.mrb[0].mxu0
      %v1148 = vadd.f32 %v951, %v1147
      %v1149 = vpop.f32.mrb[0].mxu0
      %v1150 = vpop.f32.mrb[0].mxu0
      %v1151 = vadd.f32 %v951, %v1150
      %v1152 = vpop.f32.mrb[0].mxu0
      %1153 = vmatprep.mubr.bf16.mxu0 0
      %1154 = vmatmul.mubr.bf16.gmra.mrb[0].mxu0 %v929
      %v1155 = vpop.f32.mrb[0].mxu0
      %v1156 = vadd.f32 %v951, %v1155
      %v1157 = vpop.f32.mrb[0].mxu0
      %v1158 = vpop.f32.mrb[0].mxu0
      %v1159 = vadd.f32 %v951, %v1158
      %v1160 = vpop.f32.mrb[0].mxu0
      %1161 = vmatprep.mubr.bf16.mxu0 0
      %1162 = vmatmul.mubr.bf16.gmra.mrb[0].mxu0 %v930
      %v1163 = vpop.f32.mrb[0].mxu0
      %v1164 = vadd.f32 %v951, %v1163
      %v1165 = vpop.f32.mrb[0].mxu0
      %v1166 = vpop.f32.mrb[0].mxu0
      %v1167 = vadd.f32 %v951, %v1166
      %v1168 = vpop.f32.mrb[0].mxu0
      %1169 = vmatprep.mubr.bf16.mxu0 0
      %1170 = vmatmul.mubr.bf16.gmra.mrb[0].mxu0 %v931
      %v1171 = vpop.f32.mrb[0].mxu0
      %v1172 = vadd.f32 %v951, %v1171
      %v1173 = vpop.f32.mrb[0].mxu0
      %v1174 = vpop.f32.mrb[0].mxu0
      %v1175 = vadd.f32 %v951, %v1174
      %v1176 = vpop.f32.mrb[0].mxu0
      %1177 = vmatprep.mubr.bf16.mxu0 0
      %1178 = vmatmul.mubr.bf16.gmra.mrb[0].mxu0 %v932
      %v1179 = vpop.f32.mrb[0].mxu0
      %v1180 = vadd.f32 %v951, %v1179
      %v1181 = vpop.f32.mrb[0].mxu0
      %v1182 = vpop.f32.mrb[0].mxu0
      %v1183 = vadd.f32 %v951, %v1182
      %v1184 = vpop.f32.mrb[0].mxu0
      %1185 = vmatprep.mubr.bf16.mxu0 0
      %1186 = vmatmul.mubr.bf16.gmra.mrb[0].mxu0 %v933
      %v1187 = vpop.f32.mrb[0].mxu0
      %v1188 = vadd.f32 %v951, %v1187
      %v1189 = vpop.f32.mrb[0].mxu0
      %v1190 = vpop.f32.mrb[0].mxu0
      %v1191 = vadd.f32 %v951, %v1190
      %v1192 = vpop.f32.mrb[0].mxu0
      %1193 = vmatprep.mubr.bf16.mxu0 0
      %1194 = vmatmul.mubr.bf16.gmra.mrb[0].mxu0 %v934
      %v1195 = vpop.f32.mrb[0].mxu0
      %v1196 = vadd.f32 %v951, %v1195
      %v1197 = vpop.f32.mrb[0].mxu0
      %v1198 = vpop.f32.mrb[0].mxu0
      %v1199 = vadd.f32 %v951, %v1198
      %v1200 = vpop.f32.mrb[0].mxu0
      %1201 = vmatprep.mubr.bf16.mxu0 0
      %1202 = vmatmul.mubr.bf16.gmra.mrb[0].mxu0 %v935
      %v1203 = vpop.f32.mrb[0].mxu0
      %v1204 = vadd.f32 %v951, %v1203
      %v1205 = vpop.f32.mrb[0].mxu0
      %v1206 = vpop.f32.mrb[0].mxu0
      %v1207 = vadd.f32 %v951, %v1206
      %v1208 = vpop.f32.mrb[0].mxu0
      %1209 = vmatprep.mubr.bf16.mxu0 0
      %1210 = vmatmul.mubr.bf16.gmra.mrb[0].mxu0 %v936
      %v1211 = vpop.f32.mrb[0].mxu0
      %v1212 = vadd.f32 %v951, %v1211
      %v1213 = vpop.f32.mrb[0].mxu0
      %v1214 = vpop.f32.mrb[0].mxu0
      %v1215 = vadd.f32 %v951, %v1214
      %v1216 = vpop.f32.mrb[0].mxu0
      %1217 = vmatprep.mubr.bf16.mxu0 0
      %1218 = vmatmul.mubr.bf16.gmra.mrb[0].mxu0 %v937
      %v1219 = vpop.f32.mrb[0].mxu0
      %v1220 = vadd.f32 %v951, %v1219
      %v1221 = vpop.f32.mrb[0].mxu0
      %v1222 = vpop.f32.mrb[0].mxu0
      %v1223 = vadd.f32 %v951, %v1222
      %v1224 = vpop.f32.mrb[0].mxu0
      %1225 = vmatprep.mubr.bf16.mxu0 0
      %1226 = vmatmul.mubr.bf16.gmra.mrb[0].mxu0 %v938
      %v1227 = vpop.f32.mrb[0].mxu0
      %v1228 = vadd.f32 %v951, %v1227
      %v1229 = vpop.f32.mrb[0].mxu0
      %v1230 = vpop.f32.mrb[0].mxu0
      %v1231 = vadd.f32 %v951, %v1230
      %v1232 = vpop.f32.mrb[0].mxu0
      %1233 = vmatprep.mubr.bf16.mxu0 0
      %1234 = vmatmul.mubr.bf16.gmra.mrb[0].mxu0 %v939
      %v1235 = vpop.f32.mrb[0].mxu0
      %v1236 = vadd.f32 %v951, %v1235
      %v1237 = vpop.f32.mrb[0].mxu0
      %v1238 = vpop.f32.mrb[0].mxu0
      %v1239 = vadd.f32 %v951, %v1238
      %v1240 = vpop.f32.mrb[0].mxu0
      %1241 = vmatprep.mubr.bf16.mxu0 0
      %1242 = vmatmul.mubr.bf16.gmra.mrb[0].mxu0 %v940
      %v1243 = vpop.f32.mrb[0].mxu0
      %v1244 = vadd.f32 %v951, %v1243
      %v1245 = vpop.f32.mrb[0].mxu0
      %v1246 = vpop.f32.mrb[0].mxu0
      %v1247 = vadd.f32 %v951, %v1246
      %v1248 = vpop.f32.mrb[0].mxu0
      %1249 = vmatprep.mubr.bf16.mxu0 0
      %1250 = vmatmul.mubr.bf16.gmra.mrb[0].mxu0 %v941
      %v1251 = vpop.f32.mrb[0].mxu0
      %v1252 = vadd.f32 %v951, %v1251
      %v1253 = vpop.f32.mrb[0].mxu0
      %v1254 = vpop.f32.mrb[0].mxu0
      %v1255 = vadd.f32 %v951, %v1254
      %v1256 = vpop.f32.mrb[0].mxu0
      %1257 = vmatprep.mubr.bf16.mxu0 0
      %1258 = vmatmul.mubr.bf16.gmra.mrb[0].mxu0 %v942
      %v1259 = vpop.f32.mrb[0].mxu0
      %v1260 = vadd.f32 %v951, %v1259
      %v1261 = vpop.f32.mrb[0].mxu0
      %v1262 = vpop.f32.mrb[0].mxu0
      %v1263 = vadd.f32 %v951, %v1262
      %v1264 = vpop.f32.mrb[0].mxu0
      %1265 = vmatprep.mubr.bf16.mxu0 0
      %1266 = vmatmul.mubr.bf16.gmra.mrb[0].mxu0 %v943
      %v1267 = vpop.f32.mrb[0].mxu0
      %v1268 = vadd.f32 %v951, %v1267
      %v1269 = vpop.f32.mrb[0].mxu0
      %v1270 = vpop.f32.mrb[0].mxu0
      %v1271 = vadd.f32 %v951, %v1270
      %v1272 = vpop.f32.mrb[0].mxu0
      %1273 = vmatprep.mubr.bf16.mxu0 0
      %1274 = vmatmul.mubr.bf16.gmra.mrb[0].mxu0 %v944
      %v1275 = vpop.f32.mrb[0].mxu0
      %v1276 = vadd.f32 %v951, %v1275
      %v1277 = vpop.f32.mrb[0].mxu0
      %v1278 = vpop.f32.mrb[0].mxu0
      %v1279 = vadd.f32 %v951, %v1278
      %v1280 = vpop.f32.mrb[0].mxu0
      %1281 = vmatprep.mubr.bf16.mxu0 0
      %1282 = vmatmul.mubr.bf16.gmra.mrb[0].mxu0 %v945
      %v1283 = vpop.f32.mrb[0].mxu0
      %v1284 = vadd.f32 %v951, %v1283
      %v1285 = vpop.f32.mrb[0].mxu0
      %v1286 = vpop.f32.mrb[0].mxu0
      %v1287 = vadd.f32 %v951, %v1286
      %v1288 = vpop.f32.mrb[0].mxu0
      %1289 = vdwg.mxu0
      %v1290 = vmax.f32 %v1036, 0.0
      %v1291 = vmax.f32 %v1039, 0.0
      %v1292 = vmax.f32 %v1044, 0.0
      %v1293 = vmax.f32 %v1047, 0.0
      %v1294 = vmax.f32 %v1052, 0.0
      %v1295 = vmax.f32 %v1055, 0.0
      %v1296 = vmax.f32 %v1060, 0.0
      %v1297 = vmax.f32 %v1063, 0.0
      %v1298 = vmax.f32 %v1068, 0.0
      %v1299 = vmax.f32 %v1071, 0.0
      %v1300 = vmax.f32 %v1076, 0.0
      %v1301 = vmax.f32 %v1079, 0.0
      %v1302 = vmax.f32 %v1084, 0.0
      %v1303 = vmax.f32 %v1087, 0.0
      %v1304 = vmax.f32 %v1092, 0.0
      %v1305 = vmax.f32 %v1095, 0.0
      %v1306 = vmax.f32 %v1100, 0.0
      %v1307 = vmax.f32 %v1103, 0.0
      %v1308 = vmax.f32 %v1108, 0.0
      %v1309 = vmax.f32 %v1111, 0.0
      %v1310 = vmax.f32 %v1116, 0.0
      %v1311 = vmax.f32 %v1119, 0.0
      %v1312 = vmax.f32 %v1124, 0.0
      %v1313 = vmax.f32 %v1127, 0.0
      %v1314 = vmax.f32 %v1132, 0.0
      %v1315 = vmax.f32 %v1135, 0.0
      %v1316 = vmax.f32 %v1140, 0.0
      %v1317 = vmax.f32 %v1143, 0.0
      %v1318 = vmax.f32 %v1148, 0.0
      %v1319 = vmax.f32 %v1151, 0.0
      %v1320 = vmax.f32 %v1156, 0.0
      %v1321 = vmax.f32 %v1159, 0.0
      %v1322 = vmax.f32 %v1164, 0.0
      %v1323 = vmax.f32 %v1167, 0.0
      %v1324 = vmax.f32 %v1172, 0.0
      %v1325 = vmax.f32 %v1175, 0.0
      %v1326 = vmax.f32 %v1180, 0.0
      %v1327 = vmax.f32 %v1183, 0.0
      %v1328 = vmax.f32 %v1188, 0.0
      %v1329 = vmax.f32 %v1191, 0.0
      %v1330 = vmax.f32 %v1196, 0.0
      %v1331 = vmax.f32 %v1199, 0.0
      %v1332 = vmax.f32 %v1204, 0.0
      %v1333 = vmax.f32 %v1207, 0.0
      %v1334 = vmax.f32 %v1212, 0.0
      %v1335 = vmax.f32 %v1215, 0.0
      %v1336 = vmax.f32 %v1220, 0.0
      %v1337 = vmax.f32 %v1223, 0.0
      %v1338 = vmax.f32 %v1228, 0.0
      %v1339 = vmax.f32 %v1231, 0.0
      %v1340 = vmax.f32 %v1236, 0.0
      %v1341 = vmax.f32 %v1239, 0.0
      %v1342 = vmax.f32 %v1244, 0.0
      %v1343 = vmax.f32 %v1247, 0.0
      %v1344 = vmax.f32 %v1252, 0.0
      %v1345 = vmax.f32 %v1255, 0.0
      %v1346 = vmax.f32 %v1260, 0.0
      %v1347 = vmax.f32 %v1263, 0.0
      %v1348 = vmax.f32 %v1268, 0.0
      %v1349 = vmax.f32 %v1271, 0.0
      %v1350 = vmax.f32 %v1276, 0.0
      %v1351 = vmax.f32 %v1279, 0.0
      %v1352 = vmax.f32 %v1284, 0.0
      %v1353 = vmax.f32 %v1287, 0.0
      %v1354 = vld [vmem:[%s5] sm:$0xf]
      %v1355 = vld [vmem:[%s5 + $0x4] sm:$0xf]
      %v1356 = vld [vmem:[%s5 + $0x8] sm:$0xf]
      %v1357 = vld [vmem:[%s5 + $0xc] sm:$0xf]
      %v1358 = vld [vmem:[%s5 + $0x10] sm:$0xf]
      %v1359 = vld [vmem:[%s5 + $0x14] sm:$0xf]
      %v1360 = vld [vmem:[%s5 + $0x18] sm:$0xf]
      %v1361 = vld [vmem:[%s5 + $0x1c] sm:$0xf]
      %v1362 = vld [vmem:[%s5 + $0x20] sm:$0xf]
      %v1363 = vld [vmem:[%s5 + $0x24] sm:$0xf]
      %v1364 = vld [vmem:[%s5 + $0x28] sm:$0xf]
      %v1365 = vld [vmem:[%s5 + $0x2c] sm:$0xf]
      %v1366 = vld [vmem:[%s5 + $0x30] sm:$0xf]
      %v1367 = vld [vmem:[%s5 + $0x34] sm:$0xf]
      %v1368 = vld [vmem:[%s5 + $0x38] sm:$0xf]
      %v1369 = vld [vmem:[%s5 + $0x3c] sm:$0xf]
      %v1370 = vpack.c.bf16 %v1291, %v1290
      %v1371 = vpack.c.bf16 %v1293, %v1292
      %v1372 = vpack.c.bf16 %v1295, %v1294
      %v1373 = vpack.c.bf16 %v1297, %v1296
      %v1374 = vpack.c.bf16 %v1299, %v1298
      %v1375 = vpack.c.bf16 %v1301, %v1300
      %v1376 = vpack.c.bf16 %v1303, %v1302
      %v1377 = vpack.c.bf16 %v1305, %v1304
      %v1378 = vpack.c.bf16 %v1307, %v1306
      %v1379 = vpack.c.bf16 %v1309, %v1308
      %v1380 = vpack.c.bf16 %v1311, %v1310
      %v1381 = vpack.c.bf16 %v1313, %v1312
      %v1382 = vpack.c.bf16 %v1315, %v1314
      %v1383 = vpack.c.bf16 %v1317, %v1316
      %v1384 = vpack.c.bf16 %v1319, %v1318
      %v1385 = vpack.c.bf16 %v1321, %v1320
      %v1386 = vpack.c.bf16 %v1323, %v1322
      %v1387 = vpack.c.bf16 %v1325, %v1324
      %v1388 = vpack.c.bf16 %v1327, %v1326
      %v1389 = vpack.c.bf16 %v1329, %v1328
      %v1390 = vpack.c.bf16 %v1331, %v1330
      %v1391 = vpack.c.bf16 %v1333, %v1332
      %v1392 = vpack.c.bf16 %v1335, %v1334
      %v1393 = vpack.c.bf16 %v1337, %v1336
      %v1394 = vpack.c.bf16 %v1339, %v1338
      %v1395 = vpack.c.bf16 %v1341, %v1340
      %v1396 = vpack.c.bf16 %v1343, %v1342
      %v1397 = vpack.c.bf16 %v1345, %v1344
      %v1398 = vpack.c.bf16 %v1347, %v1346
      %v1399 = vpack.c.bf16 %v1349, %v1348
      %v1400 = vpack.c.bf16 %v1351, %v1350
      %v1401 = vpack.c.bf16 %v1353, %v1352
      %v1402 = vld [vmem:[%s6] sm:$0x1]
      %v1404 = vlaneseq
      %v1405 = vshrl.u32 %v1404, 7
      %v1406 = vsub.s32 0, %v1405
      %v1407 = vrot.slane %v1402, %v1406
      %v1425 = vunpack.c.l.b16 %v1354
      %v1426 = vunpack.c.l.b16 %v1355
      %v1427 = vunpack.c.l.b16 %v1356
      %v1428 = vunpack.c.l.b16 %v1357
      %v1429 = vunpack.c.l.b16 %v1358
      %v1430 = vunpack.c.l.b16 %v1359
      %v1431 = vunpack.c.l.b16 %v1360
      %v1432 = vunpack.c.l.b16 %v1361
      %v1433 = vunpack.c.l.b16 %v1362
      %v1434 = vunpack.c.l.b16 %v1363
      %v1435 = vunpack.c.l.b16 %v1364
      %v1436 = vunpack.c.l.b16 %v1365
      %v1437 = vunpack.c.l.b16 %v1366
      %v1438 = vunpack.c.l.b16 %v1367
      %v1439 = vunpack.c.l.b16 %v1368
      %v1440 = vunpack.c.l.b16 %v1369
      %v1441 = vpack.c.b16 %v1426, %v1425
      %v1442 = vpack.c.b16 %v1428, %v1427
      %v1443 = vpack.c.b16 %v1430, %v1429
      %v1444 = vpack.c.b16 %v1432, %v1431
      %v1445 = vpack.c.b16 %v1434, %v1433
      %v1446 = vpack.c.b16 %v1436, %v1435
      %v1447 = vpack.c.b16 %v1438, %v1437
      %v1448 = vpack.c.b16 %v1440, %v1439
      %1457 = vmatprep.subr.bf16.mxu0 0
      %1458 = vmatpush1.bf16.msra.mxu0 %v1441
      %1459 = vmatprep.subr.bf16.mxu0 0
      %1460 = vmatpush1.bf16.msra.mxu0 %v1442
      %1461 = vmatprep.subr.bf16.mxu0 0
      %1462 = vmatpush1.bf16.msra.mxu0 %v1443
      %1463 = vmatprep.subr.bf16.mxu0 0
      %1464 = vmatpush1.bf16.msra.mxu0 %v1444
      %1465 = vmatprep.subr.bf16.mxu0 0
      %1466 = vmatpush1.bf16.msra.mxu0 %v1445
      %1467 = vmatprep.subr.bf16.mxu0 0
      %1468 = vmatpush1.bf16.msra.mxu0 %v1446
      %1469 = vmatprep.subr.bf16.mxu0 0
      %1470 = vmatpush1.bf16.msra.mxu0 %v1447
      %1471 = vmatprep.subr.bf16.mxu0 0
      %1472 = vmatpush1.bf16.msra.mxu0 %v1448
      %1473 = vmatprep.subr.bf16.mxu0 0
      %1474 = vmatpush1.bf16.msra.mxu0 0
      %1475 = vmatprep.subr.bf16.mxu0 0
      %1476 = vmatpush1.bf16.msra.mxu0 0
      %1477 = vmatprep.subr.bf16.mxu0 0
      %1478 = vmatpush1.bf16.msra.mxu0 0
      %1479 = vmatprep.subr.bf16.mxu0 0
      %1480 = vmatpush1.bf16.msra.mxu0 0
      %1481 = vmatprep.subr.bf16.mxu0 0
      %1482 = vmatpush1.bf16.msra.mxu0 0
      %1483 = vmatprep.subr.bf16.mxu0 0
      %1484 = vmatpush1.bf16.msra.mxu0 0
      %1485 = vmatprep.subr.bf16.mxu0 0
      %1486 = vmatpush1.bf16.msra.mxu0 0
      %1487 = vmatprep.subr.bf16.mxu0 0
      %1488 = vmatpush1.bf16.msra.mxu0 0
      %1489 = vmatprep.mubr.bf16.mxu0 0
      %1490 = vmatmul.mubr.bf16.gmra.mrb[0].mxu0 %v1370
      %v1491 = vpop.f32.mrb[0].mxu0
      %v1492 = vadd.f32 %v1407, %v1491
      %v1493 = vpop.f32.mrb[0].mxu0
      %v1494 = vpop.f32.mrb[0].mxu0
      %v1495 = vadd.f32 %v1407, %v1494
      %v1496 = vpop.f32.mrb[0].mxu0
      %1497 = vmatprep.mubr.bf16.mxu0 0
      %1498 = vmatmul.mubr.bf16.gmra.mrb[0].mxu0 %v1371
      %v1499 = vpop.f32.mrb[0].mxu0
      %v1500 = vadd.f32 %v1407, %v1499
      %v1501 = vpop.f32.mrb[0].mxu0
      %v1502 = vpop.f32.mrb[0].mxu0
      %v1503 = vadd.f32 %v1407, %v1502
      %v1504 = vpop.f32.mrb[0].mxu0
      %1505 = vmatprep.mubr.bf16.mxu0 0
      %1506 = vmatmul.mubr.bf16.gmra.mrb[0].mxu0 %v1372
      %v1507 = vpop.f32.mrb[0].mxu0
      %v1508 = vadd.f32 %v1407, %v1507
      %v1509 = vpop.f32.mrb[0].mxu0
      %v1510 = vpop.f32.mrb[0].mxu0
      %v1511 = vadd.f32 %v1407, %v1510
      %v1512 = vpop.f32.mrb[0].mxu0
      %1513 = vmatprep.mubr.bf16.mxu0 0
      %1514 = vmatmul.mubr.bf16.gmra.mrb[0].mxu0 %v1373
      %v1515 = vpop.f32.mrb[0].mxu0
      %v1516 = vadd.f32 %v1407, %v1515
      %v1517 = vpop.f32.mrb[0].mxu0
      %v1518 = vpop.f32.mrb[0].mxu0
      %v1519 = vadd.f32 %v1407, %v1518
      %v1520 = vpop.f32.mrb[0].mxu0
      %1521 = vmatprep.mubr.bf16.mxu0 0
      %1522 = vmatmul.mubr.bf16.gmra.mrb[0].mxu0 %v1374
      %v1523 = vpop.f32.mrb[0].mxu0
      %v1524 = vadd.f32 %v1407, %v1523
      %v1525 = vpop.f32.mrb[0].mxu0
      %v1526 = vpop.f32.mrb[0].mxu0
      %v1527 = vadd.f32 %v1407, %v1526
      %v1528 = vpop.f32.mrb[0].mxu0
      %1529 = vmatprep.mubr.bf16.mxu0 0
      %1530 = vmatmul.mubr.bf16.gmra.mrb[0].mxu0 %v1375
      %v1531 = vpop.f32.mrb[0].mxu0
      %v1532 = vadd.f32 %v1407, %v1531
      %v1533 = vpop.f32.mrb[0].mxu0
      %v1534 = vpop.f32.mrb[0].mxu0
      %v1535 = vadd.f32 %v1407, %v1534
      %v1536 = vpop.f32.mrb[0].mxu0
      %1537 = vmatprep.mubr.bf16.mxu0 0
      %1538 = vmatmul.mubr.bf16.gmra.mrb[0].mxu0 %v1376
      %v1539 = vpop.f32.mrb[0].mxu0
      %v1540 = vadd.f32 %v1407, %v1539
      %v1541 = vpop.f32.mrb[0].mxu0
      %v1542 = vpop.f32.mrb[0].mxu0
      %v1543 = vadd.f32 %v1407, %v1542
      %v1544 = vpop.f32.mrb[0].mxu0
      %1545 = vmatprep.mubr.bf16.mxu0 0
      %1546 = vmatmul.mubr.bf16.gmra.mrb[0].mxu0 %v1377
      %v1547 = vpop.f32.mrb[0].mxu0
      %v1548 = vadd.f32 %v1407, %v1547
      %v1549 = vpop.f32.mrb[0].mxu0
      %v1550 = vpop.f32.mrb[0].mxu0
      %v1551 = vadd.f32 %v1407, %v1550
      %v1552 = vpop.f32.mrb[0].mxu0
      %1553 = vmatprep.mubr.bf16.mxu0 0
      %1554 = vmatmul.mubr.bf16.gmra.mrb[0].mxu0 %v1378
      %v1555 = vpop.f32.mrb[0].mxu0
      %v1556 = vadd.f32 %v1407, %v1555
      %v1557 = vpop.f32.mrb[0].mxu0
      %v1558 = vpop.f32.mrb[0].mxu0
      %v1559 = vadd.f32 %v1407, %v1558
      %v1560 = vpop.f32.mrb[0].mxu0
      %1561 = vmatprep.mubr.bf16.mxu0 0
      %1562 = vmatmul.mubr.bf16.gmra.mrb[0].mxu0 %v1379
      %v1563 = vpop.f32.mrb[0].mxu0
      %v1564 = vadd.f32 %v1407, %v1563
      %v1565 = vpop.f32.mrb[0].mxu0
      %v1566 = vpop.f32.mrb[0].mxu0
      %v1567 = vadd.f32 %v1407, %v1566
      %v1568 = vpop.f32.mrb[0].mxu0
      %1569 = vmatprep.mubr.bf16.mxu0 0
      %1570 = vmatmul.mubr.bf16.gmra.mrb[0].mxu0 %v1380
      %v1571 = vpop.f32.mrb[0].mxu0
      %v1572 = vadd.f32 %v1407, %v1571
      %v1573 = vpop.f32.mrb[0].mxu0
      %v1574 = vpop.f32.mrb[0].mxu0
      %v1575 = vadd.f32 %v1407, %v1574
      %v1576 = vpop.f32.mrb[0].mxu0
      %1577 = vmatprep.mubr.bf16.mxu0 0
      %1578 = vmatmul.mubr.bf16.gmra.mrb[0].mxu0 %v1381
      %v1579 = vpop.f32.mrb[0].mxu0
      %v1580 = vadd.f32 %v1407, %v1579
      %v1581 = vpop.f32.mrb[0].mxu0
      %v1582 = vpop.f32.mrb[0].mxu0
      %v1583 = vadd.f32 %v1407, %v1582
      %v1584 = vpop.f32.mrb[0].mxu0
      %1585 = vmatprep.mubr.bf16.mxu0 0
      %1586 = vmatmul.mubr.bf16.gmra.mrb[0].mxu0 %v1382
      %v1587 = vpop.f32.mrb[0].mxu0
      %v1588 = vadd.f32 %v1407, %v1587
      %v1589 = vpop.f32.mrb[0].mxu0
      %v1590 = vpop.f32.mrb[0].mxu0
      %v1591 = vadd.f32 %v1407, %v1590
      %v1592 = vpop.f32.mrb[0].mxu0
      %1593 = vmatprep.mubr.bf16.mxu0 0
      %1594 = vmatmul.mubr.bf16.gmra.mrb[0].mxu0 %v1383
      %v1595 = vpop.f32.mrb[0].mxu0
      %v1596 = vadd.f32 %v1407, %v1595
      %v1597 = vpop.f32.mrb[0].mxu0
      %v1598 = vpop.f32.mrb[0].mxu0
      %v1599 = vadd.f32 %v1407, %v1598
      %v1600 = vpop.f32.mrb[0].mxu0
      %1601 = vmatprep.mubr.bf16.mxu0 0
      %1602 = vmatmul.mubr.bf16.gmra.mrb[0].mxu0 %v1384
      %v1603 = vpop.f32.mrb[0].mxu0
      %v1604 = vadd.f32 %v1407, %v1603
      %v1605 = vpop.f32.mrb[0].mxu0
      %v1606 = vpop.f32.mrb[0].mxu0
      %v1607 = vadd.f32 %v1407, %v1606
      %v1608 = vpop.f32.mrb[0].mxu0
      %1609 = vmatprep.mubr.bf16.mxu0 0
      %1610 = vmatmul.mubr.bf16.gmra.mrb[0].mxu0 %v1385
      %v1611 = vpop.f32.mrb[0].mxu0
      %v1612 = vadd.f32 %v1407, %v1611
      %v1613 = vpop.f32.mrb[0].mxu0
      %v1614 = vpop.f32.mrb[0].mxu0
      %v1615 = vadd.f32 %v1407, %v1614
      %v1616 = vpop.f32.mrb[0].mxu0
      %1617 = vmatprep.mubr.bf16.mxu0 0
      %1618 = vmatmul.mubr.bf16.gmra.mrb[0].mxu0 %v1386
      %v1619 = vpop.f32.mrb[0].mxu0
      %v1620 = vadd.f32 %v1407, %v1619
      %v1621 = vpop.f32.mrb[0].mxu0
      %v1622 = vpop.f32.mrb[0].mxu0
      %v1623 = vadd.f32 %v1407, %v1622
      %v1624 = vpop.f32.mrb[0].mxu0
      %1625 = vmatprep.mubr.bf16.mxu0 0
      %1626 = vmatmul.mubr.bf16.gmra.mrb[0].mxu0 %v1387
      %v1627 = vpop.f32.mrb[0].mxu0
      %v1628 = vadd.f32 %v1407, %v1627
      %v1629 = vpop.f32.mrb[0].mxu0
      %v1630 = vpop.f32.mrb[0].mxu0
      %v1631 = vadd.f32 %v1407, %v1630
      %v1632 = vpop.f32.mrb[0].mxu0
      %1633 = vmatprep.mubr.bf16.mxu0 0
      %1634 = vmatmul.mubr.bf16.gmra.mrb[0].mxu0 %v1388
      %v1635 = vpop.f32.mrb[0].mxu0
      %v1636 = vadd.f32 %v1407, %v1635
      %v1637 = vpop.f32.mrb[0].mxu0
      %v1638 = vpop.f32.mrb[0].mxu0
      %v1639 = vadd.f32 %v1407, %v1638
      %v1640 = vpop.f32.mrb[0].mxu0
      %1641 = vmatprep.mubr.bf16.mxu0 0
      %1642 = vmatmul.mubr.bf16.gmra.mrb[0].mxu0 %v1389
      %v1643 = vpop.f32.mrb[0].mxu0
      %v1644 = vadd.f32 %v1407, %v1643
      %v1645 = vpop.f32.mrb[0].mxu0
      %v1646 = vpop.f32.mrb[0].mxu0
      %v1647 = vadd.f32 %v1407, %v1646
      %v1648 = vpop.f32.mrb[0].mxu0
      %1649 = vmatprep.mubr.bf16.mxu0 0
      %1650 = vmatmul.mubr.bf16.gmra.mrb[0].mxu0 %v1390
      %v1651 = vpop.f32.mrb[0].mxu0
      %v1652 = vadd.f32 %v1407, %v1651
      %v1653 = vpop.f32.mrb[0].mxu0
      %v1654 = vpop.f32.mrb[0].mxu0
      %v1655 = vadd.f32 %v1407, %v1654
      %v1656 = vpop.f32.mrb[0].mxu0
      %1657 = vmatprep.mubr.bf16.mxu0 0
      %1658 = vmatmul.mubr.bf16.gmra.mrb[0].mxu0 %v1391
      %v1659 = vpop.f32.mrb[0].mxu0
      %v1660 = vadd.f32 %v1407, %v1659
      %v1661 = vpop.f32.mrb[0].mxu0
      %v1662 = vpop.f32.mrb[0].mxu0
      %v1663 = vadd.f32 %v1407, %v1662
      %v1664 = vpop.f32.mrb[0].mxu0
      %1665 = vmatprep.mubr.bf16.mxu0 0
      %1666 = vmatmul.mubr.bf16.gmra.mrb[0].mxu0 %v1392
      %v1667 = vpop.f32.mrb[0].mxu0
      %v1668 = vadd.f32 %v1407, %v1667
      %v1669 = vpop.f32.mrb[0].mxu0
      %v1670 = vpop.f32.mrb[0].mxu0
      %v1671 = vadd.f32 %v1407, %v1670
      %v1672 = vpop.f32.mrb[0].mxu0
      %1673 = vmatprep.mubr.bf16.mxu0 0
      %1674 = vmatmul.mubr.bf16.gmra.mrb[0].mxu0 %v1393
      %v1675 = vpop.f32.mrb[0].mxu0
      %v1676 = vadd.f32 %v1407, %v1675
      %v1677 = vpop.f32.mrb[0].mxu0
      %v1678 = vpop.f32.mrb[0].mxu0
      %v1679 = vadd.f32 %v1407, %v1678
      %v1680 = vpop.f32.mrb[0].mxu0
      %1681 = vmatprep.mubr.bf16.mxu0 0
      %1682 = vmatmul.mubr.bf16.gmra.mrb[0].mxu0 %v1394
      %v1683 = vpop.f32.mrb[0].mxu0
      %v1684 = vadd.f32 %v1407, %v1683
      %v1685 = vpop.f32.mrb[0].mxu0
      %v1686 = vpop.f32.mrb[0].mxu0
      %v1687 = vadd.f32 %v1407, %v1686
      %v1688 = vpop.f32.mrb[0].mxu0
      %1689 = vmatprep.mubr.bf16.mxu0 0
      %1690 = vmatmul.mubr.bf16.gmra.mrb[0].mxu0 %v1395
      %v1691 = vpop.f32.mrb[0].mxu0
      %v1692 = vadd.f32 %v1407, %v1691
      %v1693 = vpop.f32.mrb[0].mxu0
      %v1694 = vpop.f32.mrb[0].mxu0
      %v1695 = vadd.f32 %v1407, %v1694
      %v1696 = vpop.f32.mrb[0].mxu0
      %1697 = vmatprep.mubr.bf16.mxu0 0
      %1698 = vmatmul.mubr.bf16.gmra.mrb[0].mxu0 %v1396
      %v1699 = vpop.f32.mrb[0].mxu0
      %v1700 = vadd.f32 %v1407, %v1699
      %v1701 = vpop.f32.mrb[0].mxu0
      %v1702 = vpop.f32.mrb[0].mxu0
      %v1703 = vadd.f32 %v1407, %v1702
      %v1704 = vpop.f32.mrb[0].mxu0
      %1705 = vmatprep.mubr.bf16.mxu0 0
      %1706 = vmatmul.mubr.bf16.gmra.mrb[0].mxu0 %v1397
      %v1707 = vpop.f32.mrb[0].mxu0
      %v1708 = vadd.f32 %v1407, %v1707
      %v1709 = vpop.f32.mrb[0].mxu0
      %v1710 = vpop.f32.mrb[0].mxu0
      %v1711 = vadd.f32 %v1407, %v1710
      %v1712 = vpop.f32.mrb[0].mxu0
      %1713 = vmatprep.mubr.bf16.mxu0 0
      %1714 = vmatmul.mubr.bf16.gmra.mrb[0].mxu0 %v1398
      %v1715 = vpop.f32.mrb[0].mxu0
      %v1716 = vadd.f32 %v1407, %v1715
      %v1717 = vpop.f32.mrb[0].mxu0
      %v1718 = vpop.f32.mrb[0].mxu0
      %v1719 = vadd.f32 %v1407, %v1718
      %v1720 = vpop.f32.mrb[0].mxu0
      %1721 = vmatprep.mubr.bf16.mxu0 0
      %1722 = vmatmul.mubr.bf16.gmra.mrb[0].mxu0 %v1399
      %v1723 = vpop.f32.mrb[0].mxu0
      %v1724 = vadd.f32 %v1407, %v1723
      %v1725 = vpop.f32.mrb[0].mxu0
      %v1726 = vpop.f32.mrb[0].mxu0
      %v1727 = vadd.f32 %v1407, %v1726
      %v1728 = vpop.f32.mrb[0].mxu0
      %1729 = vmatprep.mubr.bf16.mxu0 0
      %1730 = vmatmul.mubr.bf16.gmra.mrb[0].mxu0 %v1400
      %v1731 = vpop.f32.mrb[0].mxu0
      %v1732 = vadd.f32 %v1407, %v1731
      %v1733 = vpop.f32.mrb[0].mxu0
      %v1734 = vpop.f32.mrb[0].mxu0
      %v1735 = vadd.f32 %v1407, %v1734
      %v1736 = vpop.f32.mrb[0].mxu0
      %1737 = vmatprep.mubr.bf16.mxu0 0
      %1738 = vmatmul.mubr.bf16.gmra.mrb[0].mxu0 %v1401
      %v1739 = vpop.f32.mrb[0].mxu0
      %v1740 = vadd.f32 %v1407, %v1739
      %v1741 = vpop.f32.mrb[0].mxu0
      %v1742 = vpop.f32.mrb[0].mxu0
      %v1743 = vadd.f32 %v1407, %v1742
      %v1744 = vpop.f32.mrb[0].mxu0
      %1745 = vdwg.mxu0
      %v1746 = vld [vmem:[%s7] sm:$0x1]
      %v1747 = vld [vmem:[%s8] sm:$0x1]
      %1748 = vadd.xlane.f32.xlu0 %v1492
      %v1749 = vpop.xlane.xlu0 %1748
      %1750 = vadd.xlane.f32.xlu0 %v1495
      %v1751 = vpop.xlane.xlu0 %1750
      %1752 = vadd.xlane.f32.xlu0 %v1500
      %v1753 = vpop.xlane.xlu0 %1752
      %1754 = vadd.xlane.f32.xlu0 %v1503
      %v1755 = vpop.xlane.xlu0 %1754
      %1756 = vadd.xlane.f32.xlu0 %v1508
      %v1757 = vpop.xlane.xlu0 %1756
      %1758 = vadd.xlane.f32.xlu0 %v1511
      %v1759 = vpop.xlane.xlu0 %1758
      %1760 = vadd.xlane.f32.xlu0 %v1516
      %v1761 = vpop.xlane.xlu0 %1760
      %1762 = vadd.xlane.f32.xlu0 %v1519
      %v1763 = vpop.xlane.xlu0 %1762
      %1764 = vadd.xlane.f32.xlu0 %v1524
      %v1765 = vpop.xlane.xlu0 %1764
      %1766 = vadd.xlane.f32.xlu0 %v1527
      %v1767 = vpop.xlane.xlu0 %1766
      %1768 = vadd.xlane.f32.xlu0 %v1532
      %v1769 = vpop.xlane.xlu0 %1768
      %1770 = vadd.xlane.f32.xlu0 %v1535
      %v1771 = vpop.xlane.xlu0 %1770
      %1772 = vadd.xlane.f32.xlu0 %v1540
      %v1773 = vpop.xlane.xlu0 %1772
      %1774 = vadd.xlane.f32.xlu0 %v1543
      %v1775 = vpop.xlane.xlu0 %1774
      %1776 = vadd.xlane.f32.xlu0 %v1548
      %v1777 = vpop.xlane.xlu0 %1776
      %1778 = vadd.xlane.f32.xlu0 %v1551
      %v1779 = vpop.xlane.xlu0 %1778
      %1780 = vadd.xlane.f32.xlu0 %v1556
      %v1781 = vpop.xlane.xlu0 %1780
      %1782 = vadd.xlane.f32.xlu0 %v1559
      %v1783 = vpop.xlane.xlu0 %1782
      %1784 = vadd.xlane.f32.xlu0 %v1564
      %v1785 = vpop.xlane.xlu0 %1784
      %1786 = vadd.xlane.f32.xlu0 %v1567
      %v1787 = vpop.xlane.xlu0 %1786
      %1788 = vadd.xlane.f32.xlu0 %v1572
      %v1789 = vpop.xlane.xlu0 %1788
      %1790 = vadd.xlane.f32.xlu0 %v1575
      %v1791 = vpop.xlane.xlu0 %1790
      %1792 = vadd.xlane.f32.xlu0 %v1580
      %v1793 = vpop.xlane.xlu0 %1792
      %1794 = vadd.xlane.f32.xlu0 %v1583
      %v1795 = vpop.xlane.xlu0 %1794
      %1796 = vadd.xlane.f32.xlu0 %v1588
      %v1797 = vpop.xlane.xlu0 %1796
      %1798 = vadd.xlane.f32.xlu0 %v1591
      %v1799 = vpop.xlane.xlu0 %1798
      %1800 = vadd.xlane.f32.xlu0 %v1596
      %v1801 = vpop.xlane.xlu0 %1800
      %1802 = vadd.xlane.f32.xlu0 %v1599
      %v1803 = vpop.xlane.xlu0 %1802
      %1804 = vadd.xlane.f32.xlu0 %v1604
      %v1805 = vpop.xlane.xlu0 %1804
      %1806 = vadd.xlane.f32.xlu0 %v1607
      %v1807 = vpop.xlane.xlu0 %1806
      %1808 = vadd.xlane.f32.xlu0 %v1612
      %v1809 = vpop.xlane.xlu0 %1808
      %1810 = vadd.xlane.f32.xlu0 %v1615
      %v1811 = vpop.xlane.xlu0 %1810
      %1812 = vadd.xlane.f32.xlu0 %v1620
      %v1813 = vpop.xlane.xlu0 %1812
      %1814 = vadd.xlane.f32.xlu0 %v1623
      %v1815 = vpop.xlane.xlu0 %1814
      %1816 = vadd.xlane.f32.xlu0 %v1628
      %v1817 = vpop.xlane.xlu0 %1816
      %1818 = vadd.xlane.f32.xlu0 %v1631
      %v1819 = vpop.xlane.xlu0 %1818
      %1820 = vadd.xlane.f32.xlu0 %v1636
      %v1821 = vpop.xlane.xlu0 %1820
      %1822 = vadd.xlane.f32.xlu0 %v1639
      %v1823 = vpop.xlane.xlu0 %1822
      %1824 = vadd.xlane.f32.xlu0 %v1644
      %v1825 = vpop.xlane.xlu0 %1824
      %1826 = vadd.xlane.f32.xlu0 %v1647
      %v1827 = vpop.xlane.xlu0 %1826
      %1828 = vadd.xlane.f32.xlu0 %v1652
      %v1829 = vpop.xlane.xlu0 %1828
      %1830 = vadd.xlane.f32.xlu0 %v1655
      %v1831 = vpop.xlane.xlu0 %1830
      %1832 = vadd.xlane.f32.xlu0 %v1660
      %v1833 = vpop.xlane.xlu0 %1832
      %1834 = vadd.xlane.f32.xlu0 %v1663
      %v1835 = vpop.xlane.xlu0 %1834
      %1836 = vadd.xlane.f32.xlu0 %v1668
      %v1837 = vpop.xlane.xlu0 %1836
      %1838 = vadd.xlane.f32.xlu0 %v1671
      %v1839 = vpop.xlane.xlu0 %1838
      %1840 = vadd.xlane.f32.xlu0 %v1676
      %v1841 = vpop.xlane.xlu0 %1840
      %1842 = vadd.xlane.f32.xlu0 %v1679
      %v1843 = vpop.xlane.xlu0 %1842
      %1844 = vadd.xlane.f32.xlu0 %v1684
      %v1845 = vpop.xlane.xlu0 %1844
      %1846 = vadd.xlane.f32.xlu0 %v1687
      %v1847 = vpop.xlane.xlu0 %1846
      %1848 = vadd.xlane.f32.xlu0 %v1692
      %v1849 = vpop.xlane.xlu0 %1848
      %1850 = vadd.xlane.f32.xlu0 %v1695
      %v1851 = vpop.xlane.xlu0 %1850
      %1852 = vadd.xlane.f32.xlu0 %v1700
      %v1853 = vpop.xlane.xlu0 %1852
      %1854 = vadd.xlane.f32.xlu0 %v1703
      %v1855 = vpop.xlane.xlu0 %1854
      %1856 = vadd.xlane.f32.xlu0 %v1708
      %v1857 = vpop.xlane.xlu0 %1856
      %1858 = vadd.xlane.f32.xlu0 %v1711
      %v1859 = vpop.xlane.xlu0 %1858
      %1860 = vadd.xlane.f32.xlu0 %v1716
      %v1861 = vpop.xlane.xlu0 %1860
      %1862 = vadd.xlane.f32.xlu0 %v1719
      %v1863 = vpop.xlane.xlu0 %1862
      %1864 = vadd.xlane.f32.xlu0 %v1724
      %v1865 = vpop.xlane.xlu0 %1864
      %1866 = vadd.xlane.f32.xlu0 %v1727
      %v1867 = vpop.xlane.xlu0 %1866
      %1868 = vadd.xlane.f32.xlu0 %v1732
      %v1869 = vpop.xlane.xlu0 %1868
      %1870 = vadd.xlane.f32.xlu0 %v1735
      %v1871 = vpop.xlane.xlu0 %1870
      %1872 = vadd.xlane.f32.xlu0 %v1740
      %v1873 = vpop.xlane.xlu0 %1872
      %1874 = vadd.xlane.f32.xlu0 %v1743
      %v1875 = vpop.xlane.xlu0 %1874
      %v1876 = vrcp.pop 128.0
      %v1877 = vmul.f32 %v1749, %v1876
      %v1878 = vmul.f32 %v1751, %v1876
      %v1879 = vmul.f32 %v1753, %v1876
      %v1880 = vmul.f32 %v1755, %v1876
      %v1881 = vmul.f32 %v1757, %v1876
      %v1882 = vmul.f32 %v1759, %v1876
      %v1883 = vmul.f32 %v1761, %v1876
      %v1884 = vmul.f32 %v1763, %v1876
      %v1885 = vmul.f32 %v1765, %v1876
      %v1886 = vmul.f32 %v1767, %v1876
      %v1887 = vmul.f32 %v1769, %v1876
      %v1888 = vmul.f32 %v1771, %v1876
      %v1889 = vmul.f32 %v1773, %v1876
      %v1890 = vmul.f32 %v1775, %v1876
      %v1891 = vmul.f32 %v1777, %v1876
      %v1892 = vmul.f32 %v1779, %v1876
      %v1893 = vmul.f32 %v1781, %v1876
      %v1894 = vmul.f32 %v1783, %v1876
      %v1895 = vmul.f32 %v1785, %v1876
      %v1896 = vmul.f32 %v1787, %v1876
      %v1897 = vmul.f32 %v1789, %v1876
      %v1898 = vmul.f32 %v1791, %v1876
      %v1899 = vmul.f32 %v1793, %v1876
      %v1900 = vmul.f32 %v1795, %v1876
      %v1901 = vmul.f32 %v1797, %v1876
      %v1902 = vmul.f32 %v1799, %v1876
      %v1903 = vmul.f32 %v1801, %v1876
      %v1904 = vmul.f32 %v1803, %v1876
      %v1905 = vmul.f32 %v1805, %v1876
      %v1906 = vmul.f32 %v1807, %v1876
      %v1907 = vmul.f32 %v1809, %v1876
      %v1908 = vmul.f32 %v1811, %v1876
      %v1909 = vmul.f32 %v1813, %v1876
      %v1910 = vmul.f32 %v1815, %v1876
      %v1911 = vmul.f32 %v1817, %v1876
      %v1912 = vmul.f32 %v1819, %v1876
      %v1913 = vmul.f32 %v1821, %v1876
      %v1914 = vmul.f32 %v1823, %v1876
      %v1915 = vmul.f32 %v1825, %v1876
      %v1916 = vmul.f32 %v1827, %v1876
      %v1917 = vmul.f32 %v1829, %v1876
      %v1918 = vmul.f32 %v1831, %v1876
      %v1919 = vmul.f32 %v1833, %v1876
      %v1920 = vmul.f32 %v1835, %v1876
      %v1921 = vmul.f32 %v1837, %v1876
      %v1922 = vmul.f32 %v1839, %v1876
      %v1923 = vmul.f32 %v1841, %v1876
      %v1924 = vmul.f32 %v1843, %v1876
      %v1925 = vmul.f32 %v1845, %v1876
      %v1926 = vmul.f32 %v1847, %v1876
      %v1927 = vmul.f32 %v1849, %v1876
      %v1928 = vmul.f32 %v1851, %v1876
      %v1929 = vmul.f32 %v1853, %v1876
      %v1930 = vmul.f32 %v1855, %v1876
      %v1931 = vmul.f32 %v1857, %v1876
      %v1932 = vmul.f32 %v1859, %v1876
      %v1933 = vmul.f32 %v1861, %v1876
      %v1934 = vmul.f32 %v1863, %v1876
      %v1935 = vmul.f32 %v1865, %v1876
      %v1936 = vmul.f32 %v1867, %v1876
      %v1937 = vmul.f32 %v1869, %v1876
      %v1938 = vmul.f32 %v1871, %v1876
      %v1939 = vmul.f32 %v1873, %v1876
      %v1940 = vmul.f32 %v1875, %v1876
      %v1941 = vsub.f32 %v1492, %v1877
      %v1942 = vsub.f32 %v1495, %v1878
      %v1943 = vsub.f32 %v1500, %v1879
      %v1944 = vsub.f32 %v1503, %v1880
      %v1945 = vsub.f32 %v1508, %v1881
      %v1946 = vsub.f32 %v1511, %v1882
      %v1947 = vsub.f32 %v1516, %v1883
      %v1948 = vsub.f32 %v1519, %v1884
      %v1949 = vsub.f32 %v1524, %v1885
      %v1950 = vsub.f32 %v1527, %v1886
      %v1951 = vsub.f32 %v1532, %v1887
      %v1952 = vsub.f32 %v1535, %v1888
      %v1953 = vsub.f32 %v1540, %v1889
      %v1954 = vsub.f32 %v1543, %v1890
      %v1955 = vsub.f32 %v1548, %v1891
      %v1956 = vsub.f32 %v1551, %v1892
      %v1957 = vsub.f32 %v1556, %v1893
      %v1958 = vsub.f32 %v1559, %v1894
      %v1959 = vsub.f32 %v1564, %v1895
      %v1960 = vsub.f32 %v1567, %v1896
      %v1961 = vsub.f32 %v1572, %v1897
      %v1962 = vsub.f32 %v1575, %v1898
      %v1963 = vsub.f32 %v1580, %v1899
      %v1964 = vsub.f32 %v1583, %v1900
      %v1965 = vsub.f32 %v1588, %v1901
      %v1966 = vsub.f32 %v1591, %v1902
      %v1967 = vsub.f32 %v1596, %v1903
      %v1968 = vsub.f32 %v1599, %v1904
      %v1969 = vsub.f32 %v1604, %v1905
      %v1970 = vsub.f32 %v1607, %v1906
      %v1971 = vsub.f32 %v1612, %v1907
      %v1972 = vsub.f32 %v1615, %v1908
      %v1973 = vsub.f32 %v1620, %v1909
      %v1974 = vsub.f32 %v1623, %v1910
      %v1975 = vsub.f32 %v1628, %v1911
      %v1976 = vsub.f32 %v1631, %v1912
      %v1977 = vsub.f32 %v1636, %v1913
      %v1978 = vsub.f32 %v1639, %v1914
      %v1979 = vsub.f32 %v1644, %v1915
      %v1980 = vsub.f32 %v1647, %v1916
      %v1981 = vsub.f32 %v1652, %v1917
      %v1982 = vsub.f32 %v1655, %v1918
      %v1983 = vsub.f32 %v1660, %v1919
      %v1984 = vsub.f32 %v1663, %v1920
      %v1985 = vsub.f32 %v1668, %v1921
      %v1986 = vsub.f32 %v1671, %v1922
      %v1987 = vsub.f32 %v1676, %v1923
      %v1988 = vsub.f32 %v1679, %v1924
      %v1989 = vsub.f32 %v1684, %v1925
      %v1990 = vsub.f32 %v1687, %v1926
      %v1991 = vsub.f32 %v1692, %v1927
      %v1992 = vsub.f32 %v1695, %v1928
      %v1993 = vsub.f32 %v1700, %v1929
      %v1994 = vsub.f32 %v1703, %v1930
      %v1995 = vsub.f32 %v1708, %v1931
      %v1996 = vsub.f32 %v1711, %v1932
      %v1997 = vsub.f32 %v1716, %v1933
      %v1998 = vsub.f32 %v1719, %v1934
      %v1999 = vsub.f32 %v1724, %v1935
      %v2000 = vsub.f32 %v1727, %v1936
      %v2001 = vsub.f32 %v1732, %v1937
      %v2002 = vsub.f32 %v1735, %v1938
      %v2003 = vsub.f32 %v1740, %v1939
      %v2004 = vsub.f32 %v1743, %v1940
      %v2005 = vmul.f32 %v1941, %v1941
      %v2006 = vmul.f32 %v1942, %v1942
      %v2007 = vmul.f32 %v1943, %v1943
      %v2008 = vmul.f32 %v1944, %v1944
      %v2009 = vmul.f32 %v1945, %v1945
      %v2010 = vmul.f32 %v1946, %v1946
      %v2011 = vmul.f32 %v1947, %v1947
      %v2012 = vmul.f32 %v1948, %v1948
      %v2013 = vmul.f32 %v1949, %v1949
      %v2014 = vmul.f32 %v1950, %v1950
      %v2015 = vmul.f32 %v1951, %v1951
      %v2016 = vmul.f32 %v1952, %v1952
      %v2017 = vmul.f32 %v1953, %v1953
      %v2018 = vmul.f32 %v1954, %v1954
      %v2019 = vmul.f32 %v1955, %v1955
      %v2020 = vmul.f32 %v1956, %v1956
      %v2021 = vmul.f32 %v1957, %v1957
      %v2022 = vmul.f32 %v1958, %v1958
      %v2023 = vmul.f32 %v1959, %v1959
      %v2024 = vmul.f32 %v1960, %v1960
      %v2025 = vmul.f32 %v1961, %v1961
      %v2026 = vmul.f32 %v1962, %v1962
      %v2027 = vmul.f32 %v1963, %v1963
      %v2028 = vmul.f32 %v1964, %v1964
      %v2029 = vmul.f32 %v1965, %v1965
      %v2030 = vmul.f32 %v1966, %v1966
      %v2031 = vmul.f32 %v1967, %v1967
      %v2032 = vmul.f32 %v1968, %v1968
      %v2033 = vmul.f32 %v1969, %v1969
      %v2034 = vmul.f32 %v1970, %v1970
      %v2035 = vmul.f32 %v1971, %v1971
      %v2036 = vmul.f32 %v1972, %v1972
      %v2037 = vmul.f32 %v1973, %v1973
      %v2038 = vmul.f32 %v1974, %v1974
      %v2039 = vmul.f32 %v1975, %v1975
      %v2040 = vmul.f32 %v1976, %v1976
      %v2041 = vmul.f32 %v1977, %v1977
      %v2042 = vmul.f32 %v1978, %v1978
      %v2043 = vmul.f32 %v1979, %v1979
      %v2044 = vmul.f32 %v1980, %v1980
      %v2045 = vmul.f32 %v1981, %v1981
      %v2046 = vmul.f32 %v1982, %v1982
      %v2047 = vmul.f32 %v1983, %v1983
      %v2048 = vmul.f32 %v1984, %v1984
      %v2049 = vmul.f32 %v1985, %v1985
      %v2050 = vmul.f32 %v1986, %v1986
      %v2051 = vmul.f32 %v1987, %v1987
      %v2052 = vmul.f32 %v1988, %v1988
      %v2053 = vmul.f32 %v1989, %v1989
      %v2054 = vmul.f32 %v1990, %v1990
      %v2055 = vmul.f32 %v1991, %v1991
      %v2056 = vmul.f32 %v1992, %v1992
      %v2057 = vmul.f32 %v1993, %v1993
      %v2058 = vmul.f32 %v1994, %v1994
      %v2059 = vmul.f32 %v1995, %v1995
      %v2060 = vmul.f32 %v1996, %v1996
      %v2061 = vmul.f32 %v1997, %v1997
      %v2062 = vmul.f32 %v1998, %v1998
      %v2063 = vmul.f32 %v1999, %v1999
      %v2064 = vmul.f32 %v2000, %v2000
      %v2065 = vmul.f32 %v2001, %v2001
      %v2066 = vmul.f32 %v2002, %v2002
      %v2067 = vmul.f32 %v2003, %v2003
      %v2068 = vmul.f32 %v2004, %v2004
      %2069 = vadd.xlane.f32.xlu0 %v2005
      %v2070 = vpop.xlane.xlu0 %2069
      %2071 = vadd.xlane.f32.xlu0 %v2006
      %v2072 = vpop.xlane.xlu0 %2071
      %2073 = vadd.xlane.f32.xlu0 %v2007
      %v2074 = vpop.xlane.xlu0 %2073
      %2075 = vadd.xlane.f32.xlu0 %v2008
      %v2076 = vpop.xlane.xlu0 %2075
      %2077 = vadd.xlane.f32.xlu0 %v2009
      %v2078 = vpop.xlane.xlu0 %2077
      %2079 = vadd.xlane.f32.xlu0 %v2010
      %v2080 = vpop.xlane.xlu0 %2079
      %2081 = vadd.xlane.f32.xlu0 %v2011
      %v2082 = vpop.xlane.xlu0 %2081
      %2083 = vadd.xlane.f32.xlu0 %v2012
      %v2084 = vpop.xlane.xlu0 %2083
      %2085 = vadd.xlane.f32.xlu0 %v2013
      %v2086 = vpop.xlane.xlu0 %2085
      %2087 = vadd.xlane.f32.xlu0 %v2014
      %v2088 = vpop.xlane.xlu0 %2087
      %2089 = vadd.xlane.f32.xlu0 %v2015
      %v2090 = vpop.xlane.xlu0 %2089
      %2091 = vadd.xlane.f32.xlu0 %v2016
      %v2092 = vpop.xlane.xlu0 %2091
      %2093 = vadd.xlane.f32.xlu0 %v2017
      %v2094 = vpop.xlane.xlu0 %2093
      %2095 = vadd.xlane.f32.xlu0 %v2018
      %v2096 = vpop.xlane.xlu0 %2095
      %2097 = vadd.xlane.f32.xlu0 %v2019
      %v2098 = vpop.xlane.xlu0 %2097
      %2099 = vadd.xlane.f32.xlu0 %v2020
      %v2100 = vpop.xlane.xlu0 %2099
      %2101 = vadd.xlane.f32.xlu0 %v2021
      %v2102 = vpop.xlane.xlu0 %2101
      %2103 = vadd.xlane.f32.xlu0 %v2022
      %v2104 = vpop.xlane.xlu0 %2103
      %2105 = vadd.xlane.f32.xlu0 %v2023
      %v2106 = vpop.xlane.xlu0 %2105
      %2107 = vadd.xlane.f32.xlu0 %v2024
      %v2108 = vpop.xlane.xlu0 %2107
      %2109 = vadd.xlane.f32.xlu0 %v2025
      %v2110 = vpop.xlane.xlu0 %2109
      %2111 = vadd.xlane.f32.xlu0 %v2026
      %v2112 = vpop.xlane.xlu0 %2111
      %2113 = vadd.xlane.f32.xlu0 %v2027
      %v2114 = vpop.xlane.xlu0 %2113
      %2115 = vadd.xlane.f32.xlu0 %v2028
      %v2116 = vpop.xlane.xlu0 %2115
      %2117 = vadd.xlane.f32.xlu0 %v2029
      %v2118 = vpop.xlane.xlu0 %2117
      %2119 = vadd.xlane.f32.xlu0 %v2030
      %v2120 = vpop.xlane.xlu0 %2119
      %2121 = vadd.xlane.f32.xlu0 %v2031
      %v2122 = vpop.xlane.xlu0 %2121
      %2123 = vadd.xlane.f32.xlu0 %v2032
      %v2124 = vpop.xlane.xlu0 %2123
      %2125 = vadd.xlane.f32.xlu0 %v2033
      %v2126 = vpop.xlane.xlu0 %2125
      %2127 = vadd.xlane.f32.xlu0 %v2034
      %v2128 = vpop.xlane.xlu0 %2127
      %2129 = vadd.xlane.f32.xlu0 %v2035
      %v2130 = vpop.xlane.xlu0 %2129
      %2131 = vadd.xlane.f32.xlu0 %v2036
      %v2132 = vpop.xlane.xlu0 %2131
      %2133 = vadd.xlane.f32.xlu0 %v2037
      %v2134 = vpop.xlane.xlu0 %2133
      %2135 = vadd.xlane.f32.xlu0 %v2038
      %v2136 = vpop.xlane.xlu0 %2135
      %2137 = vadd.xlane.f32.xlu0 %v2039
      %v2138 = vpop.xlane.xlu0 %2137
      %2139 = vadd.xlane.f32.xlu0 %v2040
      %v2140 = vpop.xlane.xlu0 %2139
      %2141 = vadd.xlane.f32.xlu0 %v2041
      %v2142 = vpop.xlane.xlu0 %2141
      %2143 = vadd.xlane.f32.xlu0 %v2042
      %v2144 = vpop.xlane.xlu0 %2143
      %2145 = vadd.xlane.f32.xlu0 %v2043
      %v2146 = vpop.xlane.xlu0 %2145
      %2147 = vadd.xlane.f32.xlu0 %v2044
      %v2148 = vpop.xlane.xlu0 %2147
      %2149 = vadd.xlane.f32.xlu0 %v2045
      %v2150 = vpop.xlane.xlu0 %2149
      %2151 = vadd.xlane.f32.xlu0 %v2046
      %v2152 = vpop.xlane.xlu0 %2151
      %2153 = vadd.xlane.f32.xlu0 %v2047
      %v2154 = vpop.xlane.xlu0 %2153
      %2155 = vadd.xlane.f32.xlu0 %v2048
      %v2156 = vpop.xlane.xlu0 %2155
      %2157 = vadd.xlane.f32.xlu0 %v2049
      %v2158 = vpop.xlane.xlu0 %2157
      %2159 = vadd.xlane.f32.xlu0 %v2050
      %v2160 = vpop.xlane.xlu0 %2159
      %2161 = vadd.xlane.f32.xlu0 %v2051
      %v2162 = vpop.xlane.xlu0 %2161
      %2163 = vadd.xlane.f32.xlu0 %v2052
      %v2164 = vpop.xlane.xlu0 %2163
      %2165 = vadd.xlane.f32.xlu0 %v2053
      %v2166 = vpop.xlane.xlu0 %2165
      %2167 = vadd.xlane.f32.xlu0 %v2054
      %v2168 = vpop.xlane.xlu0 %2167
      %2169 = vadd.xlane.f32.xlu0 %v2055
      %v2170 = vpop.xlane.xlu0 %2169
      %2171 = vadd.xlane.f32.xlu0 %v2056
      %v2172 = vpop.xlane.xlu0 %2171
      %2173 = vadd.xlane.f32.xlu0 %v2057
      %v2174 = vpop.xlane.xlu0 %2173
      %2175 = vadd.xlane.f32.xlu0 %v2058
      %v2176 = vpop.xlane.xlu0 %2175
      %2177 = vadd.xlane.f32.xlu0 %v2059
      %v2178 = vpop.xlane.xlu0 %2177
      %2179 = vadd.xlane.f32.xlu0 %v2060
      %v2180 = vpop.xlane.xlu0 %2179
      %2181 = vadd.xlane.f32.xlu0 %v2061
      %v2182 = vpop.xlane.xlu0 %2181
      %2183 = vadd.xlane.f32.xlu0 %v2062
      %v2184 = vpop.xlane.xlu0 %2183
      %2185 = vadd.xlane.f32.xlu0 %v2063
      %v2186 = vpop.xlane.xlu0 %2185
      %2187 = vadd.xlane.f32.xlu0 %v2064
      %v2188 = vpop.xlane.xlu0 %2187
      %2189 = vadd.xlane.f32.xlu0 %v2065
      %v2190 = vpop.xlane.xlu0 %2189
      %2191 = vadd.xlane.f32.xlu0 %v2066
      %v2192 = vpop.xlane.xlu0 %2191
      %2193 = vadd.xlane.f32.xlu0 %v2067
      %v2194 = vpop.xlane.xlu0 %2193
      %2195 = vadd.xlane.f32.xlu0 %v2068
      %v2196 = vpop.xlane.xlu0 %2195
      %v2197 = vmul.f32 %v2070, %v1876
      %v2198 = vmul.f32 %v2072, %v1876
      %v2199 = vmul.f32 %v2074, %v1876
      %v2200 = vmul.f32 %v2076, %v1876
      %v2201 = vmul.f32 %v2078, %v1876
      %v2202 = vmul.f32 %v2080, %v1876
      %v2203 = vmul.f32 %v2082, %v1876
      %v2204 = vmul.f32 %v2084, %v1876
      %v2205 = vmul.f32 %v2086, %v1876
      %v2206 = vmul.f32 %v2088, %v1876
      %v2207 = vmul.f32 %v2090, %v1876
      %v2208 = vmul.f32 %v2092, %v1876
      %v2209 = vmul.f32 %v2094, %v1876
      %v2210 = vmul.f32 %v2096, %v1876
      %v2211 = vmul.f32 %v2098, %v1876
      %v2212 = vmul.f32 %v2100, %v1876
      %v2213 = vmul.f32 %v2102, %v1876
      %v2214 = vmul.f32 %v2104, %v1876
      %v2215 = vmul.f32 %v2106, %v1876
      %v2216 = vmul.f32 %v2108, %v1876
      %v2217 = vmul.f32 %v2110, %v1876
      %v2218 = vmul.f32 %v2112, %v1876
      %v2219 = vmul.f32 %v2114, %v1876
      %v2220 = vmul.f32 %v2116, %v1876
      %v2221 = vmul.f32 %v2118, %v1876
      %v2222 = vmul.f32 %v2120, %v1876
      %v2223 = vmul.f32 %v2122, %v1876
      %v2224 = vmul.f32 %v2124, %v1876
      %v2225 = vmul.f32 %v2126, %v1876
      %v2226 = vmul.f32 %v2128, %v1876
      %v2227 = vmul.f32 %v2130, %v1876
      %v2228 = vmul.f32 %v2132, %v1876
      %v2229 = vmul.f32 %v2134, %v1876
      %v2230 = vmul.f32 %v2136, %v1876
      %v2231 = vmul.f32 %v2138, %v1876
      %v2232 = vmul.f32 %v2140, %v1876
      %v2233 = vmul.f32 %v2142, %v1876
      %v2234 = vmul.f32 %v2144, %v1876
      %v2235 = vmul.f32 %v2146, %v1876
      %v2236 = vmul.f32 %v2148, %v1876
      %v2237 = vmul.f32 %v2150, %v1876
      %v2238 = vmul.f32 %v2152, %v1876
      %v2239 = vmul.f32 %v2154, %v1876
      %v2240 = vmul.f32 %v2156, %v1876
      %v2241 = vmul.f32 %v2158, %v1876
      %v2242 = vmul.f32 %v2160, %v1876
      %v2243 = vmul.f32 %v2162, %v1876
      %v2244 = vmul.f32 %v2164, %v1876
      %v2245 = vmul.f32 %v2166, %v1876
      %v2246 = vmul.f32 %v2168, %v1876
      %v2247 = vmul.f32 %v2170, %v1876
      %v2248 = vmul.f32 %v2172, %v1876
      %v2249 = vmul.f32 %v2174, %v1876
      %v2250 = vmul.f32 %v2176, %v1876
      %v2251 = vmul.f32 %v2178, %v1876
      %v2252 = vmul.f32 %v2180, %v1876
      %v2253 = vmul.f32 %v2182, %v1876
      %v2254 = vmul.f32 %v2184, %v1876
      %v2255 = vmul.f32 %v2186, %v1876
      %v2256 = vmul.f32 %v2188, %v1876
      %v2257 = vmul.f32 %v2190, %v1876
      %v2258 = vmul.f32 %v2192, %v1876
      %v2259 = vmul.f32 %v2194, %v1876
      %v2260 = vmul.f32 %v2196, %v1876
      %v2261 = vadd.f32 %v2197, 1e-05
      %v2262 = vadd.f32 %v2198, 1e-05
      %v2263 = vadd.f32 %v2199, 1e-05
      %v2264 = vadd.f32 %v2200, 1e-05
      %v2265 = vadd.f32 %v2201, 1e-05
      %v2266 = vadd.f32 %v2202, 1e-05
      %v2267 = vadd.f32 %v2203, 1e-05
      %v2268 = vadd.f32 %v2204, 1e-05
      %v2269 = vadd.f32 %v2205, 1e-05
      %v2270 = vadd.f32 %v2206, 1e-05
      %v2271 = vadd.f32 %v2207, 1e-05
      %v2272 = vadd.f32 %v2208, 1e-05
      %v2273 = vadd.f32 %v2209, 1e-05
      %v2274 = vadd.f32 %v2210, 1e-05
      %v2275 = vadd.f32 %v2211, 1e-05
      %v2276 = vadd.f32 %v2212, 1e-05
      %v2277 = vadd.f32 %v2213, 1e-05
      %v2278 = vadd.f32 %v2214, 1e-05
      %v2279 = vadd.f32 %v2215, 1e-05
      %v2280 = vadd.f32 %v2216, 1e-05
      %v2281 = vadd.f32 %v2217, 1e-05
      %v2282 = vadd.f32 %v2218, 1e-05
      %v2283 = vadd.f32 %v2219, 1e-05
      %v2284 = vadd.f32 %v2220, 1e-05
      %v2285 = vadd.f32 %v2221, 1e-05
      %v2286 = vadd.f32 %v2222, 1e-05
      %v2287 = vadd.f32 %v2223, 1e-05
      %v2288 = vadd.f32 %v2224, 1e-05
      %v2289 = vadd.f32 %v2225, 1e-05
      %v2290 = vadd.f32 %v2226, 1e-05
      %v2291 = vadd.f32 %v2227, 1e-05
      %v2292 = vadd.f32 %v2228, 1e-05
      %v2293 = vadd.f32 %v2229, 1e-05
      %v2294 = vadd.f32 %v2230, 1e-05
      %v2295 = vadd.f32 %v2231, 1e-05
      %v2296 = vadd.f32 %v2232, 1e-05
      %v2297 = vadd.f32 %v2233, 1e-05
      %v2298 = vadd.f32 %v2234, 1e-05
      %v2299 = vadd.f32 %v2235, 1e-05
      %v2300 = vadd.f32 %v2236, 1e-05
      %v2301 = vadd.f32 %v2237, 1e-05
      %v2302 = vadd.f32 %v2238, 1e-05
      %v2303 = vadd.f32 %v2239, 1e-05
      %v2304 = vadd.f32 %v2240, 1e-05
      %v2305 = vadd.f32 %v2241, 1e-05
      %v2306 = vadd.f32 %v2242, 1e-05
      %v2307 = vadd.f32 %v2243, 1e-05
      %v2308 = vadd.f32 %v2244, 1e-05
      %v2309 = vadd.f32 %v2245, 1e-05
      %v2310 = vadd.f32 %v2246, 1e-05
      %v2311 = vadd.f32 %v2247, 1e-05
      %v2312 = vadd.f32 %v2248, 1e-05
      %v2313 = vadd.f32 %v2249, 1e-05
      %v2314 = vadd.f32 %v2250, 1e-05
      %v2315 = vadd.f32 %v2251, 1e-05
      %v2316 = vadd.f32 %v2252, 1e-05
      %v2317 = vadd.f32 %v2253, 1e-05
      %v2318 = vadd.f32 %v2254, 1e-05
      %v2319 = vadd.f32 %v2255, 1e-05
      %v2320 = vadd.f32 %v2256, 1e-05
      %v2321 = vadd.f32 %v2257, 1e-05
      %v2322 = vadd.f32 %v2258, 1e-05
      %v2323 = vadd.f32 %v2259, 1e-05
      %v2324 = vadd.f32 %v2260, 1e-05
      %v2325 = vrsqrt.pop %v2261
      %v2326 = vrsqrt.pop %v2262
      %v2327 = vrsqrt.pop %v2263
      %v2328 = vrsqrt.pop %v2264
      %v2329 = vrsqrt.pop %v2265
      %v2330 = vrsqrt.pop %v2266
      %v2331 = vrsqrt.pop %v2267
      %v2332 = vrsqrt.pop %v2268
      %v2333 = vrsqrt.pop %v2269
      %v2334 = vrsqrt.pop %v2270
      %v2335 = vrsqrt.pop %v2271
      %v2336 = vrsqrt.pop %v2272
      %v2337 = vrsqrt.pop %v2273
      %v2338 = vrsqrt.pop %v2274
      %v2339 = vrsqrt.pop %v2275
      %v2340 = vrsqrt.pop %v2276
      %v2341 = vrsqrt.pop %v2277
      %v2342 = vrsqrt.pop %v2278
      %v2343 = vrsqrt.pop %v2279
      %v2344 = vrsqrt.pop %v2280
      %v2345 = vrsqrt.pop %v2281
      %v2346 = vrsqrt.pop %v2282
      %v2347 = vrsqrt.pop %v2283
      %v2348 = vrsqrt.pop %v2284
      %v2349 = vrsqrt.pop %v2285
      %v2350 = vrsqrt.pop %v2286
      %v2351 = vrsqrt.pop %v2287
      %v2352 = vrsqrt.pop %v2288
      %v2353 = vrsqrt.pop %v2289
      %v2354 = vrsqrt.pop %v2290
      %v2355 = vrsqrt.pop %v2291
      %v2356 = vrsqrt.pop %v2292
      %v2357 = vrsqrt.pop %v2293
      %v2358 = vrsqrt.pop %v2294
      %v2359 = vrsqrt.pop %v2295
      %v2360 = vrsqrt.pop %v2296
      %v2361 = vrsqrt.pop %v2297
      %v2362 = vrsqrt.pop %v2298
      %v2363 = vrsqrt.pop %v2299
      %v2364 = vrsqrt.pop %v2300
      %v2365 = vrsqrt.pop %v2301
      %v2366 = vrsqrt.pop %v2302
      %v2367 = vrsqrt.pop %v2303
      %v2368 = vrsqrt.pop %v2304
      %v2369 = vrsqrt.pop %v2305
      %v2370 = vrsqrt.pop %v2306
      %v2371 = vrsqrt.pop %v2307
      %v2372 = vrsqrt.pop %v2308
      %v2373 = vrsqrt.pop %v2309
      %v2374 = vrsqrt.pop %v2310
      %v2375 = vrsqrt.pop %v2311
      %v2376 = vrsqrt.pop %v2312
      %v2377 = vrsqrt.pop %v2313
      %v2378 = vrsqrt.pop %v2314
      %v2379 = vrsqrt.pop %v2315
      %v2380 = vrsqrt.pop %v2316
      %v2381 = vrsqrt.pop %v2317
      %v2382 = vrsqrt.pop %v2318
      %v2383 = vrsqrt.pop %v2319
      %v2384 = vrsqrt.pop %v2320
      %v2385 = vrsqrt.pop %v2321
      %v2386 = vrsqrt.pop %v2322
      %v2387 = vrsqrt.pop %v2323
      %v2388 = vrsqrt.pop %v2324
      %v2389 = vmul.f32 %v1941, %v2325
      %v2390 = vmul.f32 %v1942, %v2326
      %v2391 = vmul.f32 %v1943, %v2327
      %v2392 = vmul.f32 %v1944, %v2328
      %v2393 = vmul.f32 %v1945, %v2329
      %v2394 = vmul.f32 %v1946, %v2330
      %v2395 = vmul.f32 %v1947, %v2331
      %v2396 = vmul.f32 %v1948, %v2332
      %v2397 = vmul.f32 %v1949, %v2333
      %v2398 = vmul.f32 %v1950, %v2334
      %v2399 = vmul.f32 %v1951, %v2335
      %v2400 = vmul.f32 %v1952, %v2336
      %v2401 = vmul.f32 %v1953, %v2337
      %v2402 = vmul.f32 %v1954, %v2338
      %v2403 = vmul.f32 %v1955, %v2339
      %v2404 = vmul.f32 %v1956, %v2340
      %v2405 = vmul.f32 %v1957, %v2341
      %v2406 = vmul.f32 %v1958, %v2342
      %v2407 = vmul.f32 %v1959, %v2343
      %v2408 = vmul.f32 %v1960, %v2344
      %v2409 = vmul.f32 %v1961, %v2345
      %v2410 = vmul.f32 %v1962, %v2346
      %v2411 = vmul.f32 %v1963, %v2347
      %v2412 = vmul.f32 %v1964, %v2348
      %v2413 = vmul.f32 %v1965, %v2349
      %v2414 = vmul.f32 %v1966, %v2350
      %v2415 = vmul.f32 %v1967, %v2351
      %v2416 = vmul.f32 %v1968, %v2352
      %v2417 = vmul.f32 %v1969, %v2353
      %v2418 = vmul.f32 %v1970, %v2354
      %v2419 = vmul.f32 %v1971, %v2355
      %v2420 = vmul.f32 %v1972, %v2356
      %v2421 = vmul.f32 %v1973, %v2357
      %v2422 = vmul.f32 %v1974, %v2358
      %v2423 = vmul.f32 %v1975, %v2359
      %v2424 = vmul.f32 %v1976, %v2360
      %v2425 = vmul.f32 %v1977, %v2361
      %v2426 = vmul.f32 %v1978, %v2362
      %v2427 = vmul.f32 %v1979, %v2363
      %v2428 = vmul.f32 %v1980, %v2364
      %v2429 = vmul.f32 %v1981, %v2365
      %v2430 = vmul.f32 %v1982, %v2366
      %v2431 = vmul.f32 %v1983, %v2367
      %v2432 = vmul.f32 %v1984, %v2368
      %v2433 = vmul.f32 %v1985, %v2369
      %v2434 = vmul.f32 %v1986, %v2370
      %v2435 = vmul.f32 %v1987, %v2371
      %v2436 = vmul.f32 %v1988, %v2372
      %v2437 = vmul.f32 %v1989, %v2373
      %v2438 = vmul.f32 %v1990, %v2374
      %v2439 = vmul.f32 %v1991, %v2375
      %v2440 = vmul.f32 %v1992, %v2376
      %v2441 = vmul.f32 %v1993, %v2377
      %v2442 = vmul.f32 %v1994, %v2378
      %v2443 = vmul.f32 %v1995, %v2379
      %v2444 = vmul.f32 %v1996, %v2380
      %v2445 = vmul.f32 %v1997, %v2381
      %v2446 = vmul.f32 %v1998, %v2382
      %v2447 = vmul.f32 %v1999, %v2383
      %v2448 = vmul.f32 %v2000, %v2384
      %v2449 = vmul.f32 %v2001, %v2385
      %v2450 = vmul.f32 %v2002, %v2386
      %v2451 = vmul.f32 %v2003, %v2387
      %v2452 = vmul.f32 %v2004, %v2388
      %v2454 = vlaneseq
      %v2455 = vshrl.u32 %v2454, 7
      %v2456 = vsub.s32 0, %v2455
      %v2457 = vrot.slane %v1746, %v2456
      %v2459 = vmul.f32 %v2389, %v2457
      %v2460 = vmul.f32 %v2390, %v2457
      %v2461 = vmul.f32 %v2391, %v2457
      %v2462 = vmul.f32 %v2392, %v2457
      %v2463 = vmul.f32 %v2393, %v2457
      %v2464 = vmul.f32 %v2394, %v2457
      %v2465 = vmul.f32 %v2395, %v2457
      %v2466 = vmul.f32 %v2396, %v2457
      %v2467 = vmul.f32 %v2397, %v2457
      %v2468 = vmul.f32 %v2398, %v2457
      %v2469 = vmul.f32 %v2399, %v2457
      %v2470 = vmul.f32 %v2400, %v2457
      %v2471 = vmul.f32 %v2401, %v2457
      %v2472 = vmul.f32 %v2402, %v2457
      %v2473 = vmul.f32 %v2403, %v2457
      %v2474 = vmul.f32 %v2404, %v2457
      %v2475 = vmul.f32 %v2405, %v2457
      %v2476 = vmul.f32 %v2406, %v2457
      %v2477 = vmul.f32 %v2407, %v2457
      %v2478 = vmul.f32 %v2408, %v2457
      %v2479 = vmul.f32 %v2409, %v2457
      %v2480 = vmul.f32 %v2410, %v2457
      %v2481 = vmul.f32 %v2411, %v2457
      %v2482 = vmul.f32 %v2412, %v2457
      %v2483 = vmul.f32 %v2413, %v2457
      %v2484 = vmul.f32 %v2414, %v2457
      %v2485 = vmul.f32 %v2415, %v2457
      %v2486 = vmul.f32 %v2416, %v2457
      %v2487 = vmul.f32 %v2417, %v2457
      %v2488 = vmul.f32 %v2418, %v2457
      %v2489 = vmul.f32 %v2419, %v2457
      %v2490 = vmul.f32 %v2420, %v2457
      %v2491 = vmul.f32 %v2421, %v2457
      %v2492 = vmul.f32 %v2422, %v2457
      %v2493 = vmul.f32 %v2423, %v2457
      %v2494 = vmul.f32 %v2424, %v2457
      %v2495 = vmul.f32 %v2425, %v2457
      %v2496 = vmul.f32 %v2426, %v2457
      %v2497 = vmul.f32 %v2427, %v2457
      %v2498 = vmul.f32 %v2428, %v2457
      %v2499 = vmul.f32 %v2429, %v2457
      %v2500 = vmul.f32 %v2430, %v2457
      %v2501 = vmul.f32 %v2431, %v2457
      %v2502 = vmul.f32 %v2432, %v2457
      %v2503 = vmul.f32 %v2433, %v2457
      %v2504 = vmul.f32 %v2434, %v2457
      %v2505 = vmul.f32 %v2435, %v2457
      %v2506 = vmul.f32 %v2436, %v2457
      %v2507 = vmul.f32 %v2437, %v2457
      %v2508 = vmul.f32 %v2438, %v2457
      %v2509 = vmul.f32 %v2439, %v2457
      %v2510 = vmul.f32 %v2440, %v2457
      %v2511 = vmul.f32 %v2441, %v2457
      %v2512 = vmul.f32 %v2442, %v2457
      %v2513 = vmul.f32 %v2443, %v2457
      %v2514 = vmul.f32 %v2444, %v2457
      %v2515 = vmul.f32 %v2445, %v2457
      %v2516 = vmul.f32 %v2446, %v2457
      %v2517 = vmul.f32 %v2447, %v2457
      %v2518 = vmul.f32 %v2448, %v2457
      %v2519 = vmul.f32 %v2449, %v2457
      %v2520 = vmul.f32 %v2450, %v2457
      %v2521 = vmul.f32 %v2451, %v2457
      %v2522 = vmul.f32 %v2452, %v2457
      %v2524 = vlaneseq
      %v2525 = vshrl.u32 %v2524, 7
      %v2526 = vsub.s32 0, %v2525
      %v2527 = vrot.slane %v1747, %v2526
      %v2529 = vadd.f32 %v2459, %v2527
      %v2530 = vadd.f32 %v2460, %v2527
      %v2531 = vadd.f32 %v2461, %v2527
      %v2532 = vadd.f32 %v2462, %v2527
      %v2533 = vadd.f32 %v2463, %v2527
      %v2534 = vadd.f32 %v2464, %v2527
      %v2535 = vadd.f32 %v2465, %v2527
      %v2536 = vadd.f32 %v2466, %v2527
      %v2537 = vadd.f32 %v2467, %v2527
      %v2538 = vadd.f32 %v2468, %v2527
      %v2539 = vadd.f32 %v2469, %v2527
      %v2540 = vadd.f32 %v2470, %v2527
      %v2541 = vadd.f32 %v2471, %v2527
      %v2542 = vadd.f32 %v2472, %v2527
      %v2543 = vadd.f32 %v2473, %v2527
      %v2544 = vadd.f32 %v2474, %v2527
      %v2545 = vadd.f32 %v2475, %v2527
      %v2546 = vadd.f32 %v2476, %v2527
      %v2547 = vadd.f32 %v2477, %v2527
      %v2548 = vadd.f32 %v2478, %v2527
      %v2549 = vadd.f32 %v2479, %v2527
      %v2550 = vadd.f32 %v2480, %v2527
      %v2551 = vadd.f32 %v2481, %v2527
      %v2552 = vadd.f32 %v2482, %v2527
      %v2553 = vadd.f32 %v2483, %v2527
      %v2554 = vadd.f32 %v2484, %v2527
      %v2555 = vadd.f32 %v2485, %v2527
      %v2556 = vadd.f32 %v2486, %v2527
      %v2557 = vadd.f32 %v2487, %v2527
      %v2558 = vadd.f32 %v2488, %v2527
      %v2559 = vadd.f32 %v2489, %v2527
      %v2560 = vadd.f32 %v2490, %v2527
      %v2561 = vadd.f32 %v2491, %v2527
      %v2562 = vadd.f32 %v2492, %v2527
      %v2563 = vadd.f32 %v2493, %v2527
      %v2564 = vadd.f32 %v2494, %v2527
      %v2565 = vadd.f32 %v2495, %v2527
      %v2566 = vadd.f32 %v2496, %v2527
      %v2567 = vadd.f32 %v2497, %v2527
      %v2568 = vadd.f32 %v2498, %v2527
      %v2569 = vadd.f32 %v2499, %v2527
      %v2570 = vadd.f32 %v2500, %v2527
      %v2571 = vadd.f32 %v2501, %v2527
      %v2572 = vadd.f32 %v2502, %v2527
      %v2573 = vadd.f32 %v2503, %v2527
      %v2574 = vadd.f32 %v2504, %v2527
      %v2575 = vadd.f32 %v2505, %v2527
      %v2576 = vadd.f32 %v2506, %v2527
      %v2577 = vadd.f32 %v2507, %v2527
      %v2578 = vadd.f32 %v2508, %v2527
      %v2579 = vadd.f32 %v2509, %v2527
      %v2580 = vadd.f32 %v2510, %v2527
      %v2581 = vadd.f32 %v2511, %v2527
      %v2582 = vadd.f32 %v2512, %v2527
      %v2583 = vadd.f32 %v2513, %v2527
      %v2584 = vadd.f32 %v2514, %v2527
      %v2585 = vadd.f32 %v2515, %v2527
      %v2586 = vadd.f32 %v2516, %v2527
      %v2587 = vadd.f32 %v2517, %v2527
      %v2588 = vadd.f32 %v2518, %v2527
      %v2589 = vadd.f32 %v2519, %v2527
      %v2590 = vadd.f32 %v2520, %v2527
      %v2591 = vadd.f32 %v2521, %v2527
      %v2592 = vadd.f32 %v2522, %v2527
      %v2593 = vpack.c.bf16 %v2530, %v2529
      %v2594 = vpack.c.bf16 %v2532, %v2531
      %v2595 = vpack.c.bf16 %v2534, %v2533
      %v2596 = vpack.c.bf16 %v2536, %v2535
      %v2597 = vpack.c.bf16 %v2538, %v2537
      %v2598 = vpack.c.bf16 %v2540, %v2539
      %v2599 = vpack.c.bf16 %v2542, %v2541
      %v2600 = vpack.c.bf16 %v2544, %v2543
      %v2601 = vpack.c.bf16 %v2546, %v2545
      %v2602 = vpack.c.bf16 %v2548, %v2547
      %v2603 = vpack.c.bf16 %v2550, %v2549
      %v2604 = vpack.c.bf16 %v2552, %v2551
      %v2605 = vpack.c.bf16 %v2554, %v2553
      %v2606 = vpack.c.bf16 %v2556, %v2555
      %v2607 = vpack.c.bf16 %v2558, %v2557
      %v2608 = vpack.c.bf16 %v2560, %v2559
      %v2609 = vpack.c.bf16 %v2562, %v2561
      %v2610 = vpack.c.bf16 %v2564, %v2563
      %v2611 = vpack.c.bf16 %v2566, %v2565
      %v2612 = vpack.c.bf16 %v2568, %v2567
      %v2613 = vpack.c.bf16 %v2570, %v2569
      %v2614 = vpack.c.bf16 %v2572, %v2571
      %v2615 = vpack.c.bf16 %v2574, %v2573
      %v2616 = vpack.c.bf16 %v2576, %v2575
      %v2617 = vpack.c.bf16 %v2578, %v2577
      %v2618 = vpack.c.bf16 %v2580, %v2579
      %v2619 = vpack.c.bf16 %v2582, %v2581
      %v2620 = vpack.c.bf16 %v2584, %v2583
      %v2621 = vpack.c.bf16 %v2586, %v2585
      %v2622 = vpack.c.bf16 %v2588, %v2587
      %v2623 = vpack.c.bf16 %v2590, %v2589
      %v2624 = vpack.c.bf16 %v2592, %v2591
      %v2657 = vunpack.c.l.b16 %v2593
      %v2658 = vunpack.c.h.b16 %v2593
      %v2659 = vunpack.c.l.b16 %v2594
      %v2660 = vunpack.c.h.b16 %v2594
      %v2661 = vunpack.c.l.b16 %v2595
      %v2662 = vunpack.c.h.b16 %v2595
      %v2663 = vunpack.c.l.b16 %v2596
      %v2664 = vunpack.c.h.b16 %v2596
      %v2665 = vunpack.c.l.b16 %v2597
      %v2666 = vunpack.c.h.b16 %v2597
      %v2667 = vunpack.c.l.b16 %v2598
      %v2668 = vunpack.c.h.b16 %v2598
      %v2669 = vunpack.c.l.b16 %v2599
      %v2670 = vunpack.c.h.b16 %v2599
      %v2671 = vunpack.c.l.b16 %v2600
      %v2672 = vunpack.c.h.b16 %v2600
      %v2673 = vunpack.c.l.b16 %v2601
      %v2674 = vunpack.c.h.b16 %v2601
      %v2675 = vunpack.c.l.b16 %v2602
      %v2676 = vunpack.c.h.b16 %v2602
      %v2677 = vunpack.c.l.b16 %v2603
      %v2678 = vunpack.c.h.b16 %v2603
      %v2679 = vunpack.c.l.b16 %v2604
      %v2680 = vunpack.c.h.b16 %v2604
      %v2681 = vunpack.c.l.b16 %v2605
      %v2682 = vunpack.c.h.b16 %v2605
      %v2683 = vunpack.c.l.b16 %v2606
      %v2684 = vunpack.c.h.b16 %v2606
      %v2685 = vunpack.c.l.b16 %v2607
      %v2686 = vunpack.c.h.b16 %v2607
      %v2687 = vunpack.c.l.b16 %v2608
      %v2688 = vunpack.c.h.b16 %v2608
      %v2689 = vunpack.c.l.b16 %v2609
      %v2690 = vunpack.c.h.b16 %v2609
      %v2691 = vunpack.c.l.b16 %v2610
      %v2692 = vunpack.c.h.b16 %v2610
      %v2693 = vunpack.c.l.b16 %v2611
      %v2694 = vunpack.c.h.b16 %v2611
      %v2695 = vunpack.c.l.b16 %v2612
      %v2696 = vunpack.c.h.b16 %v2612
      %v2697 = vunpack.c.l.b16 %v2613
      %v2698 = vunpack.c.h.b16 %v2613
      %v2699 = vunpack.c.l.b16 %v2614
      %v2700 = vunpack.c.h.b16 %v2614
      %v2701 = vunpack.c.l.b16 %v2615
      %v2702 = vunpack.c.h.b16 %v2615
      %v2703 = vunpack.c.l.b16 %v2616
      %v2704 = vunpack.c.h.b16 %v2616
      %v2705 = vunpack.c.l.b16 %v2617
      %v2706 = vunpack.c.h.b16 %v2617
      %v2707 = vunpack.c.l.b16 %v2618
      %v2708 = vunpack.c.h.b16 %v2618
      %v2709 = vunpack.c.l.b16 %v2619
      %v2710 = vunpack.c.h.b16 %v2619
      %v2711 = vunpack.c.l.b16 %v2620
      %v2712 = vunpack.c.h.b16 %v2620
      %v2713 = vunpack.c.l.b16 %v2621
      %v2714 = vunpack.c.h.b16 %v2621
      %v2715 = vunpack.c.l.b16 %v2622
      %v2716 = vunpack.c.h.b16 %v2622
      %v2717 = vunpack.c.l.b16 %v2623
      %v2718 = vunpack.c.h.b16 %v2623
      %v2719 = vunpack.c.l.b16 %v2624
      %v2720 = vunpack.c.h.b16 %v2624
      %v2721 = vpack.c.b16 %v2657, %v2657
      %v2722 = vpack.c.b16 %v2658, %v2658
      %v2723 = vpack.c.b16 %v2659, %v2659
      %v2724 = vpack.c.b16 %v2660, %v2660
      %v2725 = vpack.c.b16 %v2661, %v2661
      %v2726 = vpack.c.b16 %v2662, %v2662
      %v2727 = vpack.c.b16 %v2663, %v2663
      %v2728 = vpack.c.b16 %v2664, %v2664
      %v2729 = vpack.c.b16 %v2665, %v2665
      %v2730 = vpack.c.b16 %v2666, %v2666
      %v2731 = vpack.c.b16 %v2667, %v2667
      %v2732 = vpack.c.b16 %v2668, %v2668
      %v2733 = vpack.c.b16 %v2669, %v2669
      %v2734 = vpack.c.b16 %v2670, %v2670
      %v2735 = vpack.c.b16 %v2671, %v2671
      %v2736 = vpack.c.b16 %v2672, %v2672
      %v2737 = vpack.c.b16 %v2673, %v2673
      %v2738 = vpack.c.b16 %v2674, %v2674
      %v2739 = vpack.c.b16 %v2675, %v2675
      %v2740 = vpack.c.b16 %v2676, %v2676
      %v2741 = vpack.c.b16 %v2677, %v2677
      %v2742 = vpack.c.b16 %v2678, %v2678
      %v2743 = vpack.c.b16 %v2679, %v2679
      %v2744 = vpack.c.b16 %v2680, %v2680
      %v2745 = vpack.c.b16 %v2681, %v2681
      %v2746 = vpack.c.b16 %v2682, %v2682
      %v2747 = vpack.c.b16 %v2683, %v2683
      %v2748 = vpack.c.b16 %v2684, %v2684
      %v2749 = vpack.c.b16 %v2685, %v2685
      %v2750 = vpack.c.b16 %v2686, %v2686
      %v2751 = vpack.c.b16 %v2687, %v2687
      %v2752 = vpack.c.b16 %v2688, %v2688
      %v2753 = vpack.c.b16 %v2689, %v2689
      %v2754 = vpack.c.b16 %v2690, %v2690
      %v2755 = vpack.c.b16 %v2691, %v2691
      %v2756 = vpack.c.b16 %v2692, %v2692
      %v2757 = vpack.c.b16 %v2693, %v2693
      %v2758 = vpack.c.b16 %v2694, %v2694
      %v2759 = vpack.c.b16 %v2695, %v2695
      %v2760 = vpack.c.b16 %v2696, %v2696
      %v2761 = vpack.c.b16 %v2697, %v2697
      %v2762 = vpack.c.b16 %v2698, %v2698
      %v2763 = vpack.c.b16 %v2699, %v2699
      %v2764 = vpack.c.b16 %v2700, %v2700
      %v2765 = vpack.c.b16 %v2701, %v2701
      %v2766 = vpack.c.b16 %v2702, %v2702
      %v2767 = vpack.c.b16 %v2703, %v2703
      %v2768 = vpack.c.b16 %v2704, %v2704
      %v2769 = vpack.c.b16 %v2705, %v2705
      %v2770 = vpack.c.b16 %v2706, %v2706
      %v2771 = vpack.c.b16 %v2707, %v2707
      %v2772 = vpack.c.b16 %v2708, %v2708
      %v2773 = vpack.c.b16 %v2709, %v2709
      %v2774 = vpack.c.b16 %v2710, %v2710
      %v2775 = vpack.c.b16 %v2711, %v2711
      %v2776 = vpack.c.b16 %v2712, %v2712
      %v2777 = vpack.c.b16 %v2713, %v2713
      %v2778 = vpack.c.b16 %v2714, %v2714
      %v2779 = vpack.c.b16 %v2715, %v2715
      %v2780 = vpack.c.b16 %v2716, %v2716
      %v2781 = vpack.c.b16 %v2717, %v2717
      %v2782 = vpack.c.b16 %v2718, %v2718
      %v2783 = vpack.c.b16 %v2719, %v2719
      %v2784 = vpack.c.b16 %v2720, %v2720
      %2849 = vst [vmem:[%s334] sm:$0xf] %v2721
      %2850 = vst [vmem:[%s334 + $0x4] sm:$0xf] %v2722
      %2851 = vst [vmem:[%s334 + $0x8] sm:$0xf] %v2723
      %2852 = vst [vmem:[%s334 + $0xc] sm:$0xf] %v2724
      %2853 = vst [vmem:[%s334 + $0x10] sm:$0xf] %v2725
      %2854 = vst [vmem:[%s334 + $0x14] sm:$0xf] %v2726
      %2855 = vst [vmem:[%s334 + $0x18] sm:$0xf] %v2727
      %2856 = vst [vmem:[%s334 + $0x1c] sm:$0xf] %v2728
      %2857 = vst [vmem:[%s334 + $0x20] sm:$0xf] %v2729
      %2858 = vst [vmem:[%s334 + $0x24] sm:$0xf] %v2730
      %2859 = vst [vmem:[%s334 + $0x28] sm:$0xf] %v2731
      %2860 = vst [vmem:[%s334 + $0x2c] sm:$0xf] %v2732
      %2861 = vst [vmem:[%s334 + $0x30] sm:$0xf] %v2733
      %2862 = vst [vmem:[%s334 + $0x34] sm:$0xf] %v2734
      %2863 = vst [vmem:[%s334 + $0x38] sm:$0xf] %v2735
      %2864 = vst [vmem:[%s334 + $0x3c] sm:$0xf] %v2736
      %2865 = vst [vmem:[%s334 + $0x40] sm:$0xf] %v2737
      %2866 = vst [vmem:[%s334 + $0x44] sm:$0xf] %v2738
      %2867 = vst [vmem:[%s334 + $0x48] sm:$0xf] %v2739
      %2868 = vst [vmem:[%s334 + $0x4c] sm:$0xf] %v2740
      %2869 = vst [vmem:[%s334 + $0x50] sm:$0xf] %v2741
      %2870 = vst [vmem:[%s334 + $0x54] sm:$0xf] %v2742
      %2871 = vst [vmem:[%s334 + $0x58] sm:$0xf] %v2743
      %2872 = vst [vmem:[%s334 + $0x5c] sm:$0xf] %v2744
      %2873 = vst [vmem:[%s334 + $0x60] sm:$0xf] %v2745
      %2874 = vst [vmem:[%s334 + $0x64] sm:$0xf] %v2746
      %2875 = vst [vmem:[%s334 + $0x68] sm:$0xf] %v2747
      %2876 = vst [vmem:[%s334 + $0x6c] sm:$0xf] %v2748
      %2877 = vst [vmem:[%s334 + $0x70] sm:$0xf] %v2749
      %2878 = vst [vmem:[%s334 + $0x74] sm:$0xf] %v2750
      %2879 = vst [vmem:[%s334 + $0x78] sm:$0xf] %v2751
      %2880 = vst [vmem:[%s334 + $0x7c] sm:$0xf] %v2752
      %2881 = vst [vmem:[%s334 + $0x80] sm:$0xf] %v2753
      %2882 = vst [vmem:[%s334 + $0x84] sm:$0xf] %v2754
      %2883 = vst [vmem:[%s334 + $0x88] sm:$0xf] %v2755
      %2884 = vst [vmem:[%s334 + $0x8c] sm:$0xf] %v2756
      %2885 = vst [vmem:[%s334 + $0x90] sm:$0xf] %v2757
      %2886 = vst [vmem:[%s334 + $0x94] sm:$0xf] %v2758
      %2887 = vst [vmem:[%s334 + $0x98] sm:$0xf] %v2759
      %2888 = vst [vmem:[%s334 + $0x9c] sm:$0xf] %v2760
      %2889 = vst [vmem:[%s334 + $0xa0] sm:$0xf] %v2761
      %2890 = vst [vmem:[%s334 + $0xa4] sm:$0xf] %v2762
      %2891 = vst [vmem:[%s334 + $0xa8] sm:$0xf] %v2763
      %2892 = vst [vmem:[%s334 + $0xac] sm:$0xf] %v2764
      %2893 = vst [vmem:[%s334 + $0xb0] sm:$0xf] %v2765
      %2894 = vst [vmem:[%s334 + $0xb4] sm:$0xf] %v2766
      %2895 = vst [vmem:[%s334 + $0xb8] sm:$0xf] %v2767
      %2896 = vst [vmem:[%s334 + $0xbc] sm:$0xf] %v2768
      %2897 = vst [vmem:[%s334 + $0xc0] sm:$0xf] %v2769
      %2898 = vst [vmem:[%s334 + $0xc4] sm:$0xf] %v2770
      %2899 = vst [vmem:[%s334 + $0xc8] sm:$0xf] %v2771
      %2900 = vst [vmem:[%s334 + $0xcc] sm:$0xf] %v2772
      %2901 = vst [vmem:[%s334 + $0xd0] sm:$0xf] %v2773
      %2902 = vst [vmem:[%s334 + $0xd4] sm:$0xf] %v2774
      %2903 = vst [vmem:[%s334 + $0xd8] sm:$0xf] %v2775
      %2904 = vst [vmem:[%s334 + $0xdc] sm:$0xf] %v2776
      %2905 = vst [vmem:[%s334 + $0xe0] sm:$0xf] %v2777
      %2906 = vst [vmem:[%s334 + $0xe4] sm:$0xf] %v2778
      %2907 = vst [vmem:[%s334 + $0xe8] sm:$0xf] %v2779
      %2908 = vst [vmem:[%s334 + $0xec] sm:$0xf] %v2780
      %2909 = vst [vmem:[%s334 + $0xf0] sm:$0xf] %v2781
      %2910 = vst [vmem:[%s334 + $0xf4] sm:$0xf] %v2782
      %2911 = vst [vmem:[%s334 + $0xf8] sm:$0xf] %v2783
      %2912 = vst [vmem:[%s334 + $0xfc] sm:$0xf] %v2784
      %s2913 = smul.u32 64, %s20
      %p2914 = scmp.lt.s32.totalorder %s2913, 127
      %s2915 = scalar_select %p2914, %s2913, 127
      %s2916 = smul.addr %s2915, 4
      %s2917 = scalar_lea.vmem %s9, %s2916
      // Predicated region
      $region57: #{meshgraphnet_forward.7} parent=55 // pred_check
        %p2918 = pneg %p232
      $region58: #{meshgraphnet_forward.7} parent=55 // pred_check_branch
        %2920 = sbr.rel (%p2918) target = $region60
      $region59: #{meshgraphnet_forward.7} parent=55 // pred_region
        %s2921 = smul.u32 64, %s20
      $region60: #{meshgraphnet_forward.7} parent=55 // pred_fallthru
        _
    $region56: #{meshgraphnet_forward.7} parent=5 // pred_fallthru
      _
    %p2922 = scmp.le.s32.totalorder 2, %s15
    // Predicated region
    $region61: #{meshgraphnet_forward.7} parent=5 // pred_check
      %p2923 = pneg %p2922
    $region62: #{meshgraphnet_forward.7} parent=5 // pred_check_branch
      %2925 = sbr.rel (%p2923) target = $region64
    $region63: #{meshgraphnet_forward.7} parent=5 // pred_region
      %s2926 = ssub.s32 %s15, 2
      // Predicated region
      $region65: #{meshgraphnet_forward.7} parent=63 // pred_check
        %p2927 = pneg %p238
      $region66: #{meshgraphnet_forward.7} parent=63 // pred_check_branch
        %2929 = sbr.rel (%p2927) target = $region68
      $region67: #{meshgraphnet_forward.7} parent=63 // pred_region
        %s2930 = smul.u32 64, %s21
        %p2931 = scmp.lt.s32.totalorder %s2930, 127
        %s2932 = scalar_select %p2931, %s2930, 127
        %s2933 = smul.addr %s2932, 4
        %s2934 = scalar_lea.vmem %s9, %s2933
      $region68: #{meshgraphnet_forward.7} parent=63 // pred_fallthru
        _
    $region64: #{meshgraphnet_forward.7} parent=5 // pred_fallthru
      _
  $region6: #{meshgraphnet_forward.7} parent=0 // loop_footer
    %s19 = sadd.s32 1, %s15
  $region7: #{meshgraphnet_forward.7} parent=0 // loop_footer_branch
    %14 = sbr.rel target = $region3
  $region8: #{meshgraphnet_forward.7} parent=0 // loop_exit
    _

// kernel: meshgraphnet_forward.10
$region0: #{meshgraphnet_forward.10}
  #allocation0 [shape = 'u32[]', space=smem, size = 0x4, offset = 0x4, fixed_abs, tag = 'smem constant byte address 0x4 - core index']
  #allocation1 [shape = 'u32[144,128]{1,0:T(1,128)}', space=vmem, size = 0x12000, scoped, tag = 'internal scratch']
  %s0 = inlined_call_operand.vmem [shape: f32[256,128], index: 0, kind: input, shape index: {}]
  %s1 = inlined_call_operand.vmem [shape: bf16[256,128], index: 1, kind: input, shape index: {}]
  %s2 = inlined_call_operand.vmem [shape: bf16[128,128], index: 2, kind: input, shape index: {}]
  %s3 = inlined_call_operand.vmem [shape: bf16[128,128], index: 3, kind: input, shape index: {}]
  %s4 = inlined_call_operand.vmem [shape: f32[1,128], index: 4, kind: input, shape index: {}]
  %s5 = inlined_call_operand.vmem [shape: bf16[128,128], index: 5, kind: input, shape index: {}]
  %s6 = inlined_call_operand.vmem [shape: f32[1,128], index: 6, kind: input, shape index: {}]
  %s7 = inlined_call_operand.vmem [shape: bf16[128,128], index: 7, kind: input, shape index: {}]
  %s8 = inlined_call_operand.vmem [shape: f32[1,128], index: 8, kind: input, shape index: {}]
  %s9 = inlined_call_operand.vmem [shape: f32[1,128], index: 9, kind: input, shape index: {}]
  %s10 = inlined_call_operand.vmem [shape: f32[1,128], index: 10, kind: input, shape index: {}]
  %s11 = inlined_call_operand.vmem [shape: bf16[256,128], index: 11, kind: output, shape index: {}]
  %s12 = sld [smem:[#allocation0]]
  $region77: #{meshgraphnet_forward.10} parent=0
    _
  %s14 = ssub.s32 1, %s12
  %s15 = scalar_select 0, %s14, %s12
  loop: start=0, step=1, limit=4
  $region2: #{meshgraphnet_forward.10} parent=0 // loop_pre_header
    _
  $region3: #{meshgraphnet_forward.10} parent=0 // loop_header
    %s17 = sphi 0, %s21
    %p18 = scmp.ge.s32.totalorder %s17, 4
    %s27 = sphi 0, %s29
    %s30 = sphi 0, %s27
    %s31 = sphi 0, %s30
    %s47 = sphi 0, %s31
    %s53 = sphi 0, %s55
    %s56 = sphi 0, %s53
    %s57 = sphi 0, %s56
    %s73 = sphi 0, %s57
    %s77 = sphi 0, %s77
    %s79 = sphi 0, %s77
    %s80 = sphi 0, %s79
    %s94 = sphi 0, %s80
    %s98 = sphi 0, %s98
    %s100 = sphi 0, %s98
    %s101 = sphi 0, %s100
    %s115 = sphi 0, %s101
    %s119 = sphi 0, %s119
    %s121 = sphi 0, %s119
    %s122 = sphi 0, %s121
    %s136 = sphi 0, %s122
    %s140 = sphi 0, %s140
    %s142 = sphi 0, %s140
    %s143 = sphi 0, %s142
    %s157 = sphi 0, %s143
    %s161 = sphi 0, %s161
    %s163 = sphi 0, %s161
    %s164 = sphi 0, %s163
    %s178 = sphi 0, %s164
    %s182 = sphi 0, %s182
    %s184 = sphi 0, %s182
    %s185 = sphi 0, %s184
    %s199 = sphi 0, %s185
    %s203 = sphi 0, %s203
    %s205 = sphi 0, %s203
    %s206 = sphi 0, %s205
    %s220 = sphi 0, %s206
    %s224 = sphi 0, %s224
    %s226 = sphi 0, %s224
    %s227 = sphi 0, %s226
    %s241 = sphi 0, %s227
    %s245 = sphi 0, %s245
    %s247 = sphi 0, %s245
    %s248 = sphi 0, %s247
    %s262 = sphi 0, %s248
    %s268 = sphi 0, %s270
    %s271 = sphi 0, %s268
    %s272 = sphi 0, %s271
    %s288 = sphi 0, %s272
  $region4: #{meshgraphnet_forward.10} parent=0 // loop_header_branch
    %20 = sbr.rel (%p18) target = $region8
  $region5: #{meshgraphnet_forward.10} parent=0 // loop_body
    %s22 = ssub.s32 %s17, 1
    %s23 = ssub.s32 %s17, 2
    %s24 = sadd.s32 %s17, 1
    %s25 = ssub.s32 %s17, %s24
    %p26 = scmp.eq.s32.totalorder %s25, 0
    %s28 = sadd.s32 %s27, 1
    %s29 = scalar_select %p26, %s27, %s28
    %p32 = pneg %p26
    %p33 = scmp.eq.s32.totalorder %s17, 1
    %p34 = por %p32, %p33
    %p35 = scmp.ne.s32.totalorder %s27, %s30
    %p36 = scmp.eq.s32.totalorder %s17, 0
    %p37 = por %p35, %p36
    %p38 = scmp.ne.s32.totalorder %s27, %s30
    %p39 = scmp.eq.s32.totalorder %s22, 1
    %p40 = por %p38, %p39
    %p41 = scmp.ne.s32.totalorder %s30, %s31
    %p42 = scmp.eq.s32.totalorder %s22, 0
    %p43 = por %p41, %p42
    %p44 = scmp.ne.s32.totalorder %s30, %s31
    %p45 = scmp.eq.s32.totalorder %s23, 1
    %p46 = por %p44, %p45
    %p48 = scmp.ne.s32.totalorder %s31, %s47
    %p49 = scmp.eq.s32.totalorder %s23, 0
    %p50 = por %p48, %p49
    %s51 = ssub.s32 %s17, %s24
    %p52 = scmp.eq.s32.totalorder %s51, 0
    %s54 = sadd.s32 %s53, 1
    %s55 = scalar_select %p52, %s53, %s54
    %p58 = pneg %p52
    %p59 = scmp.eq.s32.totalorder %s17, 1
    %p60 = por %p58, %p59
    %p61 = scmp.ne.s32.totalorder %s53, %s56
    %p62 = scmp.eq.s32.totalorder %s17, 0
    %p63 = por %p61, %p62
    %p64 = scmp.ne.s32.totalorder %s53, %s56
    %p65 = scmp.eq.s32.totalorder %s22, 1
    %p66 = por %p64, %p65
    %p67 = scmp.ne.s32.totalorder %s56, %s57
    %p68 = scmp.eq.s32.totalorder %s22, 0
    %p69 = por %p67, %p68
    %p70 = scmp.ne.s32.totalorder %s56, %s57
    %p71 = scmp.eq.s32.totalorder %s23, 1
    %p72 = por %p70, %p71
    %p74 = scmp.ne.s32.totalorder %s57, %s73
    %p75 = scmp.eq.s32.totalorder %s23, 0
    %p76 = por %p74, %p75
    %s78 = sadd.s32 %s77, 1
    %p81 = scmp.eq.s32.totalorder %s17, 1
    %p82 = scmp.ne.s32.totalorder %s77, %s79
    %p83 = scmp.eq.s32.totalorder %s17, 0
    %p84 = por %p82, %p83
    %p85 = scmp.ne.s32.totalorder %s77, %s79
    %p86 = scmp.eq.s32.totalorder %s22, 1
    %p87 = por %p85, %p86
    %p88 = scmp.ne.s32.totalorder %s79, %s80
    %p89 = scmp.eq.s32.totalorder %s22, 0
    %p90 = por %p88, %p89
    %p91 = scmp.ne.s32.totalorder %s79, %s80
    %p92 = scmp.eq.s32.totalorder %s23, 1
    %p93 = por %p91, %p92
    %p95 = scmp.ne.s32.totalorder %s80, %s94
    %p96 = scmp.eq.s32.totalorder %s23, 0
    %p97 = por %p95, %p96
    %s99 = sadd.s32 %s98, 1
    %p102 = scmp.eq.s32.totalorder %s17, 1
    %p103 = scmp.ne.s32.totalorder %s98, %s100
    %p104 = scmp.eq.s32.totalorder %s17, 0
    %p105 = por %p103, %p104
    %p106 = scmp.ne.s32.totalorder %s98, %s100
    %p107 = scmp.eq.s32.totalorder %s22, 1
    %p108 = por %p106, %p107
    %p109 = scmp.ne.s32.totalorder %s100, %s101
    %p110 = scmp.eq.s32.totalorder %s22, 0
    %p111 = por %p109, %p110
    %p112 = scmp.ne.s32.totalorder %s100, %s101
    %p113 = scmp.eq.s32.totalorder %s23, 1
    %p114 = por %p112, %p113
    %p116 = scmp.ne.s32.totalorder %s101, %s115
    %p117 = scmp.eq.s32.totalorder %s23, 0
    %p118 = por %p116, %p117
    %s120 = sadd.s32 %s119, 1
    %p123 = scmp.eq.s32.totalorder %s17, 1
    %p124 = scmp.ne.s32.totalorder %s119, %s121
    %p125 = scmp.eq.s32.totalorder %s17, 0
    %p126 = por %p124, %p125
    %p127 = scmp.ne.s32.totalorder %s119, %s121
    %p128 = scmp.eq.s32.totalorder %s22, 1
    %p129 = por %p127, %p128
    %p130 = scmp.ne.s32.totalorder %s121, %s122
    %p131 = scmp.eq.s32.totalorder %s22, 0
    %p132 = por %p130, %p131
    %p133 = scmp.ne.s32.totalorder %s121, %s122
    %p134 = scmp.eq.s32.totalorder %s23, 1
    %p135 = por %p133, %p134
    %p137 = scmp.ne.s32.totalorder %s122, %s136
    %p138 = scmp.eq.s32.totalorder %s23, 0
    %p139 = por %p137, %p138
    %s141 = sadd.s32 %s140, 1
    %p144 = scmp.eq.s32.totalorder %s17, 1
    %p145 = scmp.ne.s32.totalorder %s140, %s142
    %p146 = scmp.eq.s32.totalorder %s17, 0
    %p147 = por %p145, %p146
    %p148 = scmp.ne.s32.totalorder %s140, %s142
    %p149 = scmp.eq.s32.totalorder %s22, 1
    %p150 = por %p148, %p149
    %p151 = scmp.ne.s32.totalorder %s142, %s143
    %p152 = scmp.eq.s32.totalorder %s22, 0
    %p153 = por %p151, %p152
    %p154 = scmp.ne.s32.totalorder %s142, %s143
    %p155 = scmp.eq.s32.totalorder %s23, 1
    %p156 = por %p154, %p155
    %p158 = scmp.ne.s32.totalorder %s143, %s157
    %p159 = scmp.eq.s32.totalorder %s23, 0
    %p160 = por %p158, %p159
    %s162 = sadd.s32 %s161, 1
    %p165 = scmp.eq.s32.totalorder %s17, 1
    %p166 = scmp.ne.s32.totalorder %s161, %s163
    %p167 = scmp.eq.s32.totalorder %s17, 0
    %p168 = por %p166, %p167
    %p169 = scmp.ne.s32.totalorder %s161, %s163
    %p170 = scmp.eq.s32.totalorder %s22, 1
    %p171 = por %p169, %p170
    %p172 = scmp.ne.s32.totalorder %s163, %s164
    %p173 = scmp.eq.s32.totalorder %s22, 0
    %p174 = por %p172, %p173
    %p175 = scmp.ne.s32.totalorder %s163, %s164
    %p176 = scmp.eq.s32.totalorder %s23, 1
    %p177 = por %p175, %p176
    %p179 = scmp.ne.s32.totalorder %s164, %s178
    %p180 = scmp.eq.s32.totalorder %s23, 0
    %p181 = por %p179, %p180
    %s183 = sadd.s32 %s182, 1
    %p186 = scmp.eq.s32.totalorder %s17, 1
    %p187 = scmp.ne.s32.totalorder %s182, %s184
    %p188 = scmp.eq.s32.totalorder %s17, 0
    %p189 = por %p187, %p188
    %p190 = scmp.ne.s32.totalorder %s182, %s184
    %p191 = scmp.eq.s32.totalorder %s22, 1
    %p192 = por %p190, %p191
    %p193 = scmp.ne.s32.totalorder %s184, %s185
    %p194 = scmp.eq.s32.totalorder %s22, 0
    %p195 = por %p193, %p194
    %p196 = scmp.ne.s32.totalorder %s184, %s185
    %p197 = scmp.eq.s32.totalorder %s23, 1
    %p198 = por %p196, %p197
    %p200 = scmp.ne.s32.totalorder %s185, %s199
    %p201 = scmp.eq.s32.totalorder %s23, 0
    %p202 = por %p200, %p201
    %s204 = sadd.s32 %s203, 1
    %p207 = scmp.eq.s32.totalorder %s17, 1
    %p208 = scmp.ne.s32.totalorder %s203, %s205
    %p209 = scmp.eq.s32.totalorder %s17, 0
    %p210 = por %p208, %p209
    %p211 = scmp.ne.s32.totalorder %s203, %s205
    %p212 = scmp.eq.s32.totalorder %s22, 1
    %p213 = por %p211, %p212
    %p214 = scmp.ne.s32.totalorder %s205, %s206
    %p215 = scmp.eq.s32.totalorder %s22, 0
    %p216 = por %p214, %p215
    %p217 = scmp.ne.s32.totalorder %s205, %s206
    %p218 = scmp.eq.s32.totalorder %s23, 1
    %p219 = por %p217, %p218
    %p221 = scmp.ne.s32.totalorder %s206, %s220
    %p222 = scmp.eq.s32.totalorder %s23, 0
    %p223 = por %p221, %p222
    %s225 = sadd.s32 %s224, 1
    %p228 = scmp.eq.s32.totalorder %s17, 1
    %p229 = scmp.ne.s32.totalorder %s224, %s226
    %p230 = scmp.eq.s32.totalorder %s17, 0
    %p231 = por %p229, %p230
    %p232 = scmp.ne.s32.totalorder %s224, %s226
    %p233 = scmp.eq.s32.totalorder %s22, 1
    %p234 = por %p232, %p233
    %p235 = scmp.ne.s32.totalorder %s226, %s227
    %p236 = scmp.eq.s32.totalorder %s22, 0
    %p237 = por %p235, %p236
    %p238 = scmp.ne.s32.totalorder %s226, %s227
    %p239 = scmp.eq.s32.totalorder %s23, 1
    %p240 = por %p238, %p239
    %p242 = scmp.ne.s32.totalorder %s227, %s241
    %p243 = scmp.eq.s32.totalorder %s23, 0
    %p244 = por %p242, %p243
    %s246 = sadd.s32 %s245, 1
    %p249 = scmp.eq.s32.totalorder %s17, 1
    %p250 = scmp.ne.s32.totalorder %s245, %s247
    %p251 = scmp.eq.s32.totalorder %s17, 0
    %p252 = por %p250, %p251
    %p253 = scmp.ne.s32.totalorder %s245, %s247
    %p254 = scmp.eq.s32.totalorder %s22, 1
    %p255 = por %p253, %p254
    %p256 = scmp.ne.s32.totalorder %s247, %s248
    %p257 = scmp.eq.s32.totalorder %s22, 0
    %p258 = por %p256, %p257
    %p259 = scmp.ne.s32.totalorder %s247, %s248
    %p260 = scmp.eq.s32.totalorder %s23, 1
    %p261 = por %p259, %p260
    %p263 = scmp.ne.s32.totalorder %s248, %s262
    %p264 = scmp.eq.s32.totalorder %s23, 0
    %p265 = por %p263, %p264
    %s266 = ssub.s32 %s17, %s24
    %p267 = scmp.eq.s32.totalorder %s266, 0
    %s269 = sadd.s32 %s268, 1
    %s270 = scalar_select %p267, %s268, %s269
    %p273 = pneg %p267
    %p274 = scmp.eq.s32.totalorder %s17, 1
    %p275 = por %p273, %p274
    %p276 = scmp.ne.s32.totalorder %s268, %s271
    %p277 = scmp.eq.s32.totalorder %s17, 0
    %p278 = por %p276, %p277
    %p279 = scmp.ne.s32.totalorder %s268, %s271
    %p280 = scmp.eq.s32.totalorder %s22, 1
    %p281 = por %p279, %p280
    %p282 = scmp.ne.s32.totalorder %s271, %s272
    %p283 = scmp.eq.s32.totalorder %s22, 0
    %p284 = por %p282, %p283
    %p285 = scmp.ne.s32.totalorder %s271, %s272
    %p286 = scmp.eq.s32.totalorder %s23, 1
    %p287 = por %p285, %p286
    %p289 = scmp.ne.s32.totalorder %s272, %s288
    %p290 = scmp.eq.s32.totalorder %s23, 0
    %p291 = por %p289, %p290
    %p292 = scmp.le.s32.totalorder 1, %s17
    %p293 = scmp.lt.s32.totalorder %s17, 3
    %p294 = pnand %p292, %p293
    %p295 = pneg %p294
    // Predicated region
    $region9: #{meshgraphnet_forward.10} parent=5 // pred_check
      _
    $region10: #{meshgraphnet_forward.10} parent=5 // pred_check_branch
      %297 = sbr.rel (%p294) target = $region12
    $region11: #{meshgraphnet_forward.10} parent=5 // pred_region
      %s298 = ssub.s32 %s17, 1
      // Predicated region
      $region13: #{meshgraphnet_forward.10} parent=11 // pred_check
        %p299 = pneg %p90
      $region14: #{meshgraphnet_forward.10} parent=11 // pred_check_branch
        %301 = sbr.rel (%p299) target = $region16
      $region15: #{meshgraphnet_forward.10} parent=11 // pred_region
        _
      $region16: #{meshgraphnet_forward.10} parent=11 // pred_fallthru
        _
      // Predicated region
      $region17: #{meshgraphnet_forward.10} parent=11 // pred_check
        %p302 = pneg %p111
      $region18: #{meshgraphnet_forward.10} parent=11 // pred_check_branch
        %304 = sbr.rel (%p302) target = $region20
      $region19: #{meshgraphnet_forward.10} parent=11 // pred_region
        _
      $region20: #{meshgraphnet_forward.10} parent=11 // pred_fallthru
        _
      // Predicated region
      $region21: #{meshgraphnet_forward.10} parent=11 // pred_check
        %p305 = pneg %p132
      $region22: #{meshgraphnet_forward.10} parent=11 // pred_check_branch
        %307 = sbr.rel (%p305) target = $region24
      $region23: #{meshgraphnet_forward.10} parent=11 // pred_region
        _
      $region24: #{meshgraphnet_forward.10} parent=11 // pred_fallthru
        _
      // Predicated region
      $region25: #{meshgraphnet_forward.10} parent=11 // pred_check
        %p308 = pneg %p153
      $region26: #{meshgraphnet_forward.10} parent=11 // pred_check_branch
        %310 = sbr.rel (%p308) target = $region28
      $region27: #{meshgraphnet_forward.10} parent=11 // pred_region
        _
      $region28: #{meshgraphnet_forward.10} parent=11 // pred_fallthru
        _
      // Predicated region
      $region29: #{meshgraphnet_forward.10} parent=11 // pred_check
        %p311 = pneg %p174
      $region30: #{meshgraphnet_forward.10} parent=11 // pred_check_branch
        %313 = sbr.rel (%p311) target = $region32
      $region31: #{meshgraphnet_forward.10} parent=11 // pred_region
        _
      $region32: #{meshgraphnet_forward.10} parent=11 // pred_fallthru
        _
      // Predicated region
      $region33: #{meshgraphnet_forward.10} parent=11 // pred_check
        %p314 = pneg %p195
      $region34: #{meshgraphnet_forward.10} parent=11 // pred_check_branch
        %316 = sbr.rel (%p314) target = $region36
      $region35: #{meshgraphnet_forward.10} parent=11 // pred_region
        _
      $region36: #{meshgraphnet_forward.10} parent=11 // pred_fallthru
        _
      // Predicated region
      $region37: #{meshgraphnet_forward.10} parent=11 // pred_check
        %p317 = pneg %p216
      $region38: #{meshgraphnet_forward.10} parent=11 // pred_check_branch
        %319 = sbr.rel (%p317) target = $region40
      $region39: #{meshgraphnet_forward.10} parent=11 // pred_region
        _
      $region40: #{meshgraphnet_forward.10} parent=11 // pred_fallthru
        _
      // Predicated region
      $region41: #{meshgraphnet_forward.10} parent=11 // pred_check
        %p320 = pneg %p237
      $region42: #{meshgraphnet_forward.10} parent=11 // pred_check_branch
        %322 = sbr.rel (%p320) target = $region44
      $region43: #{meshgraphnet_forward.10} parent=11 // pred_region
        _
      $region44: #{meshgraphnet_forward.10} parent=11 // pred_fallthru
        _
      // Predicated region
      $region45: #{meshgraphnet_forward.10} parent=11 // pred_check
        %p323 = pneg %p258
      $region46: #{meshgraphnet_forward.10} parent=11 // pred_check_branch
        %325 = sbr.rel (%p323) target = $region48
      $region47: #{meshgraphnet_forward.10} parent=11 // pred_region
        _
      $region48: #{meshgraphnet_forward.10} parent=11 // pred_fallthru
        _
    $region12: #{meshgraphnet_forward.10} parent=5 // pred_fallthru
      _
    %p326 = scmp.lt.s32.totalorder %s17, 2
    // Predicated region
    $region49: #{meshgraphnet_forward.10} parent=5 // pred_check
      %p327 = pneg %p326
    $region50: #{meshgraphnet_forward.10} parent=5 // pred_check_branch
      %329 = sbr.rel (%p327) target = $region52
    $region51: #{meshgraphnet_forward.10} parent=5 // pred_region
      // Predicated region
      $region53: #{meshgraphnet_forward.10} parent=51 // pred_check
        %p330 = pneg %p37
      $region54: #{meshgraphnet_forward.10} parent=51 // pred_check_branch
        %332 = sbr.rel (%p330) target = $region56
      $region55: #{meshgraphnet_forward.10} parent=51 // pred_region
        %s333 = smul.u32 16, %s17
        %p334 = scmp.lt.s32.totalorder %s333, 31
        %s335 = scalar_select %p334, %s333, 31
        %s336 = smul.addr %s335, 8
        %s337 = scalar_lea.vmem %s0, %s336
        %s338 = smul.u32 16, %s17
      $region56: #{meshgraphnet_forward.10} parent=51 // pred_fallthru
        _
      // Predicated region
      $region57: #{meshgraphnet_forward.10} parent=51 // pred_check
        %p339 = pneg %p63
      $region58: #{meshgraphnet_forward.10} parent=51 // pred_check_branch
        %341 = sbr.rel (%p339) target = $region60
      $region59: #{meshgraphnet_forward.10} parent=51 // pred_region
        %s342 = smul.u32 16, %s17
        %p343 = scmp.lt.s32.totalorder %s342, 31
        %s344 = scalar_select %p343, %s342, 31
        %s345 = smul.addr %s344, 4
        %s346 = scalar_lea.vmem %s1, %s345
        %s347 = smul.u32 16, %s17
      $region60: #{meshgraphnet_forward.10} parent=51 // pred_fallthru
        _
    $region52: #{meshgraphnet_forward.10} parent=5 // pred_fallthru
      _
    %p348 = scmp.le.s32.totalorder 1, %s17
    %p349 = scmp.lt.s32.totalorder %s17, 3
    %p350 = pnand %p348, %p349
    %p351 = pneg %p350
    // Predicated region
    $region61: #{meshgraphnet_forward.10} parent=5 // pred_check
      _
    $region62: #{meshgraphnet_forward.10} parent=5 // pred_check_branch
      %353 = sbr.rel (%p350) target = $region64
    $region63: #{meshgraphnet_forward.10} parent=5 // pred_region
      %s354 = ssub.s32 %s17, 1
      %s355 = smul.u32 16, %s22
      %p356 = scmp.lt.s32.totalorder %s355, 31
      %s357 = scalar_select %p356, %s355, 31
      %s358 = smul.addr %s357, 8
      %s359 = scalar_lea.vmem %s0, %s358
      %p360 = pneg %p43
      %p361 = pneg %p40
      %s362 = smul.u32 16, %s22
      %p363 = scmp.lt.s32.totalorder %s362, 31
      %s364 = scalar_select %p363, %s362, 31
      %s365 = smul.addr %s364, 4
      %s366 = scalar_lea.vmem %s1, %s365
      %p367 = pneg %p69
      %p368 = pneg %p66
      %p369 = pneg %p90
      %p370 = pneg %p87
      %p371 = pneg %p111
      %p372 = pneg %p108
      %p373 = pneg %p132
      %p374 = pneg %p129
      %p375 = pneg %p153
      %p376 = pneg %p150
      %p377 = pneg %p174
      %p378 = pneg %p171
      %p379 = pneg %p195
      %p380 = pneg %p192
      %p381 = pneg %p216
      %p382 = pneg %p213
      %p383 = pneg %p237
      %p384 = pneg %p234
      %p385 = pneg %p258
      %p386 = pneg %p255
      %p387 = pneg %p284
      %p388 = pneg %p281
      %s389 = smul.u32 16, %s22
      %p390 = scmp.lt.s32.totalorder %s389, 31
      %s391 = scalar_select %p390, %s389, 31
      %s392 = smul.addr %s391, 4
      %s393 = scalar_lea.vmem %s11, %s392
      %s394 = smul.u32 16, %s22
      %p395 = scmp.lt.s32.totalorder %s394, 31
      %s396 = scalar_select %p395, %s394, 31
      %s397 = smul.addr %s396, 8
      %s398 = scalar_lea.vmem %s0, %s397
      %s399 = smul.u32 16, %s22
      %s400 = smul.u32 16, %s22
      %p401 = scmp.lt.s32.totalorder %s400, 31
      %s402 = scalar_select %p401, %s400, 31
      %s403 = smul.addr %s402, 4
      %s404 = scalar_lea.vmem %s1, %s403
      %s405 = smul.u32 16, %s22
      %s406 = smul.u32 16, %s22
      %p407 = scmp.lt.s32.totalorder %s406, 31
      %s408 = scalar_select %p407, %s406, 31
      %s409 = smul.addr %s408, 4
      %s410 = scalar_lea.vmem %s11, %s409
      %s411 = smul.u32 16, %s22
      %v413 = vld [vmem:[%s404] sm:$0xf]
      %v414 = vld [vmem:[%s404 + $0x4] sm:$0xf]
      %v415 = vld [vmem:[%s404 + $0x8] sm:$0xf]
      %v416 = vld [vmem:[%s404 + $0xc] sm:$0xf]
      %v417 = vld [vmem:[%s404 + $0x10] sm:$0xf]
      %v418 = vld [vmem:[%s404 + $0x14] sm:$0xf]
      %v419 = vld [vmem:[%s404 + $0x18] sm:$0xf]
      %v420 = vld [vmem:[%s404 + $0x1c] sm:$0xf]
      %v421 = vld [vmem:[%s404 + $0x20] sm:$0xf]
      %v422 = vld [vmem:[%s404 + $0x24] sm:$0xf]
      %v423 = vld [vmem:[%s404 + $0x28] sm:$0xf]
      %v424 = vld [vmem:[%s404 + $0x2c] sm:$0xf]
      %v425 = vld [vmem:[%s404 + $0x30] sm:$0xf]
      %v426 = vld [vmem:[%s404 + $0x34] sm:$0xf]
      %v427 = vld [vmem:[%s404 + $0x38] sm:$0xf]
      %v428 = vld [vmem:[%s404 + $0x3c] sm:$0xf]
      %v429 = vld [vmem:[%s398] sm:$0xff]
      %v430 = vld [vmem:[%s398 + $0x8] sm:$0xff]
      %v431 = vld [vmem:[%s398 + $0x10] sm:$0xff]
      %v432 = vld [vmem:[%s398 + $0x18] sm:$0xff]
      %v433 = vld [vmem:[%s398 + $0x20] sm:$0xff]
      %v434 = vld [vmem:[%s398 + $0x28] sm:$0xff]
      %v435 = vld [vmem:[%s398 + $0x30] sm:$0xff]
      %v436 = vld [vmem:[%s398 + $0x38] sm:$0xff]
      %v437 = vld [vmem:[%s398 + $0x40] sm:$0xff]
      %v438 = vld [vmem:[%s398 + $0x48] sm:$0xff]
      %v439 = vld [vmem:[%s398 + $0x50] sm:$0xff]
      %v440 = vld [vmem:[%s398 + $0x58] sm:$0xff]
      %v441 = vld [vmem:[%s398 + $0x60] sm:$0xff]
      %v442 = vld [vmem:[%s398 + $0x68] sm:$0xff]
      %v443 = vld [vmem:[%s398 + $0x70] sm:$0xff]
      %v444 = vld [vmem:[%s398 + $0x78] sm:$0xff]
      %v445 = vld [vmem:[%s2] sm:$0xf]
      %v446 = vld [vmem:[%s2 + $0x4] sm:$0xf]
      %v447 = vld [vmem:[%s2 + $0x8] sm:$0xf]
      %v448 = vld [vmem:[%s2 + $0xc] sm:$0xf]
      %v449 = vld [vmem:[%s2 + $0x10] sm:$0xf]
      %v450 = vld [vmem:[%s2 + $0x14] sm:$0xf]
      %v451 = vld [vmem:[%s2 + $0x18] sm:$0xf]
      %v452 = vld [vmem:[%s2 + $0x1c] sm:$0xf]
      %v453 = vld [vmem:[%s2 + $0x20] sm:$0xf]
      %v454 = vld [vmem:[%s2 + $0x24] sm:$0xf]
      %v455 = vld [vmem:[%s2 + $0x28] sm:$0xf]
      %v456 = vld [vmem:[%s2 + $0x2c] sm:$0xf]
      %v457 = vld [vmem:[%s2 + $0x30] sm:$0xf]
      %v458 = vld [vmem:[%s2 + $0x34] sm:$0xf]
      %v459 = vld [vmem:[%s2 + $0x38] sm:$0xf]
      %v460 = vld [vmem:[%s2 + $0x3c] sm:$0xf]
      %v461 = vpack.c.bf16 %v430, %v429
      %v462 = vpack.c.bf16 %v432, %v431
      %v463 = vpack.c.bf16 %v434, %v433
      %v464 = vpack.c.bf16 %v436, %v435
      %v465 = vpack.c.bf16 %v438, %v437
      %v466 = vpack.c.bf16 %v440, %v439
      %v467 = vpack.c.bf16 %v442, %v441
      %v468 = vpack.c.bf16 %v444, %v443
      %v469 = vld [vmem:[%s3] sm:$0xf]
      %v470 = vld [vmem:[%s3 + $0x4] sm:$0xf]
      %v471 = vld [vmem:[%s3 + $0x8] sm:$0xf]
      %v472 = vld [vmem:[%s3 + $0xc] sm:$0xf]
      %v473 = vld [vmem:[%s3 + $0x10] sm:$0xf]
      %v474 = vld [vmem:[%s3 + $0x14] sm:$0xf]
      %v475 = vld [vmem:[%s3 + $0x18] sm:$0xf]
      %v476 = vld [vmem:[%s3 + $0x1c] sm:$0xf]
      %v477 = vld [vmem:[%s3 + $0x20] sm:$0xf]
      %v478 = vld [vmem:[%s3 + $0x24] sm:$0xf]
      %v479 = vld [vmem:[%s3 + $0x28] sm:$0xf]
      %v480 = vld [vmem:[%s3 + $0x2c] sm:$0xf]
      %v481 = vld [vmem:[%s3 + $0x30] sm:$0xf]
      %v482 = vld [vmem:[%s3 + $0x34] sm:$0xf]
      %v483 = vld [vmem:[%s3 + $0x38] sm:$0xf]
      %v484 = vld [vmem:[%s3 + $0x3c] sm:$0xf]
      %v501 = vunpack.c.l.b16 %v413
      %v502 = vunpack.c.l.b16 %v414
      %v503 = vunpack.c.l.b16 %v415
      %v504 = vunpack.c.l.b16 %v416
      %v505 = vunpack.c.l.b16 %v417
      %v506 = vunpack.c.l.b16 %v418
      %v507 = vunpack.c.l.b16 %v419
      %v508 = vunpack.c.l.b16 %v420
      %v509 = vunpack.c.l.b16 %v421
      %v510 = vunpack.c.l.b16 %v422
      %v511 = vunpack.c.l.b16 %v423
      %v512 = vunpack.c.l.b16 %v424
      %v513 = vunpack.c.l.b16 %v425
      %v514 = vunpack.c.l.b16 %v426
      %v515 = vunpack.c.l.b16 %v427
      %v516 = vunpack.c.l.b16 %v428
      %v517 = vpack.c.b16 %v502, %v501
      %v518 = vpack.c.b16 %v504, %v503
      %v519 = vpack.c.b16 %v506, %v505
      %v520 = vpack.c.b16 %v508, %v507
      %v521 = vpack.c.b16 %v510, %v509
      %v522 = vpack.c.b16 %v512, %v511
      %v523 = vpack.c.b16 %v514, %v513
      %v524 = vpack.c.b16 %v516, %v515
      %v549 = vunpack.c.l.b16 %v469
      %v550 = vunpack.c.l.b16 %v470
      %v551 = vunpack.c.l.b16 %v471
      %v552 = vunpack.c.l.b16 %v472
      %v553 = vunpack.c.l.b16 %v473
      %v554 = vunpack.c.l.b16 %v474
      %v555 = vunpack.c.l.b16 %v475
      %v556 = vunpack.c.l.b16 %v476
      %v557 = vunpack.c.l.b16 %v477
      %v558 = vunpack.c.l.b16 %v478
      %v559 = vunpack.c.l.b16 %v479
      %v560 = vunpack.c.l.b16 %v480
      %v561 = vunpack.c.l.b16 %v481
      %v562 = vunpack.c.l.b16 %v482
      %v563 = vunpack.c.l.b16 %v483
      %v564 = vunpack.c.l.b16 %v484
      %v565 = vpack.c.b16 %v550, %v549
      %v566 = vpack.c.b16 %v552, %v551
      %v567 = vpack.c.b16 %v554, %v553
      %v568 = vpack.c.b16 %v556, %v555
      %v569 = vpack.c.b16 %v558, %v557
      %v570 = vpack.c.b16 %v560, %v559
      %v571 = vpack.c.b16 %v562, %v561
      %v572 = vpack.c.b16 %v564, %v563
      %581 = vmatprep.subr.bf16.mxu0 0
      %582 = vmatpush1.bf16.msra.mxu0 %v565
      %583 = vmatprep.subr.bf16.mxu0 0
      %584 = vmatpush1.bf16.msra.mxu0 %v566
      %585 = vmatprep.subr.bf16.mxu0 0
      %586 = vmatpush1.bf16.msra.mxu0 %v567
      %587 = vmatprep.subr.bf16.mxu0 0
      %588 = vmatpush1.bf16.msra.mxu0 %v568
      %589 = vmatprep.subr.bf16.mxu0 0
      %590 = vmatpush1.bf16.msra.mxu0 %v569
      %591 = vmatprep.subr.bf16.mxu0 0
      %592 = vmatpush1.bf16.msra.mxu0 %v570
      %593 = vmatprep.subr.bf16.mxu0 0
      %594 = vmatpush1.bf16.msra.mxu0 %v571
      %595 = vmatprep.subr.bf16.mxu0 0
      %596 = vmatpush1.bf16.msra.mxu0 %v572
      %597 = vmatprep.subr.bf16.mxu0 0
      %598 = vmatpush1.bf16.msra.mxu0 0
      %599 = vmatprep.subr.bf16.mxu0 0
      %600 = vmatpush1.bf16.msra.mxu0 0
      %601 = vmatprep.subr.bf16.mxu0 0
      %602 = vmatpush1.bf16.msra.mxu0 0
      %603 = vmatprep.subr.bf16.mxu0 0
      %604 = vmatpush1.bf16.msra.mxu0 0
      %605 = vmatprep.subr.bf16.mxu0 0
      %606 = vmatpush1.bf16.msra.mxu0 0
      %607 = vmatprep.subr.bf16.mxu0 0
      %608 = vmatpush1.bf16.msra.mxu0 0
      %609 = vmatprep.subr.bf16.mxu0 0
      %610 = vmatpush1.bf16.msra.mxu0 0
      %611 = vmatprep.subr.bf16.mxu0 0
      %612 = vmatpush1.bf16.msra.mxu0 0
      %613 = vmatprep.mubr.bf16.mxu0 0
      %614 = vmatmul.mubr.bf16.gmra.mrb[0].mxu0 %v517
      %v615 = vpop.f32.mrb[0].mxu0
      %v616 = vadd.f32 0.0, %v615
      %v617 = vpop.f32.mrb[0].mxu0
      %v618 = vpop.f32.mrb[0].mxu0
      %v619 = vadd.f32 0.0, %v618
      %v620 = vpop.f32.mrb[0].mxu0
      %621 = vmatprep.mubr.bf16.mxu0 0
      %622 = vmatmul.mubr.bf16.gmra.mrb[0].mxu0 %v518
      %v623 = vpop.f32.mrb[0].mxu0
      %v624 = vadd.f32 0.0, %v623
      %v625 = vpop.f32.mrb[0].mxu0
      %v626 = vpop.f32.mrb[0].mxu0
      %v627 = vadd.f32 0.0, %v626
      %v628 = vpop.f32.mrb[0].mxu0
      %629 = vmatprep.mubr.bf16.mxu0 0
      %630 = vmatmul.mubr.bf16.gmra.mrb[0].mxu0 %v519
      %v631 = vpop.f32.mrb[0].mxu0
      %v632 = vadd.f32 0.0, %v631
      %v633 = vpop.f32.mrb[0].mxu0
      %v634 = vpop.f32.mrb[0].mxu0
      %v635 = vadd.f32 0.0, %v634
      %v636 = vpop.f32.mrb[0].mxu0
      %637 = vmatprep.mubr.bf16.mxu0 0
      %638 = vmatmul.mubr.bf16.gmra.mrb[0].mxu0 %v520
      %v639 = vpop.f32.mrb[0].mxu0
      %v640 = vadd.f32 0.0, %v639
      %v641 = vpop.f32.mrb[0].mxu0
      %v642 = vpop.f32.mrb[0].mxu0
      %v643 = vadd.f32 0.0, %v642
      %v644 = vpop.f32.mrb[0].mxu0
      %645 = vmatprep.mubr.bf16.mxu0 0
      %646 = vmatmul.mubr.bf16.gmra.mrb[0].mxu0 %v521
      %v647 = vpop.f32.mrb[0].mxu0
      %v648 = vadd.f32 0.0, %v647
      %v649 = vpop.f32.mrb[0].mxu0
      %v650 = vpop.f32.mrb[0].mxu0
      %v651 = vadd.f32 0.0, %v650
      %v652 = vpop.f32.mrb[0].mxu0
      %653 = vmatprep.mubr.bf16.mxu0 0
      %654 = vmatmul.mubr.bf16.gmra.mrb[0].mxu0 %v522
      %v655 = vpop.f32.mrb[0].mxu0
      %v656 = vadd.f32 0.0, %v655
      %v657 = vpop.f32.mrb[0].mxu0
      %v658 = vpop.f32.mrb[0].mxu0
      %v659 = vadd.f32 0.0, %v658
      %v660 = vpop.f32.mrb[0].mxu0
      %661 = vmatprep.mubr.bf16.mxu0 0
      %662 = vmatmul.mubr.bf16.gmra.mrb[0].mxu0 %v523
      %v663 = vpop.f32.mrb[0].mxu0
      %v664 = vadd.f32 0.0, %v663
      %v665 = vpop.f32.mrb[0].mxu0
      %v666 = vpop.f32.mrb[0].mxu0
      %v667 = vadd.f32 0.0, %v666
      %v668 = vpop.f32.mrb[0].mxu0
      %669 = vmatprep.mubr.bf16.mxu0 0
      %670 = vmatmul.mubr.bf16.gmra.mrb[0].mxu0 %v524
      %v671 = vpop.f32.mrb[0].mxu0
      %v672 = vadd.f32 0.0, %v671
      %v673 = vpop.f32.mrb[0].mxu0
      %v674 = vpop.f32.mrb[0].mxu0
      %v675 = vadd.f32 0.0, %v674
      %v676 = vpop.f32.mrb[0].mxu0
      %677 = vdwg.mxu0
      %v694 = vunpack.c.l.b16 %v445
      %v695 = vunpack.c.l.b16 %v446
      %v696 = vunpack.c.l.b16 %v447
      %v697 = vunpack.c.l.b16 %v448
      %v698 = vunpack.c.l.b16 %v449
      %v699 = vunpack.c.l.b16 %v450
      %v700 = vunpack.c.l.b16 %v451
      %v701 = vunpack.c.l.b16 %v452
      %v702 = vunpack.c.l.b16 %v453
      %v703 = vunpack.c.l.b16 %v454
      %v704 = vunpack.c.l.b16 %v455
      %v705 = vunpack.c.l.b16 %v456
      %v706 = vunpack.c.l.b16 %v457
      %v707 = vunpack.c.l.b16 %v458
      %v708 = vunpack.c.l.b16 %v459
      %v709 = vunpack.c.l.b16 %v460
      %v710 = vpack.c.b16 %v695, %v694
      %v711 = vpack.c.b16 %v697, %v696
      %v712 = vpack.c.b16 %v699, %v698
      %v713 = vpack.c.b16 %v701, %v700
      %v714 = vpack.c.b16 %v703, %v702
      %v715 = vpack.c.b16 %v705, %v704
      %v716 = vpack.c.b16 %v707, %v706
      %v717 = vpack.c.b16 %v709, %v708
      %726 = vmatprep.subr.bf16.mxu0 0
      %727 = vmatpush1.bf16.msra.mxu0 %v710
      %728 = vmatprep.subr.bf16.mxu0 0
      %729 = vmatpush1.bf16.msra.mxu0 %v711
      %730 = vmatprep.subr.bf16.mxu0 0
      %731 = vmatpush1.bf16.msra.mxu0 %v712
      %732 = vmatprep.subr.bf16.mxu0 0
      %733 = vmatpush1.bf16.msra.mxu0 %v713
      %734 = vmatprep.subr.bf16.mxu0 0
      %735 = vmatpush1.bf16.msra.mxu0 %v714
      %736 = vmatprep.subr.bf16.mxu0 0
      %737 = vmatpush1.bf16.msra.mxu0 %v715
      %738 = vmatprep.subr.bf16.mxu0 0
      %739 = vmatpush1.bf16.msra.mxu0 %v716
      %740 = vmatprep.subr.bf16.mxu0 0
      %741 = vmatpush1.bf16.msra.mxu0 %v717
      %742 = vmatprep.subr.bf16.mxu0 0
      %743 = vmatpush1.bf16.msra.mxu0 0
      %744 = vmatprep.subr.bf16.mxu0 0
      %745 = vmatpush1.bf16.msra.mxu0 0
      %746 = vmatprep.subr.bf16.mxu0 0
      %747 = vmatpush1.bf16.msra.mxu0 0
      %748 = vmatprep.subr.bf16.mxu0 0
      %749 = vmatpush1.bf16.msra.mxu0 0
      %750 = vmatprep.subr.bf16.mxu0 0
      %751 = vmatpush1.bf16.msra.mxu0 0
      %752 = vmatprep.subr.bf16.mxu0 0
      %753 = vmatpush1.bf16.msra.mxu0 0
      %754 = vmatprep.subr.bf16.mxu0 0
      %755 = vmatpush1.bf16.msra.mxu0 0
      %756 = vmatprep.subr.bf16.mxu0 0
      %757 = vmatpush1.bf16.msra.mxu0 0
      %758 = vmatprep.mubr.bf16.mxu0 0
      %759 = vmatmul.mubr.bf16.gmra.mrb[0].mxu0 %v461
      %v760 = vpop.f32.mrb[0].mxu0
      %v761 = vadd.f32 %v616, %v760
      %v762 = vpop.f32.mrb[0].mxu0
      %v763 = vpop.f32.mrb[0].mxu0
      %v764 = vadd.f32 %v619, %v763
      %v765 = vpop.f32.mrb[0].mxu0
      %766 = vmatprep.mubr.bf16.mxu0 0
      %767 = vmatmul.mubr.bf16.gmra.mrb[0].mxu0 %v462
      %v768 = vpop.f32.mrb[0].mxu0
      %v769 = vadd.f32 %v624, %v768
      %v770 = vpop.f32.mrb[0].mxu0
      %v771 = vpop.f32.mrb[0].mxu0
      %v772 = vadd.f32 %v627, %v771
      %v773 = vpop.f32.mrb[0].mxu0
      %774 = vmatprep.mubr.bf16.mxu0 0
      %775 = vmatmul.mubr.bf16.gmra.mrb[0].mxu0 %v463
      %v776 = vpop.f32.mrb[0].mxu0
      %v777 = vadd.f32 %v632, %v776
      %v778 = vpop.f32.mrb[0].mxu0
      %v779 = vpop.f32.mrb[0].mxu0
      %v780 = vadd.f32 %v635, %v779
      %v781 = vpop.f32.mrb[0].mxu0
      %782 = vmatprep.mubr.bf16.mxu0 0
      %783 = vmatmul.mubr.bf16.gmra.mrb[0].mxu0 %v464
      %v784 = vpop.f32.mrb[0].mxu0
      %v785 = vadd.f32 %v640, %v784
      %v786 = vpop.f32.mrb[0].mxu0
      %v787 = vpop.f32.mrb[0].mxu0
      %v788 = vadd.f32 %v643, %v787
      %v789 = vpop.f32.mrb[0].mxu0
      %790 = vmatprep.mubr.bf16.mxu0 0
      %791 = vmatmul.mubr.bf16.gmra.mrb[0].mxu0 %v465
      %v792 = vpop.f32.mrb[0].mxu0
      %v793 = vadd.f32 %v648, %v792
      %v794 = vpop.f32.mrb[0].mxu0
      %v795 = vpop.f32.mrb[0].mxu0
      %v796 = vadd.f32 %v651, %v795
      %v797 = vpop.f32.mrb[0].mxu0
      %798 = vmatprep.mubr.bf16.mxu0 0
      %799 = vmatmul.mubr.bf16.gmra.mrb[0].mxu0 %v466
      %v800 = vpop.f32.mrb[0].mxu0
      %v801 = vadd.f32 %v656, %v800
      %v802 = vpop.f32.mrb[0].mxu0
      %v803 = vpop.f32.mrb[0].mxu0
      %v804 = vadd.f32 %v659, %v803
      %v805 = vpop.f32.mrb[0].mxu0
      %806 = vmatprep.mubr.bf16.mxu0 0
      %807 = vmatmul.mubr.bf16.gmra.mrb[0].mxu0 %v467
      %v808 = vpop.f32.mrb[0].mxu0
      %v809 = vadd.f32 %v664, %v808
      %v810 = vpop.f32.mrb[0].mxu0
      %v811 = vpop.f32.mrb[0].mxu0
      %v812 = vadd.f32 %v667, %v811
      %v813 = vpop.f32.mrb[0].mxu0
      %814 = vmatprep.mubr.bf16.mxu0 0
      %815 = vmatmul.mubr.bf16.gmra.mrb[0].mxu0 %v468
      %v816 = vpop.f32.mrb[0].mxu0
      %v817 = vadd.f32 %v672, %v816
      %v818 = vpop.f32.mrb[0].mxu0
      %v819 = vpop.f32.mrb[0].mxu0
      %v820 = vadd.f32 %v675, %v819
      %v821 = vpop.f32.mrb[0].mxu0
      %822 = vdwg.mxu0
      %v823 = vld [vmem:[%s4] sm:$0x1]
      %v825 = vlaneseq
      %v826 = vshrl.u32 %v825, 7
      %v827 = vsub.s32 0, %v826
      %v828 = vrot.slane %v823, %v827
      %v830 = vadd.f32 %v761, %v828
      %v831 = vadd.f32 %v764, %v828
      %v832 = vadd.f32 %v769, %v828
      %v833 = vadd.f32 %v772, %v828
      %v834 = vadd.f32 %v777, %v828
      %v835 = vadd.f32 %v780, %v828
      %v836 = vadd.f32 %v785, %v828
      %v837 = vadd.f32 %v788, %v828
      %v838 = vadd.f32 %v793, %v828
      %v839 = vadd.f32 %v796, %v828
      %v840 = vadd.f32 %v801, %v828
      %v841 = vadd.f32 %v804, %v828
      %v842 = vadd.f32 %v809, %v828
      %v843 = vadd.f32 %v812, %v828
      %v844 = vadd.f32 %v817, %v828
      %v845 = vadd.f32 %v820, %v828
      %v846 = vmax.f32 %v830, 0.0
      %v847 = vmax.f32 %v831, 0.0
      %v848 = vmax.f32 %v832, 0.0
      %v849 = vmax.f32 %v833, 0.0
      %v850 = vmax.f32 %v834, 0.0
      %v851 = vmax.f32 %v835, 0.0
      %v852 = vmax.f32 %v836, 0.0
      %v853 = vmax.f32 %v837, 0.0
      %v854 = vmax.f32 %v838, 0.0
      %v855 = vmax.f32 %v839, 0.0
      %v856 = vmax.f32 %v840, 0.0
      %v857 = vmax.f32 %v841, 0.0
      %v858 = vmax.f32 %v842, 0.0
      %v859 = vmax.f32 %v843, 0.0
      %v860 = vmax.f32 %v844, 0.0
      %v861 = vmax.f32 %v845, 0.0
      %v862 = vld [vmem:[%s5] sm:$0xf]
      %v863 = vld [vmem:[%s5 + $0x4] sm:$0xf]
      %v864 = vld [vmem:[%s5 + $0x8] sm:$0xf]
      %v865 = vld [vmem:[%s5 + $0xc] sm:$0xf]
      %v866 = vld [vmem:[%s5 + $0x10] sm:$0xf]
      %v867 = vld [vmem:[%s5 + $0x14] sm:$0xf]
      %v868 = vld [vmem:[%s5 + $0x18] sm:$0xf]
      %v869 = vld [vmem:[%s5 + $0x1c] sm:$0xf]
      %v870 = vld [vmem:[%s5 + $0x20] sm:$0xf]
      %v871 = vld [vmem:[%s5 + $0x24] sm:$0xf]
      %v872 = vld [vmem:[%s5 + $0x28] sm:$0xf]
      %v873 = vld [vmem:[%s5 + $0x2c] sm:$0xf]
      %v874 = vld [vmem:[%s5 + $0x30] sm:$0xf]
      %v875 = vld [vmem:[%s5 + $0x34] sm:$0xf]
      %v876 = vld [vmem:[%s5 + $0x38] sm:$0xf]
      %v877 = vld [vmem:[%s5 + $0x3c] sm:$0xf]
      %v878 = vpack.c.bf16 %v847, %v846
      %v879 = vpack.c.bf16 %v849, %v848
      %v880 = vpack.c.bf16 %v851, %v850
      %v881 = vpack.c.bf16 %v853, %v852
      %v882 = vpack.c.bf16 %v855, %v854
      %v883 = vpack.c.bf16 %v857, %v856
      %v884 = vpack.c.bf16 %v859, %v858
      %v885 = vpack.c.bf16 %v861, %v860
      %v886 = vld [vmem:[%s6] sm:$0x1]
      %v888 = vlaneseq
      %v889 = vshrl.u32 %v888, 7
      %v890 = vsub.s32 0, %v889
      %v891 = vrot.slane %v886, %v890
      %v909 = vunpack.c.l.b16 %v862
      %v910 = vunpack.c.l.b16 %v863
      %v911 = vunpack.c.l.b16 %v864
      %v912 = vunpack.c.l.b16 %v865
      %v913 = vunpack.c.l.b16 %v866
      %v914 = vunpack.c.l.b16 %v867
      %v915 = vunpack.c.l.b16 %v868
      %v916 = vunpack.c.l.b16 %v869
      %v917 = vunpack.c.l.b16 %v870
      %v918 = vunpack.c.l.b16 %v871
      %v919 = vunpack.c.l.b16 %v872
      %v920 = vunpack.c.l.b16 %v873
      %v921 = vunpack.c.l.b16 %v874
      %v922 = vunpack.c.l.b16 %v875
      %v923 = vunpack.c.l.b16 %v876
      %v924 = vunpack.c.l.b16 %v877
      %v925 = vpack.c.b16 %v910, %v909
      %v926 = vpack.c.b16 %v912, %v911
      %v927 = vpack.c.b16 %v914, %v913
      %v928 = vpack.c.b16 %v916, %v915
      %v929 = vpack.c.b16 %v918, %v917
      %v930 = vpack.c.b16 %v920, %v919
      %v931 = vpack.c.b16 %v922, %v921
      %v932 = vpack.c.b16 %v924, %v923
      %941 = vmatprep.subr.bf16.mxu0 0
      %942 = vmatpush1.bf16.msra.mxu0 %v925
      %943 = vmatprep.subr.bf16.mxu0 0
      %944 = vmatpush1.bf16.msra.mxu0 %v926
      %945 = vmatprep.subr.bf16.mxu0 0
      %946 = vmatpush1.bf16.msra.mxu0 %v927
      %947 = vmatprep.subr.bf16.mxu0 0
      %948 = vmatpush1.bf16.msra.mxu0 %v928
      %949 = vmatprep.subr.bf16.mxu0 0
      %950 = vmatpush1.bf16.msra.mxu0 %v929
      %951 = vmatprep.subr.bf16.mxu0 0
      %952 = vmatpush1.bf16.msra.mxu0 %v930
      %953 = vmatprep.subr.bf16.mxu0 0
      %954 = vmatpush1.bf16.msra.mxu0 %v931
      %955 = vmatprep.subr.bf16.mxu0 0
      %956 = vmatpush1.bf16.msra.mxu0 %v932
      %957 = vmatprep.subr.bf16.mxu0 0
      %958 = vmatpush1.bf16.msra.mxu0 0
      %959 = vmatprep.subr.bf16.mxu0 0
      %960 = vmatpush1.bf16.msra.mxu0 0
      %961 = vmatprep.subr.bf16.mxu0 0
      %962 = vmatpush1.bf16.msra.mxu0 0
      %963 = vmatprep.subr.bf16.mxu0 0
      %964 = vmatpush1.bf16.msra.mxu0 0
      %965 = vmatprep.subr.bf16.mxu0 0
      %966 = vmatpush1.bf16.msra.mxu0 0
      %967 = vmatprep.subr.bf16.mxu0 0
      %968 = vmatpush1.bf16.msra.mxu0 0
      %969 = vmatprep.subr.bf16.mxu0 0
      %970 = vmatpush1.bf16.msra.mxu0 0
      %971 = vmatprep.subr.bf16.mxu0 0
      %972 = vmatpush1.bf16.msra.mxu0 0
      %973 = vmatprep.mubr.bf16.mxu0 0
      %974 = vmatmul.mubr.bf16.gmra.mrb[0].mxu0 %v878
      %v975 = vpop.f32.mrb[0].mxu0
      %v976 = vadd.f32 %v891, %v975
      %v977 = vpop.f32.mrb[0].mxu0
      %v978 = vpop.f32.mrb[0].mxu0
      %v979 = vadd.f32 %v891, %v978
      %v980 = vpop.f32.mrb[0].mxu0
      %981 = vmatprep.mubr.bf16.mxu0 0
      %982 = vmatmul.mubr.bf16.gmra.mrb[0].mxu0 %v879
      %v983 = vpop.f32.mrb[0].mxu0
      %v984 = vadd.f32 %v891, %v983
      %v985 = vpop.f32.mrb[0].mxu0
      %v986 = vpop.f32.mrb[0].mxu0
      %v987 = vadd.f32 %v891, %v986
      %v988 = vpop.f32.mrb[0].mxu0
      %989 = vmatprep.mubr.bf16.mxu0 0
      %990 = vmatmul.mubr.bf16.gmra.mrb[0].mxu0 %v880
      %v991 = vpop.f32.mrb[0].mxu0
      %v992 = vadd.f32 %v891, %v991
      %v993 = vpop.f32.mrb[0].mxu0
      %v994 = vpop.f32.mrb[0].mxu0
      %v995 = vadd.f32 %v891, %v994
      %v996 = vpop.f32.mrb[0].mxu0
      %997 = vmatprep.mubr.bf16.mxu0 0
      %998 = vmatmul.mubr.bf16.gmra.mrb[0].mxu0 %v881
      %v999 = vpop.f32.mrb[0].mxu0
      %v1000 = vadd.f32 %v891, %v999
      %v1001 = vpop.f32.mrb[0].mxu0
      %v1002 = vpop.f32.mrb[0].mxu0
      %v1003 = vadd.f32 %v891, %v1002
      %v1004 = vpop.f32.mrb[0].mxu0
      %1005 = vmatprep.mubr.bf16.mxu0 0
      %1006 = vmatmul.mubr.bf16.gmra.mrb[0].mxu0 %v882
      %v1007 = vpop.f32.mrb[0].mxu0
      %v1008 = vadd.f32 %v891, %v1007
      %v1009 = vpop.f32.mrb[0].mxu0
      %v1010 = vpop.f32.mrb[0].mxu0
      %v1011 = vadd.f32 %v891, %v1010
      %v1012 = vpop.f32.mrb[0].mxu0
      %1013 = vmatprep.mubr.bf16.mxu0 0
      %1014 = vmatmul.mubr.bf16.gmra.mrb[0].mxu0 %v883
      %v1015 = vpop.f32.mrb[0].mxu0
      %v1016 = vadd.f32 %v891, %v1015
      %v1017 = vpop.f32.mrb[0].mxu0
      %v1018 = vpop.f32.mrb[0].mxu0
      %v1019 = vadd.f32 %v891, %v1018
      %v1020 = vpop.f32.mrb[0].mxu0
      %1021 = vmatprep.mubr.bf16.mxu0 0
      %1022 = vmatmul.mubr.bf16.gmra.mrb[0].mxu0 %v884
      %v1023 = vpop.f32.mrb[0].mxu0
      %v1024 = vadd.f32 %v891, %v1023
      %v1025 = vpop.f32.mrb[0].mxu0
      %v1026 = vpop.f32.mrb[0].mxu0
      %v1027 = vadd.f32 %v891, %v1026
      %v1028 = vpop.f32.mrb[0].mxu0
      %1029 = vmatprep.mubr.bf16.mxu0 0
      %1030 = vmatmul.mubr.bf16.gmra.mrb[0].mxu0 %v885
      %v1031 = vpop.f32.mrb[0].mxu0
      %v1032 = vadd.f32 %v891, %v1031
      %v1033 = vpop.f32.mrb[0].mxu0
      %v1034 = vpop.f32.mrb[0].mxu0
      %v1035 = vadd.f32 %v891, %v1034
      %v1036 = vpop.f32.mrb[0].mxu0
      %1037 = vdwg.mxu0
      %v1038 = vmax.f32 %v976, 0.0
      %v1039 = vmax.f32 %v979, 0.0
      %v1040 = vmax.f32 %v984, 0.0
      %v1041 = vmax.f32 %v987, 0.0
      %v1042 = vmax.f32 %v992, 0.0
      %v1043 = vmax.f32 %v995, 0.0
      %v1044 = vmax.f32 %v1000, 0.0
      %v1045 = vmax.f32 %v1003, 0.0
      %v1046 = vmax.f32 %v1008, 0.0
      %v1047 = vmax.f32 %v1011, 0.0
      %v1048 = vmax.f32 %v1016, 0.0
      %v1049 = vmax.f32 %v1019, 0.0
      %v1050 = vmax.f32 %v1024, 0.0
      %v1051 = vmax.f32 %v1027, 0.0
      %v1052 = vmax.f32 %v1032, 0.0
      %v1053 = vmax.f32 %v1035, 0.0
      %v1054 = vld [vmem:[%s7] sm:$0xf]
      %v1055 = vld [vmem:[%s7 + $0x4] sm:$0xf]
      %v1056 = vld [vmem:[%s7 + $0x8] sm:$0xf]
      %v1057 = vld [vmem:[%s7 + $0xc] sm:$0xf]
      %v1058 = vld [vmem:[%s7 + $0x10] sm:$0xf]
      %v1059 = vld [vmem:[%s7 + $0x14] sm:$0xf]
      %v1060 = vld [vmem:[%s7 + $0x18] sm:$0xf]
      %v1061 = vld [vmem:[%s7 + $0x1c] sm:$0xf]
      %v1062 = vld [vmem:[%s7 + $0x20] sm:$0xf]
      %v1063 = vld [vmem:[%s7 + $0x24] sm:$0xf]
      %v1064 = vld [vmem:[%s7 + $0x28] sm:$0xf]
      %v1065 = vld [vmem:[%s7 + $0x2c] sm:$0xf]
      %v1066 = vld [vmem:[%s7 + $0x30] sm:$0xf]
      %v1067 = vld [vmem:[%s7 + $0x34] sm:$0xf]
      %v1068 = vld [vmem:[%s7 + $0x38] sm:$0xf]
      %v1069 = vld [vmem:[%s7 + $0x3c] sm:$0xf]
      %v1070 = vpack.c.bf16 %v1039, %v1038
      %v1071 = vpack.c.bf16 %v1041, %v1040
      %v1072 = vpack.c.bf16 %v1043, %v1042
      %v1073 = vpack.c.bf16 %v1045, %v1044
      %v1074 = vpack.c.bf16 %v1047, %v1046
      %v1075 = vpack.c.bf16 %v1049, %v1048
      %v1076 = vpack.c.bf16 %v1051, %v1050
      %v1077 = vpack.c.bf16 %v1053, %v1052
      %v1078 = vld [vmem:[%s8] sm:$0x1]
      %v1080 = vlaneseq
      %v1081 = vshrl.u32 %v1080, 7
      %v1082 = vsub.s32 0, %v1081
      %v1083 = vrot.slane %v1078, %v1082
      %v1101 = vunpack.c.l.b16 %v1054
      %v1102 = vunpack.c.l.b16 %v1055
      %v1103 = vunpack.c.l.b16 %v1056
      %v1104 = vunpack.c.l.b16 %v1057
      %v1105 = vunpack.c.l.b16 %v1058
      %v1106 = vunpack.c.l.b16 %v1059
      %v1107 = vunpack.c.l.b16 %v1060
      %v1108 = vunpack.c.l.b16 %v1061
      %v1109 = vunpack.c.l.b16 %v1062
      %v1110 = vunpack.c.l.b16 %v1063
      %v1111 = vunpack.c.l.b16 %v1064
      %v1112 = vunpack.c.l.b16 %v1065
      %v1113 = vunpack.c.l.b16 %v1066
      %v1114 = vunpack.c.l.b16 %v1067
      %v1115 = vunpack.c.l.b16 %v1068
      %v1116 = vunpack.c.l.b16 %v1069
      %v1117 = vpack.c.b16 %v1102, %v1101
      %v1118 = vpack.c.b16 %v1104, %v1103
      %v1119 = vpack.c.b16 %v1106, %v1105
      %v1120 = vpack.c.b16 %v1108, %v1107
      %v1121 = vpack.c.b16 %v1110, %v1109
      %v1122 = vpack.c.b16 %v1112, %v1111
      %v1123 = vpack.c.b16 %v1114, %v1113
      %v1124 = vpack.c.b16 %v1116, %v1115
      %1133 = vmatprep.subr.bf16.mxu0 0
      %1134 = vmatpush1.bf16.msra.mxu0 %v1117
      %1135 = vmatprep.subr.bf16.mxu0 0
      %1136 = vmatpush1.bf16.msra.mxu0 %v1118
      %1137 = vmatprep.subr.bf16.mxu0 0
      %1138 = vmatpush1.bf16.msra.mxu0 %v1119
      %1139 = vmatprep.subr.bf16.mxu0 0
      %1140 = vmatpush1.bf16.msra.mxu0 %v1120
      %1141 = vmatprep.subr.bf16.mxu0 0
      %1142 = vmatpush1.bf16.msra.mxu0 %v1121
      %1143 = vmatprep.subr.bf16.mxu0 0
      %1144 = vmatpush1.bf16.msra.mxu0 %v1122
      %1145 = vmatprep.subr.bf16.mxu0 0
      %1146 = vmatpush1.bf16.msra.mxu0 %v1123
      %1147 = vmatprep.subr.bf16.mxu0 0
      %1148 = vmatpush1.bf16.msra.mxu0 %v1124
      %1149 = vmatprep.subr.bf16.mxu0 0
      %1150 = vmatpush1.bf16.msra.mxu0 0
      %1151 = vmatprep.subr.bf16.mxu0 0
      %1152 = vmatpush1.bf16.msra.mxu0 0
      %1153 = vmatprep.subr.bf16.mxu0 0
      %1154 = vmatpush1.bf16.msra.mxu0 0
      %1155 = vmatprep.subr.bf16.mxu0 0
      %1156 = vmatpush1.bf16.msra.mxu0 0
      %1157 = vmatprep.subr.bf16.mxu0 0
      %1158 = vmatpush1.bf16.msra.mxu0 0
      %1159 = vmatprep.subr.bf16.mxu0 0
      %1160 = vmatpush1.bf16.msra.mxu0 0
      %1161 = vmatprep.subr.bf16.mxu0 0
      %1162 = vmatpush1.bf16.msra.mxu0 0
      %1163 = vmatprep.subr.bf16.mxu0 0
      %1164 = vmatpush1.bf16.msra.mxu0 0
      %1165 = vmatprep.mubr.bf16.mxu0 0
      %1166 = vmatmul.mubr.bf16.gmra.mrb[0].mxu0 %v1070
      %v1167 = vpop.f32.mrb[0].mxu0
      %v1168 = vadd.f32 %v1083, %v1167
      %v1169 = vpop.f32.mrb[0].mxu0
      %v1170 = vpop.f32.mrb[0].mxu0
      %v1171 = vadd.f32 %v1083, %v1170
      %v1172 = vpop.f32.mrb[0].mxu0
      %1173 = vmatprep.mubr.bf16.mxu0 0
      %1174 = vmatmul.mubr.bf16.gmra.mrb[0].mxu0 %v1071
      %v1175 = vpop.f32.mrb[0].mxu0
      %v1176 = vadd.f32 %v1083, %v1175
      %v1177 = vpop.f32.mrb[0].mxu0
      %v1178 = vpop.f32.mrb[0].mxu0
      %v1179 = vadd.f32 %v1083, %v1178
      %v1180 = vpop.f32.mrb[0].mxu0
      %1181 = vmatprep.mubr.bf16.mxu0 0
      %1182 = vmatmul.mubr.bf16.gmra.mrb[0].mxu0 %v1072
      %v1183 = vpop.f32.mrb[0].mxu0
      %v1184 = vadd.f32 %v1083, %v1183
      %v1185 = vpop.f32.mrb[0].mxu0
      %v1186 = vpop.f32.mrb[0].mxu0
      %v1187 = vadd.f32 %v1083, %v1186
      %v1188 = vpop.f32.mrb[0].mxu0
      %1189 = vmatprep.mubr.bf16.mxu0 0
      %1190 = vmatmul.mubr.bf16.gmra.mrb[0].mxu0 %v1073
      %v1191 = vpop.f32.mrb[0].mxu0
      %v1192 = vadd.f32 %v1083, %v1191
      %v1193 = vpop.f32.mrb[0].mxu0
      %v1194 = vpop.f32.mrb[0].mxu0
      %v1195 = vadd.f32 %v1083, %v1194
      %v1196 = vpop.f32.mrb[0].mxu0
      %1197 = vmatprep.mubr.bf16.mxu0 0
      %1198 = vmatmul.mubr.bf16.gmra.mrb[0].mxu0 %v1074
      %v1199 = vpop.f32.mrb[0].mxu0
      %v1200 = vadd.f32 %v1083, %v1199
      %v1201 = vpop.f32.mrb[0].mxu0
      %v1202 = vpop.f32.mrb[0].mxu0
      %v1203 = vadd.f32 %v1083, %v1202
      %v1204 = vpop.f32.mrb[0].mxu0
      %1205 = vmatprep.mubr.bf16.mxu0 0
      %1206 = vmatmul.mubr.bf16.gmra.mrb[0].mxu0 %v1075
      %v1207 = vpop.f32.mrb[0].mxu0
      %v1208 = vadd.f32 %v1083, %v1207
      %v1209 = vpop.f32.mrb[0].mxu0
      %v1210 = vpop.f32.mrb[0].mxu0
      %v1211 = vadd.f32 %v1083, %v1210
      %v1212 = vpop.f32.mrb[0].mxu0
      %1213 = vmatprep.mubr.bf16.mxu0 0
      %1214 = vmatmul.mubr.bf16.gmra.mrb[0].mxu0 %v1076
      %v1215 = vpop.f32.mrb[0].mxu0
      %v1216 = vadd.f32 %v1083, %v1215
      %v1217 = vpop.f32.mrb[0].mxu0
      %v1218 = vpop.f32.mrb[0].mxu0
      %v1219 = vadd.f32 %v1083, %v1218
      %v1220 = vpop.f32.mrb[0].mxu0
      %1221 = vmatprep.mubr.bf16.mxu0 0
      %1222 = vmatmul.mubr.bf16.gmra.mrb[0].mxu0 %v1077
      %v1223 = vpop.f32.mrb[0].mxu0
      %v1224 = vadd.f32 %v1083, %v1223
      %v1225 = vpop.f32.mrb[0].mxu0
      %v1226 = vpop.f32.mrb[0].mxu0
      %v1227 = vadd.f32 %v1083, %v1226
      %v1228 = vpop.f32.mrb[0].mxu0
      %1229 = vdwg.mxu0
      %v1230 = vld [vmem:[%s9] sm:$0x1]
      %v1231 = vld [vmem:[%s10] sm:$0x1]
      %1232 = vadd.xlane.f32.xlu0 %v1168
      %v1233 = vpop.xlane.xlu0 %1232
      %1234 = vadd.xlane.f32.xlu0 %v1171
      %v1235 = vpop.xlane.xlu0 %1234
      %1236 = vadd.xlane.f32.xlu0 %v1176
      %v1237 = vpop.xlane.xlu0 %1236
      %1238 = vadd.xlane.f32.xlu0 %v1179
      %v1239 = vpop.xlane.xlu0 %1238
      %1240 = vadd.xlane.f32.xlu0 %v1184
      %v1241 = vpop.xlane.xlu0 %1240
      %1242 = vadd.xlane.f32.xlu0 %v1187
      %v1243 = vpop.xlane.xlu0 %1242
      %1244 = vadd.xlane.f32.xlu0 %v1192
      %v1245 = vpop.xlane.xlu0 %1244
      %1246 = vadd.xlane.f32.xlu0 %v1195
      %v1247 = vpop.xlane.xlu0 %1246
      %1248 = vadd.xlane.f32.xlu0 %v1200
      %v1249 = vpop.xlane.xlu0 %1248
      %1250 = vadd.xlane.f32.xlu0 %v1203
      %v1251 = vpop.xlane.xlu0 %1250
      %1252 = vadd.xlane.f32.xlu0 %v1208
      %v1253 = vpop.xlane.xlu0 %1252
      %1254 = vadd.xlane.f32.xlu0 %v1211
      %v1255 = vpop.xlane.xlu0 %1254
      %1256 = vadd.xlane.f32.xlu0 %v1216
      %v1257 = vpop.xlane.xlu0 %1256
      %1258 = vadd.xlane.f32.xlu0 %v1219
      %v1259 = vpop.xlane.xlu0 %1258
      %1260 = vadd.xlane.f32.xlu0 %v1224
      %v1261 = vpop.xlane.xlu0 %1260
      %1262 = vadd.xlane.f32.xlu0 %v1227
      %v1263 = vpop.xlane.xlu0 %1262
      %v1264 = vrcp.pop 128.0
      %v1265 = vmul.f32 %v1233, %v1264
      %v1266 = vmul.f32 %v1235, %v1264
      %v1267 = vmul.f32 %v1237, %v1264
      %v1268 = vmul.f32 %v1239, %v1264
      %v1269 = vmul.f32 %v1241, %v1264
      %v1270 = vmul.f32 %v1243, %v1264
      %v1271 = vmul.f32 %v1245, %v1264
      %v1272 = vmul.f32 %v1247, %v1264
      %v1273 = vmul.f32 %v1249, %v1264
      %v1274 = vmul.f32 %v1251, %v1264
      %v1275 = vmul.f32 %v1253, %v1264
      %v1276 = vmul.f32 %v1255, %v1264
      %v1277 = vmul.f32 %v1257, %v1264
      %v1278 = vmul.f32 %v1259, %v1264
      %v1279 = vmul.f32 %v1261, %v1264
      %v1280 = vmul.f32 %v1263, %v1264
      %v1281 = vsub.f32 %v1168, %v1265
      %v1282 = vsub.f32 %v1171, %v1266
      %v1283 = vsub.f32 %v1176, %v1267
      %v1284 = vsub.f32 %v1179, %v1268
      %v1285 = vsub.f32 %v1184, %v1269
      %v1286 = vsub.f32 %v1187, %v1270
      %v1287 = vsub.f32 %v1192, %v1271
      %v1288 = vsub.f32 %v1195, %v1272
      %v1289 = vsub.f32 %v1200, %v1273
      %v1290 = vsub.f32 %v1203, %v1274
      %v1291 = vsub.f32 %v1208, %v1275
      %v1292 = vsub.f32 %v1211, %v1276
      %v1293 = vsub.f32 %v1216, %v1277
      %v1294 = vsub.f32 %v1219, %v1278
      %v1295 = vsub.f32 %v1224, %v1279
      %v1296 = vsub.f32 %v1227, %v1280
      %v1297 = vmul.f32 %v1281, %v1281
      %v1298 = vmul.f32 %v1282, %v1282
      %v1299 = vmul.f32 %v1283, %v1283
      %v1300 = vmul.f32 %v1284, %v1284
      %v1301 = vmul.f32 %v1285, %v1285
      %v1302 = vmul.f32 %v1286, %v1286
      %v1303 = vmul.f32 %v1287, %v1287
      %v1304 = vmul.f32 %v1288, %v1288
      %v1305 = vmul.f32 %v1289, %v1289
      %v1306 = vmul.f32 %v1290, %v1290
      %v1307 = vmul.f32 %v1291, %v1291
      %v1308 = vmul.f32 %v1292, %v1292
      %v1309 = vmul.f32 %v1293, %v1293
      %v1310 = vmul.f32 %v1294, %v1294
      %v1311 = vmul.f32 %v1295, %v1295
      %v1312 = vmul.f32 %v1296, %v1296
      %1313 = vadd.xlane.f32.xlu0 %v1297
      %v1314 = vpop.xlane.xlu0 %1313
      %1315 = vadd.xlane.f32.xlu0 %v1298
      %v1316 = vpop.xlane.xlu0 %1315
      %1317 = vadd.xlane.f32.xlu0 %v1299
      %v1318 = vpop.xlane.xlu0 %1317
      %1319 = vadd.xlane.f32.xlu0 %v1300
      %v1320 = vpop.xlane.xlu0 %1319
      %1321 = vadd.xlane.f32.xlu0 %v1301
      %v1322 = vpop.xlane.xlu0 %1321
      %1323 = vadd.xlane.f32.xlu0 %v1302
      %v1324 = vpop.xlane.xlu0 %1323
      %1325 = vadd.xlane.f32.xlu0 %v1303
      %v1326 = vpop.xlane.xlu0 %1325
      %1327 = vadd.xlane.f32.xlu0 %v1304
      %v1328 = vpop.xlane.xlu0 %1327
      %1329 = vadd.xlane.f32.xlu0 %v1305
      %v1330 = vpop.xlane.xlu0 %1329
      %1331 = vadd.xlane.f32.xlu0 %v1306
      %v1332 = vpop.xlane.xlu0 %1331
      %1333 = vadd.xlane.f32.xlu0 %v1307
      %v1334 = vpop.xlane.xlu0 %1333
      %1335 = vadd.xlane.f32.xlu0 %v1308
      %v1336 = vpop.xlane.xlu0 %1335
      %1337 = vadd.xlane.f32.xlu0 %v1309
      %v1338 = vpop.xlane.xlu0 %1337
      %1339 = vadd.xlane.f32.xlu0 %v1310
      %v1340 = vpop.xlane.xlu0 %1339
      %1341 = vadd.xlane.f32.xlu0 %v1311
      %v1342 = vpop.xlane.xlu0 %1341
      %1343 = vadd.xlane.f32.xlu0 %v1312
      %v1344 = vpop.xlane.xlu0 %1343
      %v1345 = vmul.f32 %v1314, %v1264
      %v1346 = vmul.f32 %v1316, %v1264
      %v1347 = vmul.f32 %v1318, %v1264
      %v1348 = vmul.f32 %v1320, %v1264
      %v1349 = vmul.f32 %v1322, %v1264
      %v1350 = vmul.f32 %v1324, %v1264
      %v1351 = vmul.f32 %v1326, %v1264
      %v1352 = vmul.f32 %v1328, %v1264
      %v1353 = vmul.f32 %v1330, %v1264
      %v1354 = vmul.f32 %v1332, %v1264
      %v1355 = vmul.f32 %v1334, %v1264
      %v1356 = vmul.f32 %v1336, %v1264
      %v1357 = vmul.f32 %v1338, %v1264
      %v1358 = vmul.f32 %v1340, %v1264
      %v1359 = vmul.f32 %v1342, %v1264
      %v1360 = vmul.f32 %v1344, %v1264
      %v1361 = vadd.f32 %v1345, 1e-05
      %v1362 = vadd.f32 %v1346, 1e-05
      %v1363 = vadd.f32 %v1347, 1e-05
      %v1364 = vadd.f32 %v1348, 1e-05
      %v1365 = vadd.f32 %v1349, 1e-05
      %v1366 = vadd.f32 %v1350, 1e-05
      %v1367 = vadd.f32 %v1351, 1e-05
      %v1368 = vadd.f32 %v1352, 1e-05
      %v1369 = vadd.f32 %v1353, 1e-05
      %v1370 = vadd.f32 %v1354, 1e-05
      %v1371 = vadd.f32 %v1355, 1e-05
      %v1372 = vadd.f32 %v1356, 1e-05
      %v1373 = vadd.f32 %v1357, 1e-05
      %v1374 = vadd.f32 %v1358, 1e-05
      %v1375 = vadd.f32 %v1359, 1e-05
      %v1376 = vadd.f32 %v1360, 1e-05
      %v1377 = vrsqrt.pop %v1361
      %v1378 = vrsqrt.pop %v1362
      %v1379 = vrsqrt.pop %v1363
      %v1380 = vrsqrt.pop %v1364
      %v1381 = vrsqrt.pop %v1365
      %v1382 = vrsqrt.pop %v1366
      %v1383 = vrsqrt.pop %v1367
      %v1384 = vrsqrt.pop %v1368
      %v1385 = vrsqrt.pop %v1369
      %v1386 = vrsqrt.pop %v1370
      %v1387 = vrsqrt.pop %v1371
      %v1388 = vrsqrt.pop %v1372
      %v1389 = vrsqrt.pop %v1373
      %v1390 = vrsqrt.pop %v1374
      %v1391 = vrsqrt.pop %v1375
      %v1392 = vrsqrt.pop %v1376
      %v1393 = vmul.f32 %v1281, %v1377
      %v1394 = vmul.f32 %v1282, %v1378
      %v1395 = vmul.f32 %v1283, %v1379
      %v1396 = vmul.f32 %v1284, %v1380
      %v1397 = vmul.f32 %v1285, %v1381
      %v1398 = vmul.f32 %v1286, %v1382
      %v1399 = vmul.f32 %v1287, %v1383
      %v1400 = vmul.f32 %v1288, %v1384
      %v1401 = vmul.f32 %v1289, %v1385
      %v1402 = vmul.f32 %v1290, %v1386
      %v1403 = vmul.f32 %v1291, %v1387
      %v1404 = vmul.f32 %v1292, %v1388
      %v1405 = vmul.f32 %v1293, %v1389
      %v1406 = vmul.f32 %v1294, %v1390
      %v1407 = vmul.f32 %v1295, %v1391
      %v1408 = vmul.f32 %v1296, %v1392
      %v1410 = vlaneseq
      %v1411 = vshrl.u32 %v1410, 7
      %v1412 = vsub.s32 0, %v1411
      %v1413 = vrot.slane %v1230, %v1412
      %v1415 = vmul.f32 %v1393, %v1413
      %v1416 = vmul.f32 %v1394, %v1413
      %v1417 = vmul.f32 %v1395, %v1413
      %v1418 = vmul.f32 %v1396, %v1413
      %v1419 = vmul.f32 %v1397, %v1413
      %v1420 = vmul.f32 %v1398, %v1413
      %v1421 = vmul.f32 %v1399, %v1413
      %v1422 = vmul.f32 %v1400, %v1413
      %v1423 = vmul.f32 %v1401, %v1413
      %v1424 = vmul.f32 %v1402, %v1413
      %v1425 = vmul.f32 %v1403, %v1413
      %v1426 = vmul.f32 %v1404, %v1413
      %v1427 = vmul.f32 %v1405, %v1413
      %v1428 = vmul.f32 %v1406, %v1413
      %v1429 = vmul.f32 %v1407, %v1413
      %v1430 = vmul.f32 %v1408, %v1413
      %v1432 = vlaneseq
      %v1433 = vshrl.u32 %v1432, 7
      %v1434 = vsub.s32 0, %v1433
      %v1435 = vrot.slane %v1231, %v1434
      %v1437 = vadd.f32 %v1415, %v1435
      %v1438 = vadd.f32 %v1416, %v1435
      %v1439 = vadd.f32 %v1417, %v1435
      %v1440 = vadd.f32 %v1418, %v1435
      %v1441 = vadd.f32 %v1419, %v1435
      %v1442 = vadd.f32 %v1420, %v1435
      %v1443 = vadd.f32 %v1421, %v1435
      %v1444 = vadd.f32 %v1422, %v1435
      %v1445 = vadd.f32 %v1423, %v1435
      %v1446 = vadd.f32 %v1424, %v1435
      %v1447 = vadd.f32 %v1425, %v1435
      %v1448 = vadd.f32 %v1426, %v1435
      %v1449 = vadd.f32 %v1427, %v1435
      %v1450 = vadd.f32 %v1428, %v1435
      %v1451 = vadd.f32 %v1429, %v1435
      %v1452 = vadd.f32 %v1430, %v1435
      %v1453 = vunpack.c.l.bf16 %v413
      %v1454 = vunpack.c.l.bf16 %v414
      %v1455 = vunpack.c.l.bf16 %v415
      %v1456 = vunpack.c.l.bf16 %v416
      %v1457 = vunpack.c.l.bf16 %v417
      %v1458 = vunpack.c.l.bf16 %v418
      %v1459 = vunpack.c.l.bf16 %v419
      %v1460 = vunpack.c.l.bf16 %v420
      %v1461 = vunpack.c.l.bf16 %v421
      %v1462 = vunpack.c.l.bf16 %v422
      %v1463 = vunpack.c.l.bf16 %v423
      %v1464 = vunpack.c.l.bf16 %v424
      %v1465 = vunpack.c.l.bf16 %v425
      %v1466 = vunpack.c.l.bf16 %v426
      %v1467 = vunpack.c.l.bf16 %v427
      %v1468 = vunpack.c.l.bf16 %v428
      %v1469 = vadd.f32 %v1437, %v1453
      %v1470 = vadd.f32 %v1438, %v1454
      %v1471 = vadd.f32 %v1439, %v1455
      %v1472 = vadd.f32 %v1440, %v1456
      %v1473 = vadd.f32 %v1441, %v1457
      %v1474 = vadd.f32 %v1442, %v1458
      %v1475 = vadd.f32 %v1443, %v1459
      %v1476 = vadd.f32 %v1444, %v1460
      %v1477 = vadd.f32 %v1445, %v1461
      %v1478 = vadd.f32 %v1446, %v1462
      %v1479 = vadd.f32 %v1447, %v1463
      %v1480 = vadd.f32 %v1448, %v1464
      %v1481 = vadd.f32 %v1449, %v1465
      %v1482 = vadd.f32 %v1450, %v1466
      %v1483 = vadd.f32 %v1451, %v1467
      %v1484 = vadd.f32 %v1452, %v1468
      %v1485 = vpack.c.bf16 %v1470, %v1469
      %v1486 = vpack.c.bf16 %v1472, %v1471
      %v1487 = vpack.c.bf16 %v1474, %v1473
      %v1488 = vpack.c.bf16 %v1476, %v1475
      %v1489 = vpack.c.bf16 %v1478, %v1477
      %v1490 = vpack.c.bf16 %v1480, %v1479
      %v1491 = vpack.c.bf16 %v1482, %v1481
      %v1492 = vpack.c.bf16 %v1484, %v1483
      %v1501 = vunpack.c.l.b16 %v1485
      %v1502 = vunpack.c.h.b16 %v1485
      %v1503 = vunpack.c.l.b16 %v1486
      %v1504 = vunpack.c.h.b16 %v1486
      %v1505 = vunpack.c.l.b16 %v1487
      %v1506 = vunpack.c.h.b16 %v1487
      %v1507 = vunpack.c.l.b16 %v1488
      %v1508 = vunpack.c.h.b16 %v1488
      %v1509 = vunpack.c.l.b16 %v1489
      %v1510 = vunpack.c.h.b16 %v1489
      %v1511 = vunpack.c.l.b16 %v1490
      %v1512 = vunpack.c.h.b16 %v1490
      %v1513 = vunpack.c.l.b16 %v1491
      %v1514 = vunpack.c.h.b16 %v1491
      %v1515 = vunpack.c.l.b16 %v1492
      %v1516 = vunpack.c.h.b16 %v1492
      %v1517 = vpack.c.b16 %v1501, %v1501
      %v1518 = vpack.c.b16 %v1502, %v1502
      %v1519 = vpack.c.b16 %v1503, %v1503
      %v1520 = vpack.c.b16 %v1504, %v1504
      %v1521 = vpack.c.b16 %v1505, %v1505
      %v1522 = vpack.c.b16 %v1506, %v1506
      %v1523 = vpack.c.b16 %v1507, %v1507
      %v1524 = vpack.c.b16 %v1508, %v1508
      %v1525 = vpack.c.b16 %v1509, %v1509
      %v1526 = vpack.c.b16 %v1510, %v1510
      %v1527 = vpack.c.b16 %v1511, %v1511
      %v1528 = vpack.c.b16 %v1512, %v1512
      %v1529 = vpack.c.b16 %v1513, %v1513
      %v1530 = vpack.c.b16 %v1514, %v1514
      %v1531 = vpack.c.b16 %v1515, %v1515
      %v1532 = vpack.c.b16 %v1516, %v1516
      %1549 = vst [vmem:[%s410] sm:$0xf] %v1517
      %1550 = vst [vmem:[%s410 + $0x4] sm:$0xf] %v1518
      %1551 = vst [vmem:[%s410 + $0x8] sm:$0xf] %v1519
      %1552 = vst [vmem:[%s410 + $0xc] sm:$0xf] %v1520
      %1553 = vst [vmem:[%s410 + $0x10] sm:$0xf] %v1521
      %1554 = vst [vmem:[%s410 + $0x14] sm:$0xf] %v1522
      %1555 = vst [vmem:[%s410 + $0x18] sm:$0xf] %v1523
      %1556 = vst [vmem:[%s410 + $0x1c] sm:$0xf] %v1524
      %1557 = vst [vmem:[%s410 + $0x20] sm:$0xf] %v1525
      %1558 = vst [vmem:[%s410 + $0x24] sm:$0xf] %v1526
      %1559 = vst [vmem:[%s410 + $0x28] sm:$0xf] %v1527
      %1560 = vst [vmem:[%s410 + $0x2c] sm:$0xf] %v1528
      %1561 = vst [vmem:[%s410 + $0x30] sm:$0xf] %v1529
      %1562 = vst [vmem:[%s410 + $0x34] sm:$0xf] %v1530
      %1563 = vst [vmem:[%s410 + $0x38] sm:$0xf] %v1531
      %1564 = vst [vmem:[%s410 + $0x3c] sm:$0xf] %v1532
      %s1565 = smul.u32 16, %s22
      %p1566 = scmp.lt.s32.totalorder %s1565, 31
      %s1567 = scalar_select %p1566, %s1565, 31
      %s1568 = smul.addr %s1567, 4
      %s1569 = scalar_lea.vmem %s11, %s1568
      // Predicated region
      $region65: #{meshgraphnet_forward.10} parent=63 // pred_check
        %p1570 = pneg %p281
      $region66: #{meshgraphnet_forward.10} parent=63 // pred_check_branch
        %1572 = sbr.rel (%p1570) target = $region68
      $region67: #{meshgraphnet_forward.10} parent=63 // pred_region
        %s1573 = smul.u32 16, %s22
      $region68: #{meshgraphnet_forward.10} parent=63 // pred_fallthru
        _
    $region64: #{meshgraphnet_forward.10} parent=5 // pred_fallthru
      _
    %p1574 = scmp.le.s32.totalorder 2, %s17
    // Predicated region
    $region69: #{meshgraphnet_forward.10} parent=5 // pred_check
      %p1575 = pneg %p1574
    $region70: #{meshgraphnet_forward.10} parent=5 // pred_check_branch
      %1577 = sbr.rel (%p1575) target = $region72
    $region71: #{meshgraphnet_forward.10} parent=5 // pred_region
      %s1578 = ssub.s32 %s17, 2
      // Predicated region
      $region73: #{meshgraphnet_forward.10} parent=71 // pred_check
        %p1579 = pneg %p287
      $region74: #{meshgraphnet_forward.10} parent=71 // pred_check_branch
        %1581 = sbr.rel (%p1579) target = $region76
      $region75: #{meshgraphnet_forward.10} parent=71 // pred_region
        %s1582 = smul.u32 16, %s23
        %p1583 = scmp.lt.s32.totalorder %s1582, 31
        %s1584 = scalar_select %p1583, %s1582, 31
        %s1585 = smul.addr %s1584, 4
        %s1586 = scalar_lea.vmem %s11, %s1585
      $region76: #{meshgraphnet_forward.10} parent=71 // pred_fallthru
        _
    $region72: #{meshgraphnet_forward.10} parent=5 // pred_fallthru
      _
  $region6: #{meshgraphnet_forward.10} parent=0 // loop_footer
    %s21 = sadd.s32 1, %s17
  $region7: #{meshgraphnet_forward.10} parent=0 // loop_footer_branch
    %16 = sbr.rel target = $region3
  $region8: #{meshgraphnet_forward.10} parent=0 // loop_exit
    _

// kernel: meshgraphnet_forward.9
$region0: #{meshgraphnet_forward.9}
  #allocation0 [shape = 'u32[]', space=smem, size = 0x4, offset = 0x4, fixed_abs, tag = 'smem constant byte address 0x4 - core index']
  #allocation1 [shape = 'u32[144,128]{1,0:T(1,128)}', space=vmem, size = 0x12000, scoped, tag = 'internal scratch']
  %s0 = inlined_call_operand.vmem [shape: bf16[1024,128], index: 0, kind: input, shape index: {}]
  %s1 = inlined_call_operand.vmem [shape: bf16[1024,128], index: 1, kind: input, shape index: {}]
  %s2 = inlined_call_operand.vmem [shape: bf16[1024,128], index: 2, kind: input, shape index: {}]
  %s3 = inlined_call_operand.vmem [shape: bf16[128,128], index: 3, kind: input, shape index: {}]
  %s4 = inlined_call_operand.vmem [shape: bf16[128,128], index: 4, kind: input, shape index: {}]
  %s5 = inlined_call_operand.vmem [shape: bf16[128,128], index: 5, kind: input, shape index: {}]
  %s6 = inlined_call_operand.vmem [shape: f32[1,128], index: 6, kind: input, shape index: {}]
  %s7 = inlined_call_operand.vmem [shape: bf16[128,128], index: 7, kind: input, shape index: {}]
  %s8 = inlined_call_operand.vmem [shape: f32[1,128], index: 8, kind: input, shape index: {}]
  %s9 = inlined_call_operand.vmem [shape: bf16[128,128], index: 9, kind: input, shape index: {}]
  %s10 = inlined_call_operand.vmem [shape: f32[1,128], index: 10, kind: input, shape index: {}]
  %s11 = inlined_call_operand.vmem [shape: f32[1,128], index: 11, kind: input, shape index: {}]
  %s12 = inlined_call_operand.vmem [shape: f32[1,128], index: 12, kind: input, shape index: {}]
  %s13 = inlined_call_operand.vmem [shape: bf16[1024,128], index: 13, kind: output, shape index: {}]
  %s14 = sld [smem:[#allocation0]]
  $region85: #{meshgraphnet_forward.9} parent=0
    _
  %s16 = ssub.s32 1, %s14
  %s17 = scalar_select 0, %s16, %s14
  loop: start=0, step=1, limit=4
  $region2: #{meshgraphnet_forward.9} parent=0 // loop_pre_header
    _
  $region3: #{meshgraphnet_forward.9} parent=0 // loop_header
    %s19 = sphi 0, %s23
    %p20 = scmp.ge.s32.totalorder %s19, 4
    %s29 = sphi 0, %s31
    %s32 = sphi 0, %s29
    %s33 = sphi 0, %s32
    %s49 = sphi 0, %s33
    %s55 = sphi 0, %s57
    %s58 = sphi 0, %s55
    %s59 = sphi 0, %s58
    %s75 = sphi 0, %s59
    %s81 = sphi 0, %s83
    %s84 = sphi 0, %s81
    %s85 = sphi 0, %s84
    %s101 = sphi 0, %s85
    %s105 = sphi 0, %s105
    %s107 = sphi 0, %s105
    %s108 = sphi 0, %s107
    %s122 = sphi 0, %s108
    %s126 = sphi 0, %s126
    %s128 = sphi 0, %s126
    %s129 = sphi 0, %s128
    %s143 = sphi 0, %s129
    %s147 = sphi 0, %s147
    %s149 = sphi 0, %s147
    %s150 = sphi 0, %s149
    %s164 = sphi 0, %s150
    %s168 = sphi 0, %s168
    %s170 = sphi 0, %s168
    %s171 = sphi 0, %s170
    %s185 = sphi 0, %s171
    %s189 = sphi 0, %s189
    %s191 = sphi 0, %s189
    %s192 = sphi 0, %s191
    %s206 = sphi 0, %s192
    %s210 = sphi 0, %s210
    %s212 = sphi 0, %s210
    %s213 = sphi 0, %s212
    %s227 = sphi 0, %s213
    %s231 = sphi 0, %s231
    %s233 = sphi 0, %s231
    %s234 = sphi 0, %s233
    %s248 = sphi 0, %s234
    %s252 = sphi 0, %s252
    %s254 = sphi 0, %s252
    %s255 = sphi 0, %s254
    %s269 = sphi 0, %s255
    %s273 = sphi 0, %s273
    %s275 = sphi 0, %s273
    %s276 = sphi 0, %s275
    %s290 = sphi 0, %s276
    %s294 = sphi 0, %s294
    %s296 = sphi 0, %s294
    %s297 = sphi 0, %s296
    %s311 = sphi 0, %s297
    %s317 = sphi 0, %s319
    %s320 = sphi 0, %s317
    %s321 = sphi 0, %s320
    %s337 = sphi 0, %s321
  $region4: #{meshgraphnet_forward.9} parent=0 // loop_header_branch
    %22 = sbr.rel (%p20) target = $region8
  $region5: #{meshgraphnet_forward.9} parent=0 // loop_body
    %s24 = ssub.s32 %s19, 1
    %s25 = ssub.s32 %s19, 2
    %s26 = sadd.s32 %s19, 1
    %s27 = ssub.s32 %s19, %s26
    %p28 = scmp.eq.s32.totalorder %s27, 0
    %s30 = sadd.s32 %s29, 1
    %s31 = scalar_select %p28, %s29, %s30
    %p34 = pneg %p28
    %p35 = scmp.eq.s32.totalorder %s19, 1
    %p36 = por %p34, %p35
    %p37 = scmp.ne.s32.totalorder %s29, %s32
    %p38 = scmp.eq.s32.totalorder %s19, 0
    %p39 = por %p37, %p38
    %p40 = scmp.ne.s32.totalorder %s29, %s32
    %p41 = scmp.eq.s32.totalorder %s24, 1
    %p42 = por %p40, %p41
    %p43 = scmp.ne.s32.totalorder %s32, %s33
    %p44 = scmp.eq.s32.totalorder %s24, 0
    %p45 = por %p43, %p44
    %p46 = scmp.ne.s32.totalorder %s32, %s33
    %p47 = scmp.eq.s32.totalorder %s25, 1
    %p48 = por %p46, %p47
    %p50 = scmp.ne.s32.totalorder %s33, %s49
    %p51 = scmp.eq.s32.totalorder %s25, 0
    %p52 = por %p50, %p51
    %s53 = ssub.s32 %s19, %s26
    %p54 = scmp.eq.s32.totalorder %s53, 0
    %s56 = sadd.s32 %s55, 1
    %s57 = scalar_select %p54, %s55, %s56
    %p60 = pneg %p54
    %p61 = scmp.eq.s32.totalorder %s19, 1
    %p62 = por %p60, %p61
    %p63 = scmp.ne.s32.totalorder %s55, %s58
    %p64 = scmp.eq.s32.totalorder %s19, 0
    %p65 = por %p63, %p64
    %p66 = scmp.ne.s32.totalorder %s55, %s58
    %p67 = scmp.eq.s32.totalorder %s24, 1
    %p68 = por %p66, %p67
    %p69 = scmp.ne.s32.totalorder %s58, %s59
    %p70 = scmp.eq.s32.totalorder %s24, 0
    %p71 = por %p69, %p70
    %p72 = scmp.ne.s32.totalorder %s58, %s59
    %p73 = scmp.eq.s32.totalorder %s25, 1
    %p74 = por %p72, %p73
    %p76 = scmp.ne.s32.totalorder %s59, %s75
    %p77 = scmp.eq.s32.totalorder %s25, 0
    %p78 = por %p76, %p77
    %s79 = ssub.s32 %s19, %s26
    %p80 = scmp.eq.s32.totalorder %s79, 0
    %s82 = sadd.s32 %s81, 1
    %s83 = scalar_select %p80, %s81, %s82
    %p86 = pneg %p80
    %p87 = scmp.eq.s32.totalorder %s19, 1
    %p88 = por %p86, %p87
    %p89 = scmp.ne.s32.totalorder %s81, %s84
    %p90 = scmp.eq.s32.totalorder %s19, 0
    %p91 = por %p89, %p90
    %p92 = scmp.ne.s32.totalorder %s81, %s84
    %p93 = scmp.eq.s32.totalorder %s24, 1
    %p94 = por %p92, %p93
    %p95 = scmp.ne.s32.totalorder %s84, %s85
    %p96 = scmp.eq.s32.totalorder %s24, 0
    %p97 = por %p95, %p96
    %p98 = scmp.ne.s32.totalorder %s84, %s85
    %p99 = scmp.eq.s32.totalorder %s25, 1
    %p100 = por %p98, %p99
    %p102 = scmp.ne.s32.totalorder %s85, %s101
    %p103 = scmp.eq.s32.totalorder %s25, 0
    %p104 = por %p102, %p103
    %s106 = sadd.s32 %s105, 1
    %p109 = scmp.eq.s32.totalorder %s19, 1
    %p110 = scmp.ne.s32.totalorder %s105, %s107
    %p111 = scmp.eq.s32.totalorder %s19, 0
    %p112 = por %p110, %p111
    %p113 = scmp.ne.s32.totalorder %s105, %s107
    %p114 = scmp.eq.s32.totalorder %s24, 1
    %p115 = por %p113, %p114
    %p116 = scmp.ne.s32.totalorder %s107, %s108
    %p117 = scmp.eq.s32.totalorder %s24, 0
    %p118 = por %p116, %p117
    %p119 = scmp.ne.s32.totalorder %s107, %s108
    %p120 = scmp.eq.s32.totalorder %s25, 1
    %p121 = por %p119, %p120
    %p123 = scmp.ne.s32.totalorder %s108, %s122
    %p124 = scmp.eq.s32.totalorder %s25, 0
    %p125 = por %p123, %p124
    %s127 = sadd.s32 %s126, 1
    %p130 = scmp.eq.s32.totalorder %s19, 1
    %p131 = scmp.ne.s32.totalorder %s126, %s128
    %p132 = scmp.eq.s32.totalorder %s19, 0
    %p133 = por %p131, %p132
    %p134 = scmp.ne.s32.totalorder %s126, %s128
    %p135 = scmp.eq.s32.totalorder %s24, 1
    %p136 = por %p134, %p135
    %p137 = scmp.ne.s32.totalorder %s128, %s129
    %p138 = scmp.eq.s32.totalorder %s24, 0
    %p139 = por %p137, %p138
    %p140 = scmp.ne.s32.totalorder %s128, %s129
    %p141 = scmp.eq.s32.totalorder %s25, 1
    %p142 = por %p140, %p141
    %p144 = scmp.ne.s32.totalorder %s129, %s143
    %p145 = scmp.eq.s32.totalorder %s25, 0
    %p146 = por %p144, %p145
    %s148 = sadd.s32 %s147, 1
    %p151 = scmp.eq.s32.totalorder %s19, 1
    %p152 = scmp.ne.s32.totalorder %s147, %s149
    %p153 = scmp.eq.s32.totalorder %s19, 0
    %p154 = por %p152, %p153
    %p155 = scmp.ne.s32.totalorder %s147, %s149
    %p156 = scmp.eq.s32.totalorder %s24, 1
    %p157 = por %p155, %p156
    %p158 = scmp.ne.s32.totalorder %s149, %s150
    %p159 = scmp.eq.s32.totalorder %s24, 0
    %p160 = por %p158, %p159
    %p161 = scmp.ne.s32.totalorder %s149, %s150
    %p162 = scmp.eq.s32.totalorder %s25, 1
    %p163 = por %p161, %p162
    %p165 = scmp.ne.s32.totalorder %s150, %s164
    %p166 = scmp.eq.s32.totalorder %s25, 0
    %p167 = por %p165, %p166
    %s169 = sadd.s32 %s168, 1
    %p172 = scmp.eq.s32.totalorder %s19, 1
    %p173 = scmp.ne.s32.totalorder %s168, %s170
    %p174 = scmp.eq.s32.totalorder %s19, 0
    %p175 = por %p173, %p174
    %p176 = scmp.ne.s32.totalorder %s168, %s170
    %p177 = scmp.eq.s32.totalorder %s24, 1
    %p178 = por %p176, %p177
    %p179 = scmp.ne.s32.totalorder %s170, %s171
    %p180 = scmp.eq.s32.totalorder %s24, 0
    %p181 = por %p179, %p180
    %p182 = scmp.ne.s32.totalorder %s170, %s171
    %p183 = scmp.eq.s32.totalorder %s25, 1
    %p184 = por %p182, %p183
    %p186 = scmp.ne.s32.totalorder %s171, %s185
    %p187 = scmp.eq.s32.totalorder %s25, 0
    %p188 = por %p186, %p187
    %s190 = sadd.s32 %s189, 1
    %p193 = scmp.eq.s32.totalorder %s19, 1
    %p194 = scmp.ne.s32.totalorder %s189, %s191
    %p195 = scmp.eq.s32.totalorder %s19, 0
    %p196 = por %p194, %p195
    %p197 = scmp.ne.s32.totalorder %s189, %s191
    %p198 = scmp.eq.s32.totalorder %s24, 1
    %p199 = por %p197, %p198
    %p200 = scmp.ne.s32.totalorder %s191, %s192
    %p201 = scmp.eq.s32.totalorder %s24, 0
    %p202 = por %p200, %p201
    %p203 = scmp.ne.s32.totalorder %s191, %s192
    %p204 = scmp.eq.s32.totalorder %s25, 1
    %p205 = por %p203, %p204
    %p207 = scmp.ne.s32.totalorder %s192, %s206
    %p208 = scmp.eq.s32.totalorder %s25, 0
    %p209 = por %p207, %p208
    %s211 = sadd.s32 %s210, 1
    %p214 = scmp.eq.s32.totalorder %s19, 1
    %p215 = scmp.ne.s32.totalorder %s210, %s212
    %p216 = scmp.eq.s32.totalorder %s19, 0
    %p217 = por %p215, %p216
    %p218 = scmp.ne.s32.totalorder %s210, %s212
    %p219 = scmp.eq.s32.totalorder %s24, 1
    %p220 = por %p218, %p219
    %p221 = scmp.ne.s32.totalorder %s212, %s213
    %p222 = scmp.eq.s32.totalorder %s24, 0
    %p223 = por %p221, %p222
    %p224 = scmp.ne.s32.totalorder %s212, %s213
    %p225 = scmp.eq.s32.totalorder %s25, 1
    %p226 = por %p224, %p225
    %p228 = scmp.ne.s32.totalorder %s213, %s227
    %p229 = scmp.eq.s32.totalorder %s25, 0
    %p230 = por %p228, %p229
    %s232 = sadd.s32 %s231, 1
    %p235 = scmp.eq.s32.totalorder %s19, 1
    %p236 = scmp.ne.s32.totalorder %s231, %s233
    %p237 = scmp.eq.s32.totalorder %s19, 0
    %p238 = por %p236, %p237
    %p239 = scmp.ne.s32.totalorder %s231, %s233
    %p240 = scmp.eq.s32.totalorder %s24, 1
    %p241 = por %p239, %p240
    %p242 = scmp.ne.s32.totalorder %s233, %s234
    %p243 = scmp.eq.s32.totalorder %s24, 0
    %p244 = por %p242, %p243
    %p245 = scmp.ne.s32.totalorder %s233, %s234
    %p246 = scmp.eq.s32.totalorder %s25, 1
    %p247 = por %p245, %p246
    %p249 = scmp.ne.s32.totalorder %s234, %s248
    %p250 = scmp.eq.s32.totalorder %s25, 0
    %p251 = por %p249, %p250
    %s253 = sadd.s32 %s252, 1
    %p256 = scmp.eq.s32.totalorder %s19, 1
    %p257 = scmp.ne.s32.totalorder %s252, %s254
    %p258 = scmp.eq.s32.totalorder %s19, 0
    %p259 = por %p257, %p258
    %p260 = scmp.ne.s32.totalorder %s252, %s254
    %p261 = scmp.eq.s32.totalorder %s24, 1
    %p262 = por %p260, %p261
    %p263 = scmp.ne.s32.totalorder %s254, %s255
    %p264 = scmp.eq.s32.totalorder %s24, 0
    %p265 = por %p263, %p264
    %p266 = scmp.ne.s32.totalorder %s254, %s255
    %p267 = scmp.eq.s32.totalorder %s25, 1
    %p268 = por %p266, %p267
    %p270 = scmp.ne.s32.totalorder %s255, %s269
    %p271 = scmp.eq.s32.totalorder %s25, 0
    %p272 = por %p270, %p271
    %s274 = sadd.s32 %s273, 1
    %p277 = scmp.eq.s32.totalorder %s19, 1
    %p278 = scmp.ne.s32.totalorder %s273, %s275
    %p279 = scmp.eq.s32.totalorder %s19, 0
    %p280 = por %p278, %p279
    %p281 = scmp.ne.s32.totalorder %s273, %s275
    %p282 = scmp.eq.s32.totalorder %s24, 1
    %p283 = por %p281, %p282
    %p284 = scmp.ne.s32.totalorder %s275, %s276
    %p285 = scmp.eq.s32.totalorder %s24, 0
    %p286 = por %p284, %p285
    %p287 = scmp.ne.s32.totalorder %s275, %s276
    %p288 = scmp.eq.s32.totalorder %s25, 1
    %p289 = por %p287, %p288
    %p291 = scmp.ne.s32.totalorder %s276, %s290
    %p292 = scmp.eq.s32.totalorder %s25, 0
    %p293 = por %p291, %p292
    %s295 = sadd.s32 %s294, 1
    %p298 = scmp.eq.s32.totalorder %s19, 1
    %p299 = scmp.ne.s32.totalorder %s294, %s296
    %p300 = scmp.eq.s32.totalorder %s19, 0
    %p301 = por %p299, %p300
    %p302 = scmp.ne.s32.totalorder %s294, %s296
    %p303 = scmp.eq.s32.totalorder %s24, 1
    %p304 = por %p302, %p303
    %p305 = scmp.ne.s32.totalorder %s296, %s297
    %p306 = scmp.eq.s32.totalorder %s24, 0
    %p307 = por %p305, %p306
    %p308 = scmp.ne.s32.totalorder %s296, %s297
    %p309 = scmp.eq.s32.totalorder %s25, 1
    %p310 = por %p308, %p309
    %p312 = scmp.ne.s32.totalorder %s297, %s311
    %p313 = scmp.eq.s32.totalorder %s25, 0
    %p314 = por %p312, %p313
    %s315 = ssub.s32 %s19, %s26
    %p316 = scmp.eq.s32.totalorder %s315, 0
    %s318 = sadd.s32 %s317, 1
    %s319 = scalar_select %p316, %s317, %s318
    %p322 = pneg %p316
    %p323 = scmp.eq.s32.totalorder %s19, 1
    %p324 = por %p322, %p323
    %p325 = scmp.ne.s32.totalorder %s317, %s320
    %p326 = scmp.eq.s32.totalorder %s19, 0
    %p327 = por %p325, %p326
    %p328 = scmp.ne.s32.totalorder %s317, %s320
    %p329 = scmp.eq.s32.totalorder %s24, 1
    %p330 = por %p328, %p329
    %p331 = scmp.ne.s32.totalorder %s320, %s321
    %p332 = scmp.eq.s32.totalorder %s24, 0
    %p333 = por %p331, %p332
    %p334 = scmp.ne.s32.totalorder %s320, %s321
    %p335 = scmp.eq.s32.totalorder %s25, 1
    %p336 = por %p334, %p335
    %p338 = scmp.ne.s32.totalorder %s321, %s337
    %p339 = scmp.eq.s32.totalorder %s25, 0
    %p340 = por %p338, %p339
    %p341 = scmp.le.s32.totalorder 1, %s19
    %p342 = scmp.lt.s32.totalorder %s19, 3
    %p343 = pnand %p341, %p342
    %p344 = pneg %p343
    // Predicated region
    $region9: #{meshgraphnet_forward.9} parent=5 // pred_check
      _
    $region10: #{meshgraphnet_forward.9} parent=5 // pred_check_branch
      %346 = sbr.rel (%p343) target = $region12
    $region11: #{meshgraphnet_forward.9} parent=5 // pred_region
      %s347 = ssub.s32 %s19, 1
      // Predicated region
      $region13: #{meshgraphnet_forward.9} parent=11 // pred_check
        %p348 = pneg %p118
      $region14: #{meshgraphnet_forward.9} parent=11 // pred_check_branch
        %350 = sbr.rel (%p348) target = $region16
      $region15: #{meshgraphnet_forward.9} parent=11 // pred_region
        _
      $region16: #{meshgraphnet_forward.9} parent=11 // pred_fallthru
        _
      // Predicated region
      $region17: #{meshgraphnet_forward.9} parent=11 // pred_check
        %p351 = pneg %p139
      $region18: #{meshgraphnet_forward.9} parent=11 // pred_check_branch
        %353 = sbr.rel (%p351) target = $region20
      $region19: #{meshgraphnet_forward.9} parent=11 // pred_region
        _
      $region20: #{meshgraphnet_forward.9} parent=11 // pred_fallthru
        _
      // Predicated region
      $region21: #{meshgraphnet_forward.9} parent=11 // pred_check
        %p354 = pneg %p160
      $region22: #{meshgraphnet_forward.9} parent=11 // pred_check_branch
        %356 = sbr.rel (%p354) target = $region24
      $region23: #{meshgraphnet_forward.9} parent=11 // pred_region
        _
      $region24: #{meshgraphnet_forward.9} parent=11 // pred_fallthru
        _
      // Predicated region
      $region25: #{meshgraphnet_forward.9} parent=11 // pred_check
        %p357 = pneg %p181
      $region26: #{meshgraphnet_forward.9} parent=11 // pred_check_branch
        %359 = sbr.rel (%p357) target = $region28
      $region27: #{meshgraphnet_forward.9} parent=11 // pred_region
        _
      $region28: #{meshgraphnet_forward.9} parent=11 // pred_fallthru
        _
      // Predicated region
      $region29: #{meshgraphnet_forward.9} parent=11 // pred_check
        %p360 = pneg %p202
      $region30: #{meshgraphnet_forward.9} parent=11 // pred_check_branch
        %362 = sbr.rel (%p360) target = $region32
      $region31: #{meshgraphnet_forward.9} parent=11 // pred_region
        _
      $region32: #{meshgraphnet_forward.9} parent=11 // pred_fallthru
        _
      // Predicated region
      $region33: #{meshgraphnet_forward.9} parent=11 // pred_check
        %p363 = pneg %p223
      $region34: #{meshgraphnet_forward.9} parent=11 // pred_check_branch
        %365 = sbr.rel (%p363) target = $region36
      $region35: #{meshgraphnet_forward.9} parent=11 // pred_region
        _
      $region36: #{meshgraphnet_forward.9} parent=11 // pred_fallthru
        _
      // Predicated region
      $region37: #{meshgraphnet_forward.9} parent=11 // pred_check
        %p366 = pneg %p244
      $region38: #{meshgraphnet_forward.9} parent=11 // pred_check_branch
        %368 = sbr.rel (%p366) target = $region40
      $region39: #{meshgraphnet_forward.9} parent=11 // pred_region
        _
      $region40: #{meshgraphnet_forward.9} parent=11 // pred_fallthru
        _
      // Predicated region
      $region41: #{meshgraphnet_forward.9} parent=11 // pred_check
        %p369 = pneg %p265
      $region42: #{meshgraphnet_forward.9} parent=11 // pred_check_branch
        %371 = sbr.rel (%p369) target = $region44
      $region43: #{meshgraphnet_forward.9} parent=11 // pred_region
        _
      $region44: #{meshgraphnet_forward.9} parent=11 // pred_fallthru
        _
      // Predicated region
      $region45: #{meshgraphnet_forward.9} parent=11 // pred_check
        %p372 = pneg %p286
      $region46: #{meshgraphnet_forward.9} parent=11 // pred_check_branch
        %374 = sbr.rel (%p372) target = $region48
      $region47: #{meshgraphnet_forward.9} parent=11 // pred_region
        _
      $region48: #{meshgraphnet_forward.9} parent=11 // pred_fallthru
        _
      // Predicated region
      $region49: #{meshgraphnet_forward.9} parent=11 // pred_check
        %p375 = pneg %p307
      $region50: #{meshgraphnet_forward.9} parent=11 // pred_check_branch
        %377 = sbr.rel (%p375) target = $region52
      $region51: #{meshgraphnet_forward.9} parent=11 // pred_region
        _
      $region52: #{meshgraphnet_forward.9} parent=11 // pred_fallthru
        _
    $region12: #{meshgraphnet_forward.9} parent=5 // pred_fallthru
      _
    %p378 = scmp.lt.s32.totalorder %s19, 2
    // Predicated region
    $region53: #{meshgraphnet_forward.9} parent=5 // pred_check
      %p379 = pneg %p378
    $region54: #{meshgraphnet_forward.9} parent=5 // pred_check_branch
      %381 = sbr.rel (%p379) target = $region56
    $region55: #{meshgraphnet_forward.9} parent=5 // pred_region
      // Predicated region
      $region57: #{meshgraphnet_forward.9} parent=55 // pred_check
        %p382 = pneg %p39
      $region58: #{meshgraphnet_forward.9} parent=55 // pred_check_branch
        %384 = sbr.rel (%p382) target = $region60
      $region59: #{meshgraphnet_forward.9} parent=55 // pred_region
        %s385 = smul.u32 64, %s19
        %p386 = scmp.lt.s32.totalorder %s385, 127
        %s387 = scalar_select %p386, %s385, 127
        %s388 = smul.addr %s387, 4
        %s389 = scalar_lea.vmem %s0, %s388
        %s390 = smul.u32 64, %s19
      $region60: #{meshgraphnet_forward.9} parent=55 // pred_fallthru
        _
      // Predicated region
      $region61: #{meshgraphnet_forward.9} parent=55 // pred_check
        %p391 = pneg %p65
      $region62: #{meshgraphnet_forward.9} parent=55 // pred_check_branch
        %393 = sbr.rel (%p391) target = $region64
      $region63: #{meshgraphnet_forward.9} parent=55 // pred_region
        %s394 = smul.u32 64, %s19
        %p395 = scmp.lt.s32.totalorder %s394, 127
        %s396 = scalar_select %p395, %s394, 127
        %s397 = smul.addr %s396, 4
        %s398 = scalar_lea.vmem %s1, %s397
        %s399 = smul.u32 64, %s19
      $region64: #{meshgraphnet_forward.9} parent=55 // pred_fallthru
        _
      // Predicated region
      $region65: #{meshgraphnet_forward.9} parent=55 // pred_check
        %p400 = pneg %p91
      $region66: #{meshgraphnet_forward.9} parent=55 // pred_check_branch
        %402 = sbr.rel (%p400) target = $region68
      $region67: #{meshgraphnet_forward.9} parent=55 // pred_region
        %s403 = smul.u32 64, %s19
        %p404 = scmp.lt.s32.totalorder %s403, 127
        %s405 = scalar_select %p404, %s403, 127
        %s406 = smul.addr %s405, 4
        %s407 = scalar_lea.vmem %s2, %s406
        %s408 = smul.u32 64, %s19
      $region68: #{meshgraphnet_forward.9} parent=55 // pred_fallthru
        _
    $region56: #{meshgraphnet_forward.9} parent=5 // pred_fallthru
      _
    %p409 = scmp.le.s32.totalorder 1, %s19
    %p410 = scmp.lt.s32.totalorder %s19, 3
    %p411 = pnand %p409, %p410
    %p412 = pneg %p411
    // Predicated region
    $region69: #{meshgraphnet_forward.9} parent=5 // pred_check
      _
    $region70: #{meshgraphnet_forward.9} parent=5 // pred_check_branch
      %414 = sbr.rel (%p411) target = $region72
    $region71: #{meshgraphnet_forward.9} parent=5 // pred_region
      %s415 = ssub.s32 %s19, 1
      %s416 = smul.u32 64, %s24
      %p417 = scmp.lt.s32.totalorder %s416, 127
      %s418 = scalar_select %p417, %s416, 127
      %s419 = smul.addr %s418, 4
      %s420 = scalar_lea.vmem %s0, %s419
      %p421 = pneg %p45
      %p422 = pneg %p42
      %s423 = smul.u32 64, %s24
      %p424 = scmp.lt.s32.totalorder %s423, 127
      %s425 = scalar_select %p424, %s423, 127
      %s426 = smul.addr %s425, 4
      %s427 = scalar_lea.vmem %s1, %s426
      %p428 = pneg %p71
      %p429 = pneg %p68
      %s430 = smul.u32 64, %s24
      %p431 = scmp.lt.s32.totalorder %s430, 127
      %s432 = scalar_select %p431, %s430, 127
      %s433 = smul.addr %s432, 4
      %s434 = scalar_lea.vmem %s2, %s433
      %p435 = pneg %p97
      %p436 = pneg %p94
      %p437 = pneg %p118
      %p438 = pneg %p115
      %p439 = pneg %p139
      %p440 = pneg %p136
      %p441 = pneg %p160
      %p442 = pneg %p157
      %p443 = pneg %p181
      %p444 = pneg %p178
      %p445 = pneg %p202
      %p446 = pneg %p199
      %p447 = pneg %p223
      %p448 = pneg %p220
      %p449 = pneg %p244
      %p450 = pneg %p241
      %p451 = pneg %p265
      %p452 = pneg %p262
      %p453 = pneg %p286
      %p454 = pneg %p283
      %p455 = pneg %p307
      %p456 = pneg %p304
      %p457 = pneg %p333
      %p458 = pneg %p330
      %s459 = smul.u32 64, %s24
      %p460 = scmp.lt.s32.totalorder %s459, 127
      %s461 = scalar_select %p460, %s459, 127
      %s462 = smul.addr %s461, 4
      %s463 = scalar_lea.vmem %s13, %s462
      %s464 = smul.u32 64, %s24
      %p465 = scmp.lt.s32.totalorder %s464, 127
      %s466 = scalar_select %p465, %s464, 127
      %s467 = smul.addr %s466, 4
      %s468 = scalar_lea.vmem %s0, %s467
      %s469 = smul.u32 64, %s24
      %s470 = smul.u32 64, %s24
      %p471 = scmp.lt.s32.totalorder %s470, 127
      %s472 = scalar_select %p471, %s470, 127
      %s473 = smul.addr %s472, 4
      %s474 = scalar_lea.vmem %s1, %s473
      %s475 = smul.u32 64, %s24
      %s476 = smul.u32 64, %s24
      %p477 = scmp.lt.s32.totalorder %s476, 127
      %s478 = scalar_select %p477, %s476, 127
      %s479 = smul.addr %s478, 4
      %s480 = scalar_lea.vmem %s2, %s479
      %s481 = smul.u32 64, %s24
      %s482 = smul.u32 64, %s24
      %p483 = scmp.lt.s32.totalorder %s482, 127
      %s484 = scalar_select %p483, %s482, 127
      %s485 = smul.addr %s484, 4
      %s486 = scalar_lea.vmem %s13, %s485
      %s487 = smul.u32 64, %s24
      %v489 = vld [vmem:[%s480] sm:$0xf]
      %v490 = vld [vmem:[%s480 + $0x4] sm:$0xf]
      %v491 = vld [vmem:[%s480 + $0x8] sm:$0xf]
      %v492 = vld [vmem:[%s480 + $0xc] sm:$0xf]
      %v493 = vld [vmem:[%s480 + $0x10] sm:$0xf]
      %v494 = vld [vmem:[%s480 + $0x14] sm:$0xf]
      %v495 = vld [vmem:[%s480 + $0x18] sm:$0xf]
      %v496 = vld [vmem:[%s480 + $0x1c] sm:$0xf]
      %v497 = vld [vmem:[%s480 + $0x20] sm:$0xf]
      %v498 = vld [vmem:[%s480 + $0x24] sm:$0xf]
      %v499 = vld [vmem:[%s480 + $0x28] sm:$0xf]
      %v500 = vld [vmem:[%s480 + $0x2c] sm:$0xf]
      %v501 = vld [vmem:[%s480 + $0x30] sm:$0xf]
      %v502 = vld [vmem:[%s480 + $0x34] sm:$0xf]
      %v503 = vld [vmem:[%s480 + $0x38] sm:$0xf]
      %v504 = vld [vmem:[%s480 + $0x3c] sm:$0xf]
      %v505 = vld [vmem:[%s480 + $0x40] sm:$0xf]
      %v506 = vld [vmem:[%s480 + $0x44] sm:$0xf]
      %v507 = vld [vmem:[%s480 + $0x48] sm:$0xf]
      %v508 = vld [vmem:[%s480 + $0x4c] sm:$0xf]
      %v509 = vld [vmem:[%s480 + $0x50] sm:$0xf]
      %v510 = vld [vmem:[%s480 + $0x54] sm:$0xf]
      %v511 = vld [vmem:[%s480 + $0x58] sm:$0xf]
      %v512 = vld [vmem:[%s480 + $0x5c] sm:$0xf]
      %v513 = vld [vmem:[%s480 + $0x60] sm:$0xf]
      %v514 = vld [vmem:[%s480 + $0x64] sm:$0xf]
      %v515 = vld [vmem:[%s480 + $0x68] sm:$0xf]
      %v516 = vld [vmem:[%s480 + $0x6c] sm:$0xf]
      %v517 = vld [vmem:[%s480 + $0x70] sm:$0xf]
      %v518 = vld [vmem:[%s480 + $0x74] sm:$0xf]
      %v519 = vld [vmem:[%s480 + $0x78] sm:$0xf]
      %v520 = vld [vmem:[%s480 + $0x7c] sm:$0xf]
      %v521 = vld [vmem:[%s480 + $0x80] sm:$0xf]
      %v522 = vld [vmem:[%s480 + $0x84] sm:$0xf]
      %v523 = vld [vmem:[%s480 + $0x88] sm:$0xf]
      %v524 = vld [vmem:[%s480 + $0x8c] sm:$0xf]
      %v525 = vld [vmem:[%s480 + $0x90] sm:$0xf]
      %v526 = vld [vmem:[%s480 + $0x94] sm:$0xf]
      %v527 = vld [vmem:[%s480 + $0x98] sm:$0xf]
      %v528 = vld [vmem:[%s480 + $0x9c] sm:$0xf]
      %v529 = vld [vmem:[%s480 + $0xa0] sm:$0xf]
      %v530 = vld [vmem:[%s480 + $0xa4] sm:$0xf]
      %v531 = vld [vmem:[%s480 + $0xa8] sm:$0xf]
      %v532 = vld [vmem:[%s480 + $0xac] sm:$0xf]
      %v533 = vld [vmem:[%s480 + $0xb0] sm:$0xf]
      %v534 = vld [vmem:[%s480 + $0xb4] sm:$0xf]
      %v535 = vld [vmem:[%s480 + $0xb8] sm:$0xf]
      %v536 = vld [vmem:[%s480 + $0xbc] sm:$0xf]
      %v537 = vld [vmem:[%s480 + $0xc0] sm:$0xf]
      %v538 = vld [vmem:[%s480 + $0xc4] sm:$0xf]
      %v539 = vld [vmem:[%s480 + $0xc8] sm:$0xf]
      %v540 = vld [vmem:[%s480 + $0xcc] sm:$0xf]
      %v541 = vld [vmem:[%s480 + $0xd0] sm:$0xf]
      %v542 = vld [vmem:[%s480 + $0xd4] sm:$0xf]
      %v543 = vld [vmem:[%s480 + $0xd8] sm:$0xf]
      %v544 = vld [vmem:[%s480 + $0xdc] sm:$0xf]
      %v545 = vld [vmem:[%s480 + $0xe0] sm:$0xf]
      %v546 = vld [vmem:[%s480 + $0xe4] sm:$0xf]
      %v547 = vld [vmem:[%s480 + $0xe8] sm:$0xf]
      %v548 = vld [vmem:[%s480 + $0xec] sm:$0xf]
      %v549 = vld [vmem:[%s480 + $0xf0] sm:$0xf]
      %v550 = vld [vmem:[%s480 + $0xf4] sm:$0xf]
      %v551 = vld [vmem:[%s480 + $0xf8] sm:$0xf]
      %v552 = vld [vmem:[%s480 + $0xfc] sm:$0xf]
      %v553 = vld [vmem:[%s468] sm:$0xf]
      %v554 = vld [vmem:[%s468 + $0x4] sm:$0xf]
      %v555 = vld [vmem:[%s468 + $0x8] sm:$0xf]
      %v556 = vld [vmem:[%s468 + $0xc] sm:$0xf]
      %v557 = vld [vmem:[%s468 + $0x10] sm:$0xf]
      %v558 = vld [vmem:[%s468 + $0x14] sm:$0xf]
      %v559 = vld [vmem:[%s468 + $0x18] sm:$0xf]
      %v560 = vld [vmem:[%s468 + $0x1c] sm:$0xf]
      %v561 = vld [vmem:[%s468 + $0x20] sm:$0xf]
      %v562 = vld [vmem:[%s468 + $0x24] sm:$0xf]
      %v563 = vld [vmem:[%s468 + $0x28] sm:$0xf]
      %v564 = vld [vmem:[%s468 + $0x2c] sm:$0xf]
      %v565 = vld [vmem:[%s468 + $0x30] sm:$0xf]
      %v566 = vld [vmem:[%s468 + $0x34] sm:$0xf]
      %v567 = vld [vmem:[%s468 + $0x38] sm:$0xf]
      %v568 = vld [vmem:[%s468 + $0x3c] sm:$0xf]
      %v569 = vld [vmem:[%s468 + $0x40] sm:$0xf]
      %v570 = vld [vmem:[%s468 + $0x44] sm:$0xf]
      %v571 = vld [vmem:[%s468 + $0x48] sm:$0xf]
      %v572 = vld [vmem:[%s468 + $0x4c] sm:$0xf]
      %v573 = vld [vmem:[%s468 + $0x50] sm:$0xf]
      %v574 = vld [vmem:[%s468 + $0x54] sm:$0xf]
      %v575 = vld [vmem:[%s468 + $0x58] sm:$0xf]
      %v576 = vld [vmem:[%s468 + $0x5c] sm:$0xf]
      %v577 = vld [vmem:[%s468 + $0x60] sm:$0xf]
      %v578 = vld [vmem:[%s468 + $0x64] sm:$0xf]
      %v579 = vld [vmem:[%s468 + $0x68] sm:$0xf]
      %v580 = vld [vmem:[%s468 + $0x6c] sm:$0xf]
      %v581 = vld [vmem:[%s468 + $0x70] sm:$0xf]
      %v582 = vld [vmem:[%s468 + $0x74] sm:$0xf]
      %v583 = vld [vmem:[%s468 + $0x78] sm:$0xf]
      %v584 = vld [vmem:[%s468 + $0x7c] sm:$0xf]
      %v585 = vld [vmem:[%s468 + $0x80] sm:$0xf]
      %v586 = vld [vmem:[%s468 + $0x84] sm:$0xf]
      %v587 = vld [vmem:[%s468 + $0x88] sm:$0xf]
      %v588 = vld [vmem:[%s468 + $0x8c] sm:$0xf]
      %v589 = vld [vmem:[%s468 + $0x90] sm:$0xf]
      %v590 = vld [vmem:[%s468 + $0x94] sm:$0xf]
      %v591 = vld [vmem:[%s468 + $0x98] sm:$0xf]
      %v592 = vld [vmem:[%s468 + $0x9c] sm:$0xf]
      %v593 = vld [vmem:[%s468 + $0xa0] sm:$0xf]
      %v594 = vld [vmem:[%s468 + $0xa4] sm:$0xf]
      %v595 = vld [vmem:[%s468 + $0xa8] sm:$0xf]
      %v596 = vld [vmem:[%s468 + $0xac] sm:$0xf]
      %v597 = vld [vmem:[%s468 + $0xb0] sm:$0xf]
      %v598 = vld [vmem:[%s468 + $0xb4] sm:$0xf]
      %v599 = vld [vmem:[%s468 + $0xb8] sm:$0xf]
      %v600 = vld [vmem:[%s468 + $0xbc] sm:$0xf]
      %v601 = vld [vmem:[%s468 + $0xc0] sm:$0xf]
      %v602 = vld [vmem:[%s468 + $0xc4] sm:$0xf]
      %v603 = vld [vmem:[%s468 + $0xc8] sm:$0xf]
      %v604 = vld [vmem:[%s468 + $0xcc] sm:$0xf]
      %v605 = vld [vmem:[%s468 + $0xd0] sm:$0xf]
      %v606 = vld [vmem:[%s468 + $0xd4] sm:$0xf]
      %v607 = vld [vmem:[%s468 + $0xd8] sm:$0xf]
      %v608 = vld [vmem:[%s468 + $0xdc] sm:$0xf]
      %v609 = vld [vmem:[%s468 + $0xe0] sm:$0xf]
      %v610 = vld [vmem:[%s468 + $0xe4] sm:$0xf]
      %v611 = vld [vmem:[%s468 + $0xe8] sm:$0xf]
      %v612 = vld [vmem:[%s468 + $0xec] sm:$0xf]
      %v613 = vld [vmem:[%s468 + $0xf0] sm:$0xf]
      %v614 = vld [vmem:[%s468 + $0xf4] sm:$0xf]
      %v615 = vld [vmem:[%s468 + $0xf8] sm:$0xf]
      %v616 = vld [vmem:[%s468 + $0xfc] sm:$0xf]
      %v617 = vld [vmem:[%s3] sm:$0xf]
      %v618 = vld [vmem:[%s3 + $0x4] sm:$0xf]
      %v619 = vld [vmem:[%s3 + $0x8] sm:$0xf]
      %v620 = vld [vmem:[%s3 + $0xc] sm:$0xf]
      %v621 = vld [vmem:[%s3 + $0x10] sm:$0xf]
      %v622 = vld [vmem:[%s3 + $0x14] sm:$0xf]
      %v623 = vld [vmem:[%s3 + $0x18] sm:$0xf]
      %v624 = vld [vmem:[%s3 + $0x1c] sm:$0xf]
      %v625 = vld [vmem:[%s3 + $0x20] sm:$0xf]
      %v626 = vld [vmem:[%s3 + $0x24] sm:$0xf]
      %v627 = vld [vmem:[%s3 + $0x28] sm:$0xf]
      %v628 = vld [vmem:[%s3 + $0x2c] sm:$0xf]
      %v629 = vld [vmem:[%s3 + $0x30] sm:$0xf]
      %v630 = vld [vmem:[%s3 + $0x34] sm:$0xf]
      %v631 = vld [vmem:[%s3 + $0x38] sm:$0xf]
      %v632 = vld [vmem:[%s3 + $0x3c] sm:$0xf]
      %v633 = vld [vmem:[%s474] sm:$0xf]
      %v634 = vld [vmem:[%s474 + $0x4] sm:$0xf]
      %v635 = vld [vmem:[%s474 + $0x8] sm:$0xf]
      %v636 = vld [vmem:[%s474 + $0xc] sm:$0xf]
      %v637 = vld [vmem:[%s474 + $0x10] sm:$0xf]
      %v638 = vld [vmem:[%s474 + $0x14] sm:$0xf]
      %v639 = vld [vmem:[%s474 + $0x18] sm:$0xf]
      %v640 = vld [vmem:[%s474 + $0x1c] sm:$0xf]
      %v641 = vld [vmem:[%s474 + $0x20] sm:$0xf]
      %v642 = vld [vmem:[%s474 + $0x24] sm:$0xf]
      %v643 = vld [vmem:[%s474 + $0x28] sm:$0xf]
      %v644 = vld [vmem:[%s474 + $0x2c] sm:$0xf]
      %v645 = vld [vmem:[%s474 + $0x30] sm:$0xf]
      %v646 = vld [vmem:[%s474 + $0x34] sm:$0xf]
      %v647 = vld [vmem:[%s474 + $0x38] sm:$0xf]
      %v648 = vld [vmem:[%s474 + $0x3c] sm:$0xf]
      %v649 = vld [vmem:[%s474 + $0x40] sm:$0xf]
      %v650 = vld [vmem:[%s474 + $0x44] sm:$0xf]
      %v651 = vld [vmem:[%s474 + $0x48] sm:$0xf]
      %v652 = vld [vmem:[%s474 + $0x4c] sm:$0xf]
      %v653 = vld [vmem:[%s474 + $0x50] sm:$0xf]
      %v654 = vld [vmem:[%s474 + $0x54] sm:$0xf]
      %v655 = vld [vmem:[%s474 + $0x58] sm:$0xf]
      %v656 = vld [vmem:[%s474 + $0x5c] sm:$0xf]
      %v657 = vld [vmem:[%s474 + $0x60] sm:$0xf]
      %v658 = vld [vmem:[%s474 + $0x64] sm:$0xf]
      %v659 = vld [vmem:[%s474 + $0x68] sm:$0xf]
      %v660 = vld [vmem:[%s474 + $0x6c] sm:$0xf]
      %v661 = vld [vmem:[%s474 + $0x70] sm:$0xf]
      %v662 = vld [vmem:[%s474 + $0x74] sm:$0xf]
      %v663 = vld [vmem:[%s474 + $0x78] sm:$0xf]
      %v664 = vld [vmem:[%s474 + $0x7c] sm:$0xf]
      %v665 = vld [vmem:[%s474 + $0x80] sm:$0xf]
      %v666 = vld [vmem:[%s474 + $0x84] sm:$0xf]
      %v667 = vld [vmem:[%s474 + $0x88] sm:$0xf]
      %v668 = vld [vmem:[%s474 + $0x8c] sm:$0xf]
      %v669 = vld [vmem:[%s474 + $0x90] sm:$0xf]
      %v670 = vld [vmem:[%s474 + $0x94] sm:$0xf]
      %v671 = vld [vmem:[%s474 + $0x98] sm:$0xf]
      %v672 = vld [vmem:[%s474 + $0x9c] sm:$0xf]
      %v673 = vld [vmem:[%s474 + $0xa0] sm:$0xf]
      %v674 = vld [vmem:[%s474 + $0xa4] sm:$0xf]
      %v675 = vld [vmem:[%s474 + $0xa8] sm:$0xf]
      %v676 = vld [vmem:[%s474 + $0xac] sm:$0xf]
      %v677 = vld [vmem:[%s474 + $0xb0] sm:$0xf]
      %v678 = vld [vmem:[%s474 + $0xb4] sm:$0xf]
      %v679 = vld [vmem:[%s474 + $0xb8] sm:$0xf]
      %v680 = vld [vmem:[%s474 + $0xbc] sm:$0xf]
      %v681 = vld [vmem:[%s474 + $0xc0] sm:$0xf]
      %v682 = vld [vmem:[%s474 + $0xc4] sm:$0xf]
      %v683 = vld [vmem:[%s474 + $0xc8] sm:$0xf]
      %v684 = vld [vmem:[%s474 + $0xcc] sm:$0xf]
      %v685 = vld [vmem:[%s474 + $0xd0] sm:$0xf]
      %v686 = vld [vmem:[%s474 + $0xd4] sm:$0xf]
      %v687 = vld [vmem:[%s474 + $0xd8] sm:$0xf]
      %v688 = vld [vmem:[%s474 + $0xdc] sm:$0xf]
      %v689 = vld [vmem:[%s474 + $0xe0] sm:$0xf]
      %v690 = vld [vmem:[%s474 + $0xe4] sm:$0xf]
      %v691 = vld [vmem:[%s474 + $0xe8] sm:$0xf]
      %v692 = vld [vmem:[%s474 + $0xec] sm:$0xf]
      %v693 = vld [vmem:[%s474 + $0xf0] sm:$0xf]
      %v694 = vld [vmem:[%s474 + $0xf4] sm:$0xf]
      %v695 = vld [vmem:[%s474 + $0xf8] sm:$0xf]
      %v696 = vld [vmem:[%s474 + $0xfc] sm:$0xf]
      %v697 = vld [vmem:[%s4] sm:$0xf]
      %v698 = vld [vmem:[%s4 + $0x4] sm:$0xf]
      %v699 = vld [vmem:[%s4 + $0x8] sm:$0xf]
      %v700 = vld [vmem:[%s4 + $0xc] sm:$0xf]
      %v701 = vld [vmem:[%s4 + $0x10] sm:$0xf]
      %v702 = vld [vmem:[%s4 + $0x14] sm:$0xf]
      %v703 = vld [vmem:[%s4 + $0x18] sm:$0xf]
      %v704 = vld [vmem:[%s4 + $0x1c] sm:$0xf]
      %v705 = vld [vmem:[%s4 + $0x20] sm:$0xf]
      %v706 = vld [vmem:[%s4 + $0x24] sm:$0xf]
      %v707 = vld [vmem:[%s4 + $0x28] sm:$0xf]
      %v708 = vld [vmem:[%s4 + $0x2c] sm:$0xf]
      %v709 = vld [vmem:[%s4 + $0x30] sm:$0xf]
      %v710 = vld [vmem:[%s4 + $0x34] sm:$0xf]
      %v711 = vld [vmem:[%s4 + $0x38] sm:$0xf]
      %v712 = vld [vmem:[%s4 + $0x3c] sm:$0xf]
      %v777 = vunpack.c.l.b16 %v633
      %v778 = vunpack.c.l.b16 %v634
      %v779 = vunpack.c.l.b16 %v635
      %v780 = vunpack.c.l.b16 %v636
      %v781 = vunpack.c.l.b16 %v637
      %v782 = vunpack.c.l.b16 %v638
      %v783 = vunpack.c.l.b16 %v639
      %v784 = vunpack.c.l.b16 %v640
      %v785 = vunpack.c.l.b16 %v641
      %v786 = vunpack.c.l.b16 %v642
      %v787 = vunpack.c.l.b16 %v643
      %v788 = vunpack.c.l.b16 %v644
      %v789 = vunpack.c.l.b16 %v645
      %v790 = vunpack.c.l.b16 %v646
      %v791 = vunpack.c.l.b16 %v647
      %v792 = vunpack.c.l.b16 %v648
      %v793 = vunpack.c.l.b16 %v649
      %v794 = vunpack.c.l.b16 %v650
      %v795 = vunpack.c.l.b16 %v651
      %v796 = vunpack.c.l.b16 %v652
      %v797 = vunpack.c.l.b16 %v653
      %v798 = vunpack.c.l.b16 %v654
      %v799 = vunpack.c.l.b16 %v655
      %v800 = vunpack.c.l.b16 %v656
      %v801 = vunpack.c.l.b16 %v657
      %v802 = vunpack.c.l.b16 %v658
      %v803 = vunpack.c.l.b16 %v659
      %v804 = vunpack.c.l.b16 %v660
      %v805 = vunpack.c.l.b16 %v661
      %v806 = vunpack.c.l.b16 %v662
      %v807 = vunpack.c.l.b16 %v663
      %v808 = vunpack.c.l.b16 %v664
      %v809 = vunpack.c.l.b16 %v665
      %v810 = vunpack.c.l.b16 %v666
      %v811 = vunpack.c.l.b16 %v667
      %v812 = vunpack.c.l.b16 %v668
      %v813 = vunpack.c.l.b16 %v669
      %v814 = vunpack.c.l.b16 %v670
      %v815 = vunpack.c.l.b16 %v671
      %v816 = vunpack.c.l.b16 %v672
      %v817 = vunpack.c.l.b16 %v673
      %v818 = vunpack.c.l.b16 %v674
      %v819 = vunpack.c.l.b16 %v675
      %v820 = vunpack.c.l.b16 %v676
      %v821 = vunpack.c.l.b16 %v677
      %v822 = vunpack.c.l.b16 %v678
      %v823 = vunpack.c.l.b16 %v679
      %v824 = vunpack.c.l.b16 %v680
      %v825 = vunpack.c.l.b16 %v681
      %v826 = vunpack.c.l.b16 %v682
      %v827 = vunpack.c.l.b16 %v683
      %v828 = vunpack.c.l.b16 %v684
      %v829 = vunpack.c.l.b16 %v685
      %v830 = vunpack.c.l.b16 %v686
      %v831 = vunpack.c.l.b16 %v687
      %v832 = vunpack.c.l.b16 %v688
      %v833 = vunpack.c.l.b16 %v689
      %v834 = vunpack.c.l.b16 %v690
      %v835 = vunpack.c.l.b16 %v691
      %v836 = vunpack.c.l.b16 %v692
      %v837 = vunpack.c.l.b16 %v693
      %v838 = vunpack.c.l.b16 %v694
      %v839 = vunpack.c.l.b16 %v695
      %v840 = vunpack.c.l.b16 %v696
      %v841 = vpack.c.b16 %v778, %v777
      %v842 = vpack.c.b16 %v780, %v779
      %v843 = vpack.c.b16 %v782, %v781
      %v844 = vpack.c.b16 %v784, %v783
      %v845 = vpack.c.b16 %v786, %v785
      %v846 = vpack.c.b16 %v788, %v787
      %v847 = vpack.c.b16 %v790, %v789
      %v848 = vpack.c.b16 %v792, %v791
      %v849 = vpack.c.b16 %v794, %v793
      %v850 = vpack.c.b16 %v796, %v795
      %v851 = vpack.c.b16 %v798, %v797
      %v852 = vpack.c.b16 %v800, %v799
      %v853 = vpack.c.b16 %v802, %v801
      %v854 = vpack.c.b16 %v804, %v803
      %v855 = vpack.c.b16 %v806, %v805
      %v856 = vpack.c.b16 %v808, %v807
      %v857 = vpack.c.b16 %v810, %v809
      %v858 = vpack.c.b16 %v812, %v811
      %v859 = vpack.c.b16 %v814, %v813
      %v860 = vpack.c.b16 %v816, %v815
      %v861 = vpack.c.b16 %v818, %v817
      %v862 = vpack.c.b16 %v820, %v819
      %v863 = vpack.c.b16 %v822, %v821
      %v864 = vpack.c.b16 %v824, %v823
      %v865 = vpack.c.b16 %v826, %v825
      %v866 = vpack.c.b16 %v828, %v827
      %v867 = vpack.c.b16 %v830, %v829
      %v868 = vpack.c.b16 %v832, %v831
      %v869 = vpack.c.b16 %v834, %v833
      %v870 = vpack.c.b16 %v836, %v835
      %v871 = vpack.c.b16 %v838, %v837
      %v872 = vpack.c.b16 %v840, %v839
      %v921 = vunpack.c.l.b16 %v697
      %v922 = vunpack.c.l.b16 %v698
      %v923 = vunpack.c.l.b16 %v699
      %v924 = vunpack.c.l.b16 %v700
      %v925 = vunpack.c.l.b16 %v701
      %v926 = vunpack.c.l.b16 %v702
      %v927 = vunpack.c.l.b16 %v703
      %v928 = vunpack.c.l.b16 %v704
      %v929 = vunpack.c.l.b16 %v705
      %v930 = vunpack.c.l.b16 %v706
      %v931 = vunpack.c.l.b16 %v707
      %v932 = vunpack.c.l.b16 %v708
      %v933 = vunpack.c.l.b16 %v709
      %v934 = vunpack.c.l.b16 %v710
      %v935 = vunpack.c.l.b16 %v711
      %v936 = vunpack.c.l.b16 %v712
      %v937 = vpack.c.b16 %v922, %v921
      %v938 = vpack.c.b16 %v924, %v923
      %v939 = vpack.c.b16 %v926, %v925
      %v940 = vpack.c.b16 %v928, %v927
      %v941 = vpack.c.b16 %v930, %v929
      %v942 = vpack.c.b16 %v932, %v931
      %v943 = vpack.c.b16 %v934, %v933
      %v944 = vpack.c.b16 %v936, %v935
      %953 = vmatprep.subr.bf16.mxu0 0
      %954 = vmatpush1.bf16.msra.mxu0 %v937
      %955 = vmatprep.subr.bf16.mxu0 0
      %956 = vmatpush1.bf16.msra.mxu0 %v938
      %957 = vmatprep.subr.bf16.mxu0 0
      %958 = vmatpush1.bf16.msra.mxu0 %v939
      %959 = vmatprep.subr.bf16.mxu0 0
      %960 = vmatpush1.bf16.msra.mxu0 %v940
      %961 = vmatprep.subr.bf16.mxu0 0
      %962 = vmatpush1.bf16.msra.mxu0 %v941
      %963 = vmatprep.subr.bf16.mxu0 0
      %964 = vmatpush1.bf16.msra.mxu0 %v942
      %965 = vmatprep.subr.bf16.mxu0 0
      %966 = vmatpush1.bf16.msra.mxu0 %v943
      %967 = vmatprep.subr.bf16.mxu0 0
      %968 = vmatpush1.bf16.msra.mxu0 %v944
      %969 = vmatprep.subr.bf16.mxu0 0
      %970 = vmatpush1.bf16.msra.mxu0 0
      %971 = vmatprep.subr.bf16.mxu0 0
      %972 = vmatpush1.bf16.msra.mxu0 0
      %973 = vmatprep.subr.bf16.mxu0 0
      %974 = vmatpush1.bf16.msra.mxu0 0
      %975 = vmatprep.subr.bf16.mxu0 0
      %976 = vmatpush1.bf16.msra.mxu0 0
      %977 = vmatprep.subr.bf16.mxu0 0
      %978 = vmatpush1.bf16.msra.mxu0 0
      %979 = vmatprep.subr.bf16.mxu0 0
      %980 = vmatpush1.bf16.msra.mxu0 0
      %981 = vmatprep.subr.bf16.mxu0 0
      %982 = vmatpush1.bf16.msra.mxu0 0
      %983 = vmatprep.subr.bf16.mxu0 0
      %984 = vmatpush1.bf16.msra.mxu0 0
      %985 = vmatprep.mubr.bf16.mxu0 0
      %986 = vmatmul.mubr.bf16.gmra.mrb[0].mxu0 %v841
      %v987 = vpop.f32.mrb[0].mxu0
      %v988 = vadd.f32 0.0, %v987
      %v989 = vpop.f32.mrb[0].mxu0
      %v990 = vpop.f32.mrb[0].mxu0
      %v991 = vadd.f32 0.0, %v990
      %v992 = vpop.f32.mrb[0].mxu0
      %993 = vmatprep.mubr.bf16.mxu0 0
      %994 = vmatmul.mubr.bf16.gmra.mrb[0].mxu0 %v842
      %v995 = vpop.f32.mrb[0].mxu0
      %v996 = vadd.f32 0.0, %v995
      %v997 = vpop.f32.mrb[0].mxu0
      %v998 = vpop.f32.mrb[0].mxu0
      %v999 = vadd.f32 0.0, %v998
      %v1000 = vpop.f32.mrb[0].mxu0
      %1001 = vmatprep.mubr.bf16.mxu0 0
      %1002 = vmatmul.mubr.bf16.gmra.mrb[0].mxu0 %v843
      %v1003 = vpop.f32.mrb[0].mxu0
      %v1004 = vadd.f32 0.0, %v1003
      %v1005 = vpop.f32.mrb[0].mxu0
      %v1006 = vpop.f32.mrb[0].mxu0
      %v1007 = vadd.f32 0.0, %v1006
      %v1008 = vpop.f32.mrb[0].mxu0
      %1009 = vmatprep.mubr.bf16.mxu0 0
      %1010 = vmatmul.mubr.bf16.gmra.mrb[0].mxu0 %v844
      %v1011 = vpop.f32.mrb[0].mxu0
      %v1012 = vadd.f32 0.0, %v1011
      %v1013 = vpop.f32.mrb[0].mxu0
      %v1014 = vpop.f32.mrb[0].mxu0
      %v1015 = vadd.f32 0.0, %v1014
      %v1016 = vpop.f32.mrb[0].mxu0
      %1017 = vmatprep.mubr.bf16.mxu0 0
      %1018 = vmatmul.mubr.bf16.gmra.mrb[0].mxu0 %v845
      %v1019 = vpop.f32.mrb[0].mxu0
      %v1020 = vadd.f32 0.0, %v1019
      %v1021 = vpop.f32.mrb[0].mxu0
      %v1022 = vpop.f32.mrb[0].mxu0
      %v1023 = vadd.f32 0.0, %v1022
      %v1024 = vpop.f32.mrb[0].mxu0
      %1025 = vmatprep.mubr.bf16.mxu0 0
      %1026 = vmatmul.mubr.bf16.gmra.mrb[0].mxu0 %v846
      %v1027 = vpop.f32.mrb[0].mxu0
      %v1028 = vadd.f32 0.0, %v1027
      %v1029 = vpop.f32.mrb[0].mxu0
      %v1030 = vpop.f32.mrb[0].mxu0
      %v1031 = vadd.f32 0.0, %v1030
      %v1032 = vpop.f32.mrb[0].mxu0
      %1033 = vmatprep.mubr.bf16.mxu0 0
      %1034 = vmatmul.mubr.bf16.gmra.mrb[0].mxu0 %v847
      %v1035 = vpop.f32.mrb[0].mxu0
      %v1036 = vadd.f32 0.0, %v1035
      %v1037 = vpop.f32.mrb[0].mxu0
      %v1038 = vpop.f32.mrb[0].mxu0
      %v1039 = vadd.f32 0.0, %v1038
      %v1040 = vpop.f32.mrb[0].mxu0
      %1041 = vmatprep.mubr.bf16.mxu0 0
      %1042 = vmatmul.mubr.bf16.gmra.mrb[0].mxu0 %v848
      %v1043 = vpop.f32.mrb[0].mxu0
      %v1044 = vadd.f32 0.0, %v1043
      %v1045 = vpop.f32.mrb[0].mxu0
      %v1046 = vpop.f32.mrb[0].mxu0
      %v1047 = vadd.f32 0.0, %v1046
      %v1048 = vpop.f32.mrb[0].mxu0
      %1049 = vmatprep.mubr.bf16.mxu0 0
      %1050 = vmatmul.mubr.bf16.gmra.mrb[0].mxu0 %v849
      %v1051 = vpop.f32.mrb[0].mxu0
      %v1052 = vadd.f32 0.0, %v1051
      %v1053 = vpop.f32.mrb[0].mxu0
      %v1054 = vpop.f32.mrb[0].mxu0
      %v1055 = vadd.f32 0.0, %v1054
      %v1056 = vpop.f32.mrb[0].mxu0
      %1057 = vmatprep.mubr.bf16.mxu0 0
      %1058 = vmatmul.mubr.bf16.gmra.mrb[0].mxu0 %v850
      %v1059 = vpop.f32.mrb[0].mxu0
      %v1060 = vadd.f32 0.0, %v1059
      %v1061 = vpop.f32.mrb[0].mxu0
      %v1062 = vpop.f32.mrb[0].mxu0
      %v1063 = vadd.f32 0.0, %v1062
      %v1064 = vpop.f32.mrb[0].mxu0
      %1065 = vmatprep.mubr.bf16.mxu0 0
      %1066 = vmatmul.mubr.bf16.gmra.mrb[0].mxu0 %v851
      %v1067 = vpop.f32.mrb[0].mxu0
      %v1068 = vadd.f32 0.0, %v1067
      %v1069 = vpop.f32.mrb[0].mxu0
      %v1070 = vpop.f32.mrb[0].mxu0
      %v1071 = vadd.f32 0.0, %v1070
      %v1072 = vpop.f32.mrb[0].mxu0
      %1073 = vmatprep.mubr.bf16.mxu0 0
      %1074 = vmatmul.mubr.bf16.gmra.mrb[0].mxu0 %v852
      %v1075 = vpop.f32.mrb[0].mxu0
      %v1076 = vadd.f32 0.0, %v1075
      %v1077 = vpop.f32.mrb[0].mxu0
      %v1078 = vpop.f32.mrb[0].mxu0
      %v1079 = vadd.f32 0.0, %v1078
      %v1080 = vpop.f32.mrb[0].mxu0
      %1081 = vmatprep.mubr.bf16.mxu0 0
      %1082 = vmatmul.mubr.bf16.gmra.mrb[0].mxu0 %v853
      %v1083 = vpop.f32.mrb[0].mxu0
      %v1084 = vadd.f32 0.0, %v1083
      %v1085 = vpop.f32.mrb[0].mxu0
      %v1086 = vpop.f32.mrb[0].mxu0
      %v1087 = vadd.f32 0.0, %v1086
      %v1088 = vpop.f32.mrb[0].mxu0
      %1089 = vmatprep.mubr.bf16.mxu0 0
      %1090 = vmatmul.mubr.bf16.gmra.mrb[0].mxu0 %v854
      %v1091 = vpop.f32.mrb[0].mxu0
      %v1092 = vadd.f32 0.0, %v1091
      %v1093 = vpop.f32.mrb[0].mxu0
      %v1094 = vpop.f32.mrb[0].mxu0
      %v1095 = vadd.f32 0.0, %v1094
      %v1096 = vpop.f32.mrb[0].mxu0
      %1097 = vmatprep.mubr.bf16.mxu0 0
      %1098 = vmatmul.mubr.bf16.gmra.mrb[0].mxu0 %v855
      %v1099 = vpop.f32.mrb[0].mxu0
      %v1100 = vadd.f32 0.0, %v1099
      %v1101 = vpop.f32.mrb[0].mxu0
      %v1102 = vpop.f32.mrb[0].mxu0
      %v1103 = vadd.f32 0.0, %v1102
      %v1104 = vpop.f32.mrb[0].mxu0
      %1105 = vmatprep.mubr.bf16.mxu0 0
      %1106 = vmatmul.mubr.bf16.gmra.mrb[0].mxu0 %v856
      %v1107 = vpop.f32.mrb[0].mxu0
      %v1108 = vadd.f32 0.0, %v1107
      %v1109 = vpop.f32.mrb[0].mxu0
      %v1110 = vpop.f32.mrb[0].mxu0
      %v1111 = vadd.f32 0.0, %v1110
      %v1112 = vpop.f32.mrb[0].mxu0
      %1113 = vmatprep.mubr.bf16.mxu0 0
      %1114 = vmatmul.mubr.bf16.gmra.mrb[0].mxu0 %v857
      %v1115 = vpop.f32.mrb[0].mxu0
      %v1116 = vadd.f32 0.0, %v1115
      %v1117 = vpop.f32.mrb[0].mxu0
      %v1118 = vpop.f32.mrb[0].mxu0
      %v1119 = vadd.f32 0.0, %v1118
      %v1120 = vpop.f32.mrb[0].mxu0
      %1121 = vmatprep.mubr.bf16.mxu0 0
      %1122 = vmatmul.mubr.bf16.gmra.mrb[0].mxu0 %v858
      %v1123 = vpop.f32.mrb[0].mxu0
      %v1124 = vadd.f32 0.0, %v1123
      %v1125 = vpop.f32.mrb[0].mxu0
      %v1126 = vpop.f32.mrb[0].mxu0
      %v1127 = vadd.f32 0.0, %v1126
      %v1128 = vpop.f32.mrb[0].mxu0
      %1129 = vmatprep.mubr.bf16.mxu0 0
      %1130 = vmatmul.mubr.bf16.gmra.mrb[0].mxu0 %v859
      %v1131 = vpop.f32.mrb[0].mxu0
      %v1132 = vadd.f32 0.0, %v1131
      %v1133 = vpop.f32.mrb[0].mxu0
      %v1134 = vpop.f32.mrb[0].mxu0
      %v1135 = vadd.f32 0.0, %v1134
      %v1136 = vpop.f32.mrb[0].mxu0
      %1137 = vmatprep.mubr.bf16.mxu0 0
      %1138 = vmatmul.mubr.bf16.gmra.mrb[0].mxu0 %v860
      %v1139 = vpop.f32.mrb[0].mxu0
      %v1140 = vadd.f32 0.0, %v1139
      %v1141 = vpop.f32.mrb[0].mxu0
      %v1142 = vpop.f32.mrb[0].mxu0
      %v1143 = vadd.f32 0.0, %v1142
      %v1144 = vpop.f32.mrb[0].mxu0
      %1145 = vmatprep.mubr.bf16.mxu0 0
      %1146 = vmatmul.mubr.bf16.gmra.mrb[0].mxu0 %v861
      %v1147 = vpop.f32.mrb[0].mxu0
      %v1148 = vadd.f32 0.0, %v1147
      %v1149 = vpop.f32.mrb[0].mxu0
      %v1150 = vpop.f32.mrb[0].mxu0
      %v1151 = vadd.f32 0.0, %v1150
      %v1152 = vpop.f32.mrb[0].mxu0
      %1153 = vmatprep.mubr.bf16.mxu0 0
      %1154 = vmatmul.mubr.bf16.gmra.mrb[0].mxu0 %v862
      %v1155 = vpop.f32.mrb[0].mxu0
      %v1156 = vadd.f32 0.0, %v1155
      %v1157 = vpop.f32.mrb[0].mxu0
      %v1158 = vpop.f32.mrb[0].mxu0
      %v1159 = vadd.f32 0.0, %v1158
      %v1160 = vpop.f32.mrb[0].mxu0
      %1161 = vmatprep.mubr.bf16.mxu0 0
      %1162 = vmatmul.mubr.bf16.gmra.mrb[0].mxu0 %v863
      %v1163 = vpop.f32.mrb[0].mxu0
      %v1164 = vadd.f32 0.0, %v1163
      %v1165 = vpop.f32.mrb[0].mxu0
      %v1166 = vpop.f32.mrb[0].mxu0
      %v1167 = vadd.f32 0.0, %v1166
      %v1168 = vpop.f32.mrb[0].mxu0
      %1169 = vmatprep.mubr.bf16.mxu0 0
      %1170 = vmatmul.mubr.bf16.gmra.mrb[0].mxu0 %v864
      %v1171 = vpop.f32.mrb[0].mxu0
      %v1172 = vadd.f32 0.0, %v1171
      %v1173 = vpop.f32.mrb[0].mxu0
      %v1174 = vpop.f32.mrb[0].mxu0
      %v1175 = vadd.f32 0.0, %v1174
      %v1176 = vpop.f32.mrb[0].mxu0
      %1177 = vmatprep.mubr.bf16.mxu0 0
      %1178 = vmatmul.mubr.bf16.gmra.mrb[0].mxu0 %v865
      %v1179 = vpop.f32.mrb[0].mxu0
      %v1180 = vadd.f32 0.0, %v1179
      %v1181 = vpop.f32.mrb[0].mxu0
      %v1182 = vpop.f32.mrb[0].mxu0
      %v1183 = vadd.f32 0.0, %v1182
      %v1184 = vpop.f32.mrb[0].mxu0
      %1185 = vmatprep.mubr.bf16.mxu0 0
      %1186 = vmatmul.mubr.bf16.gmra.mrb[0].mxu0 %v866
      %v1187 = vpop.f32.mrb[0].mxu0
      %v1188 = vadd.f32 0.0, %v1187
      %v1189 = vpop.f32.mrb[0].mxu0
      %v1190 = vpop.f32.mrb[0].mxu0
      %v1191 = vadd.f32 0.0, %v1190
      %v1192 = vpop.f32.mrb[0].mxu0
      %1193 = vmatprep.mubr.bf16.mxu0 0
      %1194 = vmatmul.mubr.bf16.gmra.mrb[0].mxu0 %v867
      %v1195 = vpop.f32.mrb[0].mxu0
      %v1196 = vadd.f32 0.0, %v1195
      %v1197 = vpop.f32.mrb[0].mxu0
      %v1198 = vpop.f32.mrb[0].mxu0
      %v1199 = vadd.f32 0.0, %v1198
      %v1200 = vpop.f32.mrb[0].mxu0
      %1201 = vmatprep.mubr.bf16.mxu0 0
      %1202 = vmatmul.mubr.bf16.gmra.mrb[0].mxu0 %v868
      %v1203 = vpop.f32.mrb[0].mxu0
      %v1204 = vadd.f32 0.0, %v1203
      %v1205 = vpop.f32.mrb[0].mxu0
      %v1206 = vpop.f32.mrb[0].mxu0
      %v1207 = vadd.f32 0.0, %v1206
      %v1208 = vpop.f32.mrb[0].mxu0
      %1209 = vmatprep.mubr.bf16.mxu0 0
      %1210 = vmatmul.mubr.bf16.gmra.mrb[0].mxu0 %v869
      %v1211 = vpop.f32.mrb[0].mxu0
      %v1212 = vadd.f32 0.0, %v1211
      %v1213 = vpop.f32.mrb[0].mxu0
      %v1214 = vpop.f32.mrb[0].mxu0
      %v1215 = vadd.f32 0.0, %v1214
      %v1216 = vpop.f32.mrb[0].mxu0
      %1217 = vmatprep.mubr.bf16.mxu0 0
      %1218 = vmatmul.mubr.bf16.gmra.mrb[0].mxu0 %v870
      %v1219 = vpop.f32.mrb[0].mxu0
      %v1220 = vadd.f32 0.0, %v1219
      %v1221 = vpop.f32.mrb[0].mxu0
      %v1222 = vpop.f32.mrb[0].mxu0
      %v1223 = vadd.f32 0.0, %v1222
      %v1224 = vpop.f32.mrb[0].mxu0
      %1225 = vmatprep.mubr.bf16.mxu0 0
      %1226 = vmatmul.mubr.bf16.gmra.mrb[0].mxu0 %v871
      %v1227 = vpop.f32.mrb[0].mxu0
      %v1228 = vadd.f32 0.0, %v1227
      %v1229 = vpop.f32.mrb[0].mxu0
      %v1230 = vpop.f32.mrb[0].mxu0
      %v1231 = vadd.f32 0.0, %v1230
      %v1232 = vpop.f32.mrb[0].mxu0
      %1233 = vmatprep.mubr.bf16.mxu0 0
      %1234 = vmatmul.mubr.bf16.gmra.mrb[0].mxu0 %v872
      %v1235 = vpop.f32.mrb[0].mxu0
      %v1236 = vadd.f32 0.0, %v1235
      %v1237 = vpop.f32.mrb[0].mxu0
      %v1238 = vpop.f32.mrb[0].mxu0
      %v1239 = vadd.f32 0.0, %v1238
      %v1240 = vpop.f32.mrb[0].mxu0
      %1241 = vdwg.mxu0
      %v1306 = vunpack.c.l.b16 %v553
      %v1307 = vunpack.c.l.b16 %v554
      %v1308 = vunpack.c.l.b16 %v555
      %v1309 = vunpack.c.l.b16 %v556
      %v1310 = vunpack.c.l.b16 %v557
      %v1311 = vunpack.c.l.b16 %v558
      %v1312 = vunpack.c.l.b16 %v559
      %v1313 = vunpack.c.l.b16 %v560
      %v1314 = vunpack.c.l.b16 %v561
      %v1315 = vunpack.c.l.b16 %v562
      %v1316 = vunpack.c.l.b16 %v563
      %v1317 = vunpack.c.l.b16 %v564
      %v1318 = vunpack.c.l.b16 %v565
      %v1319 = vunpack.c.l.b16 %v566
      %v1320 = vunpack.c.l.b16 %v567
      %v1321 = vunpack.c.l.b16 %v568
      %v1322 = vunpack.c.l.b16 %v569
      %v1323 = vunpack.c.l.b16 %v570
      %v1324 = vunpack.c.l.b16 %v571
      %v1325 = vunpack.c.l.b16 %v572
      %v1326 = vunpack.c.l.b16 %v573
      %v1327 = vunpack.c.l.b16 %v574
      %v1328 = vunpack.c.l.b16 %v575
      %v1329 = vunpack.c.l.b16 %v576
      %v1330 = vunpack.c.l.b16 %v577
      %v1331 = vunpack.c.l.b16 %v578
      %v1332 = vunpack.c.l.b16 %v579
      %v1333 = vunpack.c.l.b16 %v580
      %v1334 = vunpack.c.l.b16 %v581
      %v1335 = vunpack.c.l.b16 %v582
      %v1336 = vunpack.c.l.b16 %v583
      %v1337 = vunpack.c.l.b16 %v584
      %v1338 = vunpack.c.l.b16 %v585
      %v1339 = vunpack.c.l.b16 %v586
      %v1340 = vunpack.c.l.b16 %v587
      %v1341 = vunpack.c.l.b16 %v588
      %v1342 = vunpack.c.l.b16 %v589
      %v1343 = vunpack.c.l.b16 %v590
      %v1344 = vunpack.c.l.b16 %v591
      %v1345 = vunpack.c.l.b16 %v592
      %v1346 = vunpack.c.l.b16 %v593
      %v1347 = vunpack.c.l.b16 %v594
      %v1348 = vunpack.c.l.b16 %v595
      %v1349 = vunpack.c.l.b16 %v596
      %v1350 = vunpack.c.l.b16 %v597
      %v1351 = vunpack.c.l.b16 %v598
      %v1352 = vunpack.c.l.b16 %v599
      %v1353 = vunpack.c.l.b16 %v600
      %v1354 = vunpack.c.l.b16 %v601
      %v1355 = vunpack.c.l.b16 %v602
      %v1356 = vunpack.c.l.b16 %v603
      %v1357 = vunpack.c.l.b16 %v604
      %v1358 = vunpack.c.l.b16 %v605
      %v1359 = vunpack.c.l.b16 %v606
      %v1360 = vunpack.c.l.b16 %v607
      %v1361 = vunpack.c.l.b16 %v608
      %v1362 = vunpack.c.l.b16 %v609
      %v1363 = vunpack.c.l.b16 %v610
      %v1364 = vunpack.c.l.b16 %v611
      %v1365 = vunpack.c.l.b16 %v612
      %v1366 = vunpack.c.l.b16 %v613
      %v1367 = vunpack.c.l.b16 %v614
      %v1368 = vunpack.c.l.b16 %v615
      %v1369 = vunpack.c.l.b16 %v616
      %v1370 = vpack.c.b16 %v1307, %v1306
      %v1371 = vpack.c.b16 %v1309, %v1308
      %v1372 = vpack.c.b16 %v1311, %v1310
      %v1373 = vpack.c.b16 %v1313, %v1312
      %v1374 = vpack.c.b16 %v1315, %v1314
      %v1375 = vpack.c.b16 %v1317, %v1316
      %v1376 = vpack.c.b16 %v1319, %v1318
      %v1377 = vpack.c.b16 %v1321, %v1320
      %v1378 = vpack.c.b16 %v1323, %v1322
      %v1379 = vpack.c.b16 %v1325, %v1324
      %v1380 = vpack.c.b16 %v1327, %v1326
      %v1381 = vpack.c.b16 %v1329, %v1328
      %v1382 = vpack.c.b16 %v1331, %v1330
      %v1383 = vpack.c.b16 %v1333, %v1332
      %v1384 = vpack.c.b16 %v1335, %v1334
      %v1385 = vpack.c.b16 %v1337, %v1336
      %v1386 = vpack.c.b16 %v1339, %v1338
      %v1387 = vpack.c.b16 %v1341, %v1340
      %v1388 = vpack.c.b16 %v1343, %v1342
      %v1389 = vpack.c.b16 %v1345, %v1344
      %v1390 = vpack.c.b16 %v1347, %v1346
      %v1391 = vpack.c.b16 %v1349, %v1348
      %v1392 = vpack.c.b16 %v1351, %v1350
      %v1393 = vpack.c.b16 %v1353, %v1352
      %v1394 = vpack.c.b16 %v1355, %v1354
      %v1395 = vpack.c.b16 %v1357, %v1356
      %v1396 = vpack.c.b16 %v1359, %v1358
      %v1397 = vpack.c.b16 %v1361, %v1360
      %v1398 = vpack.c.b16 %v1363, %v1362
      %v1399 = vpack.c.b16 %v1365, %v1364
      %v1400 = vpack.c.b16 %v1367, %v1366
      %v1401 = vpack.c.b16 %v1369, %v1368
      %v1450 = vunpack.c.l.b16 %v617
      %v1451 = vunpack.c.l.b16 %v618
      %v1452 = vunpack.c.l.b16 %v619
      %v1453 = vunpack.c.l.b16 %v620
      %v1454 = vunpack.c.l.b16 %v621
      %v1455 = vunpack.c.l.b16 %v622
      %v1456 = vunpack.c.l.b16 %v623
      %v1457 = vunpack.c.l.b16 %v624
      %v1458 = vunpack.c.l.b16 %v625
      %v1459 = vunpack.c.l.b16 %v626
      %v1460 = vunpack.c.l.b16 %v627
      %v1461 = vunpack.c.l.b16 %v628
      %v1462 = vunpack.c.l.b16 %v629
      %v1463 = vunpack.c.l.b16 %v630
      %v1464 = vunpack.c.l.b16 %v631
      %v1465 = vunpack.c.l.b16 %v632
      %v1466 = vpack.c.b16 %v1451, %v1450
      %v1467 = vpack.c.b16 %v1453, %v1452
      %v1468 = vpack.c.b16 %v1455, %v1454
      %v1469 = vpack.c.b16 %v1457, %v1456
      %v1470 = vpack.c.b16 %v1459, %v1458
      %v1471 = vpack.c.b16 %v1461, %v1460
      %v1472 = vpack.c.b16 %v1463, %v1462
      %v1473 = vpack.c.b16 %v1465, %v1464
      %1482 = vmatprep.subr.bf16.mxu0 0
      %1483 = vmatpush1.bf16.msra.mxu0 %v1466
      %1484 = vmatprep.subr.bf16.mxu0 0
      %1485 = vmatpush1.bf16.msra.mxu0 %v1467
      %1486 = vmatprep.subr.bf16.mxu0 0
      %1487 = vmatpush1.bf16.msra.mxu0 %v1468
      %1488 = vmatprep.subr.bf16.mxu0 0
      %1489 = vmatpush1.bf16.msra.mxu0 %v1469
      %1490 = vmatprep.subr.bf16.mxu0 0
      %1491 = vmatpush1.bf16.msra.mxu0 %v1470
      %1492 = vmatprep.subr.bf16.mxu0 0
      %1493 = vmatpush1.bf16.msra.mxu0 %v1471
      %1494 = vmatprep.subr.bf16.mxu0 0
      %1495 = vmatpush1.bf16.msra.mxu0 %v1472
      %1496 = vmatprep.subr.bf16.mxu0 0
      %1497 = vmatpush1.bf16.msra.mxu0 %v1473
      %1498 = vmatprep.subr.bf16.mxu0 0
      %1499 = vmatpush1.bf16.msra.mxu0 0
      %1500 = vmatprep.subr.bf16.mxu0 0
      %1501 = vmatpush1.bf16.msra.mxu0 0
      %1502 = vmatprep.subr.bf16.mxu0 0
      %1503 = vmatpush1.bf16.msra.mxu0 0
      %1504 = vmatprep.subr.bf16.mxu0 0
      %1505 = vmatpush1.bf16.msra.mxu0 0
      %1506 = vmatprep.subr.bf16.mxu0 0
      %1507 = vmatpush1.bf16.msra.mxu0 0
      %1508 = vmatprep.subr.bf16.mxu0 0
      %1509 = vmatpush1.bf16.msra.mxu0 0
      %1510 = vmatprep.subr.bf16.mxu0 0
      %1511 = vmatpush1.bf16.msra.mxu0 0
      %1512 = vmatprep.subr.bf16.mxu0 0
      %1513 = vmatpush1.bf16.msra.mxu0 0
      %1514 = vmatprep.mubr.bf16.mxu0 0
      %1515 = vmatmul.mubr.bf16.gmra.mrb[0].mxu0 %v1370
      %v1516 = vpop.f32.mrb[0].mxu0
      %v1517 = vadd.f32 %v988, %v1516
      %v1518 = vpop.f32.mrb[0].mxu0
      %v1519 = vpop.f32.mrb[0].mxu0
      %v1520 = vadd.f32 %v991, %v1519
      %v1521 = vpop.f32.mrb[0].mxu0
      %1522 = vmatprep.mubr.bf16.mxu0 0
      %1523 = vmatmul.mubr.bf16.gmra.mrb[0].mxu0 %v1371
      %v1524 = vpop.f32.mrb[0].mxu0
      %v1525 = vadd.f32 %v996, %v1524
      %v1526 = vpop.f32.mrb[0].mxu0
      %v1527 = vpop.f32.mrb[0].mxu0
      %v1528 = vadd.f32 %v999, %v1527
      %v1529 = vpop.f32.mrb[0].mxu0
      %1530 = vmatprep.mubr.bf16.mxu0 0
      %1531 = vmatmul.mubr.bf16.gmra.mrb[0].mxu0 %v1372
      %v1532 = vpop.f32.mrb[0].mxu0
      %v1533 = vadd.f32 %v1004, %v1532
      %v1534 = vpop.f32.mrb[0].mxu0
      %v1535 = vpop.f32.mrb[0].mxu0
      %v1536 = vadd.f32 %v1007, %v1535
      %v1537 = vpop.f32.mrb[0].mxu0
      %1538 = vmatprep.mubr.bf16.mxu0 0
      %1539 = vmatmul.mubr.bf16.gmra.mrb[0].mxu0 %v1373
      %v1540 = vpop.f32.mrb[0].mxu0
      %v1541 = vadd.f32 %v1012, %v1540
      %v1542 = vpop.f32.mrb[0].mxu0
      %v1543 = vpop.f32.mrb[0].mxu0
      %v1544 = vadd.f32 %v1015, %v1543
      %v1545 = vpop.f32.mrb[0].mxu0
      %1546 = vmatprep.mubr.bf16.mxu0 0
      %1547 = vmatmul.mubr.bf16.gmra.mrb[0].mxu0 %v1374
      %v1548 = vpop.f32.mrb[0].mxu0
      %v1549 = vadd.f32 %v1020, %v1548
      %v1550 = vpop.f32.mrb[0].mxu0
      %v1551 = vpop.f32.mrb[0].mxu0
      %v1552 = vadd.f32 %v1023, %v1551
      %v1553 = vpop.f32.mrb[0].mxu0
      %1554 = vmatprep.mubr.bf16.mxu0 0
      %1555 = vmatmul.mubr.bf16.gmra.mrb[0].mxu0 %v1375
      %v1556 = vpop.f32.mrb[0].mxu0
      %v1557 = vadd.f32 %v1028, %v1556
      %v1558 = vpop.f32.mrb[0].mxu0
      %v1559 = vpop.f32.mrb[0].mxu0
      %v1560 = vadd.f32 %v1031, %v1559
      %v1561 = vpop.f32.mrb[0].mxu0
      %1562 = vmatprep.mubr.bf16.mxu0 0
      %1563 = vmatmul.mubr.bf16.gmra.mrb[0].mxu0 %v1376
      %v1564 = vpop.f32.mrb[0].mxu0
      %v1565 = vadd.f32 %v1036, %v1564
      %v1566 = vpop.f32.mrb[0].mxu0
      %v1567 = vpop.f32.mrb[0].mxu0
      %v1568 = vadd.f32 %v1039, %v1567
      %v1569 = vpop.f32.mrb[0].mxu0
      %1570 = vmatprep.mubr.bf16.mxu0 0
      %1571 = vmatmul.mubr.bf16.gmra.mrb[0].mxu0 %v1377
      %v1572 = vpop.f32.mrb[0].mxu0
      %v1573 = vadd.f32 %v1044, %v1572
      %v1574 = vpop.f32.mrb[0].mxu0
      %v1575 = vpop.f32.mrb[0].mxu0
      %v1576 = vadd.f32 %v1047, %v1575
      %v1577 = vpop.f32.mrb[0].mxu0
      %1578 = vmatprep.mubr.bf16.mxu0 0
      %1579 = vmatmul.mubr.bf16.gmra.mrb[0].mxu0 %v1378
      %v1580 = vpop.f32.mrb[0].mxu0
      %v1581 = vadd.f32 %v1052, %v1580
      %v1582 = vpop.f32.mrb[0].mxu0
      %v1583 = vpop.f32.mrb[0].mxu0
      %v1584 = vadd.f32 %v1055, %v1583
      %v1585 = vpop.f32.mrb[0].mxu0
      %1586 = vmatprep.mubr.bf16.mxu0 0
      %1587 = vmatmul.mubr.bf16.gmra.mrb[0].mxu0 %v1379
      %v1588 = vpop.f32.mrb[0].mxu0
      %v1589 = vadd.f32 %v1060, %v1588
      %v1590 = vpop.f32.mrb[0].mxu0
      %v1591 = vpop.f32.mrb[0].mxu0
      %v1592 = vadd.f32 %v1063, %v1591
      %v1593 = vpop.f32.mrb[0].mxu0
      %1594 = vmatprep.mubr.bf16.mxu0 0
      %1595 = vmatmul.mubr.bf16.gmra.mrb[0].mxu0 %v1380
      %v1596 = vpop.f32.mrb[0].mxu0
      %v1597 = vadd.f32 %v1068, %v1596
      %v1598 = vpop.f32.mrb[0].mxu0
      %v1599 = vpop.f32.mrb[0].mxu0
      %v1600 = vadd.f32 %v1071, %v1599
      %v1601 = vpop.f32.mrb[0].mxu0
      %1602 = vmatprep.mubr.bf16.mxu0 0
      %1603 = vmatmul.mubr.bf16.gmra.mrb[0].mxu0 %v1381
      %v1604 = vpop.f32.mrb[0].mxu0
      %v1605 = vadd.f32 %v1076, %v1604
      %v1606 = vpop.f32.mrb[0].mxu0
      %v1607 = vpop.f32.mrb[0].mxu0
      %v1608 = vadd.f32 %v1079, %v1607
      %v1609 = vpop.f32.mrb[0].mxu0
      %1610 = vmatprep.mubr.bf16.mxu0 0
      %1611 = vmatmul.mubr.bf16.gmra.mrb[0].mxu0 %v1382
      %v1612 = vpop.f32.mrb[0].mxu0
      %v1613 = vadd.f32 %v1084, %v1612
      %v1614 = vpop.f32.mrb[0].mxu0
      %v1615 = vpop.f32.mrb[0].mxu0
      %v1616 = vadd.f32 %v1087, %v1615
      %v1617 = vpop.f32.mrb[0].mxu0
      %1618 = vmatprep.mubr.bf16.mxu0 0
      %1619 = vmatmul.mubr.bf16.gmra.mrb[0].mxu0 %v1383
      %v1620 = vpop.f32.mrb[0].mxu0
      %v1621 = vadd.f32 %v1092, %v1620
      %v1622 = vpop.f32.mrb[0].mxu0
      %v1623 = vpop.f32.mrb[0].mxu0
      %v1624 = vadd.f32 %v1095, %v1623
      %v1625 = vpop.f32.mrb[0].mxu0
      %1626 = vmatprep.mubr.bf16.mxu0 0
      %1627 = vmatmul.mubr.bf16.gmra.mrb[0].mxu0 %v1384
      %v1628 = vpop.f32.mrb[0].mxu0
      %v1629 = vadd.f32 %v1100, %v1628
      %v1630 = vpop.f32.mrb[0].mxu0
      %v1631 = vpop.f32.mrb[0].mxu0
      %v1632 = vadd.f32 %v1103, %v1631
      %v1633 = vpop.f32.mrb[0].mxu0
      %1634 = vmatprep.mubr.bf16.mxu0 0
      %1635 = vmatmul.mubr.bf16.gmra.mrb[0].mxu0 %v1385
      %v1636 = vpop.f32.mrb[0].mxu0
      %v1637 = vadd.f32 %v1108, %v1636
      %v1638 = vpop.f32.mrb[0].mxu0
      %v1639 = vpop.f32.mrb[0].mxu0
      %v1640 = vadd.f32 %v1111, %v1639
      %v1641 = vpop.f32.mrb[0].mxu0
      %1642 = vmatprep.mubr.bf16.mxu0 0
      %1643 = vmatmul.mubr.bf16.gmra.mrb[0].mxu0 %v1386
      %v1644 = vpop.f32.mrb[0].mxu0
      %v1645 = vadd.f32 %v1116, %v1644
      %v1646 = vpop.f32.mrb[0].mxu0
      %v1647 = vpop.f32.mrb[0].mxu0
      %v1648 = vadd.f32 %v1119, %v1647
      %v1649 = vpop.f32.mrb[0].mxu0
      %1650 = vmatprep.mubr.bf16.mxu0 0
      %1651 = vmatmul.mubr.bf16.gmra.mrb[0].mxu0 %v1387
      %v1652 = vpop.f32.mrb[0].mxu0
      %v1653 = vadd.f32 %v1124, %v1652
      %v1654 = vpop.f32.mrb[0].mxu0
      %v1655 = vpop.f32.mrb[0].mxu0
      %v1656 = vadd.f32 %v1127, %v1655
      %v1657 = vpop.f32.mrb[0].mxu0
      %1658 = vmatprep.mubr.bf16.mxu0 0
      %1659 = vmatmul.mubr.bf16.gmra.mrb[0].mxu0 %v1388
      %v1660 = vpop.f32.mrb[0].mxu0
      %v1661 = vadd.f32 %v1132, %v1660
      %v1662 = vpop.f32.mrb[0].mxu0
      %v1663 = vpop.f32.mrb[0].mxu0
      %v1664 = vadd.f32 %v1135, %v1663
      %v1665 = vpop.f32.mrb[0].mxu0
      %1666 = vmatprep.mubr.bf16.mxu0 0
      %1667 = vmatmul.mubr.bf16.gmra.mrb[0].mxu0 %v1389
      %v1668 = vpop.f32.mrb[0].mxu0
      %v1669 = vadd.f32 %v1140, %v1668
      %v1670 = vpop.f32.mrb[0].mxu0
      %v1671 = vpop.f32.mrb[0].mxu0
      %v1672 = vadd.f32 %v1143, %v1671
      %v1673 = vpop.f32.mrb[0].mxu0
      %1674 = vmatprep.mubr.bf16.mxu0 0
      %1675 = vmatmul.mubr.bf16.gmra.mrb[0].mxu0 %v1390
      %v1676 = vpop.f32.mrb[0].mxu0
      %v1677 = vadd.f32 %v1148, %v1676
      %v1678 = vpop.f32.mrb[0].mxu0
      %v1679 = vpop.f32.mrb[0].mxu0
      %v1680 = vadd.f32 %v1151, %v1679
      %v1681 = vpop.f32.mrb[0].mxu0
      %1682 = vmatprep.mubr.bf16.mxu0 0
      %1683 = vmatmul.mubr.bf16.gmra.mrb[0].mxu0 %v1391
      %v1684 = vpop.f32.mrb[0].mxu0
      %v1685 = vadd.f32 %v1156, %v1684
      %v1686 = vpop.f32.mrb[0].mxu0
      %v1687 = vpop.f32.mrb[0].mxu0
      %v1688 = vadd.f32 %v1159, %v1687
      %v1689 = vpop.f32.mrb[0].mxu0
      %1690 = vmatprep.mubr.bf16.mxu0 0
      %1691 = vmatmul.mubr.bf16.gmra.mrb[0].mxu0 %v1392
      %v1692 = vpop.f32.mrb[0].mxu0
      %v1693 = vadd.f32 %v1164, %v1692
      %v1694 = vpop.f32.mrb[0].mxu0
      %v1695 = vpop.f32.mrb[0].mxu0
      %v1696 = vadd.f32 %v1167, %v1695
      %v1697 = vpop.f32.mrb[0].mxu0
      %1698 = vmatprep.mubr.bf16.mxu0 0
      %1699 = vmatmul.mubr.bf16.gmra.mrb[0].mxu0 %v1393
      %v1700 = vpop.f32.mrb[0].mxu0
      %v1701 = vadd.f32 %v1172, %v1700
      %v1702 = vpop.f32.mrb[0].mxu0
      %v1703 = vpop.f32.mrb[0].mxu0
      %v1704 = vadd.f32 %v1175, %v1703
      %v1705 = vpop.f32.mrb[0].mxu0
      %1706 = vmatprep.mubr.bf16.mxu0 0
      %1707 = vmatmul.mubr.bf16.gmra.mrb[0].mxu0 %v1394
      %v1708 = vpop.f32.mrb[0].mxu0
      %v1709 = vadd.f32 %v1180, %v1708
      %v1710 = vpop.f32.mrb[0].mxu0
      %v1711 = vpop.f32.mrb[0].mxu0
      %v1712 = vadd.f32 %v1183, %v1711
      %v1713 = vpop.f32.mrb[0].mxu0
      %1714 = vmatprep.mubr.bf16.mxu0 0
      %1715 = vmatmul.mubr.bf16.gmra.mrb[0].mxu0 %v1395
      %v1716 = vpop.f32.mrb[0].mxu0
      %v1717 = vadd.f32 %v1188, %v1716
      %v1718 = vpop.f32.mrb[0].mxu0
      %v1719 = vpop.f32.mrb[0].mxu0
      %v1720 = vadd.f32 %v1191, %v1719
      %v1721 = vpop.f32.mrb[0].mxu0
      %1722 = vmatprep.mubr.bf16.mxu0 0
      %1723 = vmatmul.mubr.bf16.gmra.mrb[0].mxu0 %v1396
      %v1724 = vpop.f32.mrb[0].mxu0
      %v1725 = vadd.f32 %v1196, %v1724
      %v1726 = vpop.f32.mrb[0].mxu0
      %v1727 = vpop.f32.mrb[0].mxu0
      %v1728 = vadd.f32 %v1199, %v1727
      %v1729 = vpop.f32.mrb[0].mxu0
      %1730 = vmatprep.mubr.bf16.mxu0 0
      %1731 = vmatmul.mubr.bf16.gmra.mrb[0].mxu0 %v1397
      %v1732 = vpop.f32.mrb[0].mxu0
      %v1733 = vadd.f32 %v1204, %v1732
      %v1734 = vpop.f32.mrb[0].mxu0
      %v1735 = vpop.f32.mrb[0].mxu0
      %v1736 = vadd.f32 %v1207, %v1735
      %v1737 = vpop.f32.mrb[0].mxu0
      %1738 = vmatprep.mubr.bf16.mxu0 0
      %1739 = vmatmul.mubr.bf16.gmra.mrb[0].mxu0 %v1398
      %v1740 = vpop.f32.mrb[0].mxu0
      %v1741 = vadd.f32 %v1212, %v1740
      %v1742 = vpop.f32.mrb[0].mxu0
      %v1743 = vpop.f32.mrb[0].mxu0
      %v1744 = vadd.f32 %v1215, %v1743
      %v1745 = vpop.f32.mrb[0].mxu0
      %1746 = vmatprep.mubr.bf16.mxu0 0
      %1747 = vmatmul.mubr.bf16.gmra.mrb[0].mxu0 %v1399
      %v1748 = vpop.f32.mrb[0].mxu0
      %v1749 = vadd.f32 %v1220, %v1748
      %v1750 = vpop.f32.mrb[0].mxu0
      %v1751 = vpop.f32.mrb[0].mxu0
      %v1752 = vadd.f32 %v1223, %v1751
      %v1753 = vpop.f32.mrb[0].mxu0
      %1754 = vmatprep.mubr.bf16.mxu0 0
      %1755 = vmatmul.mubr.bf16.gmra.mrb[0].mxu0 %v1400
      %v1756 = vpop.f32.mrb[0].mxu0
      %v1757 = vadd.f32 %v1228, %v1756
      %v1758 = vpop.f32.mrb[0].mxu0
      %v1759 = vpop.f32.mrb[0].mxu0
      %v1760 = vadd.f32 %v1231, %v1759
      %v1761 = vpop.f32.mrb[0].mxu0
      %1762 = vmatprep.mubr.bf16.mxu0 0
      %1763 = vmatmul.mubr.bf16.gmra.mrb[0].mxu0 %v1401
      %v1764 = vpop.f32.mrb[0].mxu0
      %v1765 = vadd.f32 %v1236, %v1764
      %v1766 = vpop.f32.mrb[0].mxu0
      %v1767 = vpop.f32.mrb[0].mxu0
      %v1768 = vadd.f32 %v1239, %v1767
      %v1769 = vpop.f32.mrb[0].mxu0
      %1770 = vdwg.mxu0
      %v1771 = vld [vmem:[%s5] sm:$0xf]
      %v1772 = vld [vmem:[%s5 + $0x4] sm:$0xf]
      %v1773 = vld [vmem:[%s5 + $0x8] sm:$0xf]
      %v1774 = vld [vmem:[%s5 + $0xc] sm:$0xf]
      %v1775 = vld [vmem:[%s5 + $0x10] sm:$0xf]
      %v1776 = vld [vmem:[%s5 + $0x14] sm:$0xf]
      %v1777 = vld [vmem:[%s5 + $0x18] sm:$0xf]
      %v1778 = vld [vmem:[%s5 + $0x1c] sm:$0xf]
      %v1779 = vld [vmem:[%s5 + $0x20] sm:$0xf]
      %v1780 = vld [vmem:[%s5 + $0x24] sm:$0xf]
      %v1781 = vld [vmem:[%s5 + $0x28] sm:$0xf]
      %v1782 = vld [vmem:[%s5 + $0x2c] sm:$0xf]
      %v1783 = vld [vmem:[%s5 + $0x30] sm:$0xf]
      %v1784 = vld [vmem:[%s5 + $0x34] sm:$0xf]
      %v1785 = vld [vmem:[%s5 + $0x38] sm:$0xf]
      %v1786 = vld [vmem:[%s5 + $0x3c] sm:$0xf]
      %v1851 = vunpack.c.l.b16 %v489
      %v1852 = vunpack.c.l.b16 %v490
      %v1853 = vunpack.c.l.b16 %v491
      %v1854 = vunpack.c.l.b16 %v492
      %v1855 = vunpack.c.l.b16 %v493
      %v1856 = vunpack.c.l.b16 %v494
      %v1857 = vunpack.c.l.b16 %v495
      %v1858 = vunpack.c.l.b16 %v496
      %v1859 = vunpack.c.l.b16 %v497
      %v1860 = vunpack.c.l.b16 %v498
      %v1861 = vunpack.c.l.b16 %v499
      %v1862 = vunpack.c.l.b16 %v500
      %v1863 = vunpack.c.l.b16 %v501
      %v1864 = vunpack.c.l.b16 %v502
      %v1865 = vunpack.c.l.b16 %v503
      %v1866 = vunpack.c.l.b16 %v504
      %v1867 = vunpack.c.l.b16 %v505
      %v1868 = vunpack.c.l.b16 %v506
      %v1869 = vunpack.c.l.b16 %v507
      %v1870 = vunpack.c.l.b16 %v508
      %v1871 = vunpack.c.l.b16 %v509
      %v1872 = vunpack.c.l.b16 %v510
      %v1873 = vunpack.c.l.b16 %v511
      %v1874 = vunpack.c.l.b16 %v512
      %v1875 = vunpack.c.l.b16 %v513
      %v1876 = vunpack.c.l.b16 %v514
      %v1877 = vunpack.c.l.b16 %v515
      %v1878 = vunpack.c.l.b16 %v516
      %v1879 = vunpack.c.l.b16 %v517
      %v1880 = vunpack.c.l.b16 %v518
      %v1881 = vunpack.c.l.b16 %v519
      %v1882 = vunpack.c.l.b16 %v520
      %v1883 = vunpack.c.l.b16 %v521
      %v1884 = vunpack.c.l.b16 %v522
      %v1885 = vunpack.c.l.b16 %v523
      %v1886 = vunpack.c.l.b16 %v524
      %v1887 = vunpack.c.l.b16 %v525
      %v1888 = vunpack.c.l.b16 %v526
      %v1889 = vunpack.c.l.b16 %v527
      %v1890 = vunpack.c.l.b16 %v528
      %v1891 = vunpack.c.l.b16 %v529
      %v1892 = vunpack.c.l.b16 %v530
      %v1893 = vunpack.c.l.b16 %v531
      %v1894 = vunpack.c.l.b16 %v532
      %v1895 = vunpack.c.l.b16 %v533
      %v1896 = vunpack.c.l.b16 %v534
      %v1897 = vunpack.c.l.b16 %v535
      %v1898 = vunpack.c.l.b16 %v536
      %v1899 = vunpack.c.l.b16 %v537
      %v1900 = vunpack.c.l.b16 %v538
      %v1901 = vunpack.c.l.b16 %v539
      %v1902 = vunpack.c.l.b16 %v540
      %v1903 = vunpack.c.l.b16 %v541
      %v1904 = vunpack.c.l.b16 %v542
      %v1905 = vunpack.c.l.b16 %v543
      %v1906 = vunpack.c.l.b16 %v544
      %v1907 = vunpack.c.l.b16 %v545
      %v1908 = vunpack.c.l.b16 %v546
      %v1909 = vunpack.c.l.b16 %v547
      %v1910 = vunpack.c.l.b16 %v548
      %v1911 = vunpack.c.l.b16 %v549
      %v1912 = vunpack.c.l.b16 %v550
      %v1913 = vunpack.c.l.b16 %v551
      %v1914 = vunpack.c.l.b16 %v552
      %v1915 = vpack.c.b16 %v1852, %v1851
      %v1916 = vpack.c.b16 %v1854, %v1853
      %v1917 = vpack.c.b16 %v1856, %v1855
      %v1918 = vpack.c.b16 %v1858, %v1857
      %v1919 = vpack.c.b16 %v1860, %v1859
      %v1920 = vpack.c.b16 %v1862, %v1861
      %v1921 = vpack.c.b16 %v1864, %v1863
      %v1922 = vpack.c.b16 %v1866, %v1865
      %v1923 = vpack.c.b16 %v1868, %v1867
      %v1924 = vpack.c.b16 %v1870, %v1869
      %v1925 = vpack.c.b16 %v1872, %v1871
      %v1926 = vpack.c.b16 %v1874, %v1873
      %v1927 = vpack.c.b16 %v1876, %v1875
      %v1928 = vpack.c.b16 %v1878, %v1877
      %v1929 = vpack.c.b16 %v1880, %v1879
      %v1930 = vpack.c.b16 %v1882, %v1881
      %v1931 = vpack.c.b16 %v1884, %v1883
      %v1932 = vpack.c.b16 %v1886, %v1885
      %v1933 = vpack.c.b16 %v1888, %v1887
      %v1934 = vpack.c.b16 %v1890, %v1889
      %v1935 = vpack.c.b16 %v1892, %v1891
      %v1936 = vpack.c.b16 %v1894, %v1893
      %v1937 = vpack.c.b16 %v1896, %v1895
      %v1938 = vpack.c.b16 %v1898, %v1897
      %v1939 = vpack.c.b16 %v1900, %v1899
      %v1940 = vpack.c.b16 %v1902, %v1901
      %v1941 = vpack.c.b16 %v1904, %v1903
      %v1942 = vpack.c.b16 %v1906, %v1905
      %v1943 = vpack.c.b16 %v1908, %v1907
      %v1944 = vpack.c.b16 %v1910, %v1909
      %v1945 = vpack.c.b16 %v1912, %v1911
      %v1946 = vpack.c.b16 %v1914, %v1913
      %v1995 = vunpack.c.l.b16 %v1771
      %v1996 = vunpack.c.l.b16 %v1772
      %v1997 = vunpack.c.l.b16 %v1773
      %v1998 = vunpack.c.l.b16 %v1774
      %v1999 = vunpack.c.l.b16 %v1775
      %v2000 = vunpack.c.l.b16 %v1776
      %v2001 = vunpack.c.l.b16 %v1777
      %v2002 = vunpack.c.l.b16 %v1778
      %v2003 = vunpack.c.l.b16 %v1779
      %v2004 = vunpack.c.l.b16 %v1780
      %v2005 = vunpack.c.l.b16 %v1781
      %v2006 = vunpack.c.l.b16 %v1782
      %v2007 = vunpack.c.l.b16 %v1783
      %v2008 = vunpack.c.l.b16 %v1784
      %v2009 = vunpack.c.l.b16 %v1785
      %v2010 = vunpack.c.l.b16 %v1786
      %v2011 = vpack.c.b16 %v1996, %v1995
      %v2012 = vpack.c.b16 %v1998, %v1997
      %v2013 = vpack.c.b16 %v2000, %v1999
      %v2014 = vpack.c.b16 %v2002, %v2001
      %v2015 = vpack.c.b16 %v2004, %v2003
      %v2016 = vpack.c.b16 %v2006, %v2005
      %v2017 = vpack.c.b16 %v2008, %v2007
      %v2018 = vpack.c.b16 %v2010, %v2009
      %2027 = vmatprep.subr.bf16.mxu0 0
      %2028 = vmatpush1.bf16.msra.mxu0 %v2011
      %2029 = vmatprep.subr.bf16.mxu0 0
      %2030 = vmatpush1.bf16.msra.mxu0 %v2012
      %2031 = vmatprep.subr.bf16.mxu0 0
      %2032 = vmatpush1.bf16.msra.mxu0 %v2013
      %2033 = vmatprep.subr.bf16.mxu0 0
      %2034 = vmatpush1.bf16.msra.mxu0 %v2014
      %2035 = vmatprep.subr.bf16.mxu0 0
      %2036 = vmatpush1.bf16.msra.mxu0 %v2015
      %2037 = vmatprep.subr.bf16.mxu0 0
      %2038 = vmatpush1.bf16.msra.mxu0 %v2016
      %2039 = vmatprep.subr.bf16.mxu0 0
      %2040 = vmatpush1.bf16.msra.mxu0 %v2017
      %2041 = vmatprep.subr.bf16.mxu0 0
      %2042 = vmatpush1.bf16.msra.mxu0 %v2018
      %2043 = vmatprep.subr.bf16.mxu0 0
      %2044 = vmatpush1.bf16.msra.mxu0 0
      %2045 = vmatprep.subr.bf16.mxu0 0
      %2046 = vmatpush1.bf16.msra.mxu0 0
      %2047 = vmatprep.subr.bf16.mxu0 0
      %2048 = vmatpush1.bf16.msra.mxu0 0
      %2049 = vmatprep.subr.bf16.mxu0 0
      %2050 = vmatpush1.bf16.msra.mxu0 0
      %2051 = vmatprep.subr.bf16.mxu0 0
      %2052 = vmatpush1.bf16.msra.mxu0 0
      %2053 = vmatprep.subr.bf16.mxu0 0
      %2054 = vmatpush1.bf16.msra.mxu0 0
      %2055 = vmatprep.subr.bf16.mxu0 0
      %2056 = vmatpush1.bf16.msra.mxu0 0
      %2057 = vmatprep.subr.bf16.mxu0 0
      %2058 = vmatpush1.bf16.msra.mxu0 0
      %2059 = vmatprep.mubr.bf16.mxu0 0
      %2060 = vmatmul.mubr.bf16.gmra.mrb[0].mxu0 %v1915
      %v2061 = vpop.f32.mrb[0].mxu0
      %v2062 = vadd.f32 0.0, %v2061
      %v2063 = vpop.f32.mrb[0].mxu0
      %v2064 = vpop.f32.mrb[0].mxu0
      %v2065 = vadd.f32 0.0, %v2064
      %v2066 = vpop.f32.mrb[0].mxu0
      %2067 = vmatprep.mubr.bf16.mxu0 0
      %2068 = vmatmul.mubr.bf16.gmra.mrb[0].mxu0 %v1916
      %v2069 = vpop.f32.mrb[0].mxu0
      %v2070 = vadd.f32 0.0, %v2069
      %v2071 = vpop.f32.mrb[0].mxu0
      %v2072 = vpop.f32.mrb[0].mxu0
      %v2073 = vadd.f32 0.0, %v2072
      %v2074 = vpop.f32.mrb[0].mxu0
      %2075 = vmatprep.mubr.bf16.mxu0 0
      %2076 = vmatmul.mubr.bf16.gmra.mrb[0].mxu0 %v1917
      %v2077 = vpop.f32.mrb[0].mxu0
      %v2078 = vadd.f32 0.0, %v2077
      %v2079 = vpop.f32.mrb[0].mxu0
      %v2080 = vpop.f32.mrb[0].mxu0
      %v2081 = vadd.f32 0.0, %v2080
      %v2082 = vpop.f32.mrb[0].mxu0
      %2083 = vmatprep.mubr.bf16.mxu0 0
      %2084 = vmatmul.mubr.bf16.gmra.mrb[0].mxu0 %v1918
      %v2085 = vpop.f32.mrb[0].mxu0
      %v2086 = vadd.f32 0.0, %v2085
      %v2087 = vpop.f32.mrb[0].mxu0
      %v2088 = vpop.f32.mrb[0].mxu0
      %v2089 = vadd.f32 0.0, %v2088
      %v2090 = vpop.f32.mrb[0].mxu0
      %2091 = vmatprep.mubr.bf16.mxu0 0
      %2092 = vmatmul.mubr.bf16.gmra.mrb[0].mxu0 %v1919
      %v2093 = vpop.f32.mrb[0].mxu0
      %v2094 = vadd.f32 0.0, %v2093
      %v2095 = vpop.f32.mrb[0].mxu0
      %v2096 = vpop.f32.mrb[0].mxu0
      %v2097 = vadd.f32 0.0, %v2096
      %v2098 = vpop.f32.mrb[0].mxu0
      %2099 = vmatprep.mubr.bf16.mxu0 0
      %2100 = vmatmul.mubr.bf16.gmra.mrb[0].mxu0 %v1920
      %v2101 = vpop.f32.mrb[0].mxu0
      %v2102 = vadd.f32 0.0, %v2101
      %v2103 = vpop.f32.mrb[0].mxu0
      %v2104 = vpop.f32.mrb[0].mxu0
      %v2105 = vadd.f32 0.0, %v2104
      %v2106 = vpop.f32.mrb[0].mxu0
      %2107 = vmatprep.mubr.bf16.mxu0 0
      %2108 = vmatmul.mubr.bf16.gmra.mrb[0].mxu0 %v1921
      %v2109 = vpop.f32.mrb[0].mxu0
      %v2110 = vadd.f32 0.0, %v2109
      %v2111 = vpop.f32.mrb[0].mxu0
      %v2112 = vpop.f32.mrb[0].mxu0
      %v2113 = vadd.f32 0.0, %v2112
      %v2114 = vpop.f32.mrb[0].mxu0
      %2115 = vmatprep.mubr.bf16.mxu0 0
      %2116 = vmatmul.mubr.bf16.gmra.mrb[0].mxu0 %v1922
      %v2117 = vpop.f32.mrb[0].mxu0
      %v2118 = vadd.f32 0.0, %v2117
      %v2119 = vpop.f32.mrb[0].mxu0
      %v2120 = vpop.f32.mrb[0].mxu0
      %v2121 = vadd.f32 0.0, %v2120
      %v2122 = vpop.f32.mrb[0].mxu0
      %2123 = vmatprep.mubr.bf16.mxu0 0
      %2124 = vmatmul.mubr.bf16.gmra.mrb[0].mxu0 %v1923
      %v2125 = vpop.f32.mrb[0].mxu0
      %v2126 = vadd.f32 0.0, %v2125
      %v2127 = vpop.f32.mrb[0].mxu0
      %v2128 = vpop.f32.mrb[0].mxu0
      %v2129 = vadd.f32 0.0, %v2128
      %v2130 = vpop.f32.mrb[0].mxu0
      %2131 = vmatprep.mubr.bf16.mxu0 0
      %2132 = vmatmul.mubr.bf16.gmra.mrb[0].mxu0 %v1924
      %v2133 = vpop.f32.mrb[0].mxu0
      %v2134 = vadd.f32 0.0, %v2133
      %v2135 = vpop.f32.mrb[0].mxu0
      %v2136 = vpop.f32.mrb[0].mxu0
      %v2137 = vadd.f32 0.0, %v2136
      %v2138 = vpop.f32.mrb[0].mxu0
      %2139 = vmatprep.mubr.bf16.mxu0 0
      %2140 = vmatmul.mubr.bf16.gmra.mrb[0].mxu0 %v1925
      %v2141 = vpop.f32.mrb[0].mxu0
      %v2142 = vadd.f32 0.0, %v2141
      %v2143 = vpop.f32.mrb[0].mxu0
      %v2144 = vpop.f32.mrb[0].mxu0
      %v2145 = vadd.f32 0.0, %v2144
      %v2146 = vpop.f32.mrb[0].mxu0
      %2147 = vmatprep.mubr.bf16.mxu0 0
      %2148 = vmatmul.mubr.bf16.gmra.mrb[0].mxu0 %v1926
      %v2149 = vpop.f32.mrb[0].mxu0
      %v2150 = vadd.f32 0.0, %v2149
      %v2151 = vpop.f32.mrb[0].mxu0
      %v2152 = vpop.f32.mrb[0].mxu0
      %v2153 = vadd.f32 0.0, %v2152
      %v2154 = vpop.f32.mrb[0].mxu0
      %2155 = vmatprep.mubr.bf16.mxu0 0
      %2156 = vmatmul.mubr.bf16.gmra.mrb[0].mxu0 %v1927
      %v2157 = vpop.f32.mrb[0].mxu0
      %v2158 = vadd.f32 0.0, %v2157
      %v2159 = vpop.f32.mrb[0].mxu0
      %v2160 = vpop.f32.mrb[0].mxu0
      %v2161 = vadd.f32 0.0, %v2160
      %v2162 = vpop.f32.mrb[0].mxu0
      %2163 = vmatprep.mubr.bf16.mxu0 0
      %2164 = vmatmul.mubr.bf16.gmra.mrb[0].mxu0 %v1928
      %v2165 = vpop.f32.mrb[0].mxu0
      %v2166 = vadd.f32 0.0, %v2165
      %v2167 = vpop.f32.mrb[0].mxu0
      %v2168 = vpop.f32.mrb[0].mxu0
      %v2169 = vadd.f32 0.0, %v2168
      %v2170 = vpop.f32.mrb[0].mxu0
      %2171 = vmatprep.mubr.bf16.mxu0 0
      %2172 = vmatmul.mubr.bf16.gmra.mrb[0].mxu0 %v1929
      %v2173 = vpop.f32.mrb[0].mxu0
      %v2174 = vadd.f32 0.0, %v2173
      %v2175 = vpop.f32.mrb[0].mxu0
      %v2176 = vpop.f32.mrb[0].mxu0
      %v2177 = vadd.f32 0.0, %v2176
      %v2178 = vpop.f32.mrb[0].mxu0
      %2179 = vmatprep.mubr.bf16.mxu0 0
      %2180 = vmatmul.mubr.bf16.gmra.mrb[0].mxu0 %v1930
      %v2181 = vpop.f32.mrb[0].mxu0
      %v2182 = vadd.f32 0.0, %v2181
      %v2183 = vpop.f32.mrb[0].mxu0
      %v2184 = vpop.f32.mrb[0].mxu0
      %v2185 = vadd.f32 0.0, %v2184
      %v2186 = vpop.f32.mrb[0].mxu0
      %2187 = vmatprep.mubr.bf16.mxu0 0
      %2188 = vmatmul.mubr.bf16.gmra.mrb[0].mxu0 %v1931
      %v2189 = vpop.f32.mrb[0].mxu0
      %v2190 = vadd.f32 0.0, %v2189
      %v2191 = vpop.f32.mrb[0].mxu0
      %v2192 = vpop.f32.mrb[0].mxu0
      %v2193 = vadd.f32 0.0, %v2192
      %v2194 = vpop.f32.mrb[0].mxu0
      %2195 = vmatprep.mubr.bf16.mxu0 0
      %2196 = vmatmul.mubr.bf16.gmra.mrb[0].mxu0 %v1932
      %v2197 = vpop.f32.mrb[0].mxu0
      %v2198 = vadd.f32 0.0, %v2197
      %v2199 = vpop.f32.mrb[0].mxu0
      %v2200 = vpop.f32.mrb[0].mxu0
      %v2201 = vadd.f32 0.0, %v2200
      %v2202 = vpop.f32.mrb[0].mxu0
      %2203 = vmatprep.mubr.bf16.mxu0 0
      %2204 = vmatmul.mubr.bf16.gmra.mrb[0].mxu0 %v1933
      %v2205 = vpop.f32.mrb[0].mxu0
      %v2206 = vadd.f32 0.0, %v2205
      %v2207 = vpop.f32.mrb[0].mxu0
      %v2208 = vpop.f32.mrb[0].mxu0
      %v2209 = vadd.f32 0.0, %v2208
      %v2210 = vpop.f32.mrb[0].mxu0
      %2211 = vmatprep.mubr.bf16.mxu0 0
      %2212 = vmatmul.mubr.bf16.gmra.mrb[0].mxu0 %v1934
      %v2213 = vpop.f32.mrb[0].mxu0
      %v2214 = vadd.f32 0.0, %v2213
      %v2215 = vpop.f32.mrb[0].mxu0
      %v2216 = vpop.f32.mrb[0].mxu0
      %v2217 = vadd.f32 0.0, %v2216
      %v2218 = vpop.f32.mrb[0].mxu0
      %2219 = vmatprep.mubr.bf16.mxu0 0
      %2220 = vmatmul.mubr.bf16.gmra.mrb[0].mxu0 %v1935
      %v2221 = vpop.f32.mrb[0].mxu0
      %v2222 = vadd.f32 0.0, %v2221
      %v2223 = vpop.f32.mrb[0].mxu0
      %v2224 = vpop.f32.mrb[0].mxu0
      %v2225 = vadd.f32 0.0, %v2224
      %v2226 = vpop.f32.mrb[0].mxu0
      %2227 = vmatprep.mubr.bf16.mxu0 0
      %2228 = vmatmul.mubr.bf16.gmra.mrb[0].mxu0 %v1936
      %v2229 = vpop.f32.mrb[0].mxu0
      %v2230 = vadd.f32 0.0, %v2229
      %v2231 = vpop.f32.mrb[0].mxu0
      %v2232 = vpop.f32.mrb[0].mxu0
      %v2233 = vadd.f32 0.0, %v2232
      %v2234 = vpop.f32.mrb[0].mxu0
      %2235 = vmatprep.mubr.bf16.mxu0 0
      %2236 = vmatmul.mubr.bf16.gmra.mrb[0].mxu0 %v1937
      %v2237 = vpop.f32.mrb[0].mxu0
      %v2238 = vadd.f32 0.0, %v2237
      %v2239 = vpop.f32.mrb[0].mxu0
      %v2240 = vpop.f32.mrb[0].mxu0
      %v2241 = vadd.f32 0.0, %v2240
      %v2242 = vpop.f32.mrb[0].mxu0
      %2243 = vmatprep.mubr.bf16.mxu0 0
      %2244 = vmatmul.mubr.bf16.gmra.mrb[0].mxu0 %v1938
      %v2245 = vpop.f32.mrb[0].mxu0
      %v2246 = vadd.f32 0.0, %v2245
      %v2247 = vpop.f32.mrb[0].mxu0
      %v2248 = vpop.f32.mrb[0].mxu0
      %v2249 = vadd.f32 0.0, %v2248
      %v2250 = vpop.f32.mrb[0].mxu0
      %2251 = vmatprep.mubr.bf16.mxu0 0
      %2252 = vmatmul.mubr.bf16.gmra.mrb[0].mxu0 %v1939
      %v2253 = vpop.f32.mrb[0].mxu0
      %v2254 = vadd.f32 0.0, %v2253
      %v2255 = vpop.f32.mrb[0].mxu0
      %v2256 = vpop.f32.mrb[0].mxu0
      %v2257 = vadd.f32 0.0, %v2256
      %v2258 = vpop.f32.mrb[0].mxu0
      %2259 = vmatprep.mubr.bf16.mxu0 0
      %2260 = vmatmul.mubr.bf16.gmra.mrb[0].mxu0 %v1940
      %v2261 = vpop.f32.mrb[0].mxu0
      %v2262 = vadd.f32 0.0, %v2261
      %v2263 = vpop.f32.mrb[0].mxu0
      %v2264 = vpop.f32.mrb[0].mxu0
      %v2265 = vadd.f32 0.0, %v2264
      %v2266 = vpop.f32.mrb[0].mxu0
      %2267 = vmatprep.mubr.bf16.mxu0 0
      %2268 = vmatmul.mubr.bf16.gmra.mrb[0].mxu0 %v1941
      %v2269 = vpop.f32.mrb[0].mxu0
      %v2270 = vadd.f32 0.0, %v2269
      %v2271 = vpop.f32.mrb[0].mxu0
      %v2272 = vpop.f32.mrb[0].mxu0
      %v2273 = vadd.f32 0.0, %v2272
      %v2274 = vpop.f32.mrb[0].mxu0
      %2275 = vmatprep.mubr.bf16.mxu0 0
      %2276 = vmatmul.mubr.bf16.gmra.mrb[0].mxu0 %v1942
      %v2277 = vpop.f32.mrb[0].mxu0
      %v2278 = vadd.f32 0.0, %v2277
      %v2279 = vpop.f32.mrb[0].mxu0
      %v2280 = vpop.f32.mrb[0].mxu0
      %v2281 = vadd.f32 0.0, %v2280
      %v2282 = vpop.f32.mrb[0].mxu0
      %2283 = vmatprep.mubr.bf16.mxu0 0
      %2284 = vmatmul.mubr.bf16.gmra.mrb[0].mxu0 %v1943
      %v2285 = vpop.f32.mrb[0].mxu0
      %v2286 = vadd.f32 0.0, %v2285
      %v2287 = vpop.f32.mrb[0].mxu0
      %v2288 = vpop.f32.mrb[0].mxu0
      %v2289 = vadd.f32 0.0, %v2288
      %v2290 = vpop.f32.mrb[0].mxu0
      %2291 = vmatprep.mubr.bf16.mxu0 0
      %2292 = vmatmul.mubr.bf16.gmra.mrb[0].mxu0 %v1944
      %v2293 = vpop.f32.mrb[0].mxu0
      %v2294 = vadd.f32 0.0, %v2293
      %v2295 = vpop.f32.mrb[0].mxu0
      %v2296 = vpop.f32.mrb[0].mxu0
      %v2297 = vadd.f32 0.0, %v2296
      %v2298 = vpop.f32.mrb[0].mxu0
      %2299 = vmatprep.mubr.bf16.mxu0 0
      %2300 = vmatmul.mubr.bf16.gmra.mrb[0].mxu0 %v1945
      %v2301 = vpop.f32.mrb[0].mxu0
      %v2302 = vadd.f32 0.0, %v2301
      %v2303 = vpop.f32.mrb[0].mxu0
      %v2304 = vpop.f32.mrb[0].mxu0
      %v2305 = vadd.f32 0.0, %v2304
      %v2306 = vpop.f32.mrb[0].mxu0
      %2307 = vmatprep.mubr.bf16.mxu0 0
      %2308 = vmatmul.mubr.bf16.gmra.mrb[0].mxu0 %v1946
      %v2309 = vpop.f32.mrb[0].mxu0
      %v2310 = vadd.f32 0.0, %v2309
      %v2311 = vpop.f32.mrb[0].mxu0
      %v2312 = vpop.f32.mrb[0].mxu0
      %v2313 = vadd.f32 0.0, %v2312
      %v2314 = vpop.f32.mrb[0].mxu0
      %2315 = vdwg.mxu0
      %v2316 = vadd.f32 %v1517, %v2062
      %v2317 = vadd.f32 %v1520, %v2065
      %v2318 = vadd.f32 %v1525, %v2070
      %v2319 = vadd.f32 %v1528, %v2073
      %v2320 = vadd.f32 %v1533, %v2078
      %v2321 = vadd.f32 %v1536, %v2081
      %v2322 = vadd.f32 %v1541, %v2086
      %v2323 = vadd.f32 %v1544, %v2089
      %v2324 = vadd.f32 %v1549, %v2094
      %v2325 = vadd.f32 %v1552, %v2097
      %v2326 = vadd.f32 %v1557, %v2102
      %v2327 = vadd.f32 %v1560, %v2105
      %v2328 = vadd.f32 %v1565, %v2110
      %v2329 = vadd.f32 %v1568, %v2113
      %v2330 = vadd.f32 %v1573, %v2118
      %v2331 = vadd.f32 %v1576, %v2121
      %v2332 = vadd.f32 %v1581, %v2126
      %v2333 = vadd.f32 %v1584, %v2129
      %v2334 = vadd.f32 %v1589, %v2134
      %v2335 = vadd.f32 %v1592, %v2137
      %v2336 = vadd.f32 %v1597, %v2142
      %v2337 = vadd.f32 %v1600, %v2145
      %v2338 = vadd.f32 %v1605, %v2150
      %v2339 = vadd.f32 %v1608, %v2153
      %v2340 = vadd.f32 %v1613, %v2158
      %v2341 = vadd.f32 %v1616, %v2161
      %v2342 = vadd.f32 %v1621, %v2166
      %v2343 = vadd.f32 %v1624, %v2169
      %v2344 = vadd.f32 %v1629, %v2174
      %v2345 = vadd.f32 %v1632, %v2177
      %v2346 = vadd.f32 %v1637, %v2182
      %v2347 = vadd.f32 %v1640, %v2185
      %v2348 = vadd.f32 %v1645, %v2190
      %v2349 = vadd.f32 %v1648, %v2193
      %v2350 = vadd.f32 %v1653, %v2198
      %v2351 = vadd.f32 %v1656, %v2201
      %v2352 = vadd.f32 %v1661, %v2206
      %v2353 = vadd.f32 %v1664, %v2209
      %v2354 = vadd.f32 %v1669, %v2214
      %v2355 = vadd.f32 %v1672, %v2217
      %v2356 = vadd.f32 %v1677, %v2222
      %v2357 = vadd.f32 %v1680, %v2225
      %v2358 = vadd.f32 %v1685, %v2230
      %v2359 = vadd.f32 %v1688, %v2233
      %v2360 = vadd.f32 %v1693, %v2238
      %v2361 = vadd.f32 %v1696, %v2241
      %v2362 = vadd.f32 %v1701, %v2246
      %v2363 = vadd.f32 %v1704, %v2249
      %v2364 = vadd.f32 %v1709, %v2254
      %v2365 = vadd.f32 %v1712, %v2257
      %v2366 = vadd.f32 %v1717, %v2262
      %v2367 = vadd.f32 %v1720, %v2265
      %v2368 = vadd.f32 %v1725, %v2270
      %v2369 = vadd.f32 %v1728, %v2273
      %v2370 = vadd.f32 %v1733, %v2278
      %v2371 = vadd.f32 %v1736, %v2281
      %v2372 = vadd.f32 %v1741, %v2286
      %v2373 = vadd.f32 %v1744, %v2289
      %v2374 = vadd.f32 %v1749, %v2294
      %v2375 = vadd.f32 %v1752, %v2297
      %v2376 = vadd.f32 %v1757, %v2302
      %v2377 = vadd.f32 %v1760, %v2305
      %v2378 = vadd.f32 %v1765, %v2310
      %v2379 = vadd.f32 %v1768, %v2313
      %v2380 = vld [vmem:[%s6] sm:$0x1]
      %v2382 = vlaneseq
      %v2383 = vshrl.u32 %v2382, 7
      %v2384 = vsub.s32 0, %v2383
      %v2385 = vrot.slane %v2380, %v2384
      %v2387 = vadd.f32 %v2316, %v2385
      %v2388 = vadd.f32 %v2317, %v2385
      %v2389 = vadd.f32 %v2318, %v2385
      %v2390 = vadd.f32 %v2319, %v2385
      %v2391 = vadd.f32 %v2320, %v2385
      %v2392 = vadd.f32 %v2321, %v2385
      %v2393 = vadd.f32 %v2322, %v2385
      %v2394 = vadd.f32 %v2323, %v2385
      %v2395 = vadd.f32 %v2324, %v2385
      %v2396 = vadd.f32 %v2325, %v2385
      %v2397 = vadd.f32 %v2326, %v2385
      %v2398 = vadd.f32 %v2327, %v2385
      %v2399 = vadd.f32 %v2328, %v2385
      %v2400 = vadd.f32 %v2329, %v2385
      %v2401 = vadd.f32 %v2330, %v2385
      %v2402 = vadd.f32 %v2331, %v2385
      %v2403 = vadd.f32 %v2332, %v2385
      %v2404 = vadd.f32 %v2333, %v2385
      %v2405 = vadd.f32 %v2334, %v2385
      %v2406 = vadd.f32 %v2335, %v2385
      %v2407 = vadd.f32 %v2336, %v2385
      %v2408 = vadd.f32 %v2337, %v2385
      %v2409 = vadd.f32 %v2338, %v2385
      %v2410 = vadd.f32 %v2339, %v2385
      %v2411 = vadd.f32 %v2340, %v2385
      %v2412 = vadd.f32 %v2341, %v2385
      %v2413 = vadd.f32 %v2342, %v2385
      %v2414 = vadd.f32 %v2343, %v2385
      %v2415 = vadd.f32 %v2344, %v2385
      %v2416 = vadd.f32 %v2345, %v2385
      %v2417 = vadd.f32 %v2346, %v2385
      %v2418 = vadd.f32 %v2347, %v2385
      %v2419 = vadd.f32 %v2348, %v2385
      %v2420 = vadd.f32 %v2349, %v2385
      %v2421 = vadd.f32 %v2350, %v2385
      %v2422 = vadd.f32 %v2351, %v2385
      %v2423 = vadd.f32 %v2352, %v2385
      %v2424 = vadd.f32 %v2353, %v2385
      %v2425 = vadd.f32 %v2354, %v2385
      %v2426 = vadd.f32 %v2355, %v2385
      %v2427 = vadd.f32 %v2356, %v2385
      %v2428 = vadd.f32 %v2357, %v2385
      %v2429 = vadd.f32 %v2358, %v2385
      %v2430 = vadd.f32 %v2359, %v2385
      %v2431 = vadd.f32 %v2360, %v2385
      %v2432 = vadd.f32 %v2361, %v2385
      %v2433 = vadd.f32 %v2362, %v2385
      %v2434 = vadd.f32 %v2363, %v2385
      %v2435 = vadd.f32 %v2364, %v2385
      %v2436 = vadd.f32 %v2365, %v2385
      %v2437 = vadd.f32 %v2366, %v2385
      %v2438 = vadd.f32 %v2367, %v2385
      %v2439 = vadd.f32 %v2368, %v2385
      %v2440 = vadd.f32 %v2369, %v2385
      %v2441 = vadd.f32 %v2370, %v2385
      %v2442 = vadd.f32 %v2371, %v2385
      %v2443 = vadd.f32 %v2372, %v2385
      %v2444 = vadd.f32 %v2373, %v2385
      %v2445 = vadd.f32 %v2374, %v2385
      %v2446 = vadd.f32 %v2375, %v2385
      %v2447 = vadd.f32 %v2376, %v2385
      %v2448 = vadd.f32 %v2377, %v2385
      %v2449 = vadd.f32 %v2378, %v2385
      %v2450 = vadd.f32 %v2379, %v2385
      %v2451 = vmax.f32 %v2387, 0.0
      %v2452 = vmax.f32 %v2388, 0.0
      %v2453 = vmax.f32 %v2389, 0.0
      %v2454 = vmax.f32 %v2390, 0.0
      %v2455 = vmax.f32 %v2391, 0.0
      %v2456 = vmax.f32 %v2392, 0.0
      %v2457 = vmax.f32 %v2393, 0.0
      %v2458 = vmax.f32 %v2394, 0.0
      %v2459 = vmax.f32 %v2395, 0.0
      %v2460 = vmax.f32 %v2396, 0.0
      %v2461 = vmax.f32 %v2397, 0.0
      %v2462 = vmax.f32 %v2398, 0.0
      %v2463 = vmax.f32 %v2399, 0.0
      %v2464 = vmax.f32 %v2400, 0.0
      %v2465 = vmax.f32 %v2401, 0.0
      %v2466 = vmax.f32 %v2402, 0.0
      %v2467 = vmax.f32 %v2403, 0.0
      %v2468 = vmax.f32 %v2404, 0.0
      %v2469 = vmax.f32 %v2405, 0.0
      %v2470 = vmax.f32 %v2406, 0.0
      %v2471 = vmax.f32 %v2407, 0.0
      %v2472 = vmax.f32 %v2408, 0.0
      %v2473 = vmax.f32 %v2409, 0.0
      %v2474 = vmax.f32 %v2410, 0.0
      %v2475 = vmax.f32 %v2411, 0.0
      %v2476 = vmax.f32 %v2412, 0.0
      %v2477 = vmax.f32 %v2413, 0.0
      %v2478 = vmax.f32 %v2414, 0.0
      %v2479 = vmax.f32 %v2415, 0.0
      %v2480 = vmax.f32 %v2416, 0.0
      %v2481 = vmax.f32 %v2417, 0.0
      %v2482 = vmax.f32 %v2418, 0.0
      %v2483 = vmax.f32 %v2419, 0.0
      %v2484 = vmax.f32 %v2420, 0.0
      %v2485 = vmax.f32 %v2421, 0.0
      %v2486 = vmax.f32 %v2422, 0.0
      %v2487 = vmax.f32 %v2423, 0.0
      %v2488 = vmax.f32 %v2424, 0.0
      %v2489 = vmax.f32 %v2425, 0.0
      %v2490 = vmax.f32 %v2426, 0.0
      %v2491 = vmax.f32 %v2427, 0.0
      %v2492 = vmax.f32 %v2428, 0.0
      %v2493 = vmax.f32 %v2429, 0.0
      %v2494 = vmax.f32 %v2430, 0.0
      %v2495 = vmax.f32 %v2431, 0.0
      %v2496 = vmax.f32 %v2432, 0.0
      %v2497 = vmax.f32 %v2433, 0.0
      %v2498 = vmax.f32 %v2434, 0.0
      %v2499 = vmax.f32 %v2435, 0.0
      %v2500 = vmax.f32 %v2436, 0.0
      %v2501 = vmax.f32 %v2437, 0.0
      %v2502 = vmax.f32 %v2438, 0.0
      %v2503 = vmax.f32 %v2439, 0.0
      %v2504 = vmax.f32 %v2440, 0.0
      %v2505 = vmax.f32 %v2441, 0.0
      %v2506 = vmax.f32 %v2442, 0.0
      %v2507 = vmax.f32 %v2443, 0.0
      %v2508 = vmax.f32 %v2444, 0.0
      %v2509 = vmax.f32 %v2445, 0.0
      %v2510 = vmax.f32 %v2446, 0.0
      %v2511 = vmax.f32 %v2447, 0.0
      %v2512 = vmax.f32 %v2448, 0.0
      %v2513 = vmax.f32 %v2449, 0.0
      %v2514 = vmax.f32 %v2450, 0.0
      %v2515 = vld [vmem:[%s7] sm:$0xf]
      %v2516 = vld [vmem:[%s7 + $0x4] sm:$0xf]
      %v2517 = vld [vmem:[%s7 + $0x8] sm:$0xf]
      %v2518 = vld [vmem:[%s7 + $0xc] sm:$0xf]
      %v2519 = vld [vmem:[%s7 + $0x10] sm:$0xf]
      %v2520 = vld [vmem:[%s7 + $0x14] sm:$0xf]
      %v2521 = vld [vmem:[%s7 + $0x18] sm:$0xf]
      %v2522 = vld [vmem:[%s7 + $0x1c] sm:$0xf]
      %v2523 = vld [vmem:[%s7 + $0x20] sm:$0xf]
      %v2524 = vld [vmem:[%s7 + $0x24] sm:$0xf]
      %v2525 = vld [vmem:[%s7 + $0x28] sm:$0xf]
      %v2526 = vld [vmem:[%s7 + $0x2c] sm:$0xf]
      %v2527 = vld [vmem:[%s7 + $0x30] sm:$0xf]
      %v2528 = vld [vmem:[%s7 + $0x34] sm:$0xf]
      %v2529 = vld [vmem:[%s7 + $0x38] sm:$0xf]
      %v2530 = vld [vmem:[%s7 + $0x3c] sm:$0xf]
      %v2531 = vpack.c.bf16 %v2452, %v2451
      %v2532 = vpack.c.bf16 %v2454, %v2453
      %v2533 = vpack.c.bf16 %v2456, %v2455
      %v2534 = vpack.c.bf16 %v2458, %v2457
      %v2535 = vpack.c.bf16 %v2460, %v2459
      %v2536 = vpack.c.bf16 %v2462, %v2461
      %v2537 = vpack.c.bf16 %v2464, %v2463
      %v2538 = vpack.c.bf16 %v2466, %v2465
      %v2539 = vpack.c.bf16 %v2468, %v2467
      %v2540 = vpack.c.bf16 %v2470, %v2469
      %v2541 = vpack.c.bf16 %v2472, %v2471
      %v2542 = vpack.c.bf16 %v2474, %v2473
      %v2543 = vpack.c.bf16 %v2476, %v2475
      %v2544 = vpack.c.bf16 %v2478, %v2477
      %v2545 = vpack.c.bf16 %v2480, %v2479
      %v2546 = vpack.c.bf16 %v2482, %v2481
      %v2547 = vpack.c.bf16 %v2484, %v2483
      %v2548 = vpack.c.bf16 %v2486, %v2485
      %v2549 = vpack.c.bf16 %v2488, %v2487
      %v2550 = vpack.c.bf16 %v2490, %v2489
      %v2551 = vpack.c.bf16 %v2492, %v2491
      %v2552 = vpack.c.bf16 %v2494, %v2493
      %v2553 = vpack.c.bf16 %v2496, %v2495
      %v2554 = vpack.c.bf16 %v2498, %v2497
      %v2555 = vpack.c.bf16 %v2500, %v2499
      %v2556 = vpack.c.bf16 %v2502, %v2501
      %v2557 = vpack.c.bf16 %v2504, %v2503
      %v2558 = vpack.c.bf16 %v2506, %v2505
      %v2559 = vpack.c.bf16 %v2508, %v2507
      %v2560 = vpack.c.bf16 %v2510, %v2509
      %v2561 = vpack.c.bf16 %v2512, %v2511
      %v2562 = vpack.c.bf16 %v2514, %v2513
      %v2563 = vld [vmem:[%s8] sm:$0x1]
      %v2565 = vlaneseq
      %v2566 = vshrl.u32 %v2565, 7
      %v2567 = vsub.s32 0, %v2566
      %v2568 = vrot.slane %v2563, %v2567
      %v2586 = vunpack.c.l.b16 %v2515
      %v2587 = vunpack.c.l.b16 %v2516
      %v2588 = vunpack.c.l.b16 %v2517
      %v2589 = vunpack.c.l.b16 %v2518
      %v2590 = vunpack.c.l.b16 %v2519
      %v2591 = vunpack.c.l.b16 %v2520
      %v2592 = vunpack.c.l.b16 %v2521
      %v2593 = vunpack.c.l.b16 %v2522
      %v2594 = vunpack.c.l.b16 %v2523
      %v2595 = vunpack.c.l.b16 %v2524
      %v2596 = vunpack.c.l.b16 %v2525
      %v2597 = vunpack.c.l.b16 %v2526
      %v2598 = vunpack.c.l.b16 %v2527
      %v2599 = vunpack.c.l.b16 %v2528
      %v2600 = vunpack.c.l.b16 %v2529
      %v2601 = vunpack.c.l.b16 %v2530
      %v2602 = vpack.c.b16 %v2587, %v2586
      %v2603 = vpack.c.b16 %v2589, %v2588
      %v2604 = vpack.c.b16 %v2591, %v2590
      %v2605 = vpack.c.b16 %v2593, %v2592
      %v2606 = vpack.c.b16 %v2595, %v2594
      %v2607 = vpack.c.b16 %v2597, %v2596
      %v2608 = vpack.c.b16 %v2599, %v2598
      %v2609 = vpack.c.b16 %v2601, %v2600
      %2618 = vmatprep.subr.bf16.mxu0 0
      %2619 = vmatpush1.bf16.msra.mxu0 %v2602
      %2620 = vmatprep.subr.bf16.mxu0 0
      %2621 = vmatpush1.bf16.msra.mxu0 %v2603
      %2622 = vmatprep.subr.bf16.mxu0 0
      %2623 = vmatpush1.bf16.msra.mxu0 %v2604
      %2624 = vmatprep.subr.bf16.mxu0 0
      %2625 = vmatpush1.bf16.msra.mxu0 %v2605
      %2626 = vmatprep.subr.bf16.mxu0 0
      %2627 = vmatpush1.bf16.msra.mxu0 %v2606
      %2628 = vmatprep.subr.bf16.mxu0 0
      %2629 = vmatpush1.bf16.msra.mxu0 %v2607
      %2630 = vmatprep.subr.bf16.mxu0 0
      %2631 = vmatpush1.bf16.msra.mxu0 %v2608
      %2632 = vmatprep.subr.bf16.mxu0 0
      %2633 = vmatpush1.bf16.msra.mxu0 %v2609
      %2634 = vmatprep.subr.bf16.mxu0 0
      %2635 = vmatpush1.bf16.msra.mxu0 0
      %2636 = vmatprep.subr.bf16.mxu0 0
      %2637 = vmatpush1.bf16.msra.mxu0 0
      %2638 = vmatprep.subr.bf16.mxu0 0
      %2639 = vmatpush1.bf16.msra.mxu0 0
      %2640 = vmatprep.subr.bf16.mxu0 0
      %2641 = vmatpush1.bf16.msra.mxu0 0
      %2642 = vmatprep.subr.bf16.mxu0 0
      %2643 = vmatpush1.bf16.msra.mxu0 0
      %2644 = vmatprep.subr.bf16.mxu0 0
      %2645 = vmatpush1.bf16.msra.mxu0 0
      %2646 = vmatprep.subr.bf16.mxu0 0
      %2647 = vmatpush1.bf16.msra.mxu0 0
      %2648 = vmatprep.subr.bf16.mxu0 0
      %2649 = vmatpush1.bf16.msra.mxu0 0
      %2650 = vmatprep.mubr.bf16.mxu0 0
      %2651 = vmatmul.mubr.bf16.gmra.mrb[0].mxu0 %v2531
      %v2652 = vpop.f32.mrb[0].mxu0
      %v2653 = vadd.f32 %v2568, %v2652
      %v2654 = vpop.f32.mrb[0].mxu0
      %v2655 = vpop.f32.mrb[0].mxu0
      %v2656 = vadd.f32 %v2568, %v2655
      %v2657 = vpop.f32.mrb[0].mxu0
      %2658 = vmatprep.mubr.bf16.mxu0 0
      %2659 = vmatmul.mubr.bf16.gmra.mrb[0].mxu0 %v2532
      %v2660 = vpop.f32.mrb[0].mxu0
      %v2661 = vadd.f32 %v2568, %v2660
      %v2662 = vpop.f32.mrb[0].mxu0
      %v2663 = vpop.f32.mrb[0].mxu0
      %v2664 = vadd.f32 %v2568, %v2663
      %v2665 = vpop.f32.mrb[0].mxu0
      %2666 = vmatprep.mubr.bf16.mxu0 0
      %2667 = vmatmul.mubr.bf16.gmra.mrb[0].mxu0 %v2533
      %v2668 = vpop.f32.mrb[0].mxu0
      %v2669 = vadd.f32 %v2568, %v2668
      %v2670 = vpop.f32.mrb[0].mxu0
      %v2671 = vpop.f32.mrb[0].mxu0
      %v2672 = vadd.f32 %v2568, %v2671
      %v2673 = vpop.f32.mrb[0].mxu0
      %2674 = vmatprep.mubr.bf16.mxu0 0
      %2675 = vmatmul.mubr.bf16.gmra.mrb[0].mxu0 %v2534
      %v2676 = vpop.f32.mrb[0].mxu0
      %v2677 = vadd.f32 %v2568, %v2676
      %v2678 = vpop.f32.mrb[0].mxu0
      %v2679 = vpop.f32.mrb[0].mxu0
      %v2680 = vadd.f32 %v2568, %v2679
      %v2681 = vpop.f32.mrb[0].mxu0
      %2682 = vmatprep.mubr.bf16.mxu0 0
      %2683 = vmatmul.mubr.bf16.gmra.mrb[0].mxu0 %v2535
      %v2684 = vpop.f32.mrb[0].mxu0
      %v2685 = vadd.f32 %v2568, %v2684
      %v2686 = vpop.f32.mrb[0].mxu0
      %v2687 = vpop.f32.mrb[0].mxu0
      %v2688 = vadd.f32 %v2568, %v2687
      %v2689 = vpop.f32.mrb[0].mxu0
      %2690 = vmatprep.mubr.bf16.mxu0 0
      %2691 = vmatmul.mubr.bf16.gmra.mrb[0].mxu0 %v2536
      %v2692 = vpop.f32.mrb[0].mxu0
      %v2693 = vadd.f32 %v2568, %v2692
      %v2694 = vpop.f32.mrb[0].mxu0
      %v2695 = vpop.f32.mrb[0].mxu0
      %v2696 = vadd.f32 %v2568, %v2695
      %v2697 = vpop.f32.mrb[0].mxu0
      %2698 = vmatprep.mubr.bf16.mxu0 0
      %2699 = vmatmul.mubr.bf16.gmra.mrb[0].mxu0 %v2537
      %v2700 = vpop.f32.mrb[0].mxu0
      %v2701 = vadd.f32 %v2568, %v2700
      %v2702 = vpop.f32.mrb[0].mxu0
      %v2703 = vpop.f32.mrb[0].mxu0
      %v2704 = vadd.f32 %v2568, %v2703
      %v2705 = vpop.f32.mrb[0].mxu0
      %2706 = vmatprep.mubr.bf16.mxu0 0
      %2707 = vmatmul.mubr.bf16.gmra.mrb[0].mxu0 %v2538
      %v2708 = vpop.f32.mrb[0].mxu0
      %v2709 = vadd.f32 %v2568, %v2708
      %v2710 = vpop.f32.mrb[0].mxu0
      %v2711 = vpop.f32.mrb[0].mxu0
      %v2712 = vadd.f32 %v2568, %v2711
      %v2713 = vpop.f32.mrb[0].mxu0
      %2714 = vmatprep.mubr.bf16.mxu0 0
      %2715 = vmatmul.mubr.bf16.gmra.mrb[0].mxu0 %v2539
      %v2716 = vpop.f32.mrb[0].mxu0
      %v2717 = vadd.f32 %v2568, %v2716
      %v2718 = vpop.f32.mrb[0].mxu0
      %v2719 = vpop.f32.mrb[0].mxu0
      %v2720 = vadd.f32 %v2568, %v2719
      %v2721 = vpop.f32.mrb[0].mxu0
      %2722 = vmatprep.mubr.bf16.mxu0 0
      %2723 = vmatmul.mubr.bf16.gmra.mrb[0].mxu0 %v2540
      %v2724 = vpop.f32.mrb[0].mxu0
      %v2725 = vadd.f32 %v2568, %v2724
      %v2726 = vpop.f32.mrb[0].mxu0
      %v2727 = vpop.f32.mrb[0].mxu0
      %v2728 = vadd.f32 %v2568, %v2727
      %v2729 = vpop.f32.mrb[0].mxu0
      %2730 = vmatprep.mubr.bf16.mxu0 0
      %2731 = vmatmul.mubr.bf16.gmra.mrb[0].mxu0 %v2541
      %v2732 = vpop.f32.mrb[0].mxu0
      %v2733 = vadd.f32 %v2568, %v2732
      %v2734 = vpop.f32.mrb[0].mxu0
      %v2735 = vpop.f32.mrb[0].mxu0
      %v2736 = vadd.f32 %v2568, %v2735
      %v2737 = vpop.f32.mrb[0].mxu0
      %2738 = vmatprep.mubr.bf16.mxu0 0
      %2739 = vmatmul.mubr.bf16.gmra.mrb[0].mxu0 %v2542
      %v2740 = vpop.f32.mrb[0].mxu0
      %v2741 = vadd.f32 %v2568, %v2740
      %v2742 = vpop.f32.mrb[0].mxu0
      %v2743 = vpop.f32.mrb[0].mxu0
      %v2744 = vadd.f32 %v2568, %v2743
      %v2745 = vpop.f32.mrb[0].mxu0
      %2746 = vmatprep.mubr.bf16.mxu0 0
      %2747 = vmatmul.mubr.bf16.gmra.mrb[0].mxu0 %v2543
      %v2748 = vpop.f32.mrb[0].mxu0
      %v2749 = vadd.f32 %v2568, %v2748
      %v2750 = vpop.f32.mrb[0].mxu0
      %v2751 = vpop.f32.mrb[0].mxu0
      %v2752 = vadd.f32 %v2568, %v2751
      %v2753 = vpop.f32.mrb[0].mxu0
      %2754 = vmatprep.mubr.bf16.mxu0 0
      %2755 = vmatmul.mubr.bf16.gmra.mrb[0].mxu0 %v2544
      %v2756 = vpop.f32.mrb[0].mxu0
      %v2757 = vadd.f32 %v2568, %v2756
      %v2758 = vpop.f32.mrb[0].mxu0
      %v2759 = vpop.f32.mrb[0].mxu0
      %v2760 = vadd.f32 %v2568, %v2759
      %v2761 = vpop.f32.mrb[0].mxu0
      %2762 = vmatprep.mubr.bf16.mxu0 0
      %2763 = vmatmul.mubr.bf16.gmra.mrb[0].mxu0 %v2545
      %v2764 = vpop.f32.mrb[0].mxu0
      %v2765 = vadd.f32 %v2568, %v2764
      %v2766 = vpop.f32.mrb[0].mxu0
      %v2767 = vpop.f32.mrb[0].mxu0
      %v2768 = vadd.f32 %v2568, %v2767
      %v2769 = vpop.f32.mrb[0].mxu0
      %2770 = vmatprep.mubr.bf16.mxu0 0
      %2771 = vmatmul.mubr.bf16.gmra.mrb[0].mxu0 %v2546
      %v2772 = vpop.f32.mrb[0].mxu0
      %v2773 = vadd.f32 %v2568, %v2772
      %v2774 = vpop.f32.mrb[0].mxu0
      %v2775 = vpop.f32.mrb[0].mxu0
      %v2776 = vadd.f32 %v2568, %v2775
      %v2777 = vpop.f32.mrb[0].mxu0
      %2778 = vmatprep.mubr.bf16.mxu0 0
      %2779 = vmatmul.mubr.bf16.gmra.mrb[0].mxu0 %v2547
      %v2780 = vpop.f32.mrb[0].mxu0
      %v2781 = vadd.f32 %v2568, %v2780
      %v2782 = vpop.f32.mrb[0].mxu0
      %v2783 = vpop.f32.mrb[0].mxu0
      %v2784 = vadd.f32 %v2568, %v2783
      %v2785 = vpop.f32.mrb[0].mxu0
      %2786 = vmatprep.mubr.bf16.mxu0 0
      %2787 = vmatmul.mubr.bf16.gmra.mrb[0].mxu0 %v2548
      %v2788 = vpop.f32.mrb[0].mxu0
      %v2789 = vadd.f32 %v2568, %v2788
      %v2790 = vpop.f32.mrb[0].mxu0
      %v2791 = vpop.f32.mrb[0].mxu0
      %v2792 = vadd.f32 %v2568, %v2791
      %v2793 = vpop.f32.mrb[0].mxu0
      %2794 = vmatprep.mubr.bf16.mxu0 0
      %2795 = vmatmul.mubr.bf16.gmra.mrb[0].mxu0 %v2549
      %v2796 = vpop.f32.mrb[0].mxu0
      %v2797 = vadd.f32 %v2568, %v2796
      %v2798 = vpop.f32.mrb[0].mxu0
      %v2799 = vpop.f32.mrb[0].mxu0
      %v2800 = vadd.f32 %v2568, %v2799
      %v2801 = vpop.f32.mrb[0].mxu0
      %2802 = vmatprep.mubr.bf16.mxu0 0
      %2803 = vmatmul.mubr.bf16.gmra.mrb[0].mxu0 %v2550
      %v2804 = vpop.f32.mrb[0].mxu0
      %v2805 = vadd.f32 %v2568, %v2804
      %v2806 = vpop.f32.mrb[0].mxu0
      %v2807 = vpop.f32.mrb[0].mxu0
      %v2808 = vadd.f32 %v2568, %v2807
      %v2809 = vpop.f32.mrb[0].mxu0
      %2810 = vmatprep.mubr.bf16.mxu0 0
      %2811 = vmatmul.mubr.bf16.gmra.mrb[0].mxu0 %v2551
      %v2812 = vpop.f32.mrb[0].mxu0
      %v2813 = vadd.f32 %v2568, %v2812
      %v2814 = vpop.f32.mrb[0].mxu0
      %v2815 = vpop.f32.mrb[0].mxu0
      %v2816 = vadd.f32 %v2568, %v2815
      %v2817 = vpop.f32.mrb[0].mxu0
      %2818 = vmatprep.mubr.bf16.mxu0 0
      %2819 = vmatmul.mubr.bf16.gmra.mrb[0].mxu0 %v2552
      %v2820 = vpop.f32.mrb[0].mxu0
      %v2821 = vadd.f32 %v2568, %v2820
      %v2822 = vpop.f32.mrb[0].mxu0
      %v2823 = vpop.f32.mrb[0].mxu0
      %v2824 = vadd.f32 %v2568, %v2823
      %v2825 = vpop.f32.mrb[0].mxu0
      %2826 = vmatprep.mubr.bf16.mxu0 0
      %2827 = vmatmul.mubr.bf16.gmra.mrb[0].mxu0 %v2553
      %v2828 = vpop.f32.mrb[0].mxu0
      %v2829 = vadd.f32 %v2568, %v2828
      %v2830 = vpop.f32.mrb[0].mxu0
      %v2831 = vpop.f32.mrb[0].mxu0
      %v2832 = vadd.f32 %v2568, %v2831
      %v2833 = vpop.f32.mrb[0].mxu0
      %2834 = vmatprep.mubr.bf16.mxu0 0
      %2835 = vmatmul.mubr.bf16.gmra.mrb[0].mxu0 %v2554
      %v2836 = vpop.f32.mrb[0].mxu0
      %v2837 = vadd.f32 %v2568, %v2836
      %v2838 = vpop.f32.mrb[0].mxu0
      %v2839 = vpop.f32.mrb[0].mxu0
      %v2840 = vadd.f32 %v2568, %v2839
      %v2841 = vpop.f32.mrb[0].mxu0
      %2842 = vmatprep.mubr.bf16.mxu0 0
      %2843 = vmatmul.mubr.bf16.gmra.mrb[0].mxu0 %v2555
      %v2844 = vpop.f32.mrb[0].mxu0
      %v2845 = vadd.f32 %v2568, %v2844
      %v2846 = vpop.f32.mrb[0].mxu0
      %v2847 = vpop.f32.mrb[0].mxu0
      %v2848 = vadd.f32 %v2568, %v2847
      %v2849 = vpop.f32.mrb[0].mxu0
      %2850 = vmatprep.mubr.bf16.mxu0 0
      %2851 = vmatmul.mubr.bf16.gmra.mrb[0].mxu0 %v2556
      %v2852 = vpop.f32.mrb[0].mxu0
      %v2853 = vadd.f32 %v2568, %v2852
      %v2854 = vpop.f32.mrb[0].mxu0
      %v2855 = vpop.f32.mrb[0].mxu0
      %v2856 = vadd.f32 %v2568, %v2855
      %v2857 = vpop.f32.mrb[0].mxu0
      %2858 = vmatprep.mubr.bf16.mxu0 0
      %2859 = vmatmul.mubr.bf16.gmra.mrb[0].mxu0 %v2557
      %v2860 = vpop.f32.mrb[0].mxu0
      %v2861 = vadd.f32 %v2568, %v2860
      %v2862 = vpop.f32.mrb[0].mxu0
      %v2863 = vpop.f32.mrb[0].mxu0
      %v2864 = vadd.f32 %v2568, %v2863
      %v2865 = vpop.f32.mrb[0].mxu0
      %2866 = vmatprep.mubr.bf16.mxu0 0
      %2867 = vmatmul.mubr.bf16.gmra.mrb[0].mxu0 %v2558
      %v2868 = vpop.f32.mrb[0].mxu0
      %v2869 = vadd.f32 %v2568, %v2868
      %v2870 = vpop.f32.mrb[0].mxu0
      %v2871 = vpop.f32.mrb[0].mxu0
      %v2872 = vadd.f32 %v2568, %v2871
      %v2873 = vpop.f32.mrb[0].mxu0
      %2874 = vmatprep.mubr.bf16.mxu0 0
      %2875 = vmatmul.mubr.bf16.gmra.mrb[0].mxu0 %v2559
      %v2876 = vpop.f32.mrb[0].mxu0
      %v2877 = vadd.f32 %v2568, %v2876
      %v2878 = vpop.f32.mrb[0].mxu0
      %v2879 = vpop.f32.mrb[0].mxu0
      %v2880 = vadd.f32 %v2568, %v2879
      %v2881 = vpop.f32.mrb[0].mxu0
      %2882 = vmatprep.mubr.bf16.mxu0 0
      %2883 = vmatmul.mubr.bf16.gmra.mrb[0].mxu0 %v2560
      %v2884 = vpop.f32.mrb[0].mxu0
      %v2885 = vadd.f32 %v2568, %v2884
      %v2886 = vpop.f32.mrb[0].mxu0
      %v2887 = vpop.f32.mrb[0].mxu0
      %v2888 = vadd.f32 %v2568, %v2887
      %v2889 = vpop.f32.mrb[0].mxu0
      %2890 = vmatprep.mubr.bf16.mxu0 0
      %2891 = vmatmul.mubr.bf16.gmra.mrb[0].mxu0 %v2561
      %v2892 = vpop.f32.mrb[0].mxu0
      %v2893 = vadd.f32 %v2568, %v2892
      %v2894 = vpop.f32.mrb[0].mxu0
      %v2895 = vpop.f32.mrb[0].mxu0
      %v2896 = vadd.f32 %v2568, %v2895
      %v2897 = vpop.f32.mrb[0].mxu0
      %2898 = vmatprep.mubr.bf16.mxu0 0
      %2899 = vmatmul.mubr.bf16.gmra.mrb[0].mxu0 %v2562
      %v2900 = vpop.f32.mrb[0].mxu0
      %v2901 = vadd.f32 %v2568, %v2900
      %v2902 = vpop.f32.mrb[0].mxu0
      %v2903 = vpop.f32.mrb[0].mxu0
      %v2904 = vadd.f32 %v2568, %v2903
      %v2905 = vpop.f32.mrb[0].mxu0
      %2906 = vdwg.mxu0
      %v2907 = vmax.f32 %v2653, 0.0
      %v2908 = vmax.f32 %v2656, 0.0
      %v2909 = vmax.f32 %v2661, 0.0
      %v2910 = vmax.f32 %v2664, 0.0
      %v2911 = vmax.f32 %v2669, 0.0
      %v2912 = vmax.f32 %v2672, 0.0
      %v2913 = vmax.f32 %v2677, 0.0
      %v2914 = vmax.f32 %v2680, 0.0
      %v2915 = vmax.f32 %v2685, 0.0
      %v2916 = vmax.f32 %v2688, 0.0
      %v2917 = vmax.f32 %v2693, 0.0
      %v2918 = vmax.f32 %v2696, 0.0
      %v2919 = vmax.f32 %v2701, 0.0
      %v2920 = vmax.f32 %v2704, 0.0
      %v2921 = vmax.f32 %v2709, 0.0
      %v2922 = vmax.f32 %v2712, 0.0
      %v2923 = vmax.f32 %v2717, 0.0
      %v2924 = vmax.f32 %v2720, 0.0
      %v2925 = vmax.f32 %v2725, 0.0
      %v2926 = vmax.f32 %v2728, 0.0
      %v2927 = vmax.f32 %v2733, 0.0
      %v2928 = vmax.f32 %v2736, 0.0
      %v2929 = vmax.f32 %v2741, 0.0
      %v2930 = vmax.f32 %v2744, 0.0
      %v2931 = vmax.f32 %v2749, 0.0
      %v2932 = vmax.f32 %v2752, 0.0
      %v2933 = vmax.f32 %v2757, 0.0
      %v2934 = vmax.f32 %v2760, 0.0
      %v2935 = vmax.f32 %v2765, 0.0
      %v2936 = vmax.f32 %v2768, 0.0
      %v2937 = vmax.f32 %v2773, 0.0
      %v2938 = vmax.f32 %v2776, 0.0
      %v2939 = vmax.f32 %v2781, 0.0
      %v2940 = vmax.f32 %v2784, 0.0
      %v2941 = vmax.f32 %v2789, 0.0
      %v2942 = vmax.f32 %v2792, 0.0
      %v2943 = vmax.f32 %v2797, 0.0
      %v2944 = vmax.f32 %v2800, 0.0
      %v2945 = vmax.f32 %v2805, 0.0
      %v2946 = vmax.f32 %v2808, 0.0
      %v2947 = vmax.f32 %v2813, 0.0
      %v2948 = vmax.f32 %v2816, 0.0
      %v2949 = vmax.f32 %v2821, 0.0
      %v2950 = vmax.f32 %v2824, 0.0
      %v2951 = vmax.f32 %v2829, 0.0
      %v2952 = vmax.f32 %v2832, 0.0
      %v2953 = vmax.f32 %v2837, 0.0
      %v2954 = vmax.f32 %v2840, 0.0
      %v2955 = vmax.f32 %v2845, 0.0
      %v2956 = vmax.f32 %v2848, 0.0
      %v2957 = vmax.f32 %v2853, 0.0
      %v2958 = vmax.f32 %v2856, 0.0
      %v2959 = vmax.f32 %v2861, 0.0
      %v2960 = vmax.f32 %v2864, 0.0
      %v2961 = vmax.f32 %v2869, 0.0
      %v2962 = vmax.f32 %v2872, 0.0
      %v2963 = vmax.f32 %v2877, 0.0
      %v2964 = vmax.f32 %v2880, 0.0
      %v2965 = vmax.f32 %v2885, 0.0
      %v2966 = vmax.f32 %v2888, 0.0
      %v2967 = vmax.f32 %v2893, 0.0
      %v2968 = vmax.f32 %v2896, 0.0
      %v2969 = vmax.f32 %v2901, 0.0
      %v2970 = vmax.f32 %v2904, 0.0
      %v2971 = vld [vmem:[%s9] sm:$0xf]
      %v2972 = vld [vmem:[%s9 + $0x4] sm:$0xf]
      %v2973 = vld [vmem:[%s9 + $0x8] sm:$0xf]
      %v2974 = vld [vmem:[%s9 + $0xc] sm:$0xf]
      %v2975 = vld [vmem:[%s9 + $0x10] sm:$0xf]
      %v2976 = vld [vmem:[%s9 + $0x14] sm:$0xf]
      %v2977 = vld [vmem:[%s9 + $0x18] sm:$0xf]
      %v2978 = vld [vmem:[%s9 + $0x1c] sm:$0xf]
      %v2979 = vld [vmem:[%s9 + $0x20] sm:$0xf]
      %v2980 = vld [vmem:[%s9 + $0x24] sm:$0xf]
      %v2981 = vld [vmem:[%s9 + $0x28] sm:$0xf]
      %v2982 = vld [vmem:[%s9 + $0x2c] sm:$0xf]
      %v2983 = vld [vmem:[%s9 + $0x30] sm:$0xf]
      %v2984 = vld [vmem:[%s9 + $0x34] sm:$0xf]
      %v2985 = vld [vmem:[%s9 + $0x38] sm:$0xf]
      %v2986 = vld [vmem:[%s9 + $0x3c] sm:$0xf]
      %v2987 = vpack.c.bf16 %v2908, %v2907
      %v2988 = vpack.c.bf16 %v2910, %v2909
      %v2989 = vpack.c.bf16 %v2912, %v2911
      %v2990 = vpack.c.bf16 %v2914, %v2913
      %v2991 = vpack.c.bf16 %v2916, %v2915
      %v2992 = vpack.c.bf16 %v2918, %v2917
      %v2993 = vpack.c.bf16 %v2920, %v2919
      %v2994 = vpack.c.bf16 %v2922, %v2921
      %v2995 = vpack.c.bf16 %v2924, %v2923
      %v2996 = vpack.c.bf16 %v2926, %v2925
      %v2997 = vpack.c.bf16 %v2928, %v2927
      %v2998 = vpack.c.bf16 %v2930, %v2929
      %v2999 = vpack.c.bf16 %v2932, %v2931
      %v3000 = vpack.c.bf16 %v2934, %v2933
      %v3001 = vpack.c.bf16 %v2936, %v2935
      %v3002 = vpack.c.bf16 %v2938, %v2937
      %v3003 = vpack.c.bf16 %v2940, %v2939
      %v3004 = vpack.c.bf16 %v2942, %v2941
      %v3005 = vpack.c.bf16 %v2944, %v2943
      %v3006 = vpack.c.bf16 %v2946, %v2945
      %v3007 = vpack.c.bf16 %v2948, %v2947
      %v3008 = vpack.c.bf16 %v2950, %v2949
      %v3009 = vpack.c.bf16 %v2952, %v2951
      %v3010 = vpack.c.bf16 %v2954, %v2953
      %v3011 = vpack.c.bf16 %v2956, %v2955
      %v3012 = vpack.c.bf16 %v2958, %v2957
      %v3013 = vpack.c.bf16 %v2960, %v2959
      %v3014 = vpack.c.bf16 %v2962, %v2961
      %v3015 = vpack.c.bf16 %v2964, %v2963
      %v3016 = vpack.c.bf16 %v2966, %v2965
      %v3017 = vpack.c.bf16 %v2968, %v2967
      %v3018 = vpack.c.bf16 %v2970, %v2969
      %v3019 = vld [vmem:[%s10] sm:$0x1]
      %v3021 = vlaneseq
      %v3022 = vshrl.u32 %v3021, 7
      %v3023 = vsub.s32 0, %v3022
      %v3024 = vrot.slane %v3019, %v3023
      %v3042 = vunpack.c.l.b16 %v2971
      %v3043 = vunpack.c.l.b16 %v2972
      %v3044 = vunpack.c.l.b16 %v2973
      %v3045 = vunpack.c.l.b16 %v2974
      %v3046 = vunpack.c.l.b16 %v2975
      %v3047 = vunpack.c.l.b16 %v2976
      %v3048 = vunpack.c.l.b16 %v2977
      %v3049 = vunpack.c.l.b16 %v2978
      %v3050 = vunpack.c.l.b16 %v2979
      %v3051 = vunpack.c.l.b16 %v2980
      %v3052 = vunpack.c.l.b16 %v2981
      %v3053 = vunpack.c.l.b16 %v2982
      %v3054 = vunpack.c.l.b16 %v2983
      %v3055 = vunpack.c.l.b16 %v2984
      %v3056 = vunpack.c.l.b16 %v2985
      %v3057 = vunpack.c.l.b16 %v2986
      %v3058 = vpack.c.b16 %v3043, %v3042
      %v3059 = vpack.c.b16 %v3045, %v3044
      %v3060 = vpack.c.b16 %v3047, %v3046
      %v3061 = vpack.c.b16 %v3049, %v3048
      %v3062 = vpack.c.b16 %v3051, %v3050
      %v3063 = vpack.c.b16 %v3053, %v3052
      %v3064 = vpack.c.b16 %v3055, %v3054
      %v3065 = vpack.c.b16 %v3057, %v3056
      %3074 = vmatprep.subr.bf16.mxu0 0
      %3075 = vmatpush1.bf16.msra.mxu0 %v3058
      %3076 = vmatprep.subr.bf16.mxu0 0
      %3077 = vmatpush1.bf16.msra.mxu0 %v3059
      %3078 = vmatprep.subr.bf16.mxu0 0
      %3079 = vmatpush1.bf16.msra.mxu0 %v3060
      %3080 = vmatprep.subr.bf16.mxu0 0
      %3081 = vmatpush1.bf16.msra.mxu0 %v3061
      %3082 = vmatprep.subr.bf16.mxu0 0
      %3083 = vmatpush1.bf16.msra.mxu0 %v3062
      %3084 = vmatprep.subr.bf16.mxu0 0
      %3085 = vmatpush1.bf16.msra.mxu0 %v3063
      %3086 = vmatprep.subr.bf16.mxu0 0
      %3087 = vmatpush1.bf16.msra.mxu0 %v3064
      %3088 = vmatprep.subr.bf16.mxu0 0
      %3089 = vmatpush1.bf16.msra.mxu0 %v3065
      %3090 = vmatprep.subr.bf16.mxu0 0
      %3091 = vmatpush1.bf16.msra.mxu0 0
      %3092 = vmatprep.subr.bf16.mxu0 0
      %3093 = vmatpush1.bf16.msra.mxu0 0
      %3094 = vmatprep.subr.bf16.mxu0 0
      %3095 = vmatpush1.bf16.msra.mxu0 0
      %3096 = vmatprep.subr.bf16.mxu0 0
      %3097 = vmatpush1.bf16.msra.mxu0 0
      %3098 = vmatprep.subr.bf16.mxu0 0
      %3099 = vmatpush1.bf16.msra.mxu0 0
      %3100 = vmatprep.subr.bf16.mxu0 0
      %3101 = vmatpush1.bf16.msra.mxu0 0
      %3102 = vmatprep.subr.bf16.mxu0 0
      %3103 = vmatpush1.bf16.msra.mxu0 0
      %3104 = vmatprep.subr.bf16.mxu0 0
      %3105 = vmatpush1.bf16.msra.mxu0 0
      %3106 = vmatprep.mubr.bf16.mxu0 0
      %3107 = vmatmul.mubr.bf16.gmra.mrb[0].mxu0 %v2987
      %v3108 = vpop.f32.mrb[0].mxu0
      %v3109 = vadd.f32 %v3024, %v3108
      %v3110 = vpop.f32.mrb[0].mxu0
      %v3111 = vpop.f32.mrb[0].mxu0
      %v3112 = vadd.f32 %v3024, %v3111
      %v3113 = vpop.f32.mrb[0].mxu0
      %3114 = vmatprep.mubr.bf16.mxu0 0
      %3115 = vmatmul.mubr.bf16.gmra.mrb[0].mxu0 %v2988
      %v3116 = vpop.f32.mrb[0].mxu0
      %v3117 = vadd.f32 %v3024, %v3116
      %v3118 = vpop.f32.mrb[0].mxu0
      %v3119 = vpop.f32.mrb[0].mxu0
      %v3120 = vadd.f32 %v3024, %v3119
      %v3121 = vpop.f32.mrb[0].mxu0
      %3122 = vmatprep.mubr.bf16.mxu0 0
      %3123 = vmatmul.mubr.bf16.gmra.mrb[0].mxu0 %v2989
      %v3124 = vpop.f32.mrb[0].mxu0
      %v3125 = vadd.f32 %v3024, %v3124
      %v3126 = vpop.f32.mrb[0].mxu0
      %v3127 = vpop.f32.mrb[0].mxu0
      %v3128 = vadd.f32 %v3024, %v3127
      %v3129 = vpop.f32.mrb[0].mxu0
      %3130 = vmatprep.mubr.bf16.mxu0 0
      %3131 = vmatmul.mubr.bf16.gmra.mrb[0].mxu0 %v2990
      %v3132 = vpop.f32.mrb[0].mxu0
      %v3133 = vadd.f32 %v3024, %v3132
      %v3134 = vpop.f32.mrb[0].mxu0
      %v3135 = vpop.f32.mrb[0].mxu0
      %v3136 = vadd.f32 %v3024, %v3135
      %v3137 = vpop.f32.mrb[0].mxu0
      %3138 = vmatprep.mubr.bf16.mxu0 0
      %3139 = vmatmul.mubr.bf16.gmra.mrb[0].mxu0 %v2991
      %v3140 = vpop.f32.mrb[0].mxu0
      %v3141 = vadd.f32 %v3024, %v3140
      %v3142 = vpop.f32.mrb[0].mxu0
      %v3143 = vpop.f32.mrb[0].mxu0
      %v3144 = vadd.f32 %v3024, %v3143
      %v3145 = vpop.f32.mrb[0].mxu0
      %3146 = vmatprep.mubr.bf16.mxu0 0
      %3147 = vmatmul.mubr.bf16.gmra.mrb[0].mxu0 %v2992
      %v3148 = vpop.f32.mrb[0].mxu0
      %v3149 = vadd.f32 %v3024, %v3148
      %v3150 = vpop.f32.mrb[0].mxu0
      %v3151 = vpop.f32.mrb[0].mxu0
      %v3152 = vadd.f32 %v3024, %v3151
      %v3153 = vpop.f32.mrb[0].mxu0
      %3154 = vmatprep.mubr.bf16.mxu0 0
      %3155 = vmatmul.mubr.bf16.gmra.mrb[0].mxu0 %v2993
      %v3156 = vpop.f32.mrb[0].mxu0
      %v3157 = vadd.f32 %v3024, %v3156
      %v3158 = vpop.f32.mrb[0].mxu0
      %v3159 = vpop.f32.mrb[0].mxu0
      %v3160 = vadd.f32 %v3024, %v3159
      %v3161 = vpop.f32.mrb[0].mxu0
      %3162 = vmatprep.mubr.bf16.mxu0 0
      %3163 = vmatmul.mubr.bf16.gmra.mrb[0].mxu0 %v2994
      %v3164 = vpop.f32.mrb[0].mxu0
      %v3165 = vadd.f32 %v3024, %v3164
      %v3166 = vpop.f32.mrb[0].mxu0
      %v3167 = vpop.f32.mrb[0].mxu0
      %v3168 = vadd.f32 %v3024, %v3167
      %v3169 = vpop.f32.mrb[0].mxu0
      %3170 = vmatprep.mubr.bf16.mxu0 0
      %3171 = vmatmul.mubr.bf16.gmra.mrb[0].mxu0 %v2995
      %v3172 = vpop.f32.mrb[0].mxu0
      %v3173 = vadd.f32 %v3024, %v3172
      %v3174 = vpop.f32.mrb[0].mxu0
      %v3175 = vpop.f32.mrb[0].mxu0
      %v3176 = vadd.f32 %v3024, %v3175
      %v3177 = vpop.f32.mrb[0].mxu0
      %3178 = vmatprep.mubr.bf16.mxu0 0
      %3179 = vmatmul.mubr.bf16.gmra.mrb[0].mxu0 %v2996
      %v3180 = vpop.f32.mrb[0].mxu0
      %v3181 = vadd.f32 %v3024, %v3180
      %v3182 = vpop.f32.mrb[0].mxu0
      %v3183 = vpop.f32.mrb[0].mxu0
      %v3184 = vadd.f32 %v3024, %v3183
      %v3185 = vpop.f32.mrb[0].mxu0
      %3186 = vmatprep.mubr.bf16.mxu0 0
      %3187 = vmatmul.mubr.bf16.gmra.mrb[0].mxu0 %v2997
      %v3188 = vpop.f32.mrb[0].mxu0
      %v3189 = vadd.f32 %v3024, %v3188
      %v3190 = vpop.f32.mrb[0].mxu0
      %v3191 = vpop.f32.mrb[0].mxu0
      %v3192 = vadd.f32 %v3024, %v3191
      %v3193 = vpop.f32.mrb[0].mxu0
      %3194 = vmatprep.mubr.bf16.mxu0 0
      %3195 = vmatmul.mubr.bf16.gmra.mrb[0].mxu0 %v2998
      %v3196 = vpop.f32.mrb[0].mxu0
      %v3197 = vadd.f32 %v3024, %v3196
      %v3198 = vpop.f32.mrb[0].mxu0
      %v3199 = vpop.f32.mrb[0].mxu0
      %v3200 = vadd.f32 %v3024, %v3199
      %v3201 = vpop.f32.mrb[0].mxu0
      %3202 = vmatprep.mubr.bf16.mxu0 0
      %3203 = vmatmul.mubr.bf16.gmra.mrb[0].mxu0 %v2999
      %v3204 = vpop.f32.mrb[0].mxu0
      %v3205 = vadd.f32 %v3024, %v3204
      %v3206 = vpop.f32.mrb[0].mxu0
      %v3207 = vpop.f32.mrb[0].mxu0
      %v3208 = vadd.f32 %v3024, %v3207
      %v3209 = vpop.f32.mrb[0].mxu0
      %3210 = vmatprep.mubr.bf16.mxu0 0
      %3211 = vmatmul.mubr.bf16.gmra.mrb[0].mxu0 %v3000
      %v3212 = vpop.f32.mrb[0].mxu0
      %v3213 = vadd.f32 %v3024, %v3212
      %v3214 = vpop.f32.mrb[0].mxu0
      %v3215 = vpop.f32.mrb[0].mxu0
      %v3216 = vadd.f32 %v3024, %v3215
      %v3217 = vpop.f32.mrb[0].mxu0
      %3218 = vmatprep.mubr.bf16.mxu0 0
      %3219 = vmatmul.mubr.bf16.gmra.mrb[0].mxu0 %v3001
      %v3220 = vpop.f32.mrb[0].mxu0
      %v3221 = vadd.f32 %v3024, %v3220
      %v3222 = vpop.f32.mrb[0].mxu0
      %v3223 = vpop.f32.mrb[0].mxu0
      %v3224 = vadd.f32 %v3024, %v3223
      %v3225 = vpop.f32.mrb[0].mxu0
      %3226 = vmatprep.mubr.bf16.mxu0 0
      %3227 = vmatmul.mubr.bf16.gmra.mrb[0].mxu0 %v3002
      %v3228 = vpop.f32.mrb[0].mxu0
      %v3229 = vadd.f32 %v3024, %v3228
      %v3230 = vpop.f32.mrb[0].mxu0
      %v3231 = vpop.f32.mrb[0].mxu0
      %v3232 = vadd.f32 %v3024, %v3231
      %v3233 = vpop.f32.mrb[0].mxu0
      %3234 = vmatprep.mubr.bf16.mxu0 0
      %3235 = vmatmul.mubr.bf16.gmra.mrb[0].mxu0 %v3003
      %v3236 = vpop.f32.mrb[0].mxu0
      %v3237 = vadd.f32 %v3024, %v3236
      %v3238 = vpop.f32.mrb[0].mxu0
      %v3239 = vpop.f32.mrb[0].mxu0
      %v3240 = vadd.f32 %v3024, %v3239
      %v3241 = vpop.f32.mrb[0].mxu0
      %3242 = vmatprep.mubr.bf16.mxu0 0
      %3243 = vmatmul.mubr.bf16.gmra.mrb[0].mxu0 %v3004
      %v3244 = vpop.f32.mrb[0].mxu0
      %v3245 = vadd.f32 %v3024, %v3244
      %v3246 = vpop.f32.mrb[0].mxu0
      %v3247 = vpop.f32.mrb[0].mxu0
      %v3248 = vadd.f32 %v3024, %v3247
      %v3249 = vpop.f32.mrb[0].mxu0
      %3250 = vmatprep.mubr.bf16.mxu0 0
      %3251 = vmatmul.mubr.bf16.gmra.mrb[0].mxu0 %v3005
      %v3252 = vpop.f32.mrb[0].mxu0
      %v3253 = vadd.f32 %v3024, %v3252
      %v3254 = vpop.f32.mrb[0].mxu0
      %v3255 = vpop.f32.mrb[0].mxu0
      %v3256 = vadd.f32 %v3024, %v3255
      %v3257 = vpop.f32.mrb[0].mxu0
      %3258 = vmatprep.mubr.bf16.mxu0 0
      %3259 = vmatmul.mubr.bf16.gmra.mrb[0].mxu0 %v3006
      %v3260 = vpop.f32.mrb[0].mxu0
      %v3261 = vadd.f32 %v3024, %v3260
      %v3262 = vpop.f32.mrb[0].mxu0
      %v3263 = vpop.f32.mrb[0].mxu0
      %v3264 = vadd.f32 %v3024, %v3263
      %v3265 = vpop.f32.mrb[0].mxu0
      %3266 = vmatprep.mubr.bf16.mxu0 0
      %3267 = vmatmul.mubr.bf16.gmra.mrb[0].mxu0 %v3007
      %v3268 = vpop.f32.mrb[0].mxu0
      %v3269 = vadd.f32 %v3024, %v3268
      %v3270 = vpop.f32.mrb[0].mxu0
      %v3271 = vpop.f32.mrb[0].mxu0
      %v3272 = vadd.f32 %v3024, %v3271
      %v3273 = vpop.f32.mrb[0].mxu0
      %3274 = vmatprep.mubr.bf16.mxu0 0
      %3275 = vmatmul.mubr.bf16.gmra.mrb[0].mxu0 %v3008
      %v3276 = vpop.f32.mrb[0].mxu0
      %v3277 = vadd.f32 %v3024, %v3276
      %v3278 = vpop.f32.mrb[0].mxu0
      %v3279 = vpop.f32.mrb[0].mxu0
      %v3280 = vadd.f32 %v3024, %v3279
      %v3281 = vpop.f32.mrb[0].mxu0
      %3282 = vmatprep.mubr.bf16.mxu0 0
      %3283 = vmatmul.mubr.bf16.gmra.mrb[0].mxu0 %v3009
      %v3284 = vpop.f32.mrb[0].mxu0
      %v3285 = vadd.f32 %v3024, %v3284
      %v3286 = vpop.f32.mrb[0].mxu0
      %v3287 = vpop.f32.mrb[0].mxu0
      %v3288 = vadd.f32 %v3024, %v3287
      %v3289 = vpop.f32.mrb[0].mxu0
      %3290 = vmatprep.mubr.bf16.mxu0 0
      %3291 = vmatmul.mubr.bf16.gmra.mrb[0].mxu0 %v3010
      %v3292 = vpop.f32.mrb[0].mxu0
      %v3293 = vadd.f32 %v3024, %v3292
      %v3294 = vpop.f32.mrb[0].mxu0
      %v3295 = vpop.f32.mrb[0].mxu0
      %v3296 = vadd.f32 %v3024, %v3295
      %v3297 = vpop.f32.mrb[0].mxu0
      %3298 = vmatprep.mubr.bf16.mxu0 0
      %3299 = vmatmul.mubr.bf16.gmra.mrb[0].mxu0 %v3011
      %v3300 = vpop.f32.mrb[0].mxu0
      %v3301 = vadd.f32 %v3024, %v3300
      %v3302 = vpop.f32.mrb[0].mxu0
      %v3303 = vpop.f32.mrb[0].mxu0
      %v3304 = vadd.f32 %v3024, %v3303
      %v3305 = vpop.f32.mrb[0].mxu0
      %3306 = vmatprep.mubr.bf16.mxu0 0
      %3307 = vmatmul.mubr.bf16.gmra.mrb[0].mxu0 %v3012
      %v3308 = vpop.f32.mrb[0].mxu0
      %v3309 = vadd.f32 %v3024, %v3308
      %v3310 = vpop.f32.mrb[0].mxu0
      %v3311 = vpop.f32.mrb[0].mxu0
      %v3312 = vadd.f32 %v3024, %v3311
      %v3313 = vpop.f32.mrb[0].mxu0
      %3314 = vmatprep.mubr.bf16.mxu0 0
      %3315 = vmatmul.mubr.bf16.gmra.mrb[0].mxu0 %v3013
      %v3316 = vpop.f32.mrb[0].mxu0
      %v3317 = vadd.f32 %v3024, %v3316
      %v3318 = vpop.f32.mrb[0].mxu0
      %v3319 = vpop.f32.mrb[0].mxu0
      %v3320 = vadd.f32 %v3024, %v3319
      %v3321 = vpop.f32.mrb[0].mxu0
      %3322 = vmatprep.mubr.bf16.mxu0 0
      %3323 = vmatmul.mubr.bf16.gmra.mrb[0].mxu0 %v3014
      %v3324 = vpop.f32.mrb[0].mxu0
      %v3325 = vadd.f32 %v3024, %v3324
      %v3326 = vpop.f32.mrb[0].mxu0
      %v3327 = vpop.f32.mrb[0].mxu0
      %v3328 = vadd.f32 %v3024, %v3327
      %v3329 = vpop.f32.mrb[0].mxu0
      %3330 = vmatprep.mubr.bf16.mxu0 0
      %3331 = vmatmul.mubr.bf16.gmra.mrb[0].mxu0 %v3015
      %v3332 = vpop.f32.mrb[0].mxu0
      %v3333 = vadd.f32 %v3024, %v3332
      %v3334 = vpop.f32.mrb[0].mxu0
      %v3335 = vpop.f32.mrb[0].mxu0
      %v3336 = vadd.f32 %v3024, %v3335
      %v3337 = vpop.f32.mrb[0].mxu0
      %3338 = vmatprep.mubr.bf16.mxu0 0
      %3339 = vmatmul.mubr.bf16.gmra.mrb[0].mxu0 %v3016
      %v3340 = vpop.f32.mrb[0].mxu0
      %v3341 = vadd.f32 %v3024, %v3340
      %v3342 = vpop.f32.mrb[0].mxu0
      %v3343 = vpop.f32.mrb[0].mxu0
      %v3344 = vadd.f32 %v3024, %v3343
      %v3345 = vpop.f32.mrb[0].mxu0
      %3346 = vmatprep.mubr.bf16.mxu0 0
      %3347 = vmatmul.mubr.bf16.gmra.mrb[0].mxu0 %v3017
      %v3348 = vpop.f32.mrb[0].mxu0
      %v3349 = vadd.f32 %v3024, %v3348
      %v3350 = vpop.f32.mrb[0].mxu0
      %v3351 = vpop.f32.mrb[0].mxu0
      %v3352 = vadd.f32 %v3024, %v3351
      %v3353 = vpop.f32.mrb[0].mxu0
      %3354 = vmatprep.mubr.bf16.mxu0 0
      %3355 = vmatmul.mubr.bf16.gmra.mrb[0].mxu0 %v3018
      %v3356 = vpop.f32.mrb[0].mxu0
      %v3357 = vadd.f32 %v3024, %v3356
      %v3358 = vpop.f32.mrb[0].mxu0
      %v3359 = vpop.f32.mrb[0].mxu0
      %v3360 = vadd.f32 %v3024, %v3359
      %v3361 = vpop.f32.mrb[0].mxu0
      %3362 = vdwg.mxu0
      %v3363 = vld [vmem:[%s11] sm:$0x1]
      %v3364 = vld [vmem:[%s12] sm:$0x1]
      %3365 = vadd.xlane.f32.xlu0 %v3109
      %v3366 = vpop.xlane.xlu0 %3365
      %3367 = vadd.xlane.f32.xlu0 %v3112
      %v3368 = vpop.xlane.xlu0 %3367
      %3369 = vadd.xlane.f32.xlu0 %v3117
      %v3370 = vpop.xlane.xlu0 %3369
      %3371 = vadd.xlane.f32.xlu0 %v3120
      %v3372 = vpop.xlane.xlu0 %3371
      %3373 = vadd.xlane.f32.xlu0 %v3125
      %v3374 = vpop.xlane.xlu0 %3373
      %3375 = vadd.xlane.f32.xlu0 %v3128
      %v3376 = vpop.xlane.xlu0 %3375
      %3377 = vadd.xlane.f32.xlu0 %v3133
      %v3378 = vpop.xlane.xlu0 %3377
      %3379 = vadd.xlane.f32.xlu0 %v3136
      %v3380 = vpop.xlane.xlu0 %3379
      %3381 = vadd.xlane.f32.xlu0 %v3141
      %v3382 = vpop.xlane.xlu0 %3381
      %3383 = vadd.xlane.f32.xlu0 %v3144
      %v3384 = vpop.xlane.xlu0 %3383
      %3385 = vadd.xlane.f32.xlu0 %v3149
      %v3386 = vpop.xlane.xlu0 %3385
      %3387 = vadd.xlane.f32.xlu0 %v3152
      %v3388 = vpop.xlane.xlu0 %3387
      %3389 = vadd.xlane.f32.xlu0 %v3157
      %v3390 = vpop.xlane.xlu0 %3389
      %3391 = vadd.xlane.f32.xlu0 %v3160
      %v3392 = vpop.xlane.xlu0 %3391
      %3393 = vadd.xlane.f32.xlu0 %v3165
      %v3394 = vpop.xlane.xlu0 %3393
      %3395 = vadd.xlane.f32.xlu0 %v3168
      %v3396 = vpop.xlane.xlu0 %3395
      %3397 = vadd.xlane.f32.xlu0 %v3173
      %v3398 = vpop.xlane.xlu0 %3397
      %3399 = vadd.xlane.f32.xlu0 %v3176
      %v3400 = vpop.xlane.xlu0 %3399
      %3401 = vadd.xlane.f32.xlu0 %v3181
      %v3402 = vpop.xlane.xlu0 %3401
      %3403 = vadd.xlane.f32.xlu0 %v3184
      %v3404 = vpop.xlane.xlu0 %3403
      %3405 = vadd.xlane.f32.xlu0 %v3189
      %v3406 = vpop.xlane.xlu0 %3405
      %3407 = vadd.xlane.f32.xlu0 %v3192
      %v3408 = vpop.xlane.xlu0 %3407
      %3409 = vadd.xlane.f32.xlu0 %v3197
      %v3410 = vpop.xlane.xlu0 %3409
      %3411 = vadd.xlane.f32.xlu0 %v3200
      %v3412 = vpop.xlane.xlu0 %3411
      %3413 = vadd.xlane.f32.xlu0 %v3205
      %v3414 = vpop.xlane.xlu0 %3413
      %3415 = vadd.xlane.f32.xlu0 %v3208
      %v3416 = vpop.xlane.xlu0 %3415
      %3417 = vadd.xlane.f32.xlu0 %v3213
      %v3418 = vpop.xlane.xlu0 %3417
      %3419 = vadd.xlane.f32.xlu0 %v3216
      %v3420 = vpop.xlane.xlu0 %3419
      %3421 = vadd.xlane.f32.xlu0 %v3221
      %v3422 = vpop.xlane.xlu0 %3421
      %3423 = vadd.xlane.f32.xlu0 %v3224
      %v3424 = vpop.xlane.xlu0 %3423
      %3425 = vadd.xlane.f32.xlu0 %v3229
      %v3426 = vpop.xlane.xlu0 %3425
      %3427 = vadd.xlane.f32.xlu0 %v3232
      %v3428 = vpop.xlane.xlu0 %3427
      %3429 = vadd.xlane.f32.xlu0 %v3237
      %v3430 = vpop.xlane.xlu0 %3429
      %3431 = vadd.xlane.f32.xlu0 %v3240
      %v3432 = vpop.xlane.xlu0 %3431
      %3433 = vadd.xlane.f32.xlu0 %v3245
      %v3434 = vpop.xlane.xlu0 %3433
      %3435 = vadd.xlane.f32.xlu0 %v3248
      %v3436 = vpop.xlane.xlu0 %3435
      %3437 = vadd.xlane.f32.xlu0 %v3253
      %v3438 = vpop.xlane.xlu0 %3437
      %3439 = vadd.xlane.f32.xlu0 %v3256
      %v3440 = vpop.xlane.xlu0 %3439
      %3441 = vadd.xlane.f32.xlu0 %v3261
      %v3442 = vpop.xlane.xlu0 %3441
      %3443 = vadd.xlane.f32.xlu0 %v3264
      %v3444 = vpop.xlane.xlu0 %3443
      %3445 = vadd.xlane.f32.xlu0 %v3269
      %v3446 = vpop.xlane.xlu0 %3445
      %3447 = vadd.xlane.f32.xlu0 %v3272
      %v3448 = vpop.xlane.xlu0 %3447
      %3449 = vadd.xlane.f32.xlu0 %v3277
      %v3450 = vpop.xlane.xlu0 %3449
      %3451 = vadd.xlane.f32.xlu0 %v3280
      %v3452 = vpop.xlane.xlu0 %3451
      %3453 = vadd.xlane.f32.xlu0 %v3285
      %v3454 = vpop.xlane.xlu0 %3453
      %3455 = vadd.xlane.f32.xlu0 %v3288
      %v3456 = vpop.xlane.xlu0 %3455
      %3457 = vadd.xlane.f32.xlu0 %v3293
      %v3458 = vpop.xlane.xlu0 %3457
      %3459 = vadd.xlane.f32.xlu0 %v3296
      %v3460 = vpop.xlane.xlu0 %3459
      %3461 = vadd.xlane.f32.xlu0 %v3301
      %v3462 = vpop.xlane.xlu0 %3461
      %3463 = vadd.xlane.f32.xlu0 %v3304
      %v3464 = vpop.xlane.xlu0 %3463
      %3465 = vadd.xlane.f32.xlu0 %v3309
      %v3466 = vpop.xlane.xlu0 %3465
      %3467 = vadd.xlane.f32.xlu0 %v3312
      %v3468 = vpop.xlane.xlu0 %3467
      %3469 = vadd.xlane.f32.xlu0 %v3317
      %v3470 = vpop.xlane.xlu0 %3469
      %3471 = vadd.xlane.f32.xlu0 %v3320
      %v3472 = vpop.xlane.xlu0 %3471
      %3473 = vadd.xlane.f32.xlu0 %v3325
      %v3474 = vpop.xlane.xlu0 %3473
      %3475 = vadd.xlane.f32.xlu0 %v3328
      %v3476 = vpop.xlane.xlu0 %3475
      %3477 = vadd.xlane.f32.xlu0 %v3333
      %v3478 = vpop.xlane.xlu0 %3477
      %3479 = vadd.xlane.f32.xlu0 %v3336
      %v3480 = vpop.xlane.xlu0 %3479
      %3481 = vadd.xlane.f32.xlu0 %v3341
      %v3482 = vpop.xlane.xlu0 %3481
      %3483 = vadd.xlane.f32.xlu0 %v3344
      %v3484 = vpop.xlane.xlu0 %3483
      %3485 = vadd.xlane.f32.xlu0 %v3349
      %v3486 = vpop.xlane.xlu0 %3485
      %3487 = vadd.xlane.f32.xlu0 %v3352
      %v3488 = vpop.xlane.xlu0 %3487
      %3489 = vadd.xlane.f32.xlu0 %v3357
      %v3490 = vpop.xlane.xlu0 %3489
      %3491 = vadd.xlane.f32.xlu0 %v3360
      %v3492 = vpop.xlane.xlu0 %3491
      %v3493 = vrcp.pop 128.0
      %v3494 = vmul.f32 %v3366, %v3493
      %v3495 = vmul.f32 %v3368, %v3493
      %v3496 = vmul.f32 %v3370, %v3493
      %v3497 = vmul.f32 %v3372, %v3493
      %v3498 = vmul.f32 %v3374, %v3493
      %v3499 = vmul.f32 %v3376, %v3493
      %v3500 = vmul.f32 %v3378, %v3493
      %v3501 = vmul.f32 %v3380, %v3493
      %v3502 = vmul.f32 %v3382, %v3493
      %v3503 = vmul.f32 %v3384, %v3493
      %v3504 = vmul.f32 %v3386, %v3493
      %v3505 = vmul.f32 %v3388, %v3493
      %v3506 = vmul.f32 %v3390, %v3493
      %v3507 = vmul.f32 %v3392, %v3493
      %v3508 = vmul.f32 %v3394, %v3493
      %v3509 = vmul.f32 %v3396, %v3493
      %v3510 = vmul.f32 %v3398, %v3493
      %v3511 = vmul.f32 %v3400, %v3493
      %v3512 = vmul.f32 %v3402, %v3493
      %v3513 = vmul.f32 %v3404, %v3493
      %v3514 = vmul.f32 %v3406, %v3493
      %v3515 = vmul.f32 %v3408, %v3493
      %v3516 = vmul.f32 %v3410, %v3493
      %v3517 = vmul.f32 %v3412, %v3493
      %v3518 = vmul.f32 %v3414, %v3493
      %v3519 = vmul.f32 %v3416, %v3493
      %v3520 = vmul.f32 %v3418, %v3493
      %v3521 = vmul.f32 %v3420, %v3493
      %v3522 = vmul.f32 %v3422, %v3493
      %v3523 = vmul.f32 %v3424, %v3493
      %v3524 = vmul.f32 %v3426, %v3493
      %v3525 = vmul.f32 %v3428, %v3493
      %v3526 = vmul.f32 %v3430, %v3493
      %v3527 = vmul.f32 %v3432, %v3493
      %v3528 = vmul.f32 %v3434, %v3493
      %v3529 = vmul.f32 %v3436, %v3493
      %v3530 = vmul.f32 %v3438, %v3493
      %v3531 = vmul.f32 %v3440, %v3493
      %v3532 = vmul.f32 %v3442, %v3493
      %v3533 = vmul.f32 %v3444, %v3493
      %v3534 = vmul.f32 %v3446, %v3493
      %v3535 = vmul.f32 %v3448, %v3493
      %v3536 = vmul.f32 %v3450, %v3493
      %v3537 = vmul.f32 %v3452, %v3493
      %v3538 = vmul.f32 %v3454, %v3493
      %v3539 = vmul.f32 %v3456, %v3493
      %v3540 = vmul.f32 %v3458, %v3493
      %v3541 = vmul.f32 %v3460, %v3493
      %v3542 = vmul.f32 %v3462, %v3493
      %v3543 = vmul.f32 %v3464, %v3493
      %v3544 = vmul.f32 %v3466, %v3493
      %v3545 = vmul.f32 %v3468, %v3493
      %v3546 = vmul.f32 %v3470, %v3493
      %v3547 = vmul.f32 %v3472, %v3493
      %v3548 = vmul.f32 %v3474, %v3493
      %v3549 = vmul.f32 %v3476, %v3493
      %v3550 = vmul.f32 %v3478, %v3493
      %v3551 = vmul.f32 %v3480, %v3493
      %v3552 = vmul.f32 %v3482, %v3493
      %v3553 = vmul.f32 %v3484, %v3493
      %v3554 = vmul.f32 %v3486, %v3493
      %v3555 = vmul.f32 %v3488, %v3493
      %v3556 = vmul.f32 %v3490, %v3493
      %v3557 = vmul.f32 %v3492, %v3493
      %v3558 = vsub.f32 %v3109, %v3494
      %v3559 = vsub.f32 %v3112, %v3495
      %v3560 = vsub.f32 %v3117, %v3496
      %v3561 = vsub.f32 %v3120, %v3497
      %v3562 = vsub.f32 %v3125, %v3498
      %v3563 = vsub.f32 %v3128, %v3499
      %v3564 = vsub.f32 %v3133, %v3500
      %v3565 = vsub.f32 %v3136, %v3501
      %v3566 = vsub.f32 %v3141, %v3502
      %v3567 = vsub.f32 %v3144, %v3503
      %v3568 = vsub.f32 %v3149, %v3504
      %v3569 = vsub.f32 %v3152, %v3505
      %v3570 = vsub.f32 %v3157, %v3506
      %v3571 = vsub.f32 %v3160, %v3507
      %v3572 = vsub.f32 %v3165, %v3508
      %v3573 = vsub.f32 %v3168, %v3509
      %v3574 = vsub.f32 %v3173, %v3510
      %v3575 = vsub.f32 %v3176, %v3511
      %v3576 = vsub.f32 %v3181, %v3512
      %v3577 = vsub.f32 %v3184, %v3513
      %v3578 = vsub.f32 %v3189, %v3514
      %v3579 = vsub.f32 %v3192, %v3515
      %v3580 = vsub.f32 %v3197, %v3516
      %v3581 = vsub.f32 %v3200, %v3517
      %v3582 = vsub.f32 %v3205, %v3518
      %v3583 = vsub.f32 %v3208, %v3519
      %v3584 = vsub.f32 %v3213, %v3520
      %v3585 = vsub.f32 %v3216, %v3521
      %v3586 = vsub.f32 %v3221, %v3522
      %v3587 = vsub.f32 %v3224, %v3523
      %v3588 = vsub.f32 %v3229, %v3524
      %v3589 = vsub.f32 %v3232, %v3525
      %v3590 = vsub.f32 %v3237, %v3526
      %v3591 = vsub.f32 %v3240, %v3527
      %v3592 = vsub.f32 %v3245, %v3528
      %v3593 = vsub.f32 %v3248, %v3529
      %v3594 = vsub.f32 %v3253, %v3530
      %v3595 = vsub.f32 %v3256, %v3531
      %v3596 = vsub.f32 %v3261, %v3532
      %v3597 = vsub.f32 %v3264, %v3533
      %v3598 = vsub.f32 %v3269, %v3534
      %v3599 = vsub.f32 %v3272, %v3535
      %v3600 = vsub.f32 %v3277, %v3536
      %v3601 = vsub.f32 %v3280, %v3537
      %v3602 = vsub.f32 %v3285, %v3538
      %v3603 = vsub.f32 %v3288, %v3539
      %v3604 = vsub.f32 %v3293, %v3540
      %v3605 = vsub.f32 %v3296, %v3541
      %v3606 = vsub.f32 %v3301, %v3542
      %v3607 = vsub.f32 %v3304, %v3543
      %v3608 = vsub.f32 %v3309, %v3544
      %v3609 = vsub.f32 %v3312, %v3545
      %v3610 = vsub.f32 %v3317, %v3546
      %v3611 = vsub.f32 %v3320, %v3547
      %v3612 = vsub.f32 %v3325, %v3548
      %v3613 = vsub.f32 %v3328, %v3549
      %v3614 = vsub.f32 %v3333, %v3550
      %v3615 = vsub.f32 %v3336, %v3551
      %v3616 = vsub.f32 %v3341, %v3552
      %v3617 = vsub.f32 %v3344, %v3553
      %v3618 = vsub.f32 %v3349, %v3554
      %v3619 = vsub.f32 %v3352, %v3555
      %v3620 = vsub.f32 %v3357, %v3556
      %v3621 = vsub.f32 %v3360, %v3557
      %v3622 = vmul.f32 %v3558, %v3558
      %v3623 = vmul.f32 %v3559, %v3559
      %v3624 = vmul.f32 %v3560, %v3560
      %v3625 = vmul.f32 %v3561, %v3561
      %v3626 = vmul.f32 %v3562, %v3562
      %v3627 = vmul.f32 %v3563, %v3563
      %v3628 = vmul.f32 %v3564, %v3564
      %v3629 = vmul.f32 %v3565, %v3565
      %v3630 = vmul.f32 %v3566, %v3566
      %v3631 = vmul.f32 %v3567, %v3567
      %v3632 = vmul.f32 %v3568, %v3568
      %v3633 = vmul.f32 %v3569, %v3569
      %v3634 = vmul.f32 %v3570, %v3570
      %v3635 = vmul.f32 %v3571, %v3571
      %v3636 = vmul.f32 %v3572, %v3572
      %v3637 = vmul.f32 %v3573, %v3573
      %v3638 = vmul.f32 %v3574, %v3574
      %v3639 = vmul.f32 %v3575, %v3575
      %v3640 = vmul.f32 %v3576, %v3576
      %v3641 = vmul.f32 %v3577, %v3577
      %v3642 = vmul.f32 %v3578, %v3578
      %v3643 = vmul.f32 %v3579, %v3579
      %v3644 = vmul.f32 %v3580, %v3580
      %v3645 = vmul.f32 %v3581, %v3581
      %v3646 = vmul.f32 %v3582, %v3582
      %v3647 = vmul.f32 %v3583, %v3583
      %v3648 = vmul.f32 %v3584, %v3584
      %v3649 = vmul.f32 %v3585, %v3585
      %v3650 = vmul.f32 %v3586, %v3586
      %v3651 = vmul.f32 %v3587, %v3587
      %v3652 = vmul.f32 %v3588, %v3588
      %v3653 = vmul.f32 %v3589, %v3589
      %v3654 = vmul.f32 %v3590, %v3590
      %v3655 = vmul.f32 %v3591, %v3591
      %v3656 = vmul.f32 %v3592, %v3592
      %v3657 = vmul.f32 %v3593, %v3593
      %v3658 = vmul.f32 %v3594, %v3594
      %v3659 = vmul.f32 %v3595, %v3595
      %v3660 = vmul.f32 %v3596, %v3596
      %v3661 = vmul.f32 %v3597, %v3597
      %v3662 = vmul.f32 %v3598, %v3598
      %v3663 = vmul.f32 %v3599, %v3599
      %v3664 = vmul.f32 %v3600, %v3600
      %v3665 = vmul.f32 %v3601, %v3601
      %v3666 = vmul.f32 %v3602, %v3602
      %v3667 = vmul.f32 %v3603, %v3603
      %v3668 = vmul.f32 %v3604, %v3604
      %v3669 = vmul.f32 %v3605, %v3605
      %v3670 = vmul.f32 %v3606, %v3606
      %v3671 = vmul.f32 %v3607, %v3607
      %v3672 = vmul.f32 %v3608, %v3608
      %v3673 = vmul.f32 %v3609, %v3609
      %v3674 = vmul.f32 %v3610, %v3610
      %v3675 = vmul.f32 %v3611, %v3611
      %v3676 = vmul.f32 %v3612, %v3612
      %v3677 = vmul.f32 %v3613, %v3613
      %v3678 = vmul.f32 %v3614, %v3614
      %v3679 = vmul.f32 %v3615, %v3615
      %v3680 = vmul.f32 %v3616, %v3616
      %v3681 = vmul.f32 %v3617, %v3617
      %v3682 = vmul.f32 %v3618, %v3618
      %v3683 = vmul.f32 %v3619, %v3619
      %v3684 = vmul.f32 %v3620, %v3620
      %v3685 = vmul.f32 %v3621, %v3621
      %3686 = vadd.xlane.f32.xlu0 %v3622
      %v3687 = vpop.xlane.xlu0 %3686
      %3688 = vadd.xlane.f32.xlu0 %v3623
      %v3689 = vpop.xlane.xlu0 %3688
      %3690 = vadd.xlane.f32.xlu0 %v3624
      %v3691 = vpop.xlane.xlu0 %3690
      %3692 = vadd.xlane.f32.xlu0 %v3625
      %v3693 = vpop.xlane.xlu0 %3692
      %3694 = vadd.xlane.f32.xlu0 %v3626
      %v3695 = vpop.xlane.xlu0 %3694
      %3696 = vadd.xlane.f32.xlu0 %v3627
      %v3697 = vpop.xlane.xlu0 %3696
      %3698 = vadd.xlane.f32.xlu0 %v3628
      %v3699 = vpop.xlane.xlu0 %3698
      %3700 = vadd.xlane.f32.xlu0 %v3629
      %v3701 = vpop.xlane.xlu0 %3700
      %3702 = vadd.xlane.f32.xlu0 %v3630
      %v3703 = vpop.xlane.xlu0 %3702
      %3704 = vadd.xlane.f32.xlu0 %v3631
      %v3705 = vpop.xlane.xlu0 %3704
      %3706 = vadd.xlane.f32.xlu0 %v3632
      %v3707 = vpop.xlane.xlu0 %3706
      %3708 = vadd.xlane.f32.xlu0 %v3633
      %v3709 = vpop.xlane.xlu0 %3708
      %3710 = vadd.xlane.f32.xlu0 %v3634
      %v3711 = vpop.xlane.xlu0 %3710
      %3712 = vadd.xlane.f32.xlu0 %v3635
      %v3713 = vpop.xlane.xlu0 %3712
      %3714 = vadd.xlane.f32.xlu0 %v3636
      %v3715 = vpop.xlane.xlu0 %3714
      %3716 = vadd.xlane.f32.xlu0 %v3637
      %v3717 = vpop.xlane.xlu0 %3716
      %3718 = vadd.xlane.f32.xlu0 %v3638
      %v3719 = vpop.xlane.xlu0 %3718
      %3720 = vadd.xlane.f32.xlu0 %v3639
      %v3721 = vpop.xlane.xlu0 %3720
      %3722 = vadd.xlane.f32.xlu0 %v3640
      %v3723 = vpop.xlane.xlu0 %3722
      %3724 = vadd.xlane.f32.xlu0 %v3641
      %v3725 = vpop.xlane.xlu0 %3724
      %3726 = vadd.xlane.f32.xlu0 %v3642
      %v3727 = vpop.xlane.xlu0 %3726
      %3728 = vadd.xlane.f32.xlu0 %v3643
      %v3729 = vpop.xlane.xlu0 %3728
      %3730 = vadd.xlane.f32.xlu0 %v3644
      %v3731 = vpop.xlane.xlu0 %3730
      %3732 = vadd.xlane.f32.xlu0 %v3645
      %v3733 = vpop.xlane.xlu0 %3732
      %3734 = vadd.xlane.f32.xlu0 %v3646
      %v3735 = vpop.xlane.xlu0 %3734
      %3736 = vadd.xlane.f32.xlu0 %v3647
      %v3737 = vpop.xlane.xlu0 %3736
      %3738 = vadd.xlane.f32.xlu0 %v3648
      %v3739 = vpop.xlane.xlu0 %3738
      %3740 = vadd.xlane.f32.xlu0 %v3649
      %v3741 = vpop.xlane.xlu0 %3740
      %3742 = vadd.xlane.f32.xlu0 %v3650
      %v3743 = vpop.xlane.xlu0 %3742
      %3744 = vadd.xlane.f32.xlu0 %v3651
      %v3745 = vpop.xlane.xlu0 %3744
      %3746 = vadd.xlane.f32.xlu0 %v3652
      %v3747 = vpop.xlane.xlu0 %3746
      %3748 = vadd.xlane.f32.xlu0 %v3653
      %v3749 = vpop.xlane.xlu0 %3748
      %3750 = vadd.xlane.f32.xlu0 %v3654
      %v3751 = vpop.xlane.xlu0 %3750
      %3752 = vadd.xlane.f32.xlu0 %v3655
      %v3753 = vpop.xlane.xlu0 %3752
      %3754 = vadd.xlane.f32.xlu0 %v3656
      %v3755 = vpop.xlane.xlu0 %3754
      %3756 = vadd.xlane.f32.xlu0 %v3657
      %v3757 = vpop.xlane.xlu0 %3756
      %3758 = vadd.xlane.f32.xlu0 %v3658
      %v3759 = vpop.xlane.xlu0 %3758
      %3760 = vadd.xlane.f32.xlu0 %v3659
      %v3761 = vpop.xlane.xlu0 %3760
      %3762 = vadd.xlane.f32.xlu0 %v3660
      %v3763 = vpop.xlane.xlu0 %3762
      %3764 = vadd.xlane.f32.xlu0 %v3661
      %v3765 = vpop.xlane.xlu0 %3764
      %3766 = vadd.xlane.f32.xlu0 %v3662
      %v3767 = vpop.xlane.xlu0 %3766
      %3768 = vadd.xlane.f32.xlu0 %v3663
      %v3769 = vpop.xlane.xlu0 %3768
      %3770 = vadd.xlane.f32.xlu0 %v3664
      %v3771 = vpop.xlane.xlu0 %3770
      %3772 = vadd.xlane.f32.xlu0 %v3665
      %v3773 = vpop.xlane.xlu0 %3772
      %3774 = vadd.xlane.f32.xlu0 %v3666
      %v3775 = vpop.xlane.xlu0 %3774
      %3776 = vadd.xlane.f32.xlu0 %v3667
      %v3777 = vpop.xlane.xlu0 %3776
      %3778 = vadd.xlane.f32.xlu0 %v3668
      %v3779 = vpop.xlane.xlu0 %3778
      %3780 = vadd.xlane.f32.xlu0 %v3669
      %v3781 = vpop.xlane.xlu0 %3780
      %3782 = vadd.xlane.f32.xlu0 %v3670
      %v3783 = vpop.xlane.xlu0 %3782
      %3784 = vadd.xlane.f32.xlu0 %v3671
      %v3785 = vpop.xlane.xlu0 %3784
      %3786 = vadd.xlane.f32.xlu0 %v3672
      %v3787 = vpop.xlane.xlu0 %3786
      %3788 = vadd.xlane.f32.xlu0 %v3673
      %v3789 = vpop.xlane.xlu0 %3788
      %3790 = vadd.xlane.f32.xlu0 %v3674
      %v3791 = vpop.xlane.xlu0 %3790
      %3792 = vadd.xlane.f32.xlu0 %v3675
      %v3793 = vpop.xlane.xlu0 %3792
      %3794 = vadd.xlane.f32.xlu0 %v3676
      %v3795 = vpop.xlane.xlu0 %3794
      %3796 = vadd.xlane.f32.xlu0 %v3677
      %v3797 = vpop.xlane.xlu0 %3796
      %3798 = vadd.xlane.f32.xlu0 %v3678
      %v3799 = vpop.xlane.xlu0 %3798
      %3800 = vadd.xlane.f32.xlu0 %v3679
      %v3801 = vpop.xlane.xlu0 %3800
      %3802 = vadd.xlane.f32.xlu0 %v3680
      %v3803 = vpop.xlane.xlu0 %3802
      %3804 = vadd.xlane.f32.xlu0 %v3681
      %v3805 = vpop.xlane.xlu0 %3804
      %3806 = vadd.xlane.f32.xlu0 %v3682
      %v3807 = vpop.xlane.xlu0 %3806
      %3808 = vadd.xlane.f32.xlu0 %v3683
      %v3809 = vpop.xlane.xlu0 %3808
      %3810 = vadd.xlane.f32.xlu0 %v3684
      %v3811 = vpop.xlane.xlu0 %3810
      %3812 = vadd.xlane.f32.xlu0 %v3685
      %v3813 = vpop.xlane.xlu0 %3812
      %v3814 = vmul.f32 %v3687, %v3493
      %v3815 = vmul.f32 %v3689, %v3493
      %v3816 = vmul.f32 %v3691, %v3493
      %v3817 = vmul.f32 %v3693, %v3493
      %v3818 = vmul.f32 %v3695, %v3493
      %v3819 = vmul.f32 %v3697, %v3493
      %v3820 = vmul.f32 %v3699, %v3493
      %v3821 = vmul.f32 %v3701, %v3493
      %v3822 = vmul.f32 %v3703, %v3493
      %v3823 = vmul.f32 %v3705, %v3493
      %v3824 = vmul.f32 %v3707, %v3493
      %v3825 = vmul.f32 %v3709, %v3493
      %v3826 = vmul.f32 %v3711, %v3493
      %v3827 = vmul.f32 %v3713, %v3493
      %v3828 = vmul.f32 %v3715, %v3493
      %v3829 = vmul.f32 %v3717, %v3493
      %v3830 = vmul.f32 %v3719, %v3493
      %v3831 = vmul.f32 %v3721, %v3493
      %v3832 = vmul.f32 %v3723, %v3493
      %v3833 = vmul.f32 %v3725, %v3493
      %v3834 = vmul.f32 %v3727, %v3493
      %v3835 = vmul.f32 %v3729, %v3493
      %v3836 = vmul.f32 %v3731, %v3493
      %v3837 = vmul.f32 %v3733, %v3493
      %v3838 = vmul.f32 %v3735, %v3493
      %v3839 = vmul.f32 %v3737, %v3493
      %v3840 = vmul.f32 %v3739, %v3493
      %v3841 = vmul.f32 %v3741, %v3493
      %v3842 = vmul.f32 %v3743, %v3493
      %v3843 = vmul.f32 %v3745, %v3493
      %v3844 = vmul.f32 %v3747, %v3493
      %v3845 = vmul.f32 %v3749, %v3493
      %v3846 = vmul.f32 %v3751, %v3493
      %v3847 = vmul.f32 %v3753, %v3493
      %v3848 = vmul.f32 %v3755, %v3493
      %v3849 = vmul.f32 %v3757, %v3493
      %v3850 = vmul.f32 %v3759, %v3493
      %v3851 = vmul.f32 %v3761, %v3493
      %v3852 = vmul.f32 %v3763, %v3493
      %v3853 = vmul.f32 %v3765, %v3493
      %v3854 = vmul.f32 %v3767, %v3493
      %v3855 = vmul.f32 %v3769, %v3493
      %v3856 = vmul.f32 %v3771, %v3493
      %v3857 = vmul.f32 %v3773, %v3493
      %v3858 = vmul.f32 %v3775, %v3493
      %v3859 = vmul.f32 %v3777, %v3493
      %v3860 = vmul.f32 %v3779, %v3493
      %v3861 = vmul.f32 %v3781, %v3493
      %v3862 = vmul.f32 %v3783, %v3493
      %v3863 = vmul.f32 %v3785, %v3493
      %v3864 = vmul.f32 %v3787, %v3493
      %v3865 = vmul.f32 %v3789, %v3493
      %v3866 = vmul.f32 %v3791, %v3493
      %v3867 = vmul.f32 %v3793, %v3493
      %v3868 = vmul.f32 %v3795, %v3493
      %v3869 = vmul.f32 %v3797, %v3493
      %v3870 = vmul.f32 %v3799, %v3493
      %v3871 = vmul.f32 %v3801, %v3493
      %v3872 = vmul.f32 %v3803, %v3493
      %v3873 = vmul.f32 %v3805, %v3493
      %v3874 = vmul.f32 %v3807, %v3493
      %v3875 = vmul.f32 %v3809, %v3493
      %v3876 = vmul.f32 %v3811, %v3493
      %v3877 = vmul.f32 %v3813, %v3493
      %v3878 = vadd.f32 %v3814, 1e-05
      %v3879 = vadd.f32 %v3815, 1e-05
      %v3880 = vadd.f32 %v3816, 1e-05
      %v3881 = vadd.f32 %v3817, 1e-05
      %v3882 = vadd.f32 %v3818, 1e-05
      %v3883 = vadd.f32 %v3819, 1e-05
      %v3884 = vadd.f32 %v3820, 1e-05
      %v3885 = vadd.f32 %v3821, 1e-05
      %v3886 = vadd.f32 %v3822, 1e-05
      %v3887 = vadd.f32 %v3823, 1e-05
      %v3888 = vadd.f32 %v3824, 1e-05
      %v3889 = vadd.f32 %v3825, 1e-05
      %v3890 = vadd.f32 %v3826, 1e-05
      %v3891 = vadd.f32 %v3827, 1e-05
      %v3892 = vadd.f32 %v3828, 1e-05
      %v3893 = vadd.f32 %v3829, 1e-05
      %v3894 = vadd.f32 %v3830, 1e-05
      %v3895 = vadd.f32 %v3831, 1e-05
      %v3896 = vadd.f32 %v3832, 1e-05
      %v3897 = vadd.f32 %v3833, 1e-05
      %v3898 = vadd.f32 %v3834, 1e-05
      %v3899 = vadd.f32 %v3835, 1e-05
      %v3900 = vadd.f32 %v3836, 1e-05
      %v3901 = vadd.f32 %v3837, 1e-05
      %v3902 = vadd.f32 %v3838, 1e-05
      %v3903 = vadd.f32 %v3839, 1e-05
      %v3904 = vadd.f32 %v3840, 1e-05
      %v3905 = vadd.f32 %v3841, 1e-05
      %v3906 = vadd.f32 %v3842, 1e-05
      %v3907 = vadd.f32 %v3843, 1e-05
      %v3908 = vadd.f32 %v3844, 1e-05
      %v3909 = vadd.f32 %v3845, 1e-05
      %v3910 = vadd.f32 %v3846, 1e-05
      %v3911 = vadd.f32 %v3847, 1e-05
      %v3912 = vadd.f32 %v3848, 1e-05
      %v3913 = vadd.f32 %v3849, 1e-05
      %v3914 = vadd.f32 %v3850, 1e-05
      %v3915 = vadd.f32 %v3851, 1e-05
      %v3916 = vadd.f32 %v3852, 1e-05
      %v3917 = vadd.f32 %v3853, 1e-05
      %v3918 = vadd.f32 %v3854, 1e-05
      %v3919 = vadd.f32 %v3855, 1e-05
      %v3920 = vadd.f32 %v3856, 1e-05
      %v3921 = vadd.f32 %v3857, 1e-05
      %v3922 = vadd.f32 %v3858, 1e-05
      %v3923 = vadd.f32 %v3859, 1e-05
      %v3924 = vadd.f32 %v3860, 1e-05
      %v3925 = vadd.f32 %v3861, 1e-05
      %v3926 = vadd.f32 %v3862, 1e-05
      %v3927 = vadd.f32 %v3863, 1e-05
      %v3928 = vadd.f32 %v3864, 1e-05
      %v3929 = vadd.f32 %v3865, 1e-05
      %v3930 = vadd.f32 %v3866, 1e-05
      %v3931 = vadd.f32 %v3867, 1e-05
      %v3932 = vadd.f32 %v3868, 1e-05
      %v3933 = vadd.f32 %v3869, 1e-05
      %v3934 = vadd.f32 %v3870, 1e-05
      %v3935 = vadd.f32 %v3871, 1e-05
      %v3936 = vadd.f32 %v3872, 1e-05
      %v3937 = vadd.f32 %v3873, 1e-05
      %v3938 = vadd.f32 %v3874, 1e-05
      %v3939 = vadd.f32 %v3875, 1e-05
      %v3940 = vadd.f32 %v3876, 1e-05
      %v3941 = vadd.f32 %v3877, 1e-05
      %v3942 = vrsqrt.pop %v3878
      %v3943 = vrsqrt.pop %v3879
      %v3944 = vrsqrt.pop %v3880
      %v3945 = vrsqrt.pop %v3881
      %v3946 = vrsqrt.pop %v3882
      %v3947 = vrsqrt.pop %v3883
      %v3948 = vrsqrt.pop %v3884
      %v3949 = vrsqrt.pop %v3885
      %v3950 = vrsqrt.pop %v3886
      %v3951 = vrsqrt.pop %v3887
      %v3952 = vrsqrt.pop %v3888
      %v3953 = vrsqrt.pop %v3889
      %v3954 = vrsqrt.pop %v3890
      %v3955 = vrsqrt.pop %v3891
      %v3956 = vrsqrt.pop %v3892
      %v3957 = vrsqrt.pop %v3893
      %v3958 = vrsqrt.pop %v3894
      %v3959 = vrsqrt.pop %v3895
      %v3960 = vrsqrt.pop %v3896
      %v3961 = vrsqrt.pop %v3897
      %v3962 = vrsqrt.pop %v3898
      %v3963 = vrsqrt.pop %v3899
      %v3964 = vrsqrt.pop %v3900
      %v3965 = vrsqrt.pop %v3901
      %v3966 = vrsqrt.pop %v3902
      %v3967 = vrsqrt.pop %v3903
      %v3968 = vrsqrt.pop %v3904
      %v3969 = vrsqrt.pop %v3905
      %v3970 = vrsqrt.pop %v3906
      %v3971 = vrsqrt.pop %v3907
      %v3972 = vrsqrt.pop %v3908
      %v3973 = vrsqrt.pop %v3909
      %v3974 = vrsqrt.pop %v3910
      %v3975 = vrsqrt.pop %v3911
      %v3976 = vrsqrt.pop %v3912
      %v3977 = vrsqrt.pop %v3913
      %v3978 = vrsqrt.pop %v3914
      %v3979 = vrsqrt.pop %v3915
      %v3980 = vrsqrt.pop %v3916
      %v3981 = vrsqrt.pop %v3917
      %v3982 = vrsqrt.pop %v3918
      %v3983 = vrsqrt.pop %v3919
      %v3984 = vrsqrt.pop %v3920
      %v3985 = vrsqrt.pop %v3921
      %v3986 = vrsqrt.pop %v3922
      %v3987 = vrsqrt.pop %v3923
      %v3988 = vrsqrt.pop %v3924
      %v3989 = vrsqrt.pop %v3925
      %v3990 = vrsqrt.pop %v3926
      %v3991 = vrsqrt.pop %v3927
      %v3992 = vrsqrt.pop %v3928
      %v3993 = vrsqrt.pop %v3929
      %v3994 = vrsqrt.pop %v3930
      %v3995 = vrsqrt.pop %v3931
      %v3996 = vrsqrt.pop %v3932
      %v3997 = vrsqrt.pop %v3933
      %v3998 = vrsqrt.pop %v3934
      %v3999 = vrsqrt.pop %v3935
      %v4000 = vrsqrt.pop %v3936
      %v4001 = vrsqrt.pop %v3937
      %v4002 = vrsqrt.pop %v3938
      %v4003 = vrsqrt.pop %v3939
      %v4004 = vrsqrt.pop %v3940
      %v4005 = vrsqrt.pop %v3941
      %v4006 = vmul.f32 %v3558, %v3942
      %v4007 = vmul.f32 %v3559, %v3943
      %v4008 = vmul.f32 %v3560, %v3944
      %v4009 = vmul.f32 %v3561, %v3945
      %v4010 = vmul.f32 %v3562, %v3946
      %v4011 = vmul.f32 %v3563, %v3947
      %v4012 = vmul.f32 %v3564, %v3948
      %v4013 = vmul.f32 %v3565, %v3949
      %v4014 = vmul.f32 %v3566, %v3950
      %v4015 = vmul.f32 %v3567, %v3951
      %v4016 = vmul.f32 %v3568, %v3952
      %v4017 = vmul.f32 %v3569, %v3953
      %v4018 = vmul.f32 %v3570, %v3954
      %v4019 = vmul.f32 %v3571, %v3955
      %v4020 = vmul.f32 %v3572, %v3956
      %v4021 = vmul.f32 %v3573, %v3957
      %v4022 = vmul.f32 %v3574, %v3958
      %v4023 = vmul.f32 %v3575, %v3959
      %v4024 = vmul.f32 %v3576, %v3960
      %v4025 = vmul.f32 %v3577, %v3961
      %v4026 = vmul.f32 %v3578, %v3962
      %v4027 = vmul.f32 %v3579, %v3963
      %v4028 = vmul.f32 %v3580, %v3964
      %v4029 = vmul.f32 %v3581, %v3965
      %v4030 = vmul.f32 %v3582, %v3966
      %v4031 = vmul.f32 %v3583, %v3967
      %v4032 = vmul.f32 %v3584, %v3968
      %v4033 = vmul.f32 %v3585, %v3969
      %v4034 = vmul.f32 %v3586, %v3970
      %v4035 = vmul.f32 %v3587, %v3971
      %v4036 = vmul.f32 %v3588, %v3972
      %v4037 = vmul.f32 %v3589, %v3973
      %v4038 = vmul.f32 %v3590, %v3974
      %v4039 = vmul.f32 %v3591, %v3975
      %v4040 = vmul.f32 %v3592, %v3976
      %v4041 = vmul.f32 %v3593, %v3977
      %v4042 = vmul.f32 %v3594, %v3978
      %v4043 = vmul.f32 %v3595, %v3979
      %v4044 = vmul.f32 %v3596, %v3980
      %v4045 = vmul.f32 %v3597, %v3981
      %v4046 = vmul.f32 %v3598, %v3982
      %v4047 = vmul.f32 %v3599, %v3983
      %v4048 = vmul.f32 %v3600, %v3984
      %v4049 = vmul.f32 %v3601, %v3985
      %v4050 = vmul.f32 %v3602, %v3986
      %v4051 = vmul.f32 %v3603, %v3987
      %v4052 = vmul.f32 %v3604, %v3988
      %v4053 = vmul.f32 %v3605, %v3989
      %v4054 = vmul.f32 %v3606, %v3990
      %v4055 = vmul.f32 %v3607, %v3991
      %v4056 = vmul.f32 %v3608, %v3992
      %v4057 = vmul.f32 %v3609, %v3993
      %v4058 = vmul.f32 %v3610, %v3994
      %v4059 = vmul.f32 %v3611, %v3995
      %v4060 = vmul.f32 %v3612, %v3996
      %v4061 = vmul.f32 %v3613, %v3997
      %v4062 = vmul.f32 %v3614, %v3998
      %v4063 = vmul.f32 %v3615, %v3999
      %v4064 = vmul.f32 %v3616, %v4000
      %v4065 = vmul.f32 %v3617, %v4001
      %v4066 = vmul.f32 %v3618, %v4002
      %v4067 = vmul.f32 %v3619, %v4003
      %v4068 = vmul.f32 %v3620, %v4004
      %v4069 = vmul.f32 %v3621, %v4005
      %v4071 = vlaneseq
      %v4072 = vshrl.u32 %v4071, 7
      %v4073 = vsub.s32 0, %v4072
      %v4074 = vrot.slane %v3363, %v4073
      %v4076 = vmul.f32 %v4006, %v4074
      %v4077 = vmul.f32 %v4007, %v4074
      %v4078 = vmul.f32 %v4008, %v4074
      %v4079 = vmul.f32 %v4009, %v4074
      %v4080 = vmul.f32 %v4010, %v4074
      %v4081 = vmul.f32 %v4011, %v4074
      %v4082 = vmul.f32 %v4012, %v4074
      %v4083 = vmul.f32 %v4013, %v4074
      %v4084 = vmul.f32 %v4014, %v4074
      %v4085 = vmul.f32 %v4015, %v4074
      %v4086 = vmul.f32 %v4016, %v4074
      %v4087 = vmul.f32 %v4017, %v4074
      %v4088 = vmul.f32 %v4018, %v4074
      %v4089 = vmul.f32 %v4019, %v4074
      %v4090 = vmul.f32 %v4020, %v4074
      %v4091 = vmul.f32 %v4021, %v4074
      %v4092 = vmul.f32 %v4022, %v4074
      %v4093 = vmul.f32 %v4023, %v4074
      %v4094 = vmul.f32 %v4024, %v4074
      %v4095 = vmul.f32 %v4025, %v4074
      %v4096 = vmul.f32 %v4026, %v4074
      %v4097 = vmul.f32 %v4027, %v4074
      %v4098 = vmul.f32 %v4028, %v4074
      %v4099 = vmul.f32 %v4029, %v4074
      %v4100 = vmul.f32 %v4030, %v4074
      %v4101 = vmul.f32 %v4031, %v4074
      %v4102 = vmul.f32 %v4032, %v4074
      %v4103 = vmul.f32 %v4033, %v4074
      %v4104 = vmul.f32 %v4034, %v4074
      %v4105 = vmul.f32 %v4035, %v4074
      %v4106 = vmul.f32 %v4036, %v4074
      %v4107 = vmul.f32 %v4037, %v4074
      %v4108 = vmul.f32 %v4038, %v4074
      %v4109 = vmul.f32 %v4039, %v4074
      %v4110 = vmul.f32 %v4040, %v4074
      %v4111 = vmul.f32 %v4041, %v4074
      %v4112 = vmul.f32 %v4042, %v4074
      %v4113 = vmul.f32 %v4043, %v4074
      %v4114 = vmul.f32 %v4044, %v4074
      %v4115 = vmul.f32 %v4045, %v4074
      %v4116 = vmul.f32 %v4046, %v4074
      %v4117 = vmul.f32 %v4047, %v4074
      %v4118 = vmul.f32 %v4048, %v4074
      %v4119 = vmul.f32 %v4049, %v4074
      %v4120 = vmul.f32 %v4050, %v4074
      %v4121 = vmul.f32 %v4051, %v4074
      %v4122 = vmul.f32 %v4052, %v4074
      %v4123 = vmul.f32 %v4053, %v4074
      %v4124 = vmul.f32 %v4054, %v4074
      %v4125 = vmul.f32 %v4055, %v4074
      %v4126 = vmul.f32 %v4056, %v4074
      %v4127 = vmul.f32 %v4057, %v4074
      %v4128 = vmul.f32 %v4058, %v4074
      %v4129 = vmul.f32 %v4059, %v4074
      %v4130 = vmul.f32 %v4060, %v4074
      %v4131 = vmul.f32 %v4061, %v4074
      %v4132 = vmul.f32 %v4062, %v4074
      %v4133 = vmul.f32 %v4063, %v4074
      %v4134 = vmul.f32 %v4064, %v4074
      %v4135 = vmul.f32 %v4065, %v4074
      %v4136 = vmul.f32 %v4066, %v4074
      %v4137 = vmul.f32 %v4067, %v4074
      %v4138 = vmul.f32 %v4068, %v4074
      %v4139 = vmul.f32 %v4069, %v4074
      %v4141 = vlaneseq
      %v4142 = vshrl.u32 %v4141, 7
      %v4143 = vsub.s32 0, %v4142
      %v4144 = vrot.slane %v3364, %v4143
      %v4146 = vadd.f32 %v4076, %v4144
      %v4147 = vadd.f32 %v4077, %v4144
      %v4148 = vadd.f32 %v4078, %v4144
      %v4149 = vadd.f32 %v4079, %v4144
      %v4150 = vadd.f32 %v4080, %v4144
      %v4151 = vadd.f32 %v4081, %v4144
      %v4152 = vadd.f32 %v4082, %v4144
      %v4153 = vadd.f32 %v4083, %v4144
      %v4154 = vadd.f32 %v4084, %v4144
      %v4155 = vadd.f32 %v4085, %v4144
      %v4156 = vadd.f32 %v4086, %v4144
      %v4157 = vadd.f32 %v4087, %v4144
      %v4158 = vadd.f32 %v4088, %v4144
      %v4159 = vadd.f32 %v4089, %v4144
      %v4160 = vadd.f32 %v4090, %v4144
      %v4161 = vadd.f32 %v4091, %v4144
      %v4162 = vadd.f32 %v4092, %v4144
      %v4163 = vadd.f32 %v4093, %v4144
      %v4164 = vadd.f32 %v4094, %v4144
      %v4165 = vadd.f32 %v4095, %v4144
      %v4166 = vadd.f32 %v4096, %v4144
      %v4167 = vadd.f32 %v4097, %v4144
      %v4168 = vadd.f32 %v4098, %v4144
      %v4169 = vadd.f32 %v4099, %v4144
      %v4170 = vadd.f32 %v4100, %v4144
      %v4171 = vadd.f32 %v4101, %v4144
      %v4172 = vadd.f32 %v4102, %v4144
      %v4173 = vadd.f32 %v4103, %v4144
      %v4174 = vadd.f32 %v4104, %v4144
      %v4175 = vadd.f32 %v4105, %v4144
      %v4176 = vadd.f32 %v4106, %v4144
      %v4177 = vadd.f32 %v4107, %v4144
      %v4178 = vadd.f32 %v4108, %v4144
      %v4179 = vadd.f32 %v4109, %v4144
      %v4180 = vadd.f32 %v4110, %v4144
      %v4181 = vadd.f32 %v4111, %v4144
      %v4182 = vadd.f32 %v4112, %v4144
      %v4183 = vadd.f32 %v4113, %v4144
      %v4184 = vadd.f32 %v4114, %v4144
      %v4185 = vadd.f32 %v4115, %v4144
      %v4186 = vadd.f32 %v4116, %v4144
      %v4187 = vadd.f32 %v4117, %v4144
      %v4188 = vadd.f32 %v4118, %v4144
      %v4189 = vadd.f32 %v4119, %v4144
      %v4190 = vadd.f32 %v4120, %v4144
      %v4191 = vadd.f32 %v4121, %v4144
      %v4192 = vadd.f32 %v4122, %v4144
      %v4193 = vadd.f32 %v4123, %v4144
      %v4194 = vadd.f32 %v4124, %v4144
      %v4195 = vadd.f32 %v4125, %v4144
      %v4196 = vadd.f32 %v4126, %v4144
      %v4197 = vadd.f32 %v4127, %v4144
      %v4198 = vadd.f32 %v4128, %v4144
      %v4199 = vadd.f32 %v4129, %v4144
      %v4200 = vadd.f32 %v4130, %v4144
      %v4201 = vadd.f32 %v4131, %v4144
      %v4202 = vadd.f32 %v4132, %v4144
      %v4203 = vadd.f32 %v4133, %v4144
      %v4204 = vadd.f32 %v4134, %v4144
      %v4205 = vadd.f32 %v4135, %v4144
      %v4206 = vadd.f32 %v4136, %v4144
      %v4207 = vadd.f32 %v4137, %v4144
      %v4208 = vadd.f32 %v4138, %v4144
      %v4209 = vadd.f32 %v4139, %v4144
      %v4210 = vunpack.c.l.bf16 %v489
      %v4211 = vunpack.c.l.bf16 %v490
      %v4212 = vunpack.c.l.bf16 %v491
      %v4213 = vunpack.c.l.bf16 %v492
      %v4214 = vunpack.c.l.bf16 %v493
      %v4215 = vunpack.c.l.bf16 %v494
      %v4216 = vunpack.c.l.bf16 %v495
      %v4217 = vunpack.c.l.bf16 %v496
      %v4218 = vunpack.c.l.bf16 %v497
      %v4219 = vunpack.c.l.bf16 %v498
      %v4220 = vunpack.c.l.bf16 %v499
      %v4221 = vunpack.c.l.bf16 %v500
      %v4222 = vunpack.c.l.bf16 %v501
      %v4223 = vunpack.c.l.bf16 %v502
      %v4224 = vunpack.c.l.bf16 %v503
      %v4225 = vunpack.c.l.bf16 %v504
      %v4226 = vunpack.c.l.bf16 %v505
      %v4227 = vunpack.c.l.bf16 %v506
      %v4228 = vunpack.c.l.bf16 %v507
      %v4229 = vunpack.c.l.bf16 %v508
      %v4230 = vunpack.c.l.bf16 %v509
      %v4231 = vunpack.c.l.bf16 %v510
      %v4232 = vunpack.c.l.bf16 %v511
      %v4233 = vunpack.c.l.bf16 %v512
      %v4234 = vunpack.c.l.bf16 %v513
      %v4235 = vunpack.c.l.bf16 %v514
      %v4236 = vunpack.c.l.bf16 %v515
      %v4237 = vunpack.c.l.bf16 %v516
      %v4238 = vunpack.c.l.bf16 %v517
      %v4239 = vunpack.c.l.bf16 %v518
      %v4240 = vunpack.c.l.bf16 %v519
      %v4241 = vunpack.c.l.bf16 %v520
      %v4242 = vunpack.c.l.bf16 %v521
      %v4243 = vunpack.c.l.bf16 %v522
      %v4244 = vunpack.c.l.bf16 %v523
      %v4245 = vunpack.c.l.bf16 %v524
      %v4246 = vunpack.c.l.bf16 %v525
      %v4247 = vunpack.c.l.bf16 %v526
      %v4248 = vunpack.c.l.bf16 %v527
      %v4249 = vunpack.c.l.bf16 %v528
      %v4250 = vunpack.c.l.bf16 %v529
      %v4251 = vunpack.c.l.bf16 %v530
      %v4252 = vunpack.c.l.bf16 %v531
      %v4253 = vunpack.c.l.bf16 %v532
      %v4254 = vunpack.c.l.bf16 %v533
      %v4255 = vunpack.c.l.bf16 %v534
      %v4256 = vunpack.c.l.bf16 %v535
      %v4257 = vunpack.c.l.bf16 %v536
      %v4258 = vunpack.c.l.bf16 %v537
      %v4259 = vunpack.c.l.bf16 %v538
      %v4260 = vunpack.c.l.bf16 %v539
      %v4261 = vunpack.c.l.bf16 %v540
      %v4262 = vunpack.c.l.bf16 %v541
      %v4263 = vunpack.c.l.bf16 %v542
      %v4264 = vunpack.c.l.bf16 %v543
      %v4265 = vunpack.c.l.bf16 %v544
      %v4266 = vunpack.c.l.bf16 %v545
      %v4267 = vunpack.c.l.bf16 %v546
      %v4268 = vunpack.c.l.bf16 %v547
      %v4269 = vunpack.c.l.bf16 %v548
      %v4270 = vunpack.c.l.bf16 %v549
      %v4271 = vunpack.c.l.bf16 %v550
      %v4272 = vunpack.c.l.bf16 %v551
      %v4273 = vunpack.c.l.bf16 %v552
      %v4274 = vadd.f32 %v4146, %v4210
      %v4275 = vadd.f32 %v4147, %v4211
      %v4276 = vadd.f32 %v4148, %v4212
      %v4277 = vadd.f32 %v4149, %v4213
      %v4278 = vadd.f32 %v4150, %v4214
      %v4279 = vadd.f32 %v4151, %v4215
      %v4280 = vadd.f32 %v4152, %v4216
      %v4281 = vadd.f32 %v4153, %v4217
      %v4282 = vadd.f32 %v4154, %v4218
      %v4283 = vadd.f32 %v4155, %v4219
      %v4284 = vadd.f32 %v4156, %v4220
      %v4285 = vadd.f32 %v4157, %v4221
      %v4286 = vadd.f32 %v4158, %v4222
      %v4287 = vadd.f32 %v4159, %v4223
      %v4288 = vadd.f32 %v4160, %v4224
      %v4289 = vadd.f32 %v4161, %v4225
      %v4290 = vadd.f32 %v4162, %v4226
      %v4291 = vadd.f32 %v4163, %v4227
      %v4292 = vadd.f32 %v4164, %v4228
      %v4293 = vadd.f32 %v4165, %v4229
      %v4294 = vadd.f32 %v4166, %v4230
      %v4295 = vadd.f32 %v4167, %v4231
      %v4296 = vadd.f32 %v4168, %v4232
      %v4297 = vadd.f32 %v4169, %v4233
      %v4298 = vadd.f32 %v4170, %v4234
      %v4299 = vadd.f32 %v4171, %v4235
      %v4300 = vadd.f32 %v4172, %v4236
      %v4301 = vadd.f32 %v4173, %v4237
      %v4302 = vadd.f32 %v4174, %v4238
      %v4303 = vadd.f32 %v4175, %v4239
      %v4304 = vadd.f32 %v4176, %v4240
      %v4305 = vadd.f32 %v4177, %v4241
      %v4306 = vadd.f32 %v4178, %v4242
      %v4307 = vadd.f32 %v4179, %v4243
      %v4308 = vadd.f32 %v4180, %v4244
      %v4309 = vadd.f32 %v4181, %v4245
      %v4310 = vadd.f32 %v4182, %v4246
      %v4311 = vadd.f32 %v4183, %v4247
      %v4312 = vadd.f32 %v4184, %v4248
      %v4313 = vadd.f32 %v4185, %v4249
      %v4314 = vadd.f32 %v4186, %v4250
      %v4315 = vadd.f32 %v4187, %v4251
      %v4316 = vadd.f32 %v4188, %v4252
      %v4317 = vadd.f32 %v4189, %v4253
      %v4318 = vadd.f32 %v4190, %v4254
      %v4319 = vadd.f32 %v4191, %v4255
      %v4320 = vadd.f32 %v4192, %v4256
      %v4321 = vadd.f32 %v4193, %v4257
      %v4322 = vadd.f32 %v4194, %v4258
      %v4323 = vadd.f32 %v4195, %v4259
      %v4324 = vadd.f32 %v4196, %v4260
      %v4325 = vadd.f32 %v4197, %v4261
      %v4326 = vadd.f32 %v4198, %v4262
      %v4327 = vadd.f32 %v4199, %v4263
      %v4328 = vadd.f32 %v4200, %v4264
      %v4329 = vadd.f32 %v4201, %v4265
      %v4330 = vadd.f32 %v4202, %v4266
      %v4331 = vadd.f32 %v4203, %v4267
      %v4332 = vadd.f32 %v4204, %v4268
      %v4333 = vadd.f32 %v4205, %v4269
      %v4334 = vadd.f32 %v4206, %v4270
      %v4335 = vadd.f32 %v4207, %v4271
      %v4336 = vadd.f32 %v4208, %v4272
      %v4337 = vadd.f32 %v4209, %v4273
      %v4338 = vpack.c.bf16 %v4275, %v4274
      %v4339 = vpack.c.bf16 %v4277, %v4276
      %v4340 = vpack.c.bf16 %v4279, %v4278
      %v4341 = vpack.c.bf16 %v4281, %v4280
      %v4342 = vpack.c.bf16 %v4283, %v4282
      %v4343 = vpack.c.bf16 %v4285, %v4284
      %v4344 = vpack.c.bf16 %v4287, %v4286
      %v4345 = vpack.c.bf16 %v4289, %v4288
      %v4346 = vpack.c.bf16 %v4291, %v4290
      %v4347 = vpack.c.bf16 %v4293, %v4292
      %v4348 = vpack.c.bf16 %v4295, %v4294
      %v4349 = vpack.c.bf16 %v4297, %v4296
      %v4350 = vpack.c.bf16 %v4299, %v4298
      %v4351 = vpack.c.bf16 %v4301, %v4300
      %v4352 = vpack.c.bf16 %v4303, %v4302
      %v4353 = vpack.c.bf16 %v4305, %v4304
      %v4354 = vpack.c.bf16 %v4307, %v4306
      %v4355 = vpack.c.bf16 %v4309, %v4308
      %v4356 = vpack.c.bf16 %v4311, %v4310
      %v4357 = vpack.c.bf16 %v4313, %v4312
      %v4358 = vpack.c.bf16 %v4315, %v4314
      %v4359 = vpack.c.bf16 %v4317, %v4316
      %v4360 = vpack.c.bf16 %v4319, %v4318
      %v4361 = vpack.c.bf16 %v4321, %v4320
      %v4362 = vpack.c.bf16 %v4323, %v4322
      %v4363 = vpack.c.bf16 %v4325, %v4324
      %v4364 = vpack.c.bf16 %v4327, %v4326
      %v4365 = vpack.c.bf16 %v4329, %v4328
      %v4366 = vpack.c.bf16 %v4331, %v4330
      %v4367 = vpack.c.bf16 %v4333, %v4332
      %v4368 = vpack.c.bf16 %v4335, %v4334
      %v4369 = vpack.c.bf16 %v4337, %v4336
      %v4402 = vunpack.c.l.b16 %v4338
      %v4403 = vunpack.c.h.b16 %v4338
      %v4404 = vunpack.c.l.b16 %v4339
      %v4405 = vunpack.c.h.b16 %v4339
      %v4406 = vunpack.c.l.b16 %v4340
      %v4407 = vunpack.c.h.b16 %v4340
      %v4408 = vunpack.c.l.b16 %v4341
      %v4409 = vunpack.c.h.b16 %v4341
      %v4410 = vunpack.c.l.b16 %v4342
      %v4411 = vunpack.c.h.b16 %v4342
      %v4412 = vunpack.c.l.b16 %v4343
      %v4413 = vunpack.c.h.b16 %v4343
      %v4414 = vunpack.c.l.b16 %v4344
      %v4415 = vunpack.c.h.b16 %v4344
      %v4416 = vunpack.c.l.b16 %v4345
      %v4417 = vunpack.c.h.b16 %v4345
      %v4418 = vunpack.c.l.b16 %v4346
      %v4419 = vunpack.c.h.b16 %v4346
      %v4420 = vunpack.c.l.b16 %v4347
      %v4421 = vunpack.c.h.b16 %v4347
      %v4422 = vunpack.c.l.b16 %v4348
      %v4423 = vunpack.c.h.b16 %v4348
      %v4424 = vunpack.c.l.b16 %v4349
      %v4425 = vunpack.c.h.b16 %v4349
      %v4426 = vunpack.c.l.b16 %v4350
      %v4427 = vunpack.c.h.b16 %v4350
      %v4428 = vunpack.c.l.b16 %v4351
      %v4429 = vunpack.c.h.b16 %v4351
      %v4430 = vunpack.c.l.b16 %v4352
      %v4431 = vunpack.c.h.b16 %v4352
      %v4432 = vunpack.c.l.b16 %v4353
      %v4433 = vunpack.c.h.b16 %v4353
      %v4434 = vunpack.c.l.b16 %v4354
      %v4435 = vunpack.c.h.b16 %v4354
      %v4436 = vunpack.c.l.b16 %v4355
      %v4437 = vunpack.c.h.b16 %v4355
      %v4438 = vunpack.c.l.b16 %v4356
      %v4439 = vunpack.c.h.b16 %v4356
      %v4440 = vunpack.c.l.b16 %v4357
      %v4441 = vunpack.c.h.b16 %v4357
      %v4442 = vunpack.c.l.b16 %v4358
      %v4443 = vunpack.c.h.b16 %v4358
      %v4444 = vunpack.c.l.b16 %v4359
      %v4445 = vunpack.c.h.b16 %v4359
      %v4446 = vunpack.c.l.b16 %v4360
      %v4447 = vunpack.c.h.b16 %v4360
      %v4448 = vunpack.c.l.b16 %v4361
      %v4449 = vunpack.c.h.b16 %v4361
      %v4450 = vunpack.c.l.b16 %v4362
      %v4451 = vunpack.c.h.b16 %v4362
      %v4452 = vunpack.c.l.b16 %v4363
      %v4453 = vunpack.c.h.b16 %v4363
      %v4454 = vunpack.c.l.b16 %v4364
      %v4455 = vunpack.c.h.b16 %v4364
      %v4456 = vunpack.c.l.b16 %v4365
      %v4457 = vunpack.c.h.b16 %v4365
      %v4458 = vunpack.c.l.b16 %v4366
      %v4459 = vunpack.c.h.b16 %v4366
      %v4460 = vunpack.c.l.b16 %v4367
      %v4461 = vunpack.c.h.b16 %v4367
      %v4462 = vunpack.c.l.b16 %v4368
      %v4463 = vunpack.c.h.b16 %v4368
      %v4464 = vunpack.c.l.b16 %v4369
      %v4465 = vunpack.c.h.b16 %v4369
      %v4466 = vpack.c.b16 %v4402, %v4402
      %v4467 = vpack.c.b16 %v4403, %v4403
      %v4468 = vpack.c.b16 %v4404, %v4404
      %v4469 = vpack.c.b16 %v4405, %v4405
      %v4470 = vpack.c.b16 %v4406, %v4406
      %v4471 = vpack.c.b16 %v4407, %v4407
      %v4472 = vpack.c.b16 %v4408, %v4408
      %v4473 = vpack.c.b16 %v4409, %v4409
      %v4474 = vpack.c.b16 %v4410, %v4410
      %v4475 = vpack.c.b16 %v4411, %v4411
      %v4476 = vpack.c.b16 %v4412, %v4412
      %v4477 = vpack.c.b16 %v4413, %v4413
      %v4478 = vpack.c.b16 %v4414, %v4414
      %v4479 = vpack.c.b16 %v4415, %v4415
      %v4480 = vpack.c.b16 %v4416, %v4416
      %v4481 = vpack.c.b16 %v4417, %v4417
      %v4482 = vpack.c.b16 %v4418, %v4418
      %v4483 = vpack.c.b16 %v4419, %v4419
      %v4484 = vpack.c.b16 %v4420, %v4420
      %v4485 = vpack.c.b16 %v4421, %v4421
      %v4486 = vpack.c.b16 %v4422, %v4422
      %v4487 = vpack.c.b16 %v4423, %v4423
      %v4488 = vpack.c.b16 %v4424, %v4424
      %v4489 = vpack.c.b16 %v4425, %v4425
      %v4490 = vpack.c.b16 %v4426, %v4426
      %v4491 = vpack.c.b16 %v4427, %v4427
      %v4492 = vpack.c.b16 %v4428, %v4428
      %v4493 = vpack.c.b16 %v4429, %v4429
      %v4494 = vpack.c.b16 %v4430, %v4430
      %v4495 = vpack.c.b16 %v4431, %v4431
      %v4496 = vpack.c.b16 %v4432, %v4432
      %v4497 = vpack.c.b16 %v4433, %v4433
      %v4498 = vpack.c.b16 %v4434, %v4434
      %v4499 = vpack.c.b16 %v4435, %v4435
      %v4500 = vpack.c.b16 %v4436, %v4436
      %v4501 = vpack.c.b16 %v4437, %v4437
      %v4502 = vpack.c.b16 %v4438, %v4438
      %v4503 = vpack.c.b16 %v4439, %v4439
      %v4504 = vpack.c.b16 %v4440, %v4440
      %v4505 = vpack.c.b16 %v4441, %v4441
      %v4506 = vpack.c.b16 %v4442, %v4442
      %v4507 = vpack.c.b16 %v4443, %v4443
      %v4508 = vpack.c.b16 %v4444, %v4444
      %v4509 = vpack.c.b16 %v4445, %v4445
      %v4510 = vpack.c.b16 %v4446, %v4446
      %v4511 = vpack.c.b16 %v4447, %v4447
      %v4512 = vpack.c.b16 %v4448, %v4448
      %v4513 = vpack.c.b16 %v4449, %v4449
      %v4514 = vpack.c.b16 %v4450, %v4450
      %v4515 = vpack.c.b16 %v4451, %v4451
      %v4516 = vpack.c.b16 %v4452, %v4452
      %v4517 = vpack.c.b16 %v4453, %v4453
      %v4518 = vpack.c.b16 %v4454, %v4454
      %v4519 = vpack.c.b16 %v4455, %v4455
      %v4520 = vpack.c.b16 %v4456, %v4456
      %v4521 = vpack.c.b16 %v4457, %v4457
      %v4522 = vpack.c.b16 %v4458, %v4458
      %v4523 = vpack.c.b16 %v4459, %v4459
      %v4524 = vpack.c.b16 %v4460, %v4460
      %v4525 = vpack.c.b16 %v4461, %v4461
      %v4526 = vpack.c.b16 %v4462, %v4462
      %v4527 = vpack.c.b16 %v4463, %v4463
      %v4528 = vpack.c.b16 %v4464, %v4464
      %v4529 = vpack.c.b16 %v4465, %v4465
      %4594 = vst [vmem:[%s486] sm:$0xf] %v4466
      %4595 = vst [vmem:[%s486 + $0x4] sm:$0xf] %v4467
      %4596 = vst [vmem:[%s486 + $0x8] sm:$0xf] %v4468
      %4597 = vst [vmem:[%s486 + $0xc] sm:$0xf] %v4469
      %4598 = vst [vmem:[%s486 + $0x10] sm:$0xf] %v4470
      %4599 = vst [vmem:[%s486 + $0x14] sm:$0xf] %v4471
      %4600 = vst [vmem:[%s486 + $0x18] sm:$0xf] %v4472
      %4601 = vst [vmem:[%s486 + $0x1c] sm:$0xf] %v4473
      %4602 = vst [vmem:[%s486 + $0x20] sm:$0xf] %v4474
      %4603 = vst [vmem:[%s486 + $0x24] sm:$0xf] %v4475
      %4604 = vst [vmem:[%s486 + $0x28] sm:$0xf] %v4476
      %4605 = vst [vmem:[%s486 + $0x2c] sm:$0xf] %v4477
      %4606 = vst [vmem:[%s486 + $0x30] sm:$0xf] %v4478
      %4607 = vst [vmem:[%s486 + $0x34] sm:$0xf] %v4479
      %4608 = vst [vmem:[%s486 + $0x38] sm:$0xf] %v4480
      %4609 = vst [vmem:[%s486 + $0x3c] sm:$0xf] %v4481
      %4610 = vst [vmem:[%s486 + $0x40] sm:$0xf] %v4482
      %4611 = vst [vmem:[%s486 + $0x44] sm:$0xf] %v4483
      %4612 = vst [vmem:[%s486 + $0x48] sm:$0xf] %v4484
      %4613 = vst [vmem:[%s486 + $0x4c] sm:$0xf] %v4485
      %4614 = vst [vmem:[%s486 + $0x50] sm:$0xf] %v4486
      %4615 = vst [vmem:[%s486 + $0x54] sm:$0xf] %v4487
      %4616 = vst [vmem:[%s486 + $0x58] sm:$0xf] %v4488
      %4617 = vst [vmem:[%s486 + $0x5c] sm:$0xf] %v4489
      %4618 = vst [vmem:[%s486 + $0x60] sm:$0xf] %v4490
      %4619 = vst [vmem:[%s486 + $0x64] sm:$0xf] %v4491
      %4620 = vst [vmem:[%s486 + $0x68] sm:$0xf] %v4492
      %4621 = vst [vmem:[%s486 + $0x6c] sm:$0xf] %v4493
      %4622 = vst [vmem:[%s486 + $0x70] sm:$0xf] %v4494
      %4623 = vst [vmem:[%s486 + $0x74] sm:$0xf] %v4495
      %4624 = vst [vmem:[%s486 + $0x78] sm:$0xf] %v4496
      %4625 = vst [vmem:[%s486 + $0x7c] sm:$0xf] %v4497
      %4626 = vst [vmem:[%s486 + $0x80] sm:$0xf] %v4498
      %4627 = vst [vmem:[%s486 + $0x84] sm:$0xf] %v4499
      %4628 = vst [vmem:[%s486 + $0x88] sm:$0xf] %v4500
      %4629 = vst [vmem:[%s486 + $0x8c] sm:$0xf] %v4501
      %4630 = vst [vmem:[%s486 + $0x90] sm:$0xf] %v4502
      %4631 = vst [vmem:[%s486 + $0x94] sm:$0xf] %v4503
      %4632 = vst [vmem:[%s486 + $0x98] sm:$0xf] %v4504
      %4633 = vst [vmem:[%s486 + $0x9c] sm:$0xf] %v4505
      %4634 = vst [vmem:[%s486 + $0xa0] sm:$0xf] %v4506
      %4635 = vst [vmem:[%s486 + $0xa4] sm:$0xf] %v4507
      %4636 = vst [vmem:[%s486 + $0xa8] sm:$0xf] %v4508
      %4637 = vst [vmem:[%s486 + $0xac] sm:$0xf] %v4509
      %4638 = vst [vmem:[%s486 + $0xb0] sm:$0xf] %v4510
      %4639 = vst [vmem:[%s486 + $0xb4] sm:$0xf] %v4511
      %4640 = vst [vmem:[%s486 + $0xb8] sm:$0xf] %v4512
      %4641 = vst [vmem:[%s486 + $0xbc] sm:$0xf] %v4513
      %4642 = vst [vmem:[%s486 + $0xc0] sm:$0xf] %v4514
      %4643 = vst [vmem:[%s486 + $0xc4] sm:$0xf] %v4515
      %4644 = vst [vmem:[%s486 + $0xc8] sm:$0xf] %v4516
      %4645 = vst [vmem:[%s486 + $0xcc] sm:$0xf] %v4517
      %4646 = vst [vmem:[%s486 + $0xd0] sm:$0xf] %v4518
      %4647 = vst [vmem:[%s486 + $0xd4] sm:$0xf] %v4519
      %4648 = vst [vmem:[%s486 + $0xd8] sm:$0xf] %v4520
      %4649 = vst [vmem:[%s486 + $0xdc] sm:$0xf] %v4521
      %4650 = vst [vmem:[%s486 + $0xe0] sm:$0xf] %v4522
      %4651 = vst [vmem:[%s486 + $0xe4] sm:$0xf] %v4523
      %4652 = vst [vmem:[%s486 + $0xe8] sm:$0xf] %v4524
      %4653 = vst [vmem:[%s486 + $0xec] sm:$0xf] %v4525
      %4654 = vst [vmem:[%s486 + $0xf0] sm:$0xf] %v4526
      %4655 = vst [vmem:[%s486 + $0xf4] sm:$0xf] %v4527
      %4656 = vst [vmem:[%s486 + $0xf8] sm:$0xf] %v4528
      %4657 = vst [vmem:[%s486 + $0xfc] sm:$0xf] %v4529
      %s4658 = smul.u32 64, %s24
      %p4659 = scmp.lt.s32.totalorder %s4658, 127
      %s4660 = scalar_select %p4659, %s4658, 127
      %s4661 = smul.addr %s4660, 4
      %s4662 = scalar_lea.vmem %s13, %s4661
      // Predicated region
      $region73: #{meshgraphnet_forward.9} parent=71 // pred_check
        %p4663 = pneg %p330
      $region74: #{meshgraphnet_forward.9} parent=71 // pred_check_branch
        %4665 = sbr.rel (%p4663) target = $region76
      $region75: #{meshgraphnet_forward.9} parent=71 // pred_region
        %s4666 = smul.u32 64, %s24
      $region76: #{meshgraphnet_forward.9} parent=71 // pred_fallthru
        _
    $region72: #{meshgraphnet_forward.9} parent=5 // pred_fallthru
      _
    %p4667 = scmp.le.s32.totalorder 2, %s19
    // Predicated region
    $region77: #{meshgraphnet_forward.9} parent=5 // pred_check
      %p4668 = pneg %p4667
    $region78: #{meshgraphnet_forward.9} parent=5 // pred_check_branch
      %4670 = sbr.rel (%p4668) target = $region80
    $region79: #{meshgraphnet_forward.9} parent=5 // pred_region
      %s4671 = ssub.s32 %s19, 2
      // Predicated region
      $region81: #{meshgraphnet_forward.9} parent=79 // pred_check
        %p4672 = pneg %p336
      $region82: #{meshgraphnet_forward.9} parent=79 // pred_check_branch
        %4674 = sbr.rel (%p4672) target = $region84
      $region83: #{meshgraphnet_forward.9} parent=79 // pred_region
        %s4675 = smul.u32 64, %s25
        %p4676 = scmp.lt.s32.totalorder %s4675, 127
        %s4677 = scalar_select %p4676, %s4675, 127
        %s4678 = smul.addr %s4677, 4
        %s4679 = scalar_lea.vmem %s13, %s4678
      $region84: #{meshgraphnet_forward.9} parent=79 // pred_fallthru
        _
    $region80: #{meshgraphnet_forward.9} parent=5 // pred_fallthru
      _
  $region6: #{meshgraphnet_forward.9} parent=0 // loop_footer
    %s23 = sadd.s32 1, %s19
  $region7: #{meshgraphnet_forward.9} parent=0 // loop_footer_branch
    %18 = sbr.rel target = $region3
  $region8: #{meshgraphnet_forward.9} parent=0 // loop_exit
    _

// kernel: meshgraphnet_forward.13
$region0: #{meshgraphnet_forward.13}
  #allocation0 [shape = 'u32[]', space=smem, size = 0x4, offset = 0x4, fixed_abs, tag = 'smem constant byte address 0x4 - core index']
  #allocation1 [shape = 'u32[144,128]{1,0:T(1,128)}', space=vmem, size = 0x12000, scoped, tag = 'internal scratch']
  %s0 = inlined_call_operand.vmem [shape: bf16[256,128], index: 0, kind: input, shape index: {}]
  %s1 = inlined_call_operand.vmem [shape: bf16[128,128], index: 1, kind: input, shape index: {}]
  %s2 = inlined_call_operand.vmem [shape: f32[1,128], index: 2, kind: input, shape index: {}]
  %s3 = inlined_call_operand.vmem [shape: bf16[128,128], index: 3, kind: input, shape index: {}]
  %s4 = inlined_call_operand.vmem [shape: f32[1,128], index: 4, kind: input, shape index: {}]
  %s5 = inlined_call_operand.vmem [shape: bf16[128,128], index: 5, kind: input, shape index: {}]
  %s6 = inlined_call_operand.vmem [shape: f32[1,128], index: 6, kind: input, shape index: {}]
  %s7 = inlined_call_operand.vmem [shape: f32[256,128], index: 7, kind: output, shape index: {}]
  %s8 = sld [smem:[#allocation0]]
  $region61: #{meshgraphnet_forward.13} parent=0
    _
  %s10 = ssub.s32 1, %s8
  %s11 = scalar_select 0, %s10, %s8
  loop: start=0, step=1, limit=4
  $region2: #{meshgraphnet_forward.13} parent=0 // loop_pre_header
    _
  $region3: #{meshgraphnet_forward.13} parent=0 // loop_header
    %s13 = sphi 0, %s17
    %p14 = scmp.ge.s32.totalorder %s13, 4
    %s23 = sphi 0, %s25
    %s26 = sphi 0, %s23
    %s27 = sphi 0, %s26
    %s43 = sphi 0, %s27
    %s47 = sphi 0, %s47
    %s49 = sphi 0, %s47
    %s50 = sphi 0, %s49
    %s64 = sphi 0, %s50
    %s68 = sphi 0, %s68
    %s70 = sphi 0, %s68
    %s71 = sphi 0, %s70
    %s85 = sphi 0, %s71
    %s89 = sphi 0, %s89
    %s91 = sphi 0, %s89
    %s92 = sphi 0, %s91
    %s106 = sphi 0, %s92
    %s110 = sphi 0, %s110
    %s112 = sphi 0, %s110
    %s113 = sphi 0, %s112
    %s127 = sphi 0, %s113
    %s131 = sphi 0, %s131
    %s133 = sphi 0, %s131
    %s134 = sphi 0, %s133
    %s148 = sphi 0, %s134
    %s152 = sphi 0, %s152
    %s154 = sphi 0, %s152
    %s155 = sphi 0, %s154
    %s169 = sphi 0, %s155
    %s175 = sphi 0, %s177
    %s178 = sphi 0, %s175
    %s179 = sphi 0, %s178
    %s195 = sphi 0, %s179
  $region4: #{meshgraphnet_forward.13} parent=0 // loop_header_branch
    %16 = sbr.rel (%p14) target = $region8
  $region5: #{meshgraphnet_forward.13} parent=0 // loop_body
    %s18 = ssub.s32 %s13, 1
    %s19 = ssub.s32 %s13, 2
    %s20 = sadd.s32 %s13, 1
    %s21 = ssub.s32 %s13, %s20
    %p22 = scmp.eq.s32.totalorder %s21, 0
    %s24 = sadd.s32 %s23, 1
    %s25 = scalar_select %p22, %s23, %s24
    %p28 = pneg %p22
    %p29 = scmp.eq.s32.totalorder %s13, 1
    %p30 = por %p28, %p29
    %p31 = scmp.ne.s32.totalorder %s23, %s26
    %p32 = scmp.eq.s32.totalorder %s13, 0
    %p33 = por %p31, %p32
    %p34 = scmp.ne.s32.totalorder %s23, %s26
    %p35 = scmp.eq.s32.totalorder %s18, 1
    %p36 = por %p34, %p35
    %p37 = scmp.ne.s32.totalorder %s26, %s27
    %p38 = scmp.eq.s32.totalorder %s18, 0
    %p39 = por %p37, %p38
    %p40 = scmp.ne.s32.totalorder %s26, %s27
    %p41 = scmp.eq.s32.totalorder %s19, 1
    %p42 = por %p40, %p41
    %p44 = scmp.ne.s32.totalorder %s27, %s43
    %p45 = scmp.eq.s32.totalorder %s19, 0
    %p46 = por %p44, %p45
    %s48 = sadd.s32 %s47, 1
    %p51 = scmp.eq.s32.totalorder %s13, 1
    %p52 = scmp.ne.s32.totalorder %s47, %s49
    %p53 = scmp.eq.s32.totalorder %s13, 0
    %p54 = por %p52, %p53
    %p55 = scmp.ne.s32.totalorder %s47, %s49
    %p56 = scmp.eq.s32.totalorder %s18, 1
    %p57 = por %p55, %p56
    %p58 = scmp.ne.s32.totalorder %s49, %s50
    %p59 = scmp.eq.s32.totalorder %s18, 0
    %p60 = por %p58, %p59
    %p61 = scmp.ne.s32.totalorder %s49, %s50
    %p62 = scmp.eq.s32.totalorder %s19, 1
    %p63 = por %p61, %p62
    %p65 = scmp.ne.s32.totalorder %s50, %s64
    %p66 = scmp.eq.s32.totalorder %s19, 0
    %p67 = por %p65, %p66
    %s69 = sadd.s32 %s68, 1
    %p72 = scmp.eq.s32.totalorder %s13, 1
    %p73 = scmp.ne.s32.totalorder %s68, %s70
    %p74 = scmp.eq.s32.totalorder %s13, 0
    %p75 = por %p73, %p74
    %p76 = scmp.ne.s32.totalorder %s68, %s70
    %p77 = scmp.eq.s32.totalorder %s18, 1
    %p78 = por %p76, %p77
    %p79 = scmp.ne.s32.totalorder %s70, %s71
    %p80 = scmp.eq.s32.totalorder %s18, 0
    %p81 = por %p79, %p80
    %p82 = scmp.ne.s32.totalorder %s70, %s71
    %p83 = scmp.eq.s32.totalorder %s19, 1
    %p84 = por %p82, %p83
    %p86 = scmp.ne.s32.totalorder %s71, %s85
    %p87 = scmp.eq.s32.totalorder %s19, 0
    %p88 = por %p86, %p87
    %s90 = sadd.s32 %s89, 1
    %p93 = scmp.eq.s32.totalorder %s13, 1
    %p94 = scmp.ne.s32.totalorder %s89, %s91
    %p95 = scmp.eq.s32.totalorder %s13, 0
    %p96 = por %p94, %p95
    %p97 = scmp.ne.s32.totalorder %s89, %s91
    %p98 = scmp.eq.s32.totalorder %s18, 1
    %p99 = por %p97, %p98
    %p100 = scmp.ne.s32.totalorder %s91, %s92
    %p101 = scmp.eq.s32.totalorder %s18, 0
    %p102 = por %p100, %p101
    %p103 = scmp.ne.s32.totalorder %s91, %s92
    %p104 = scmp.eq.s32.totalorder %s19, 1
    %p105 = por %p103, %p104
    %p107 = scmp.ne.s32.totalorder %s92, %s106
    %p108 = scmp.eq.s32.totalorder %s19, 0
    %p109 = por %p107, %p108
    %s111 = sadd.s32 %s110, 1
    %p114 = scmp.eq.s32.totalorder %s13, 1
    %p115 = scmp.ne.s32.totalorder %s110, %s112
    %p116 = scmp.eq.s32.totalorder %s13, 0
    %p117 = por %p115, %p116
    %p118 = scmp.ne.s32.totalorder %s110, %s112
    %p119 = scmp.eq.s32.totalorder %s18, 1
    %p120 = por %p118, %p119
    %p121 = scmp.ne.s32.totalorder %s112, %s113
    %p122 = scmp.eq.s32.totalorder %s18, 0
    %p123 = por %p121, %p122
    %p124 = scmp.ne.s32.totalorder %s112, %s113
    %p125 = scmp.eq.s32.totalorder %s19, 1
    %p126 = por %p124, %p125
    %p128 = scmp.ne.s32.totalorder %s113, %s127
    %p129 = scmp.eq.s32.totalorder %s19, 0
    %p130 = por %p128, %p129
    %s132 = sadd.s32 %s131, 1
    %p135 = scmp.eq.s32.totalorder %s13, 1
    %p136 = scmp.ne.s32.totalorder %s131, %s133
    %p137 = scmp.eq.s32.totalorder %s13, 0
    %p138 = por %p136, %p137
    %p139 = scmp.ne.s32.totalorder %s131, %s133
    %p140 = scmp.eq.s32.totalorder %s18, 1
    %p141 = por %p139, %p140
    %p142 = scmp.ne.s32.totalorder %s133, %s134
    %p143 = scmp.eq.s32.totalorder %s18, 0
    %p144 = por %p142, %p143
    %p145 = scmp.ne.s32.totalorder %s133, %s134
    %p146 = scmp.eq.s32.totalorder %s19, 1
    %p147 = por %p145, %p146
    %p149 = scmp.ne.s32.totalorder %s134, %s148
    %p150 = scmp.eq.s32.totalorder %s19, 0
    %p151 = por %p149, %p150
    %s153 = sadd.s32 %s152, 1
    %p156 = scmp.eq.s32.totalorder %s13, 1
    %p157 = scmp.ne.s32.totalorder %s152, %s154
    %p158 = scmp.eq.s32.totalorder %s13, 0
    %p159 = por %p157, %p158
    %p160 = scmp.ne.s32.totalorder %s152, %s154
    %p161 = scmp.eq.s32.totalorder %s18, 1
    %p162 = por %p160, %p161
    %p163 = scmp.ne.s32.totalorder %s154, %s155
    %p164 = scmp.eq.s32.totalorder %s18, 0
    %p165 = por %p163, %p164
    %p166 = scmp.ne.s32.totalorder %s154, %s155
    %p167 = scmp.eq.s32.totalorder %s19, 1
    %p168 = por %p166, %p167
    %p170 = scmp.ne.s32.totalorder %s155, %s169
    %p171 = scmp.eq.s32.totalorder %s19, 0
    %p172 = por %p170, %p171
    %s173 = ssub.s32 %s13, %s20
    %p174 = scmp.eq.s32.totalorder %s173, 0
    %s176 = sadd.s32 %s175, 1
    %s177 = scalar_select %p174, %s175, %s176
    %p180 = pneg %p174
    %p181 = scmp.eq.s32.totalorder %s13, 1
    %p182 = por %p180, %p181
    %p183 = scmp.ne.s32.totalorder %s175, %s178
    %p184 = scmp.eq.s32.totalorder %s13, 0
    %p185 = por %p183, %p184
    %p186 = scmp.ne.s32.totalorder %s175, %s178
    %p187 = scmp.eq.s32.totalorder %s18, 1
    %p188 = por %p186, %p187
    %p189 = scmp.ne.s32.totalorder %s178, %s179
    %p190 = scmp.eq.s32.totalorder %s18, 0
    %p191 = por %p189, %p190
    %p192 = scmp.ne.s32.totalorder %s178, %s179
    %p193 = scmp.eq.s32.totalorder %s19, 1
    %p194 = por %p192, %p193
    %p196 = scmp.ne.s32.totalorder %s179, %s195
    %p197 = scmp.eq.s32.totalorder %s19, 0
    %p198 = por %p196, %p197
    %p199 = scmp.le.s32.totalorder 1, %s13
    %p200 = scmp.lt.s32.totalorder %s13, 3
    %p201 = pnand %p199, %p200
    %p202 = pneg %p201
    // Predicated region
    $region9: #{meshgraphnet_forward.13} parent=5 // pred_check
      _
    $region10: #{meshgraphnet_forward.13} parent=5 // pred_check_branch
      %204 = sbr.rel (%p201) target = $region12
    $region11: #{meshgraphnet_forward.13} parent=5 // pred_region
      %s205 = ssub.s32 %s13, 1
      // Predicated region
      $region13: #{meshgraphnet_forward.13} parent=11 // pred_check
        %p206 = pneg %p60
      $region14: #{meshgraphnet_forward.13} parent=11 // pred_check_branch
        %208 = sbr.rel (%p206) target = $region16
      $region15: #{meshgraphnet_forward.13} parent=11 // pred_region
        _
      $region16: #{meshgraphnet_forward.13} parent=11 // pred_fallthru
        _
      // Predicated region
      $region17: #{meshgraphnet_forward.13} parent=11 // pred_check
        %p209 = pneg %p81
      $region18: #{meshgraphnet_forward.13} parent=11 // pred_check_branch
        %211 = sbr.rel (%p209) target = $region20
      $region19: #{meshgraphnet_forward.13} parent=11 // pred_region
        _
      $region20: #{meshgraphnet_forward.13} parent=11 // pred_fallthru
        _
      // Predicated region
      $region21: #{meshgraphnet_forward.13} parent=11 // pred_check
        %p212 = pneg %p102
      $region22: #{meshgraphnet_forward.13} parent=11 // pred_check_branch
        %214 = sbr.rel (%p212) target = $region24
      $region23: #{meshgraphnet_forward.13} parent=11 // pred_region
        _
      $region24: #{meshgraphnet_forward.13} parent=11 // pred_fallthru
        _
      // Predicated region
      $region25: #{meshgraphnet_forward.13} parent=11 // pred_check
        %p215 = pneg %p123
      $region26: #{meshgraphnet_forward.13} parent=11 // pred_check_branch
        %217 = sbr.rel (%p215) target = $region28
      $region27: #{meshgraphnet_forward.13} parent=11 // pred_region
        _
      $region28: #{meshgraphnet_forward.13} parent=11 // pred_fallthru
        _
      // Predicated region
      $region29: #{meshgraphnet_forward.13} parent=11 // pred_check
        %p218 = pneg %p144
      $region30: #{meshgraphnet_forward.13} parent=11 // pred_check_branch
        %220 = sbr.rel (%p218) target = $region32
      $region31: #{meshgraphnet_forward.13} parent=11 // pred_region
        _
      $region32: #{meshgraphnet_forward.13} parent=11 // pred_fallthru
        _
      // Predicated region
      $region33: #{meshgraphnet_forward.13} parent=11 // pred_check
        %p221 = pneg %p165
      $region34: #{meshgraphnet_forward.13} parent=11 // pred_check_branch
        %223 = sbr.rel (%p221) target = $region36
      $region35: #{meshgraphnet_forward.13} parent=11 // pred_region
        _
      $region36: #{meshgraphnet_forward.13} parent=11 // pred_fallthru
        _
    $region12: #{meshgraphnet_forward.13} parent=5 // pred_fallthru
      _
    %p224 = scmp.lt.s32.totalorder %s13, 2
    // Predicated region
    $region37: #{meshgraphnet_forward.13} parent=5 // pred_check
      %p225 = pneg %p224
    $region38: #{meshgraphnet_forward.13} parent=5 // pred_check_branch
      %227 = sbr.rel (%p225) target = $region40
    $region39: #{meshgraphnet_forward.13} parent=5 // pred_region
      // Predicated region
      $region41: #{meshgraphnet_forward.13} parent=39 // pred_check
        %p228 = pneg %p33
      $region42: #{meshgraphnet_forward.13} parent=39 // pred_check_branch
        %230 = sbr.rel (%p228) target = $region44
      $region43: #{meshgraphnet_forward.13} parent=39 // pred_region
        %s231 = smul.u32 16, %s13
        %p232 = scmp.lt.s32.totalorder %s231, 31
        %s233 = scalar_select %p232, %s231, 31
        %s234 = smul.addr %s233, 4
        %s235 = scalar_lea.vmem %s0, %s234
        %s236 = smul.u32 16, %s13
      $region44: #{meshgraphnet_forward.13} parent=39 // pred_fallthru
        _
    $region40: #{meshgraphnet_forward.13} parent=5 // pred_fallthru
      _
    %p237 = scmp.le.s32.totalorder 1, %s13
    %p238 = scmp.lt.s32.totalorder %s13, 3
    %p239 = pnand %p237, %p238
    %p240 = pneg %p239
    // Predicated region
    $region45: #{meshgraphnet_forward.13} parent=5 // pred_check
      _
    $region46: #{meshgraphnet_forward.13} parent=5 // pred_check_branch
      %242 = sbr.rel (%p239) target = $region48
    $region47: #{meshgraphnet_forward.13} parent=5 // pred_region
      %s243 = ssub.s32 %s13, 1
      %s244 = smul.u32 16, %s18
      %p245 = scmp.lt.s32.totalorder %s244, 31
      %s246 = scalar_select %p245, %s244, 31
      %s247 = smul.addr %s246, 4
      %s248 = scalar_lea.vmem %s0, %s247
      %p249 = pneg %p39
      %p250 = pneg %p36
      %p251 = pneg %p60
      %p252 = pneg %p57
      %p253 = pneg %p81
      %p254 = pneg %p78
      %p255 = pneg %p102
      %p256 = pneg %p99
      %p257 = pneg %p123
      %p258 = pneg %p120
      %p259 = pneg %p144
      %p260 = pneg %p141
      %p261 = pneg %p165
      %p262 = pneg %p162
      %p263 = pneg %p191
      %p264 = pneg %p188
      %s265 = smul.u32 16, %s18
      %p266 = scmp.lt.s32.totalorder %s265, 31
      %s267 = scalar_select %p266, %s265, 31
      %s268 = smul.addr %s267, 8
      %s269 = scalar_lea.vmem %s7, %s268
      %s270 = smul.u32 16, %s18
      %p271 = scmp.lt.s32.totalorder %s270, 31
      %s272 = scalar_select %p271, %s270, 31
      %s273 = smul.addr %s272, 4
      %s274 = scalar_lea.vmem %s0, %s273
      %s275 = smul.u32 16, %s18
      %s276 = smul.u32 16, %s18
      %p277 = scmp.lt.s32.totalorder %s276, 31
      %s278 = scalar_select %p277, %s276, 31
      %s279 = smul.addr %s278, 8
      %s280 = scalar_lea.vmem %s7, %s279
      %s281 = smul.u32 16, %s18
      %v283 = vld [vmem:[%s274] sm:$0xf]
      %v284 = vld [vmem:[%s274 + $0x4] sm:$0xf]
      %v285 = vld [vmem:[%s274 + $0x8] sm:$0xf]
      %v286 = vld [vmem:[%s274 + $0xc] sm:$0xf]
      %v287 = vld [vmem:[%s274 + $0x10] sm:$0xf]
      %v288 = vld [vmem:[%s274 + $0x14] sm:$0xf]
      %v289 = vld [vmem:[%s274 + $0x18] sm:$0xf]
      %v290 = vld [vmem:[%s274 + $0x1c] sm:$0xf]
      %v291 = vld [vmem:[%s274 + $0x20] sm:$0xf]
      %v292 = vld [vmem:[%s274 + $0x24] sm:$0xf]
      %v293 = vld [vmem:[%s274 + $0x28] sm:$0xf]
      %v294 = vld [vmem:[%s274 + $0x2c] sm:$0xf]
      %v295 = vld [vmem:[%s274 + $0x30] sm:$0xf]
      %v296 = vld [vmem:[%s274 + $0x34] sm:$0xf]
      %v297 = vld [vmem:[%s274 + $0x38] sm:$0xf]
      %v298 = vld [vmem:[%s274 + $0x3c] sm:$0xf]
      %v299 = vld [vmem:[%s1] sm:$0xf]
      %v300 = vld [vmem:[%s1 + $0x4] sm:$0xf]
      %v301 = vld [vmem:[%s1 + $0x8] sm:$0xf]
      %v302 = vld [vmem:[%s1 + $0xc] sm:$0xf]
      %v303 = vld [vmem:[%s1 + $0x10] sm:$0xf]
      %v304 = vld [vmem:[%s1 + $0x14] sm:$0xf]
      %v305 = vld [vmem:[%s1 + $0x18] sm:$0xf]
      %v306 = vld [vmem:[%s1 + $0x1c] sm:$0xf]
      %v307 = vld [vmem:[%s1 + $0x20] sm:$0xf]
      %v308 = vld [vmem:[%s1 + $0x24] sm:$0xf]
      %v309 = vld [vmem:[%s1 + $0x28] sm:$0xf]
      %v310 = vld [vmem:[%s1 + $0x2c] sm:$0xf]
      %v311 = vld [vmem:[%s1 + $0x30] sm:$0xf]
      %v312 = vld [vmem:[%s1 + $0x34] sm:$0xf]
      %v313 = vld [vmem:[%s1 + $0x38] sm:$0xf]
      %v314 = vld [vmem:[%s1 + $0x3c] sm:$0xf]
      %v315 = vld [vmem:[%s2] sm:$0x1]
      %v317 = vlaneseq
      %v318 = vshrl.u32 %v317, 7
      %v319 = vsub.s32 0, %v318
      %v320 = vrot.slane %v315, %v319
      %v338 = vunpack.c.l.b16 %v283
      %v339 = vunpack.c.l.b16 %v284
      %v340 = vunpack.c.l.b16 %v285
      %v341 = vunpack.c.l.b16 %v286
      %v342 = vunpack.c.l.b16 %v287
      %v343 = vunpack.c.l.b16 %v288
      %v344 = vunpack.c.l.b16 %v289
      %v345 = vunpack.c.l.b16 %v290
      %v346 = vunpack.c.l.b16 %v291
      %v347 = vunpack.c.l.b16 %v292
      %v348 = vunpack.c.l.b16 %v293
      %v349 = vunpack.c.l.b16 %v294
      %v350 = vunpack.c.l.b16 %v295
      %v351 = vunpack.c.l.b16 %v296
      %v352 = vunpack.c.l.b16 %v297
      %v353 = vunpack.c.l.b16 %v298
      %v354 = vpack.c.b16 %v339, %v338
      %v355 = vpack.c.b16 %v341, %v340
      %v356 = vpack.c.b16 %v343, %v342
      %v357 = vpack.c.b16 %v345, %v344
      %v358 = vpack.c.b16 %v347, %v346
      %v359 = vpack.c.b16 %v349, %v348
      %v360 = vpack.c.b16 %v351, %v350
      %v361 = vpack.c.b16 %v353, %v352
      %v386 = vunpack.c.l.b16 %v299
      %v387 = vunpack.c.l.b16 %v300
      %v388 = vunpack.c.l.b16 %v301
      %v389 = vunpack.c.l.b16 %v302
      %v390 = vunpack.c.l.b16 %v303
      %v391 = vunpack.c.l.b16 %v304
      %v392 = vunpack.c.l.b16 %v305
      %v393 = vunpack.c.l.b16 %v306
      %v394 = vunpack.c.l.b16 %v307
      %v395 = vunpack.c.l.b16 %v308
      %v396 = vunpack.c.l.b16 %v309
      %v397 = vunpack.c.l.b16 %v310
      %v398 = vunpack.c.l.b16 %v311
      %v399 = vunpack.c.l.b16 %v312
      %v400 = vunpack.c.l.b16 %v313
      %v401 = vunpack.c.l.b16 %v314
      %v402 = vpack.c.b16 %v387, %v386
      %v403 = vpack.c.b16 %v389, %v388
      %v404 = vpack.c.b16 %v391, %v390
      %v405 = vpack.c.b16 %v393, %v392
      %v406 = vpack.c.b16 %v395, %v394
      %v407 = vpack.c.b16 %v397, %v396
      %v408 = vpack.c.b16 %v399, %v398
      %v409 = vpack.c.b16 %v401, %v400
      %418 = vmatprep.subr.bf16.mxu0 0
      %419 = vmatpush1.bf16.msra.mxu0 %v402
      %420 = vmatprep.subr.bf16.mxu0 0
      %421 = vmatpush1.bf16.msra.mxu0 %v403
      %422 = vmatprep.subr.bf16.mxu0 0
      %423 = vmatpush1.bf16.msra.mxu0 %v404
      %424 = vmatprep.subr.bf16.mxu0 0
      %425 = vmatpush1.bf16.msra.mxu0 %v405
      %426 = vmatprep.subr.bf16.mxu0 0
      %427 = vmatpush1.bf16.msra.mxu0 %v406
      %428 = vmatprep.subr.bf16.mxu0 0
      %429 = vmatpush1.bf16.msra.mxu0 %v407
      %430 = vmatprep.subr.bf16.mxu0 0
      %431 = vmatpush1.bf16.msra.mxu0 %v408
      %432 = vmatprep.subr.bf16.mxu0 0
      %433 = vmatpush1.bf16.msra.mxu0 %v409
      %434 = vmatprep.subr.bf16.mxu0 0
      %435 = vmatpush1.bf16.msra.mxu0 0
      %436 = vmatprep.subr.bf16.mxu0 0
      %437 = vmatpush1.bf16.msra.mxu0 0
      %438 = vmatprep.subr.bf16.mxu0 0
      %439 = vmatpush1.bf16.msra.mxu0 0
      %440 = vmatprep.subr.bf16.mxu0 0
      %441 = vmatpush1.bf16.msra.mxu0 0
      %442 = vmatprep.subr.bf16.mxu0 0
      %443 = vmatpush1.bf16.msra.mxu0 0
      %444 = vmatprep.subr.bf16.mxu0 0
      %445 = vmatpush1.bf16.msra.mxu0 0
      %446 = vmatprep.subr.bf16.mxu0 0
      %447 = vmatpush1.bf16.msra.mxu0 0
      %448 = vmatprep.subr.bf16.mxu0 0
      %449 = vmatpush1.bf16.msra.mxu0 0
      %450 = vmatprep.mubr.bf16.mxu0 0
      %451 = vmatmul.mubr.bf16.gmra.mrb[0].mxu0 %v354
      %v452 = vpop.f32.mrb[0].mxu0
      %v453 = vadd.f32 %v320, %v452
      %v454 = vpop.f32.mrb[0].mxu0
      %v455 = vpop.f32.mrb[0].mxu0
      %v456 = vadd.f32 %v320, %v455
      %v457 = vpop.f32.mrb[0].mxu0
      %458 = vmatprep.mubr.bf16.mxu0 0
      %459 = vmatmul.mubr.bf16.gmra.mrb[0].mxu0 %v355
      %v460 = vpop.f32.mrb[0].mxu0
      %v461 = vadd.f32 %v320, %v460
      %v462 = vpop.f32.mrb[0].mxu0
      %v463 = vpop.f32.mrb[0].mxu0
      %v464 = vadd.f32 %v320, %v463
      %v465 = vpop.f32.mrb[0].mxu0
      %466 = vmatprep.mubr.bf16.mxu0 0
      %467 = vmatmul.mubr.bf16.gmra.mrb[0].mxu0 %v356
      %v468 = vpop.f32.mrb[0].mxu0
      %v469 = vadd.f32 %v320, %v468
      %v470 = vpop.f32.mrb[0].mxu0
      %v471 = vpop.f32.mrb[0].mxu0
      %v472 = vadd.f32 %v320, %v471
      %v473 = vpop.f32.mrb[0].mxu0
      %474 = vmatprep.mubr.bf16.mxu0 0
      %475 = vmatmul.mubr.bf16.gmra.mrb[0].mxu0 %v357
      %v476 = vpop.f32.mrb[0].mxu0
      %v477 = vadd.f32 %v320, %v476
      %v478 = vpop.f32.mrb[0].mxu0
      %v479 = vpop.f32.mrb[0].mxu0
      %v480 = vadd.f32 %v320, %v479
      %v481 = vpop.f32.mrb[0].mxu0
      %482 = vmatprep.mubr.bf16.mxu0 0
      %483 = vmatmul.mubr.bf16.gmra.mrb[0].mxu0 %v358
      %v484 = vpop.f32.mrb[0].mxu0
      %v485 = vadd.f32 %v320, %v484
      %v486 = vpop.f32.mrb[0].mxu0
      %v487 = vpop.f32.mrb[0].mxu0
      %v488 = vadd.f32 %v320, %v487
      %v489 = vpop.f32.mrb[0].mxu0
      %490 = vmatprep.mubr.bf16.mxu0 0
      %491 = vmatmul.mubr.bf16.gmra.mrb[0].mxu0 %v359
      %v492 = vpop.f32.mrb[0].mxu0
      %v493 = vadd.f32 %v320, %v492
      %v494 = vpop.f32.mrb[0].mxu0
      %v495 = vpop.f32.mrb[0].mxu0
      %v496 = vadd.f32 %v320, %v495
      %v497 = vpop.f32.mrb[0].mxu0
      %498 = vmatprep.mubr.bf16.mxu0 0
      %499 = vmatmul.mubr.bf16.gmra.mrb[0].mxu0 %v360
      %v500 = vpop.f32.mrb[0].mxu0
      %v501 = vadd.f32 %v320, %v500
      %v502 = vpop.f32.mrb[0].mxu0
      %v503 = vpop.f32.mrb[0].mxu0
      %v504 = vadd.f32 %v320, %v503
      %v505 = vpop.f32.mrb[0].mxu0
      %506 = vmatprep.mubr.bf16.mxu0 0
      %507 = vmatmul.mubr.bf16.gmra.mrb[0].mxu0 %v361
      %v508 = vpop.f32.mrb[0].mxu0
      %v509 = vadd.f32 %v320, %v508
      %v510 = vpop.f32.mrb[0].mxu0
      %v511 = vpop.f32.mrb[0].mxu0
      %v512 = vadd.f32 %v320, %v511
      %v513 = vpop.f32.mrb[0].mxu0
      %514 = vdwg.mxu0
      %v515 = vmax.f32 %v453, 0.0
      %v516 = vmax.f32 %v456, 0.0
      %v517 = vmax.f32 %v461, 0.0
      %v518 = vmax.f32 %v464, 0.0
      %v519 = vmax.f32 %v469, 0.0
      %v520 = vmax.f32 %v472, 0.0
      %v521 = vmax.f32 %v477, 0.0
      %v522 = vmax.f32 %v480, 0.0
      %v523 = vmax.f32 %v485, 0.0
      %v524 = vmax.f32 %v488, 0.0
      %v525 = vmax.f32 %v493, 0.0
      %v526 = vmax.f32 %v496, 0.0
      %v527 = vmax.f32 %v501, 0.0
      %v528 = vmax.f32 %v504, 0.0
      %v529 = vmax.f32 %v509, 0.0
      %v530 = vmax.f32 %v512, 0.0
      %v531 = vld [vmem:[%s3] sm:$0xf]
      %v532 = vld [vmem:[%s3 + $0x4] sm:$0xf]
      %v533 = vld [vmem:[%s3 + $0x8] sm:$0xf]
      %v534 = vld [vmem:[%s3 + $0xc] sm:$0xf]
      %v535 = vld [vmem:[%s3 + $0x10] sm:$0xf]
      %v536 = vld [vmem:[%s3 + $0x14] sm:$0xf]
      %v537 = vld [vmem:[%s3 + $0x18] sm:$0xf]
      %v538 = vld [vmem:[%s3 + $0x1c] sm:$0xf]
      %v539 = vld [vmem:[%s3 + $0x20] sm:$0xf]
      %v540 = vld [vmem:[%s3 + $0x24] sm:$0xf]
      %v541 = vld [vmem:[%s3 + $0x28] sm:$0xf]
      %v542 = vld [vmem:[%s3 + $0x2c] sm:$0xf]
      %v543 = vld [vmem:[%s3 + $0x30] sm:$0xf]
      %v544 = vld [vmem:[%s3 + $0x34] sm:$0xf]
      %v545 = vld [vmem:[%s3 + $0x38] sm:$0xf]
      %v546 = vld [vmem:[%s3 + $0x3c] sm:$0xf]
      %v547 = vpack.c.bf16 %v516, %v515
      %v548 = vpack.c.bf16 %v518, %v517
      %v549 = vpack.c.bf16 %v520, %v519
      %v550 = vpack.c.bf16 %v522, %v521
      %v551 = vpack.c.bf16 %v524, %v523
      %v552 = vpack.c.bf16 %v526, %v525
      %v553 = vpack.c.bf16 %v528, %v527
      %v554 = vpack.c.bf16 %v530, %v529
      %v555 = vld [vmem:[%s4] sm:$0x1]
      %v557 = vlaneseq
      %v558 = vshrl.u32 %v557, 7
      %v559 = vsub.s32 0, %v558
      %v560 = vrot.slane %v555, %v559
      %v578 = vunpack.c.l.b16 %v531
      %v579 = vunpack.c.l.b16 %v532
      %v580 = vunpack.c.l.b16 %v533
      %v581 = vunpack.c.l.b16 %v534
      %v582 = vunpack.c.l.b16 %v535
      %v583 = vunpack.c.l.b16 %v536
      %v584 = vunpack.c.l.b16 %v537
      %v585 = vunpack.c.l.b16 %v538
      %v586 = vunpack.c.l.b16 %v539
      %v587 = vunpack.c.l.b16 %v540
      %v588 = vunpack.c.l.b16 %v541
      %v589 = vunpack.c.l.b16 %v542
      %v590 = vunpack.c.l.b16 %v543
      %v591 = vunpack.c.l.b16 %v544
      %v592 = vunpack.c.l.b16 %v545
      %v593 = vunpack.c.l.b16 %v546
      %v594 = vpack.c.b16 %v579, %v578
      %v595 = vpack.c.b16 %v581, %v580
      %v596 = vpack.c.b16 %v583, %v582
      %v597 = vpack.c.b16 %v585, %v584
      %v598 = vpack.c.b16 %v587, %v586
      %v599 = vpack.c.b16 %v589, %v588
      %v600 = vpack.c.b16 %v591, %v590
      %v601 = vpack.c.b16 %v593, %v592
      %610 = vmatprep.subr.bf16.mxu0 0
      %611 = vmatpush1.bf16.msra.mxu0 %v594
      %612 = vmatprep.subr.bf16.mxu0 0
      %613 = vmatpush1.bf16.msra.mxu0 %v595
      %614 = vmatprep.subr.bf16.mxu0 0
      %615 = vmatpush1.bf16.msra.mxu0 %v596
      %616 = vmatprep.subr.bf16.mxu0 0
      %617 = vmatpush1.bf16.msra.mxu0 %v597
      %618 = vmatprep.subr.bf16.mxu0 0
      %619 = vmatpush1.bf16.msra.mxu0 %v598
      %620 = vmatprep.subr.bf16.mxu0 0
      %621 = vmatpush1.bf16.msra.mxu0 %v599
      %622 = vmatprep.subr.bf16.mxu0 0
      %623 = vmatpush1.bf16.msra.mxu0 %v600
      %624 = vmatprep.subr.bf16.mxu0 0
      %625 = vmatpush1.bf16.msra.mxu0 %v601
      %626 = vmatprep.subr.bf16.mxu0 0
      %627 = vmatpush1.bf16.msra.mxu0 0
      %628 = vmatprep.subr.bf16.mxu0 0
      %629 = vmatpush1.bf16.msra.mxu0 0
      %630 = vmatprep.subr.bf16.mxu0 0
      %631 = vmatpush1.bf16.msra.mxu0 0
      %632 = vmatprep.subr.bf16.mxu0 0
      %633 = vmatpush1.bf16.msra.mxu0 0
      %634 = vmatprep.subr.bf16.mxu0 0
      %635 = vmatpush1.bf16.msra.mxu0 0
      %636 = vmatprep.subr.bf16.mxu0 0
      %637 = vmatpush1.bf16.msra.mxu0 0
      %638 = vmatprep.subr.bf16.mxu0 0
      %639 = vmatpush1.bf16.msra.mxu0 0
      %640 = vmatprep.subr.bf16.mxu0 0
      %641 = vmatpush1.bf16.msra.mxu0 0
      %642 = vmatprep.mubr.bf16.mxu0 0
      %643 = vmatmul.mubr.bf16.gmra.mrb[0].mxu0 %v547
      %v644 = vpop.f32.mrb[0].mxu0
      %v645 = vadd.f32 %v560, %v644
      %v646 = vpop.f32.mrb[0].mxu0
      %v647 = vpop.f32.mrb[0].mxu0
      %v648 = vadd.f32 %v560, %v647
      %v649 = vpop.f32.mrb[0].mxu0
      %650 = vmatprep.mubr.bf16.mxu0 0
      %651 = vmatmul.mubr.bf16.gmra.mrb[0].mxu0 %v548
      %v652 = vpop.f32.mrb[0].mxu0
      %v653 = vadd.f32 %v560, %v652
      %v654 = vpop.f32.mrb[0].mxu0
      %v655 = vpop.f32.mrb[0].mxu0
      %v656 = vadd.f32 %v560, %v655
      %v657 = vpop.f32.mrb[0].mxu0
      %658 = vmatprep.mubr.bf16.mxu0 0
      %659 = vmatmul.mubr.bf16.gmra.mrb[0].mxu0 %v549
      %v660 = vpop.f32.mrb[0].mxu0
      %v661 = vadd.f32 %v560, %v660
      %v662 = vpop.f32.mrb[0].mxu0
      %v663 = vpop.f32.mrb[0].mxu0
      %v664 = vadd.f32 %v560, %v663
      %v665 = vpop.f32.mrb[0].mxu0
      %666 = vmatprep.mubr.bf16.mxu0 0
      %667 = vmatmul.mubr.bf16.gmra.mrb[0].mxu0 %v550
      %v668 = vpop.f32.mrb[0].mxu0
      %v669 = vadd.f32 %v560, %v668
      %v670 = vpop.f32.mrb[0].mxu0
      %v671 = vpop.f32.mrb[0].mxu0
      %v672 = vadd.f32 %v560, %v671
      %v673 = vpop.f32.mrb[0].mxu0
      %674 = vmatprep.mubr.bf16.mxu0 0
      %675 = vmatmul.mubr.bf16.gmra.mrb[0].mxu0 %v551
      %v676 = vpop.f32.mrb[0].mxu0
      %v677 = vadd.f32 %v560, %v676
      %v678 = vpop.f32.mrb[0].mxu0
      %v679 = vpop.f32.mrb[0].mxu0
      %v680 = vadd.f32 %v560, %v679
      %v681 = vpop.f32.mrb[0].mxu0
      %682 = vmatprep.mubr.bf16.mxu0 0
      %683 = vmatmul.mubr.bf16.gmra.mrb[0].mxu0 %v552
      %v684 = vpop.f32.mrb[0].mxu0
      %v685 = vadd.f32 %v560, %v684
      %v686 = vpop.f32.mrb[0].mxu0
      %v687 = vpop.f32.mrb[0].mxu0
      %v688 = vadd.f32 %v560, %v687
      %v689 = vpop.f32.mrb[0].mxu0
      %690 = vmatprep.mubr.bf16.mxu0 0
      %691 = vmatmul.mubr.bf16.gmra.mrb[0].mxu0 %v553
      %v692 = vpop.f32.mrb[0].mxu0
      %v693 = vadd.f32 %v560, %v692
      %v694 = vpop.f32.mrb[0].mxu0
      %v695 = vpop.f32.mrb[0].mxu0
      %v696 = vadd.f32 %v560, %v695
      %v697 = vpop.f32.mrb[0].mxu0
      %698 = vmatprep.mubr.bf16.mxu0 0
      %699 = vmatmul.mubr.bf16.gmra.mrb[0].mxu0 %v554
      %v700 = vpop.f32.mrb[0].mxu0
      %v701 = vadd.f32 %v560, %v700
      %v702 = vpop.f32.mrb[0].mxu0
      %v703 = vpop.f32.mrb[0].mxu0
      %v704 = vadd.f32 %v560, %v703
      %v705 = vpop.f32.mrb[0].mxu0
      %706 = vdwg.mxu0
      %v707 = vmax.f32 %v645, 0.0
      %v708 = vmax.f32 %v648, 0.0
      %v709 = vmax.f32 %v653, 0.0
      %v710 = vmax.f32 %v656, 0.0
      %v711 = vmax.f32 %v661, 0.0
      %v712 = vmax.f32 %v664, 0.0
      %v713 = vmax.f32 %v669, 0.0
      %v714 = vmax.f32 %v672, 0.0
      %v715 = vmax.f32 %v677, 0.0
      %v716 = vmax.f32 %v680, 0.0
      %v717 = vmax.f32 %v685, 0.0
      %v718 = vmax.f32 %v688, 0.0
      %v719 = vmax.f32 %v693, 0.0
      %v720 = vmax.f32 %v696, 0.0
      %v721 = vmax.f32 %v701, 0.0
      %v722 = vmax.f32 %v704, 0.0
      %v723 = vld [vmem:[%s5] sm:$0xf]
      %v724 = vld [vmem:[%s5 + $0x4] sm:$0xf]
      %v725 = vld [vmem:[%s5 + $0x8] sm:$0xf]
      %v726 = vld [vmem:[%s5 + $0xc] sm:$0xf]
      %v727 = vld [vmem:[%s5 + $0x10] sm:$0xf]
      %v728 = vld [vmem:[%s5 + $0x14] sm:$0xf]
      %v729 = vld [vmem:[%s5 + $0x18] sm:$0xf]
      %v730 = vld [vmem:[%s5 + $0x1c] sm:$0xf]
      %v731 = vld [vmem:[%s5 + $0x20] sm:$0xf]
      %v732 = vld [vmem:[%s5 + $0x24] sm:$0xf]
      %v733 = vld [vmem:[%s5 + $0x28] sm:$0xf]
      %v734 = vld [vmem:[%s5 + $0x2c] sm:$0xf]
      %v735 = vld [vmem:[%s5 + $0x30] sm:$0xf]
      %v736 = vld [vmem:[%s5 + $0x34] sm:$0xf]
      %v737 = vld [vmem:[%s5 + $0x38] sm:$0xf]
      %v738 = vld [vmem:[%s5 + $0x3c] sm:$0xf]
      %v739 = vpack.c.bf16 %v708, %v707
      %v740 = vpack.c.bf16 %v710, %v709
      %v741 = vpack.c.bf16 %v712, %v711
      %v742 = vpack.c.bf16 %v714, %v713
      %v743 = vpack.c.bf16 %v716, %v715
      %v744 = vpack.c.bf16 %v718, %v717
      %v745 = vpack.c.bf16 %v720, %v719
      %v746 = vpack.c.bf16 %v722, %v721
      %v747 = vld [vmem:[%s6] sm:$0x1]
      %v749 = vlaneseq
      %v750 = vshrl.u32 %v749, 7
      %v751 = vsub.s32 0, %v750
      %v752 = vrot.slane %v747, %v751
      %v770 = vunpack.c.l.b16 %v723
      %v771 = vunpack.c.l.b16 %v724
      %v772 = vunpack.c.l.b16 %v725
      %v773 = vunpack.c.l.b16 %v726
      %v774 = vunpack.c.l.b16 %v727
      %v775 = vunpack.c.l.b16 %v728
      %v776 = vunpack.c.l.b16 %v729
      %v777 = vunpack.c.l.b16 %v730
      %v778 = vunpack.c.l.b16 %v731
      %v779 = vunpack.c.l.b16 %v732
      %v780 = vunpack.c.l.b16 %v733
      %v781 = vunpack.c.l.b16 %v734
      %v782 = vunpack.c.l.b16 %v735
      %v783 = vunpack.c.l.b16 %v736
      %v784 = vunpack.c.l.b16 %v737
      %v785 = vunpack.c.l.b16 %v738
      %v786 = vpack.c.b16 %v771, %v770
      %v787 = vpack.c.b16 %v773, %v772
      %v788 = vpack.c.b16 %v775, %v774
      %v789 = vpack.c.b16 %v777, %v776
      %v790 = vpack.c.b16 %v779, %v778
      %v791 = vpack.c.b16 %v781, %v780
      %v792 = vpack.c.b16 %v783, %v782
      %v793 = vpack.c.b16 %v785, %v784
      %802 = vmatprep.subr.bf16.mxu0 0
      %803 = vmatpush1.bf16.msra.mxu0 %v786
      %804 = vmatprep.subr.bf16.mxu0 0
      %805 = vmatpush1.bf16.msra.mxu0 %v787
      %806 = vmatprep.subr.bf16.mxu0 0
      %807 = vmatpush1.bf16.msra.mxu0 %v788
      %808 = vmatprep.subr.bf16.mxu0 0
      %809 = vmatpush1.bf16.msra.mxu0 %v789
      %810 = vmatprep.subr.bf16.mxu0 0
      %811 = vmatpush1.bf16.msra.mxu0 %v790
      %812 = vmatprep.subr.bf16.mxu0 0
      %813 = vmatpush1.bf16.msra.mxu0 %v791
      %814 = vmatprep.subr.bf16.mxu0 0
      %815 = vmatpush1.bf16.msra.mxu0 %v792
      %816 = vmatprep.subr.bf16.mxu0 0
      %817 = vmatpush1.bf16.msra.mxu0 %v793
      %818 = vmatprep.subr.bf16.mxu0 0
      %819 = vmatpush1.bf16.msra.mxu0 0
      %820 = vmatprep.subr.bf16.mxu0 0
      %821 = vmatpush1.bf16.msra.mxu0 0
      %822 = vmatprep.subr.bf16.mxu0 0
      %823 = vmatpush1.bf16.msra.mxu0 0
      %824 = vmatprep.subr.bf16.mxu0 0
      %825 = vmatpush1.bf16.msra.mxu0 0
      %826 = vmatprep.subr.bf16.mxu0 0
      %827 = vmatpush1.bf16.msra.mxu0 0
      %828 = vmatprep.subr.bf16.mxu0 0
      %829 = vmatpush1.bf16.msra.mxu0 0
      %830 = vmatprep.subr.bf16.mxu0 0
      %831 = vmatpush1.bf16.msra.mxu0 0
      %832 = vmatprep.subr.bf16.mxu0 0
      %833 = vmatpush1.bf16.msra.mxu0 0
      %834 = vmatprep.mubr.bf16.mxu0 0
      %835 = vmatmul.mubr.bf16.gmra.mrb[0].mxu0 %v739
      %v836 = vpop.f32.mrb[0].mxu0
      %v837 = vadd.f32 %v752, %v836
      %v838 = vpop.f32.mrb[0].mxu0
      %v839 = vpop.f32.mrb[0].mxu0
      %v840 = vadd.f32 %v752, %v839
      %v841 = vpop.f32.mrb[0].mxu0
      %842 = vmatprep.mubr.bf16.mxu0 0
      %843 = vmatmul.mubr.bf16.gmra.mrb[0].mxu0 %v740
      %v844 = vpop.f32.mrb[0].mxu0
      %v845 = vadd.f32 %v752, %v844
      %v846 = vpop.f32.mrb[0].mxu0
      %v847 = vpop.f32.mrb[0].mxu0
      %v848 = vadd.f32 %v752, %v847
      %v849 = vpop.f32.mrb[0].mxu0
      %850 = vmatprep.mubr.bf16.mxu0 0
      %851 = vmatmul.mubr.bf16.gmra.mrb[0].mxu0 %v741
      %v852 = vpop.f32.mrb[0].mxu0
      %v853 = vadd.f32 %v752, %v852
      %v854 = vpop.f32.mrb[0].mxu0
      %v855 = vpop.f32.mrb[0].mxu0
      %v856 = vadd.f32 %v752, %v855
      %v857 = vpop.f32.mrb[0].mxu0
      %858 = vmatprep.mubr.bf16.mxu0 0
      %859 = vmatmul.mubr.bf16.gmra.mrb[0].mxu0 %v742
      %v860 = vpop.f32.mrb[0].mxu0
      %v861 = vadd.f32 %v752, %v860
      %v862 = vpop.f32.mrb[0].mxu0
      %v863 = vpop.f32.mrb[0].mxu0
      %v864 = vadd.f32 %v752, %v863
      %v865 = vpop.f32.mrb[0].mxu0
      %866 = vmatprep.mubr.bf16.mxu0 0
      %867 = vmatmul.mubr.bf16.gmra.mrb[0].mxu0 %v743
      %v868 = vpop.f32.mrb[0].mxu0
      %v869 = vadd.f32 %v752, %v868
      %v870 = vpop.f32.mrb[0].mxu0
      %v871 = vpop.f32.mrb[0].mxu0
      %v872 = vadd.f32 %v752, %v871
      %v873 = vpop.f32.mrb[0].mxu0
      %874 = vmatprep.mubr.bf16.mxu0 0
      %875 = vmatmul.mubr.bf16.gmra.mrb[0].mxu0 %v744
      %v876 = vpop.f32.mrb[0].mxu0
      %v877 = vadd.f32 %v752, %v876
      %v878 = vpop.f32.mrb[0].mxu0
      %v879 = vpop.f32.mrb[0].mxu0
      %v880 = vadd.f32 %v752, %v879
      %v881 = vpop.f32.mrb[0].mxu0
      %882 = vmatprep.mubr.bf16.mxu0 0
      %883 = vmatmul.mubr.bf16.gmra.mrb[0].mxu0 %v745
      %v884 = vpop.f32.mrb[0].mxu0
      %v885 = vadd.f32 %v752, %v884
      %v886 = vpop.f32.mrb[0].mxu0
      %v887 = vpop.f32.mrb[0].mxu0
      %v888 = vadd.f32 %v752, %v887
      %v889 = vpop.f32.mrb[0].mxu0
      %890 = vmatprep.mubr.bf16.mxu0 0
      %891 = vmatmul.mubr.bf16.gmra.mrb[0].mxu0 %v746
      %v892 = vpop.f32.mrb[0].mxu0
      %v893 = vadd.f32 %v752, %v892
      %v894 = vpop.f32.mrb[0].mxu0
      %v895 = vpop.f32.mrb[0].mxu0
      %v896 = vadd.f32 %v752, %v895
      %v897 = vpop.f32.mrb[0].mxu0
      %898 = vdwg.mxu0
      %899 = vst [vmem:[%s280] sm:$0xff] %v837
      %900 = vst [vmem:[%s280 + $0x8] sm:$0xff] %v840
      %901 = vst [vmem:[%s280 + $0x10] sm:$0xff] %v845
      %902 = vst [vmem:[%s280 + $0x18] sm:$0xff] %v848
      %903 = vst [vmem:[%s280 + $0x20] sm:$0xff] %v853
      %904 = vst [vmem:[%s280 + $0x28] sm:$0xff] %v856
      %905 = vst [vmem:[%s280 + $0x30] sm:$0xff] %v861
      %906 = vst [vmem:[%s280 + $0x38] sm:$0xff] %v864
      %907 = vst [vmem:[%s280 + $0x40] sm:$0xff] %v869
      %908 = vst [vmem:[%s280 + $0x48] sm:$0xff] %v872
      %909 = vst [vmem:[%s280 + $0x50] sm:$0xff] %v877
      %910 = vst [vmem:[%s280 + $0x58] sm:$0xff] %v880
      %911 = vst [vmem:[%s280 + $0x60] sm:$0xff] %v885
      %912 = vst [vmem:[%s280 + $0x68] sm:$0xff] %v888
      %913 = vst [vmem:[%s280 + $0x70] sm:$0xff] %v893
      %914 = vst [vmem:[%s280 + $0x78] sm:$0xff] %v896
      %s915 = smul.u32 16, %s18
      %p916 = scmp.lt.s32.totalorder %s915, 31
      %s917 = scalar_select %p916, %s915, 31
      %s918 = smul.addr %s917, 8
      %s919 = scalar_lea.vmem %s7, %s918
      // Predicated region
      $region49: #{meshgraphnet_forward.13} parent=47 // pred_check
        %p920 = pneg %p188
      $region50: #{meshgraphnet_forward.13} parent=47 // pred_check_branch
        %922 = sbr.rel (%p920) target = $region52
      $region51: #{meshgraphnet_forward.13} parent=47 // pred_region
        %s923 = smul.u32 16, %s18
      $region52: #{meshgraphnet_forward.13} parent=47 // pred_fallthru
        _
    $region48: #{meshgraphnet_forward.13} parent=5 // pred_fallthru
      _
    %p924 = scmp.le.s32.totalorder 2, %s13
    // Predicated region
    $region53: #{meshgraphnet_forward.13} parent=5 // pred_check
      %p925 = pneg %p924
    $region54: #{meshgraphnet_forward.13} parent=5 // pred_check_branch
      %927 = sbr.rel (%p925) target = $region56
    $region55: #{meshgraphnet_forward.13} parent=5 // pred_region
      %s928 = ssub.s32 %s13, 2
      // Predicated region
      $region57: #{meshgraphnet_forward.13} parent=55 // pred_check
        %p929 = pneg %p194
      $region58: #{meshgraphnet_forward.13} parent=55 // pred_check_branch
        %931 = sbr.rel (%p929) target = $region60
      $region59: #{meshgraphnet_forward.13} parent=55 // pred_region
        %s932 = smul.u32 16, %s19
        %p933 = scmp.lt.s32.totalorder %s932, 31
        %s934 = scalar_select %p933, %s932, 31
        %s935 = smul.addr %s934, 8
        %s936 = scalar_lea.vmem %s7, %s935
      $region60: #{meshgraphnet_forward.13} parent=55 // pred_fallthru
        _
    $region56: #{meshgraphnet_forward.13} parent=5 // pred_fallthru
      _
  $region6: #{meshgraphnet_forward.13} parent=0 // loop_footer
    %s17 = sadd.s32 1, %s13
  $region7: #{meshgraphnet_forward.13} parent=0 // loop_footer_branch
    %12 = sbr.rel target = $region3
  $region8: #{meshgraphnet_forward.13} parent=0 // loop_exit
    _

</llo_original>
